<compile_context>
chip_gen: v5e
topology: v5e:2x2
jax: 0.10.0
libtpu: 0.0.40
codegen_flags: <defaults>
</compile_context>

<pallas_src>
import functools

import numpy as np
import jax
import jax.numpy as jnp
from jax.experimental import pallas as pl
from jax.experimental.pallas import tpu as pltpu

EPS = 1e-6

# Per-branch conv sizes, matching LKA1/X1, LKA3/X3, LKA5/X5, LKA7/X7:
#   (first depthwise K, dilated depthwise K, its dilation, gate depthwise K)
_BRANCH_CFG = (
    (1, 3, 2, 1),
    (3, 5, 2, 3),
    (5, 7, 3, 5),
    (7, 9, 4, 7),
)


# --------------------------------------------------------------------------
# Fused MLKA kernel (one grid step == one image, working layout (C, H*W))
# --------------------------------------------------------------------------

def _mlka_kernel(x_ref, cvec_ref, pfw_ref, pfb_ref, pww_ref, plw_ref,
                 wma_ref, wmx_ref, wmb_ref, o_ref, *,
                 C, HW, shifts_ax, shifts_b):
    x = x_ref[0].astype(jnp.float32)                        # (C, HW) shortcut
    cv = cvec_ref[...].astype(jnp.float32)                  # (C, 8) packed vectors
    ln_w, ln_b = cv[:, 0:1], cv[:, 1:2]
    bias_a, bias_x, bias_b = cv[:, 2:3], cv[:, 3:4], cv[:, 4:5]
    bias_pw, plast_b, scale = cv[:, 5:6], cv[:, 6:7], cv[:, 7:8]

    # ---- LayerNorm (channels_first): normalize over the channel axis -------
    u = jnp.mean(x, axis=0, keepdims=True)
    d = x - u
    var = jnp.mean(d * d, axis=0, keepdims=True)
    y = d * jax.lax.rsqrt(var + EPS) * ln_w + ln_b          # rsqrt -> EUP slot

    # ---- proj_first: 1x1 conv C -> 2C on the MXU ----------------------------
    yf = jnp.dot(pfw_ref[...], y, preferred_element_type=jnp.float32) + pfb_ref[...]
    a = yf[:C, :]            # first half -> LKA branches
    g = yf[C:, :]            # second half -> gating ("x" in the PyTorch code)

    def conv_stages(v, stages, shifts):
        """Fused depthwise conv(s); all stages share the tap offsets & input.

        Each tap reads a static lane-shifted view of `v` (slice of the
        lane-doubled copy; wraparound reads are zeroed by the masks already
        folded into the weight images) and FMAs it with wm_ref[t] of shape
        (C, HW).  Zero-padding semantics live entirely in the masks.
        """
        v2 = jnp.concatenate([v, v], axis=-1)               # (C, 2*HW)
        accs = [jnp.zeros((C, HW), jnp.float32) + b for _, b in stages]
        for t, s in enumerate(shifts):
            start = s % HW
            vs = v if start == 0 else v2[:, start:start + HW]
            accs = [acc + vs * wm_ref[t]
                    for acc, (wm_ref, _) in zip(accs, stages)]
        return accs

    # Stage A (first LKA dwconvs) and stage X (gate dwconvs) share every read.
    t1, gx = conv_stages(a, [(wma_ref, bias_a), (wmx_ref, bias_x)], shifts_ax)
    # Stage B: the four dilated dwconvs applied to stage A's output.
    (t2,) = conv_stages(t1, [(wmb_ref, bias_b)], shifts_b)

    # Per-branch 1x1 convs as one block-diagonal matmul, then gating.
    lka = jnp.dot(pww_ref[...], t2, preferred_element_type=jnp.float32) + bias_pw
    xa = g * (lka * gx)                                      # x * cat_i(LKA_i * X_i)
    out = jnp.dot(plw_ref[...], xa, preferred_element_type=jnp.float32) + plast_b
    o_ref[0] = (out * scale + x).astype(o_ref.dtype)


# --------------------------------------------------------------------------
# Host-side packing: tap tables (weights * zero-pad masks), consolidated arrays
# --------------------------------------------------------------------------

def _stage_taps(kernels, dils, H, W, C, q):
    """Union tap table for 4 depthwise convs acting on disjoint channel chunks.

    Returns (shifts, wm): shifts[t] = dh*W + dw (flattened-HW read offset) and
    wm[t] is the (C, H*W) per-channel weight image with the zero-padding /
    row-wrap validity mask folded in.  Never-contributing taps are pruned.
    """
    taps = {}
    for i, (ker, dil) in enumerate(zip(kernels, dils)):
        ker = np.asarray(ker, dtype=np.float32)              # (K, K, q)
        half = ker.shape[0] // 2
        for kh in range(ker.shape[0]):
            for kw in range(ker.shape[1]):
                dh, dw = (kh - half) * dil, (kw - half) * dil
                vec = taps.setdefault((dh, dw), np.zeros((C,), np.float32))
                vec[i * q:(i + 1) * q] += ker[kh, kw, :]
    hw = H * W
    row = np.arange(hw) // W
    col = np.arange(hw) % W
    shifts, wms = [], []
    for (dh, dw) in sorted(taps):
        valid = ((row + dh >= 0) & (row + dh < H) &
                 (col + dw >= 0) & (col + dw < W)).astype(np.float32)
        wm = taps[(dh, dw)][:, None] * valid[None, :]        # (C, HW)
        if not wm.any():
            continue                                         # never contributes
        shifts.append(int(dh * W + dw))
        wms.append(wm)
    return tuple(shifts), jnp.asarray(np.stack(wms, axis=0))


def pack_params(params, H, W):
    C = params["pl_w"].shape[0]
    q = C // 4
    br = params["branch"]

    cvec = jnp.stack([
        params["ln_w"], params["ln_b"],
        jnp.concatenate([b["dw1_b"] for b in br]),
        jnp.concatenate([b["x_b"] for b in br]),
        jnp.concatenate([b["dw2_b"] for b in br]),
        jnp.concatenate([b["pw_b"] for b in br]),
        params["pl_b"], params["scale"],
    ], axis=1).astype(jnp.float32)                           # (C, 8)

    pw_w = jnp.zeros((C, C), jnp.float32)                    # block-diagonal 1x1s
    for i, b in enumerate(br):
        pw_w = pw_w.at[i * q:(i + 1) * q, i * q:(i + 1) * q].set(b["pw_w"])

    dil2 = tuple(cfg[2] for cfg in _BRANCH_CFG)
    shifts_a, wm_a = _stage_taps([b["dw1_w"] for b in br], (1,) * 4, H, W, C, q)
    shifts_x, wm_x = _stage_taps([b["x_w"] for b in br], (1,) * 4, H, W, C, q)
    shifts_b, wm_b = _stage_taps([b["dw2_w"] for b in br], dil2, H, W, C, q)
    assert shifts_a == shifts_x  # same kernel sizes / dilation -> shared reads

    weights = {
        "cvec": cvec,
        "pf_w": params["pf_w"],
        "pf_b": params["pf_b"].reshape(2 * C, 1),
        "pw_w": pw_w,
        "pl_w": params["pl_w"],
        "wm_a": wm_a, "wm_x": wm_x, "wm_b": wm_b,
    }
    return weights, (shifts_a, shifts_b)


# --------------------------------------------------------------------------
# Wrapper: one pallas_call for the whole MLKA forward
# --------------------------------------------------------------------------

def mlka_forward(weights, x_nchw, *, shifts):
    """MLKA forward.  External interface is NCHW; kernel works on (C, H*W)."""
    shifts_ax, shifts_b = shifts
    N, C, H, W = x_nchw.shape
    HW = H * W
    x = x_nchw.reshape(N, C, HW)                             # zero-copy, no transpose

    w_list = [weights[k] for k in
              ("cvec", "pf_w", "pf_b", "pw_w", "pl_w", "wm_a", "wm_x", "wm_b")]
    w_specs = [pl.BlockSpec(a.shape, lambda n, nd=a.ndim: (0,) * nd)
               for a in w_list]

    kernel = functools.partial(_mlka_kernel, C=C, HW=HW,
                               shifts_ax=shifts_ax, shifts_b=shifts_b)
    out = pl.pallas_call(
        kernel,
        out_shape=jax.ShapeDtypeStruct((N, C, HW), x.dtype),
        grid=(N,),
        in_specs=[pl.BlockSpec((1, C, HW), lambda n: (n, 0, 0))] + w_specs,
        out_specs=pl.BlockSpec((1, C, HW), lambda n: (n, 0, 0)),
        compiler_params=pltpu.CompilerParams(
            dimension_semantics=("parallel",),   # one image per TensorCore
            vmem_limit_bytes=32 * 1024 * 1024,
        ),
    )(x, *w_list)
    return out.reshape(N, C, H, W)


# --------------------------------------------------------------------------
# Parameter init (deterministic; shapes mirror the PyTorch module)
# --------------------------------------------------------------------------

def init_params(key, n_feats):
    q = n_feats // 4
    keys = iter(jax.random.split(key, 64))

    def nxt(shape, s=0.1):
        return jax.random.normal(next(keys), shape, jnp.float32) * s

    p = {
        "ln_w": jnp.ones((n_feats,), jnp.float32),
        "ln_b": jnp.zeros((n_feats,), jnp.float32),
        "pf_w": nxt((2 * n_feats, n_feats)),   # proj_first 1x1: (Cout, Cin)
        "pf_b": nxt((2 * n_feats,)),
        "pl_w": nxt((n_feats, n_feats)),       # proj_last 1x1
        "pl_b": nxt((n_feats,)),
        # Module inits scale to zeros (forward == identity); random here so the
        # kernel path is exercised.  The in-script reference uses the same value.
        "scale": nxt((n_feats,)),
    }
    branches = []
    for (k1, k2, _, kx) in _BRANCH_CFG:
        branches.append({
            "dw1_w": nxt((k1, k1, q)), "dw1_b": nxt((q,)),   # LKA depthwise #1
            "dw2_w": nxt((k2, k2, q)), "dw2_b": nxt((q,)),   # LKA depthwise #2 (dilated)
            "pw_w": nxt((q, q)),       "pw_b": nxt((q,)),    # LKA 1x1
            "x_w": nxt((kx, kx, q)),   "x_b": nxt((q,)),     # X gate depthwise
        })
    p["branch"] = branches
    return p


# --------------------------------------------------------------------------
# Pure-JAX reference (mirrors the PyTorch MLKA.forward) for correctness check
# --------------------------------------------------------------------------

def _ref_dwconv(x, w_kkc, b, dil):
    q = x.shape[1]
    K = w_kkc.shape[0]
    w = jnp.transpose(w_kkc, (2, 0, 1))[:, None, :, :]       # (q, 1, K, K)
    pad = (K // 2) * dil
    y = jax.lax.conv_general_dilated(
        x, w, window_strides=(1, 1), padding=[(pad, pad), (pad, pad)],
        rhs_dilation=(dil, dil), dimension_numbers=("NCHW", "OIHW", "NCHW"),
        feature_group_count=q, precision=jax.lax.Precision.HIGHEST)
    return y + b[None, :, None, None]


def _ref_1x1(x, w, b):
    y = jnp.einsum("oi,nihw->nohw", w, x, precision=jax.lax.Precision.HIGHEST)
    return y + b[None, :, None, None]


def mlka_reference(params, x):
    C = x.shape[1]
    q = C // 4
    shortcut = x
    u = jnp.mean(x, axis=1, keepdims=True)
    s = jnp.mean((x - u) ** 2, axis=1, keepdims=True)
    y = (x - u) / jnp.sqrt(s + EPS)
    y = params["ln_w"][None, :, None, None] * y + params["ln_b"][None, :, None, None]
    y = _ref_1x1(y, params["pf_w"], params["pf_b"])
    a, g = y[:, :C], y[:, C:]
    chunks = []
    for i, (b, (_, _, dil2, _)) in enumerate(zip(params["branch"], _BRANCH_CFG)):
        ai = a[:, i * q:(i + 1) * q]
        t = _ref_dwconv(ai, b["dw1_w"], b["dw1_b"], 1)
        t = _ref_dwconv(t, b["dw2_w"], b["dw2_b"], dil2)
        t = _ref_1x1(t, b["pw_w"], b["pw_b"])
        chunks.append(t * _ref_dwconv(ai, b["x_w"], b["x_b"], 1))
    xa = g * jnp.concatenate(chunks, axis=1)
    out = _ref_1x1(xa, params["pl_w"], params["pl_b"])
    return out * params["scale"][None, :, None, None] + shortcut


# --------------------------------------------------------------------------

if __name__ == "__main__":
    n_feats = 8            # must be divisible by 4 (MLKA chunks `a` into 4)
    N, H, W = 2, 16, 16

    key = jax.random.PRNGKey(0)
    kp, kx = jax.random.split(key)
    params = init_params(kp, n_feats)
    x = jax.random.normal(kx, (N, n_feats, H, W), jnp.float32)

    weights, shifts = pack_params(params, H, W)
    fwd = jax.jit(functools.partial(mlka_forward, shifts=shifts))
    out = jax.block_until_ready(fwd(weights, x))
    assert out.shape == (N, n_feats, H, W)
    assert out.dtype == jnp.float32

    ref = mlka_reference(params, x)
    err = float(jnp.max(jnp.abs(out - ref)))
    assert err < 2e-3, f"kernel vs reference mismatch: max abs err = {err}"
    print("KERNEL_OK")
</pallas_src>

<mosaic_0001>
module attributes {stable_mosaic.version = 11 : i64} {
  func.func @_mlka_kernel(%arg0: i32, %arg1: memref<1x8x256xf32, #tpu.memory_space<vmem>>, %arg2: memref<8x8xf32, #tpu.memory_space<vmem>>, %arg3: memref<16x8xf32, #tpu.memory_space<vmem>>, %arg4: memref<16x1xf32, #tpu.memory_space<vmem>>, %arg5: memref<8x8xf32, #tpu.memory_space<vmem>>, %arg6: memref<8x8xf32, #tpu.memory_space<vmem>>, %arg7: memref<49x8x256xf32, #tpu.memory_space<vmem>>, %arg8: memref<49x8x256xf32, #tpu.memory_space<vmem>>, %arg9: memref<113x8x256xf32, #tpu.memory_space<vmem>>, %arg10: memref<1x8x256xf32, #tpu.memory_space<vmem>>) attributes {dimension_semantics = [#tpu.dimension_semantics<parallel>], iteration_bounds = array<i64: 2>, scalar_prefetch = 0 : i64, scratch_operands = 0 : i64, tpu.core_type = #tpu.core_type<tc>, window_params = [{transform_indices = @transform_0, window_bounds = array<i64: 1, 8, 256>}, {pipeline_mode = #tpu.pipeline_mode<synchronous>, transform_indices = @transform_1, window_bounds = array<i64: 8, 8>}, {pipeline_mode = #tpu.pipeline_mode<synchronous>, transform_indices = @transform_2, window_bounds = array<i64: 16, 8>}, {pipeline_mode = #tpu.pipeline_mode<synchronous>, transform_indices = @transform_3, window_bounds = array<i64: 16, 1>}, {pipeline_mode = #tpu.pipeline_mode<synchronous>, transform_indices = @transform_4, window_bounds = array<i64: 8, 8>}, {pipeline_mode = #tpu.pipeline_mode<synchronous>, transform_indices = @transform_5, window_bounds = array<i64: 8, 8>}, {pipeline_mode = #tpu.pipeline_mode<synchronous>, transform_indices = @transform_6, window_bounds = array<i64: 49, 8, 256>}, {pipeline_mode = #tpu.pipeline_mode<synchronous>, transform_indices = @transform_7, window_bounds = array<i64: 49, 8, 256>}, {pipeline_mode = #tpu.pipeline_mode<synchronous>, transform_indices = @transform_8, window_bounds = array<i64: 113, 8, 256>}, {transform_indices = @transform_9, window_bounds = array<i64: 1, 8, 256>}]} {
    %c0 = arith.constant 0 : index
    %c0_0 = arith.constant 0 : index
    %c0_1 = arith.constant 0 : index
    %0 = vector.load %arg1[%c0, %c0_0, %c0_1] : memref<1x8x256xf32, #tpu.memory_space<vmem>>, vector<1x8x256xf32>
    %1 = vector.shape_cast %0 : vector<1x8x256xf32> to vector<8x256xf32>
    %c0_2 = arith.constant 0 : index
    %c0_3 = arith.constant 0 : index
    %2 = vector.load %arg2[%c0_2, %c0_3] : memref<8x8xf32, #tpu.memory_space<vmem>>, vector<8x8xf32>
    %3 = vector.extract_strided_slice %2 {offsets = [0, 0], sizes = [8, 1], strides = [1, 1]} : vector<8x8xf32> to vector<8x1xf32>
    %4 = vector.extract_strided_slice %2 {offsets = [0, 1], sizes = [8, 1], strides = [1, 1]} : vector<8x8xf32> to vector<8x1xf32>
    %5 = vector.extract_strided_slice %2 {offsets = [0, 2], sizes = [8, 1], strides = [1, 1]} : vector<8x8xf32> to vector<8x1xf32>
    %6 = vector.extract_strided_slice %2 {offsets = [0, 3], sizes = [8, 1], strides = [1, 1]} : vector<8x8xf32> to vector<8x1xf32>
    %7 = vector.extract_strided_slice %2 {offsets = [0, 4], sizes = [8, 1], strides = [1, 1]} : vector<8x8xf32> to vector<8x1xf32>
    %8 = vector.extract_strided_slice %2 {offsets = [0, 5], sizes = [8, 1], strides = [1, 1]} : vector<8x8xf32> to vector<8x1xf32>
    %9 = vector.extract_strided_slice %2 {offsets = [0, 6], sizes = [8, 1], strides = [1, 1]} : vector<8x8xf32> to vector<8x1xf32>
    %10 = vector.extract_strided_slice %2 {offsets = [0, 7], sizes = [8, 1], strides = [1, 1]} : vector<8x8xf32> to vector<8x1xf32>
    %cst = arith.constant dense<0.000000e+00> : vector<256xf32>
    %11 = vector.multi_reduction <add>, %1, %cst [0] : vector<8x256xf32> to vector<256xf32>
    %12 = vector.shape_cast %11 : vector<256xf32> to vector<1x256xf32>
    %cst_4 = arith.constant 8.000000e+00 : f32
    %13 = vector.broadcast %cst_4 : f32 to vector<1x256xf32>
    %14 = arith.divf %12, %13 : vector<1x256xf32>
    %15 = vector.broadcast %14 : vector<1x256xf32> to vector<8x256xf32>
    %16 = arith.subf %1, %15 : vector<8x256xf32>
    %17 = arith.mulf %16, %16 : vector<8x256xf32>
    %cst_5 = arith.constant dense<0.000000e+00> : vector<256xf32>
    %18 = vector.multi_reduction <add>, %17, %cst_5 [0] : vector<8x256xf32> to vector<256xf32>
    %19 = vector.shape_cast %18 : vector<256xf32> to vector<1x256xf32>
    %cst_6 = arith.constant 8.000000e+00 : f32
    %20 = vector.broadcast %cst_6 : f32 to vector<1x256xf32>
    %21 = arith.divf %19, %20 : vector<1x256xf32>
    %cst_7 = arith.constant 9.99999997E-7 : f32
    %22 = vector.broadcast %cst_7 : f32 to vector<1x256xf32>
    %23 = arith.addf %21, %22 : vector<1x256xf32>
    %24 = math.rsqrt %23 : vector<1x256xf32>
    %25 = vector.broadcast %24 : vector<1x256xf32> to vector<8x256xf32>
    %26 = arith.mulf %16, %25 : vector<8x256xf32>
    %27 = vector.broadcast %3 : vector<8x1xf32> to vector<8x256xf32>
    %28 = arith.mulf %26, %27 : vector<8x256xf32>
    %29 = vector.broadcast %4 : vector<8x1xf32> to vector<8x256xf32>
    %30 = arith.addf %28, %29 : vector<8x256xf32>
    %c0_8 = arith.constant 0 : index
    %c0_9 = arith.constant 0 : index
    %31 = vector.load %arg3[%c0_8, %c0_9] : memref<16x8xf32, #tpu.memory_space<vmem>>, vector<16x8xf32>
    %cst_10 = arith.constant dense<0.000000e+00> : vector<16x256xf32>
    %32 = tpu.matmul %31, %30, %cst_10 {dimension_numbers = #tpu.dot_dimension_numbers<[1], [0], [0], [1], [0, 0, 1, 1], [], []>} : vector<16x8xf32>, vector<8x256xf32>, vector<16x256xf32> -> vector<16x256xf32>
    %c0_11 = arith.constant 0 : index
    %c0_12 = arith.constant 0 : index
    %33 = vector.load %arg4[%c0_11, %c0_12] : memref<16x1xf32, #tpu.memory_space<vmem>>, vector<16x1xf32>
    %34 = vector.broadcast %33 : vector<16x1xf32> to vector<16x256xf32>
    %35 = arith.addf %32, %34 : vector<16x256xf32>
    %36 = vector.extract_strided_slice %35 {offsets = [0, 0], sizes = [8, 256], strides = [1, 1]} : vector<16x256xf32> to vector<8x256xf32>
    %37 = vector.extract_strided_slice %35 {offsets = [8, 0], sizes = [8, 256], strides = [1, 1]} : vector<16x256xf32> to vector<8x256xf32>
    %38 = tpu.concatenate %36, %36 in 1 : vector<8x256xf32>, vector<8x256xf32> -> vector<8x512xf32>
    %cst_13 = arith.constant 0.000000e+00 : f32
    %39 = vector.broadcast %cst_13 : f32 to vector<8x256xf32>
    %40 = vector.broadcast %5 : vector<8x1xf32> to vector<8x256xf32>
    %41 = arith.addf %39, %40 : vector<8x256xf32>
    %cst_14 = arith.constant 0.000000e+00 : f32
    %42 = vector.broadcast %cst_14 : f32 to vector<8x256xf32>
    %43 = vector.broadcast %6 : vector<8x1xf32> to vector<8x256xf32>
    %44 = arith.addf %42, %43 : vector<8x256xf32>
    %45 = vector.extract_strided_slice %38 {offsets = [0, 205], sizes = [8, 256], strides = [1, 1]} : vector<8x512xf32> to vector<8x256xf32>
    %c0_15 = arith.constant 0 : index
    %c0_16 = arith.constant 0 : index
    %c0_17 = arith.constant 0 : index
    %46 = vector.load %arg7[%c0_15, %c0_16, %c0_17] : memref<49x8x256xf32, #tpu.memory_space<vmem>>, vector<1x8x256xf32>
    %47 = vector.shape_cast %46 : vector<1x8x256xf32> to vector<8x256xf32>
    %48 = arith.mulf %45, %47 : vector<8x256xf32>
    %49 = arith.addf %41, %48 : vector<8x256xf32>
    %c0_18 = arith.constant 0 : index
    %c0_19 = arith.constant 0 : index
    %c0_20 = arith.constant 0 : index
    %50 = vector.load %arg8[%c0_18, %c0_19, %c0_20] : memref<49x8x256xf32, #tpu.memory_space<vmem>>, vector<1x8x256xf32>
    %51 = vector.shape_cast %50 : vector<1x8x256xf32> to vector<8x256xf32>
    %52 = arith.mulf %45, %51 : vector<8x256xf32>
    %53 = arith.addf %44, %52 : vector<8x256xf32>
    %54 = vector.extract_strided_slice %38 {offsets = [0, 206], sizes = [8, 256], strides = [1, 1]} : vector<8x512xf32> to vector<8x256xf32>
    %c1 = arith.constant 1 : index
    %c0_21 = arith.constant 0 : index
    %c0_22 = arith.constant 0 : index
    %55 = vector.load %arg7[%c1, %c0_21, %c0_22] : memref<49x8x256xf32, #tpu.memory_space<vmem>>, vector<1x8x256xf32>
    %56 = vector.shape_cast %55 : vector<1x8x256xf32> to vector<8x256xf32>
    %57 = arith.mulf %54, %56 : vector<8x256xf32>
    %58 = arith.addf %49, %57 : vector<8x256xf32>
    %c1_23 = arith.constant 1 : index
    %c0_24 = arith.constant 0 : index
    %c0_25 = arith.constant 0 : index
    %59 = vector.load %arg8[%c1_23, %c0_24, %c0_25] : memref<49x8x256xf32, #tpu.memory_space<vmem>>, vector<1x8x256xf32>
    %60 = vector.shape_cast %59 : vector<1x8x256xf32> to vector<8x256xf32>
    %61 = arith.mulf %54, %60 : vector<8x256xf32>
    %62 = arith.addf %53, %61 : vector<8x256xf32>
    %63 = vector.extract_strided_slice %38 {offsets = [0, 207], sizes = [8, 256], strides = [1, 1]} : vector<8x512xf32> to vector<8x256xf32>
    %c2 = arith.constant 2 : index
    %c0_26 = arith.constant 0 : index
    %c0_27 = arith.constant 0 : index
    %64 = vector.load %arg7[%c2, %c0_26, %c0_27] : memref<49x8x256xf32, #tpu.memory_space<vmem>>, vector<1x8x256xf32>
    %65 = vector.shape_cast %64 : vector<1x8x256xf32> to vector<8x256xf32>
    %66 = arith.mulf %63, %65 : vector<8x256xf32>
    %67 = arith.addf %58, %66 : vector<8x256xf32>
    %c2_28 = arith.constant 2 : index
    %c0_29 = arith.constant 0 : index
    %c0_30 = arith.constant 0 : index
    %68 = vector.load %arg8[%c2_28, %c0_29, %c0_30] : memref<49x8x256xf32, #tpu.memory_space<vmem>>, vector<1x8x256xf32>
    %69 = vector.shape_cast %68 : vector<1x8x256xf32> to vector<8x256xf32>
    %70 = arith.mulf %63, %69 : vector<8x256xf32>
    %71 = arith.addf %62, %70 : vector<8x256xf32>
    %72 = vector.extract_strided_slice %38 {offsets = [0, 208], sizes = [8, 256], strides = [1, 1]} : vector<8x512xf32> to vector<8x256xf32>
    %c3 = arith.constant 3 : index
    %c0_31 = arith.constant 0 : index
    %c0_32 = arith.constant 0 : index
    %73 = vector.load %arg7[%c3, %c0_31, %c0_32] : memref<49x8x256xf32, #tpu.memory_space<vmem>>, vector<1x8x256xf32>
    %74 = vector.shape_cast %73 : vector<1x8x256xf32> to vector<8x256xf32>
    %75 = arith.mulf %72, %74 : vector<8x256xf32>
    %76 = arith.addf %67, %75 : vector<8x256xf32>
    %c3_33 = arith.constant 3 : index
    %c0_34 = arith.constant 0 : index
    %c0_35 = arith.constant 0 : index
    %77 = vector.load %arg8[%c3_33, %c0_34, %c0_35] : memref<49x8x256xf32, #tpu.memory_space<vmem>>, vector<1x8x256xf32>
    %78 = vector.shape_cast %77 : vector<1x8x256xf32> to vector<8x256xf32>
    %79 = arith.mulf %72, %78 : vector<8x256xf32>
    %80 = arith.addf %71, %79 : vector<8x256xf32>
    %81 = vector.extract_strided_slice %38 {offsets = [0, 209], sizes = [8, 256], strides = [1, 1]} : vector<8x512xf32> to vector<8x256xf32>
    %c4 = arith.constant 4 : index
    %c0_36 = arith.constant 0 : index
    %c0_37 = arith.constant 0 : index
    %82 = vector.load %arg7[%c4, %c0_36, %c0_37] : memref<49x8x256xf32, #tpu.memory_space<vmem>>, vector<1x8x256xf32>
    %83 = vector.shape_cast %82 : vector<1x8x256xf32> to vector<8x256xf32>
    %84 = arith.mulf %81, %83 : vector<8x256xf32>
    %85 = arith.addf %76, %84 : vector<8x256xf32>
    %c4_38 = arith.constant 4 : index
    %c0_39 = arith.constant 0 : index
    %c0_40 = arith.constant 0 : index
    %86 = vector.load %arg8[%c4_38, %c0_39, %c0_40] : memref<49x8x256xf32, #tpu.memory_space<vmem>>, vector<1x8x256xf32>
    %87 = vector.shape_cast %86 : vector<1x8x256xf32> to vector<8x256xf32>
    %88 = arith.mulf %81, %87 : vector<8x256xf32>
    %89 = arith.addf %80, %88 : vector<8x256xf32>
    %90 = vector.extract_strided_slice %38 {offsets = [0, 210], sizes = [8, 256], strides = [1, 1]} : vector<8x512xf32> to vector<8x256xf32>
    %c5 = arith.constant 5 : index
    %c0_41 = arith.constant 0 : index
    %c0_42 = arith.constant 0 : index
    %91 = vector.load %arg7[%c5, %c0_41, %c0_42] : memref<49x8x256xf32, #tpu.memory_space<vmem>>, vector<1x8x256xf32>
    %92 = vector.shape_cast %91 : vector<1x8x256xf32> to vector<8x256xf32>
    %93 = arith.mulf %90, %92 : vector<8x256xf32>
    %94 = arith.addf %85, %93 : vector<8x256xf32>
    %c5_43 = arith.constant 5 : index
    %c0_44 = arith.constant 0 : index
    %c0_45 = arith.constant 0 : index
    %95 = vector.load %arg8[%c5_43, %c0_44, %c0_45] : memref<49x8x256xf32, #tpu.memory_space<vmem>>, vector<1x8x256xf32>
    %96 = vector.shape_cast %95 : vector<1x8x256xf32> to vector<8x256xf32>
    %97 = arith.mulf %90, %96 : vector<8x256xf32>
    %98 = arith.addf %89, %97 : vector<8x256xf32>
    %99 = vector.extract_strided_slice %38 {offsets = [0, 211], sizes = [8, 256], strides = [1, 1]} : vector<8x512xf32> to vector<8x256xf32>
    %c6 = arith.constant 6 : index
    %c0_46 = arith.constant 0 : index
    %c0_47 = arith.constant 0 : index
    %100 = vector.load %arg7[%c6, %c0_46, %c0_47] : memref<49x8x256xf32, #tpu.memory_space<vmem>>, vector<1x8x256xf32>
    %101 = vector.shape_cast %100 : vector<1x8x256xf32> to vector<8x256xf32>
    %102 = arith.mulf %99, %101 : vector<8x256xf32>
    %103 = arith.addf %94, %102 : vector<8x256xf32>
    %c6_48 = arith.constant 6 : index
    %c0_49 = arith.constant 0 : index
    %c0_50 = arith.constant 0 : index
    %104 = vector.load %arg8[%c6_48, %c0_49, %c0_50] : memref<49x8x256xf32, #tpu.memory_space<vmem>>, vector<1x8x256xf32>
    %105 = vector.shape_cast %104 : vector<1x8x256xf32> to vector<8x256xf32>
    %106 = arith.mulf %99, %105 : vector<8x256xf32>
    %107 = arith.addf %98, %106 : vector<8x256xf32>
    %108 = vector.extract_strided_slice %38 {offsets = [0, 221], sizes = [8, 256], strides = [1, 1]} : vector<8x512xf32> to vector<8x256xf32>
    %c7 = arith.constant 7 : index
    %c0_51 = arith.constant 0 : index
    %c0_52 = arith.constant 0 : index
    %109 = vector.load %arg7[%c7, %c0_51, %c0_52] : memref<49x8x256xf32, #tpu.memory_space<vmem>>, vector<1x8x256xf32>
    %110 = vector.shape_cast %109 : vector<1x8x256xf32> to vector<8x256xf32>
    %111 = arith.mulf %108, %110 : vector<8x256xf32>
    %112 = arith.addf %103, %111 : vector<8x256xf32>
    %c7_53 = arith.constant 7 : index
    %c0_54 = arith.constant 0 : index
    %c0_55 = arith.constant 0 : index
    %113 = vector.load %arg8[%c7_53, %c0_54, %c0_55] : memref<49x8x256xf32, #tpu.memory_space<vmem>>, vector<1x8x256xf32>
    %114 = vector.shape_cast %113 : vector<1x8x256xf32> to vector<8x256xf32>
    %115 = arith.mulf %108, %114 : vector<8x256xf32>
    %116 = arith.addf %107, %115 : vector<8x256xf32>
    %117 = vector.extract_strided_slice %38 {offsets = [0, 222], sizes = [8, 256], strides = [1, 1]} : vector<8x512xf32> to vector<8x256xf32>
    %c8 = arith.constant 8 : index
    %c0_56 = arith.constant 0 : index
    %c0_57 = arith.constant 0 : index
    %118 = vector.load %arg7[%c8, %c0_56, %c0_57] : memref<49x8x256xf32, #tpu.memory_space<vmem>>, vector<1x8x256xf32>
    %119 = vector.shape_cast %118 : vector<1x8x256xf32> to vector<8x256xf32>
    %120 = arith.mulf %117, %119 : vector<8x256xf32>
    %121 = arith.addf %112, %120 : vector<8x256xf32>
    %c8_58 = arith.constant 8 : index
    %c0_59 = arith.constant 0 : index
    %c0_60 = arith.constant 0 : index
    %122 = vector.load %arg8[%c8_58, %c0_59, %c0_60] : memref<49x8x256xf32, #tpu.memory_space<vmem>>, vector<1x8x256xf32>
    %123 = vector.shape_cast %122 : vector<1x8x256xf32> to vector<8x256xf32>
    %124 = arith.mulf %117, %123 : vector<8x256xf32>
    %125 = arith.addf %116, %124 : vector<8x256xf32>
    %126 = vector.extract_strided_slice %38 {offsets = [0, 223], sizes = [8, 256], strides = [1, 1]} : vector<8x512xf32> to vector<8x256xf32>
    %c9 = arith.constant 9 : index
    %c0_61 = arith.constant 0 : index
    %c0_62 = arith.constant 0 : index
    %127 = vector.load %arg7[%c9, %c0_61, %c0_62] : memref<49x8x256xf32, #tpu.memory_space<vmem>>, vector<1x8x256xf32>
    %128 = vector.shape_cast %127 : vector<1x8x256xf32> to vector<8x256xf32>
    %129 = arith.mulf %126, %128 : vector<8x256xf32>
    %130 = arith.addf %121, %129 : vector<8x256xf32>
    %c9_63 = arith.constant 9 : index
    %c0_64 = arith.constant 0 : index
    %c0_65 = arith.constant 0 : index
    %131 = vector.load %arg8[%c9_63, %c0_64, %c0_65] : memref<49x8x256xf32, #tpu.memory_space<vmem>>, vector<1x8x256xf32>
    %132 = vector.shape_cast %131 : vector<1x8x256xf32> to vector<8x256xf32>
    %133 = arith.mulf %126, %132 : vector<8x256xf32>
    %134 = arith.addf %125, %133 : vector<8x256xf32>
    %135 = vector.extract_strided_slice %38 {offsets = [0, 224], sizes = [8, 256], strides = [1, 1]} : vector<8x512xf32> to vector<8x256xf32>
    %c10 = arith.constant 10 : index
    %c0_66 = arith.constant 0 : index
    %c0_67 = arith.constant 0 : index
    %136 = vector.load %arg7[%c10, %c0_66, %c0_67] : memref<49x8x256xf32, #tpu.memory_space<vmem>>, vector<1x8x256xf32>
    %137 = vector.shape_cast %136 : vector<1x8x256xf32> to vector<8x256xf32>
    %138 = arith.mulf %135, %137 : vector<8x256xf32>
    %139 = arith.addf %130, %138 : vector<8x256xf32>
    %c10_68 = arith.constant 10 : index
    %c0_69 = arith.constant 0 : index
    %c0_70 = arith.constant 0 : index
    %140 = vector.load %arg8[%c10_68, %c0_69, %c0_70] : memref<49x8x256xf32, #tpu.memory_space<vmem>>, vector<1x8x256xf32>
    %141 = vector.shape_cast %140 : vector<1x8x256xf32> to vector<8x256xf32>
    %142 = arith.mulf %135, %141 : vector<8x256xf32>
    %143 = arith.addf %134, %142 : vector<8x256xf32>
    %144 = vector.extract_strided_slice %38 {offsets = [0, 225], sizes = [8, 256], strides = [1, 1]} : vector<8x512xf32> to vector<8x256xf32>
    %c11 = arith.constant 11 : index
    %c0_71 = arith.constant 0 : index
    %c0_72 = arith.constant 0 : index
    %145 = vector.load %arg7[%c11, %c0_71, %c0_72] : memref<49x8x256xf32, #tpu.memory_space<vmem>>, vector<1x8x256xf32>
    %146 = vector.shape_cast %145 : vector<1x8x256xf32> to vector<8x256xf32>
    %147 = arith.mulf %144, %146 : vector<8x256xf32>
    %148 = arith.addf %139, %147 : vector<8x256xf32>
    %c11_73 = arith.constant 11 : index
    %c0_74 = arith.constant 0 : index
    %c0_75 = arith.constant 0 : index
    %149 = vector.load %arg8[%c11_73, %c0_74, %c0_75] : memref<49x8x256xf32, #tpu.memory_space<vmem>>, vector<1x8x256xf32>
    %150 = vector.shape_cast %149 : vector<1x8x256xf32> to vector<8x256xf32>
    %151 = arith.mulf %144, %150 : vector<8x256xf32>
    %152 = arith.addf %143, %151 : vector<8x256xf32>
    %153 = vector.extract_strided_slice %38 {offsets = [0, 226], sizes = [8, 256], strides = [1, 1]} : vector<8x512xf32> to vector<8x256xf32>
    %c12 = arith.constant 12 : index
    %c0_76 = arith.constant 0 : index
    %c0_77 = arith.constant 0 : index
    %154 = vector.load %arg7[%c12, %c0_76, %c0_77] : memref<49x8x256xf32, #tpu.memory_space<vmem>>, vector<1x8x256xf32>
    %155 = vector.shape_cast %154 : vector<1x8x256xf32> to vector<8x256xf32>
    %156 = arith.mulf %153, %155 : vector<8x256xf32>
    %157 = arith.addf %148, %156 : vector<8x256xf32>
    %c12_78 = arith.constant 12 : index
    %c0_79 = arith.constant 0 : index
    %c0_80 = arith.constant 0 : index
    %158 = vector.load %arg8[%c12_78, %c0_79, %c0_80] : memref<49x8x256xf32, #tpu.memory_space<vmem>>, vector<1x8x256xf32>
    %159 = vector.shape_cast %158 : vector<1x8x256xf32> to vector<8x256xf32>
    %160 = arith.mulf %153, %159 : vector<8x256xf32>
    %161 = arith.addf %152, %160 : vector<8x256xf32>
    %162 = vector.extract_strided_slice %38 {offsets = [0, 227], sizes = [8, 256], strides = [1, 1]} : vector<8x512xf32> to vector<8x256xf32>
    %c13 = arith.constant 13 : index
    %c0_81 = arith.constant 0 : index
    %c0_82 = arith.constant 0 : index
    %163 = vector.load %arg7[%c13, %c0_81, %c0_82] : memref<49x8x256xf32, #tpu.memory_space<vmem>>, vector<1x8x256xf32>
    %164 = vector.shape_cast %163 : vector<1x8x256xf32> to vector<8x256xf32>
    %165 = arith.mulf %162, %164 : vector<8x256xf32>
    %166 = arith.addf %157, %165 : vector<8x256xf32>
    %c13_83 = arith.constant 13 : index
    %c0_84 = arith.constant 0 : index
    %c0_85 = arith.constant 0 : index
    %167 = vector.load %arg8[%c13_83, %c0_84, %c0_85] : memref<49x8x256xf32, #tpu.memory_space<vmem>>, vector<1x8x256xf32>
    %168 = vector.shape_cast %167 : vector<1x8x256xf32> to vector<8x256xf32>
    %169 = arith.mulf %162, %168 : vector<8x256xf32>
    %170 = arith.addf %161, %169 : vector<8x256xf32>
    %171 = vector.extract_strided_slice %38 {offsets = [0, 237], sizes = [8, 256], strides = [1, 1]} : vector<8x512xf32> to vector<8x256xf32>
    %c14 = arith.constant 14 : index
    %c0_86 = arith.constant 0 : index
    %c0_87 = arith.constant 0 : index
    %172 = vector.load %arg7[%c14, %c0_86, %c0_87] : memref<49x8x256xf32, #tpu.memory_space<vmem>>, vector<1x8x256xf32>
    %173 = vector.shape_cast %172 : vector<1x8x256xf32> to vector<8x256xf32>
    %174 = arith.mulf %171, %173 : vector<8x256xf32>
    %175 = arith.addf %166, %174 : vector<8x256xf32>
    %c14_88 = arith.constant 14 : index
    %c0_89 = arith.constant 0 : index
    %c0_90 = arith.constant 0 : index
    %176 = vector.load %arg8[%c14_88, %c0_89, %c0_90] : memref<49x8x256xf32, #tpu.memory_space<vmem>>, vector<1x8x256xf32>
    %177 = vector.shape_cast %176 : vector<1x8x256xf32> to vector<8x256xf32>
    %178 = arith.mulf %171, %177 : vector<8x256xf32>
    %179 = arith.addf %170, %178 : vector<8x256xf32>
    %180 = vector.extract_strided_slice %38 {offsets = [0, 238], sizes = [8, 256], strides = [1, 1]} : vector<8x512xf32> to vector<8x256xf32>
    %c15 = arith.constant 15 : index
    %c0_91 = arith.constant 0 : index
    %c0_92 = arith.constant 0 : index
    %181 = vector.load %arg7[%c15, %c0_91, %c0_92] : memref<49x8x256xf32, #tpu.memory_space<vmem>>, vector<1x8x256xf32>
    %182 = vector.shape_cast %181 : vector<1x8x256xf32> to vector<8x256xf32>
    %183 = arith.mulf %180, %182 : vector<8x256xf32>
    %184 = arith.addf %175, %183 : vector<8x256xf32>
    %c15_93 = arith.constant 15 : index
    %c0_94 = arith.constant 0 : index
    %c0_95 = arith.constant 0 : index
    %185 = vector.load %arg8[%c15_93, %c0_94, %c0_95] : memref<49x8x256xf32, #tpu.memory_space<vmem>>, vector<1x8x256xf32>
    %186 = vector.shape_cast %185 : vector<1x8x256xf32> to vector<8x256xf32>
    %187 = arith.mulf %180, %186 : vector<8x256xf32>
    %188 = arith.addf %179, %187 : vector<8x256xf32>
    %189 = vector.extract_strided_slice %38 {offsets = [0, 239], sizes = [8, 256], strides = [1, 1]} : vector<8x512xf32> to vector<8x256xf32>
    %c16 = arith.constant 16 : index
    %c0_96 = arith.constant 0 : index
    %c0_97 = arith.constant 0 : index
    %190 = vector.load %arg7[%c16, %c0_96, %c0_97] : memref<49x8x256xf32, #tpu.memory_space<vmem>>, vector<1x8x256xf32>
    %191 = vector.shape_cast %190 : vector<1x8x256xf32> to vector<8x256xf32>
    %192 = arith.mulf %189, %191 : vector<8x256xf32>
    %193 = arith.addf %184, %192 : vector<8x256xf32>
    %c16_98 = arith.constant 16 : index
    %c0_99 = arith.constant 0 : index
    %c0_100 = arith.constant 0 : index
    %194 = vector.load %arg8[%c16_98, %c0_99, %c0_100] : memref<49x8x256xf32, #tpu.memory_space<vmem>>, vector<1x8x256xf32>
    %195 = vector.shape_cast %194 : vector<1x8x256xf32> to vector<8x256xf32>
    %196 = arith.mulf %189, %195 : vector<8x256xf32>
    %197 = arith.addf %188, %196 : vector<8x256xf32>
    %198 = vector.extract_strided_slice %38 {offsets = [0, 240], sizes = [8, 256], strides = [1, 1]} : vector<8x512xf32> to vector<8x256xf32>
    %c17 = arith.constant 17 : index
    %c0_101 = arith.constant 0 : index
    %c0_102 = arith.constant 0 : index
    %199 = vector.load %arg7[%c17, %c0_101, %c0_102] : memref<49x8x256xf32, #tpu.memory_space<vmem>>, vector<1x8x256xf32>
    %200 = vector.shape_cast %199 : vector<1x8x256xf32> to vector<8x256xf32>
    %201 = arith.mulf %198, %200 : vector<8x256xf32>
    %202 = arith.addf %193, %201 : vector<8x256xf32>
    %c17_103 = arith.constant 17 : index
    %c0_104 = arith.constant 0 : index
    %c0_105 = arith.constant 0 : index
    %203 = vector.load %arg8[%c17_103, %c0_104, %c0_105] : memref<49x8x256xf32, #tpu.memory_space<vmem>>, vector<1x8x256xf32>
    %204 = vector.shape_cast %203 : vector<1x8x256xf32> to vector<8x256xf32>
    %205 = arith.mulf %198, %204 : vector<8x256xf32>
    %206 = arith.addf %197, %205 : vector<8x256xf32>
    %207 = vector.extract_strided_slice %38 {offsets = [0, 241], sizes = [8, 256], strides = [1, 1]} : vector<8x512xf32> to vector<8x256xf32>
    %c18 = arith.constant 18 : index
    %c0_106 = arith.constant 0 : index
    %c0_107 = arith.constant 0 : index
    %208 = vector.load %arg7[%c18, %c0_106, %c0_107] : memref<49x8x256xf32, #tpu.memory_space<vmem>>, vector<1x8x256xf32>
    %209 = vector.shape_cast %208 : vector<1x8x256xf32> to vector<8x256xf32>
    %210 = arith.mulf %207, %209 : vector<8x256xf32>
    %211 = arith.addf %202, %210 : vector<8x256xf32>
    %c18_108 = arith.constant 18 : index
    %c0_109 = arith.constant 0 : index
    %c0_110 = arith.constant 0 : index
    %212 = vector.load %arg8[%c18_108, %c0_109, %c0_110] : memref<49x8x256xf32, #tpu.memory_space<vmem>>, vector<1x8x256xf32>
    %213 = vector.shape_cast %212 : vector<1x8x256xf32> to vector<8x256xf32>
    %214 = arith.mulf %207, %213 : vector<8x256xf32>
    %215 = arith.addf %206, %214 : vector<8x256xf32>
    %216 = vector.extract_strided_slice %38 {offsets = [0, 242], sizes = [8, 256], strides = [1, 1]} : vector<8x512xf32> to vector<8x256xf32>
    %c19 = arith.constant 19 : index
    %c0_111 = arith.constant 0 : index
    %c0_112 = arith.constant 0 : index
    %217 = vector.load %arg7[%c19, %c0_111, %c0_112] : memref<49x8x256xf32, #tpu.memory_space<vmem>>, vector<1x8x256xf32>
    %218 = vector.shape_cast %217 : vector<1x8x256xf32> to vector<8x256xf32>
    %219 = arith.mulf %216, %218 : vector<8x256xf32>
    %220 = arith.addf %211, %219 : vector<8x256xf32>
    %c19_113 = arith.constant 19 : index
    %c0_114 = arith.constant 0 : index
    %c0_115 = arith.constant 0 : index
    %221 = vector.load %arg8[%c19_113, %c0_114, %c0_115] : memref<49x8x256xf32, #tpu.memory_space<vmem>>, vector<1x8x256xf32>
    %222 = vector.shape_cast %221 : vector<1x8x256xf32> to vector<8x256xf32>
    %223 = arith.mulf %216, %222 : vector<8x256xf32>
    %224 = arith.addf %215, %223 : vector<8x256xf32>
    %225 = vector.extract_strided_slice %38 {offsets = [0, 243], sizes = [8, 256], strides = [1, 1]} : vector<8x512xf32> to vector<8x256xf32>
    %c20 = arith.constant 20 : index
    %c0_116 = arith.constant 0 : index
    %c0_117 = arith.constant 0 : index
    %226 = vector.load %arg7[%c20, %c0_116, %c0_117] : memref<49x8x256xf32, #tpu.memory_space<vmem>>, vector<1x8x256xf32>
    %227 = vector.shape_cast %226 : vector<1x8x256xf32> to vector<8x256xf32>
    %228 = arith.mulf %225, %227 : vector<8x256xf32>
    %229 = arith.addf %220, %228 : vector<8x256xf32>
    %c20_118 = arith.constant 20 : index
    %c0_119 = arith.constant 0 : index
    %c0_120 = arith.constant 0 : index
    %230 = vector.load %arg8[%c20_118, %c0_119, %c0_120] : memref<49x8x256xf32, #tpu.memory_space<vmem>>, vector<1x8x256xf32>
    %231 = vector.shape_cast %230 : vector<1x8x256xf32> to vector<8x256xf32>
    %232 = arith.mulf %225, %231 : vector<8x256xf32>
    %233 = arith.addf %224, %232 : vector<8x256xf32>
    %234 = vector.extract_strided_slice %38 {offsets = [0, 253], sizes = [8, 256], strides = [1, 1]} : vector<8x512xf32> to vector<8x256xf32>
    %c21 = arith.constant 21 : index
    %c0_121 = arith.constant 0 : index
    %c0_122 = arith.constant 0 : index
    %235 = vector.load %arg7[%c21, %c0_121, %c0_122] : memref<49x8x256xf32, #tpu.memory_space<vmem>>, vector<1x8x256xf32>
    %236 = vector.shape_cast %235 : vector<1x8x256xf32> to vector<8x256xf32>
    %237 = arith.mulf %234, %236 : vector<8x256xf32>
    %238 = arith.addf %229, %237 : vector<8x256xf32>
    %c21_123 = arith.constant 21 : index
    %c0_124 = arith.constant 0 : index
    %c0_125 = arith.constant 0 : index
    %239 = vector.load %arg8[%c21_123, %c0_124, %c0_125] : memref<49x8x256xf32, #tpu.memory_space<vmem>>, vector<1x8x256xf32>
    %240 = vector.shape_cast %239 : vector<1x8x256xf32> to vector<8x256xf32>
    %241 = arith.mulf %234, %240 : vector<8x256xf32>
    %242 = arith.addf %233, %241 : vector<8x256xf32>
    %243 = vector.extract_strided_slice %38 {offsets = [0, 254], sizes = [8, 256], strides = [1, 1]} : vector<8x512xf32> to vector<8x256xf32>
    %c22 = arith.constant 22 : index
    %c0_126 = arith.constant 0 : index
    %c0_127 = arith.constant 0 : index
    %244 = vector.load %arg7[%c22, %c0_126, %c0_127] : memref<49x8x256xf32, #tpu.memory_space<vmem>>, vector<1x8x256xf32>
    %245 = vector.shape_cast %244 : vector<1x8x256xf32> to vector<8x256xf32>
    %246 = arith.mulf %243, %245 : vector<8x256xf32>
    %247 = arith.addf %238, %246 : vector<8x256xf32>
    %c22_128 = arith.constant 22 : index
    %c0_129 = arith.constant 0 : index
    %c0_130 = arith.constant 0 : index
    %248 = vector.load %arg8[%c22_128, %c0_129, %c0_130] : memref<49x8x256xf32, #tpu.memory_space<vmem>>, vector<1x8x256xf32>
    %249 = vector.shape_cast %248 : vector<1x8x256xf32> to vector<8x256xf32>
    %250 = arith.mulf %243, %249 : vector<8x256xf32>
    %251 = arith.addf %242, %250 : vector<8x256xf32>
    %252 = vector.extract_strided_slice %38 {offsets = [0, 255], sizes = [8, 256], strides = [1, 1]} : vector<8x512xf32> to vector<8x256xf32>
    %c23 = arith.constant 23 : index
    %c0_131 = arith.constant 0 : index
    %c0_132 = arith.constant 0 : index
    %253 = vector.load %arg7[%c23, %c0_131, %c0_132] : memref<49x8x256xf32, #tpu.memory_space<vmem>>, vector<1x8x256xf32>
    %254 = vector.shape_cast %253 : vector<1x8x256xf32> to vector<8x256xf32>
    %255 = arith.mulf %252, %254 : vector<8x256xf32>
    %256 = arith.addf %247, %255 : vector<8x256xf32>
    %c23_133 = arith.constant 23 : index
    %c0_134 = arith.constant 0 : index
    %c0_135 = arith.constant 0 : index
    %257 = vector.load %arg8[%c23_133, %c0_134, %c0_135] : memref<49x8x256xf32, #tpu.memory_space<vmem>>, vector<1x8x256xf32>
    %258 = vector.shape_cast %257 : vector<1x8x256xf32> to vector<8x256xf32>
    %259 = arith.mulf %252, %258 : vector<8x256xf32>
    %260 = arith.addf %251, %259 : vector<8x256xf32>
    %c24 = arith.constant 24 : index
    %c0_136 = arith.constant 0 : index
    %c0_137 = arith.constant 0 : index
    %261 = vector.load %arg7[%c24, %c0_136, %c0_137] : memref<49x8x256xf32, #tpu.memory_space<vmem>>, vector<1x8x256xf32>
    %262 = vector.shape_cast %261 : vector<1x8x256xf32> to vector<8x256xf32>
    %263 = arith.mulf %36, %262 : vector<8x256xf32>
    %264 = arith.addf %256, %263 : vector<8x256xf32>
    %c24_138 = arith.constant 24 : index
    %c0_139 = arith.constant 0 : index
    %c0_140 = arith.constant 0 : index
    %265 = vector.load %arg8[%c24_138, %c0_139, %c0_140] : memref<49x8x256xf32, #tpu.memory_space<vmem>>, vector<1x8x256xf32>
    %266 = vector.shape_cast %265 : vector<1x8x256xf32> to vector<8x256xf32>
    %267 = arith.mulf %36, %266 : vector<8x256xf32>
    %268 = arith.addf %260, %267 : vector<8x256xf32>
    %269 = vector.extract_strided_slice %38 {offsets = [0, 1], sizes = [8, 256], strides = [1, 1]} : vector<8x512xf32> to vector<8x256xf32>
    %c25 = arith.constant 25 : index
    %c0_141 = arith.constant 0 : index
    %c0_142 = arith.constant 0 : index
    %270 = vector.load %arg7[%c25, %c0_141, %c0_142] : memref<49x8x256xf32, #tpu.memory_space<vmem>>, vector<1x8x256xf32>
    %271 = vector.shape_cast %270 : vector<1x8x256xf32> to vector<8x256xf32>
    %272 = arith.mulf %269, %271 : vector<8x256xf32>
    %273 = arith.addf %264, %272 : vector<8x256xf32>
    %c25_143 = arith.constant 25 : index
    %c0_144 = arith.constant 0 : index
    %c0_145 = arith.constant 0 : index
    %274 = vector.load %arg8[%c25_143, %c0_144, %c0_145] : memref<49x8x256xf32, #tpu.memory_space<vmem>>, vector<1x8x256xf32>
    %275 = vector.shape_cast %274 : vector<1x8x256xf32> to vector<8x256xf32>
    %276 = arith.mulf %269, %275 : vector<8x256xf32>
    %277 = arith.addf %268, %276 : vector<8x256xf32>
    %278 = vector.extract_strided_slice %38 {offsets = [0, 2], sizes = [8, 256], strides = [1, 1]} : vector<8x512xf32> to vector<8x256xf32>
    %c26 = arith.constant 26 : index
    %c0_146 = arith.constant 0 : index
    %c0_147 = arith.constant 0 : index
    %279 = vector.load %arg7[%c26, %c0_146, %c0_147] : memref<49x8x256xf32, #tpu.memory_space<vmem>>, vector<1x8x256xf32>
    %280 = vector.shape_cast %279 : vector<1x8x256xf32> to vector<8x256xf32>
    %281 = arith.mulf %278, %280 : vector<8x256xf32>
    %282 = arith.addf %273, %281 : vector<8x256xf32>
    %c26_148 = arith.constant 26 : index
    %c0_149 = arith.constant 0 : index
    %c0_150 = arith.constant 0 : index
    %283 = vector.load %arg8[%c26_148, %c0_149, %c0_150] : memref<49x8x256xf32, #tpu.memory_space<vmem>>, vector<1x8x256xf32>
    %284 = vector.shape_cast %283 : vector<1x8x256xf32> to vector<8x256xf32>
    %285 = arith.mulf %278, %284 : vector<8x256xf32>
    %286 = arith.addf %277, %285 : vector<8x256xf32>
    %287 = vector.extract_strided_slice %38 {offsets = [0, 3], sizes = [8, 256], strides = [1, 1]} : vector<8x512xf32> to vector<8x256xf32>
    %c27 = arith.constant 27 : index
    %c0_151 = arith.constant 0 : index
    %c0_152 = arith.constant 0 : index
    %288 = vector.load %arg7[%c27, %c0_151, %c0_152] : memref<49x8x256xf32, #tpu.memory_space<vmem>>, vector<1x8x256xf32>
    %289 = vector.shape_cast %288 : vector<1x8x256xf32> to vector<8x256xf32>
    %290 = arith.mulf %287, %289 : vector<8x256xf32>
    %291 = arith.addf %282, %290 : vector<8x256xf32>
    %c27_153 = arith.constant 27 : index
    %c0_154 = arith.constant 0 : index
    %c0_155 = arith.constant 0 : index
    %292 = vector.load %arg8[%c27_153, %c0_154, %c0_155] : memref<49x8x256xf32, #tpu.memory_space<vmem>>, vector<1x8x256xf32>
    %293 = vector.shape_cast %292 : vector<1x8x256xf32> to vector<8x256xf32>
    %294 = arith.mulf %287, %293 : vector<8x256xf32>
    %295 = arith.addf %286, %294 : vector<8x256xf32>
    %296 = vector.extract_strided_slice %38 {offsets = [0, 13], sizes = [8, 256], strides = [1, 1]} : vector<8x512xf32> to vector<8x256xf32>
    %c28 = arith.constant 28 : index
    %c0_156 = arith.constant 0 : index
    %c0_157 = arith.constant 0 : index
    %297 = vector.load %arg7[%c28, %c0_156, %c0_157] : memref<49x8x256xf32, #tpu.memory_space<vmem>>, vector<1x8x256xf32>
    %298 = vector.shape_cast %297 : vector<1x8x256xf32> to vector<8x256xf32>
    %299 = arith.mulf %296, %298 : vector<8x256xf32>
    %300 = arith.addf %291, %299 : vector<8x256xf32>
    %c28_158 = arith.constant 28 : index
    %c0_159 = arith.constant 0 : index
    %c0_160 = arith.constant 0 : index
    %301 = vector.load %arg8[%c28_158, %c0_159, %c0_160] : memref<49x8x256xf32, #tpu.memory_space<vmem>>, vector<1x8x256xf32>
    %302 = vector.shape_cast %301 : vector<1x8x256xf32> to vector<8x256xf32>
    %303 = arith.mulf %296, %302 : vector<8x256xf32>
    %304 = arith.addf %295, %303 : vector<8x256xf32>
    %305 = vector.extract_strided_slice %38 {offsets = [0, 14], sizes = [8, 256], strides = [1, 1]} : vector<8x512xf32> to vector<8x256xf32>
    %c29 = arith.constant 29 : index
    %c0_161 = arith.constant 0 : index
    %c0_162 = arith.constant 0 : index
    %306 = vector.load %arg7[%c29, %c0_161, %c0_162] : memref<49x8x256xf32, #tpu.memory_space<vmem>>, vector<1x8x256xf32>
    %307 = vector.shape_cast %306 : vector<1x8x256xf32> to vector<8x256xf32>
    %308 = arith.mulf %305, %307 : vector<8x256xf32>
    %309 = arith.addf %300, %308 : vector<8x256xf32>
    %c29_163 = arith.constant 29 : index
    %c0_164 = arith.constant 0 : index
    %c0_165 = arith.constant 0 : index
    %310 = vector.load %arg8[%c29_163, %c0_164, %c0_165] : memref<49x8x256xf32, #tpu.memory_space<vmem>>, vector<1x8x256xf32>
    %311 = vector.shape_cast %310 : vector<1x8x256xf32> to vector<8x256xf32>
    %312 = arith.mulf %305, %311 : vector<8x256xf32>
    %313 = arith.addf %304, %312 : vector<8x256xf32>
    %314 = vector.extract_strided_slice %38 {offsets = [0, 15], sizes = [8, 256], strides = [1, 1]} : vector<8x512xf32> to vector<8x256xf32>
    %c30 = arith.constant 30 : index
    %c0_166 = arith.constant 0 : index
    %c0_167 = arith.constant 0 : index
    %315 = vector.load %arg7[%c30, %c0_166, %c0_167] : memref<49x8x256xf32, #tpu.memory_space<vmem>>, vector<1x8x256xf32>
    %316 = vector.shape_cast %315 : vector<1x8x256xf32> to vector<8x256xf32>
    %317 = arith.mulf %314, %316 : vector<8x256xf32>
    %318 = arith.addf %309, %317 : vector<8x256xf32>
    %c30_168 = arith.constant 30 : index
    %c0_169 = arith.constant 0 : index
    %c0_170 = arith.constant 0 : index
    %319 = vector.load %arg8[%c30_168, %c0_169, %c0_170] : memref<49x8x256xf32, #tpu.memory_space<vmem>>, vector<1x8x256xf32>
    %320 = vector.shape_cast %319 : vector<1x8x256xf32> to vector<8x256xf32>
    %321 = arith.mulf %314, %320 : vector<8x256xf32>
    %322 = arith.addf %313, %321 : vector<8x256xf32>
    %323 = vector.extract_strided_slice %38 {offsets = [0, 16], sizes = [8, 256], strides = [1, 1]} : vector<8x512xf32> to vector<8x256xf32>
    %c31 = arith.constant 31 : index
    %c0_171 = arith.constant 0 : index
    %c0_172 = arith.constant 0 : index
    %324 = vector.load %arg7[%c31, %c0_171, %c0_172] : memref<49x8x256xf32, #tpu.memory_space<vmem>>, vector<1x8x256xf32>
    %325 = vector.shape_cast %324 : vector<1x8x256xf32> to vector<8x256xf32>
    %326 = arith.mulf %323, %325 : vector<8x256xf32>
    %327 = arith.addf %318, %326 : vector<8x256xf32>
    %c31_173 = arith.constant 31 : index
    %c0_174 = arith.constant 0 : index
    %c0_175 = arith.constant 0 : index
    %328 = vector.load %arg8[%c31_173, %c0_174, %c0_175] : memref<49x8x256xf32, #tpu.memory_space<vmem>>, vector<1x8x256xf32>
    %329 = vector.shape_cast %328 : vector<1x8x256xf32> to vector<8x256xf32>
    %330 = arith.mulf %323, %329 : vector<8x256xf32>
    %331 = arith.addf %322, %330 : vector<8x256xf32>
    %332 = vector.extract_strided_slice %38 {offsets = [0, 17], sizes = [8, 256], strides = [1, 1]} : vector<8x512xf32> to vector<8x256xf32>
    %c32 = arith.constant 32 : index
    %c0_176 = arith.constant 0 : index
    %c0_177 = arith.constant 0 : index
    %333 = vector.load %arg7[%c32, %c0_176, %c0_177] : memref<49x8x256xf32, #tpu.memory_space<vmem>>, vector<1x8x256xf32>
    %334 = vector.shape_cast %333 : vector<1x8x256xf32> to vector<8x256xf32>
    %335 = arith.mulf %332, %334 : vector<8x256xf32>
    %336 = arith.addf %327, %335 : vector<8x256xf32>
    %c32_178 = arith.constant 32 : index
    %c0_179 = arith.constant 0 : index
    %c0_180 = arith.constant 0 : index
    %337 = vector.load %arg8[%c32_178, %c0_179, %c0_180] : memref<49x8x256xf32, #tpu.memory_space<vmem>>, vector<1x8x256xf32>
    %338 = vector.shape_cast %337 : vector<1x8x256xf32> to vector<8x256xf32>
    %339 = arith.mulf %332, %338 : vector<8x256xf32>
    %340 = arith.addf %331, %339 : vector<8x256xf32>
    %341 = vector.extract_strided_slice %38 {offsets = [0, 18], sizes = [8, 256], strides = [1, 1]} : vector<8x512xf32> to vector<8x256xf32>
    %c33 = arith.constant 33 : index
    %c0_181 = arith.constant 0 : index
    %c0_182 = arith.constant 0 : index
    %342 = vector.load %arg7[%c33, %c0_181, %c0_182] : memref<49x8x256xf32, #tpu.memory_space<vmem>>, vector<1x8x256xf32>
    %343 = vector.shape_cast %342 : vector<1x8x256xf32> to vector<8x256xf32>
    %344 = arith.mulf %341, %343 : vector<8x256xf32>
    %345 = arith.addf %336, %344 : vector<8x256xf32>
    %c33_183 = arith.constant 33 : index
    %c0_184 = arith.constant 0 : index
    %c0_185 = arith.constant 0 : index
    %346 = vector.load %arg8[%c33_183, %c0_184, %c0_185] : memref<49x8x256xf32, #tpu.memory_space<vmem>>, vector<1x8x256xf32>
    %347 = vector.shape_cast %346 : vector<1x8x256xf32> to vector<8x256xf32>
    %348 = arith.mulf %341, %347 : vector<8x256xf32>
    %349 = arith.addf %340, %348 : vector<8x256xf32>
    %350 = vector.extract_strided_slice %38 {offsets = [0, 19], sizes = [8, 256], strides = [1, 1]} : vector<8x512xf32> to vector<8x256xf32>
    %c34 = arith.constant 34 : index
    %c0_186 = arith.constant 0 : index
    %c0_187 = arith.constant 0 : index
    %351 = vector.load %arg7[%c34, %c0_186, %c0_187] : memref<49x8x256xf32, #tpu.memory_space<vmem>>, vector<1x8x256xf32>
    %352 = vector.shape_cast %351 : vector<1x8x256xf32> to vector<8x256xf32>
    %353 = arith.mulf %350, %352 : vector<8x256xf32>
    %354 = arith.addf %345, %353 : vector<8x256xf32>
    %c34_188 = arith.constant 34 : index
    %c0_189 = arith.constant 0 : index
    %c0_190 = arith.constant 0 : index
    %355 = vector.load %arg8[%c34_188, %c0_189, %c0_190] : memref<49x8x256xf32, #tpu.memory_space<vmem>>, vector<1x8x256xf32>
    %356 = vector.shape_cast %355 : vector<1x8x256xf32> to vector<8x256xf32>
    %357 = arith.mulf %350, %356 : vector<8x256xf32>
    %358 = arith.addf %349, %357 : vector<8x256xf32>
    %359 = vector.extract_strided_slice %38 {offsets = [0, 29], sizes = [8, 256], strides = [1, 1]} : vector<8x512xf32> to vector<8x256xf32>
    %c35 = arith.constant 35 : index
    %c0_191 = arith.constant 0 : index
    %c0_192 = arith.constant 0 : index
    %360 = vector.load %arg7[%c35, %c0_191, %c0_192] : memref<49x8x256xf32, #tpu.memory_space<vmem>>, vector<1x8x256xf32>
    %361 = vector.shape_cast %360 : vector<1x8x256xf32> to vector<8x256xf32>
    %362 = arith.mulf %359, %361 : vector<8x256xf32>
    %363 = arith.addf %354, %362 : vector<8x256xf32>
    %c35_193 = arith.constant 35 : index
    %c0_194 = arith.constant 0 : index
    %c0_195 = arith.constant 0 : index
    %364 = vector.load %arg8[%c35_193, %c0_194, %c0_195] : memref<49x8x256xf32, #tpu.memory_space<vmem>>, vector<1x8x256xf32>
    %365 = vector.shape_cast %364 : vector<1x8x256xf32> to vector<8x256xf32>
    %366 = arith.mulf %359, %365 : vector<8x256xf32>
    %367 = arith.addf %358, %366 : vector<8x256xf32>
    %368 = vector.extract_strided_slice %38 {offsets = [0, 30], sizes = [8, 256], strides = [1, 1]} : vector<8x512xf32> to vector<8x256xf32>
    %c36 = arith.constant 36 : index
    %c0_196 = arith.constant 0 : index
    %c0_197 = arith.constant 0 : index
    %369 = vector.load %arg7[%c36, %c0_196, %c0_197] : memref<49x8x256xf32, #tpu.memory_space<vmem>>, vector<1x8x256xf32>
    %370 = vector.shape_cast %369 : vector<1x8x256xf32> to vector<8x256xf32>
    %371 = arith.mulf %368, %370 : vector<8x256xf32>
    %372 = arith.addf %363, %371 : vector<8x256xf32>
    %c36_198 = arith.constant 36 : index
    %c0_199 = arith.constant 0 : index
    %c0_200 = arith.constant 0 : index
    %373 = vector.load %arg8[%c36_198, %c0_199, %c0_200] : memref<49x8x256xf32, #tpu.memory_space<vmem>>, vector<1x8x256xf32>
    %374 = vector.shape_cast %373 : vector<1x8x256xf32> to vector<8x256xf32>
    %375 = arith.mulf %368, %374 : vector<8x256xf32>
    %376 = arith.addf %367, %375 : vector<8x256xf32>
    %377 = vector.extract_strided_slice %38 {offsets = [0, 31], sizes = [8, 256], strides = [1, 1]} : vector<8x512xf32> to vector<8x256xf32>
    %c37 = arith.constant 37 : index
    %c0_201 = arith.constant 0 : index
    %c0_202 = arith.constant 0 : index
    %378 = vector.load %arg7[%c37, %c0_201, %c0_202] : memref<49x8x256xf32, #tpu.memory_space<vmem>>, vector<1x8x256xf32>
    %379 = vector.shape_cast %378 : vector<1x8x256xf32> to vector<8x256xf32>
    %380 = arith.mulf %377, %379 : vector<8x256xf32>
    %381 = arith.addf %372, %380 : vector<8x256xf32>
    %c37_203 = arith.constant 37 : index
    %c0_204 = arith.constant 0 : index
    %c0_205 = arith.constant 0 : index
    %382 = vector.load %arg8[%c37_203, %c0_204, %c0_205] : memref<49x8x256xf32, #tpu.memory_space<vmem>>, vector<1x8x256xf32>
    %383 = vector.shape_cast %382 : vector<1x8x256xf32> to vector<8x256xf32>
    %384 = arith.mulf %377, %383 : vector<8x256xf32>
    %385 = arith.addf %376, %384 : vector<8x256xf32>
    %386 = vector.extract_strided_slice %38 {offsets = [0, 32], sizes = [8, 256], strides = [1, 1]} : vector<8x512xf32> to vector<8x256xf32>
    %c38 = arith.constant 38 : index
    %c0_206 = arith.constant 0 : index
    %c0_207 = arith.constant 0 : index
    %387 = vector.load %arg7[%c38, %c0_206, %c0_207] : memref<49x8x256xf32, #tpu.memory_space<vmem>>, vector<1x8x256xf32>
    %388 = vector.shape_cast %387 : vector<1x8x256xf32> to vector<8x256xf32>
    %389 = arith.mulf %386, %388 : vector<8x256xf32>
    %390 = arith.addf %381, %389 : vector<8x256xf32>
    %c38_208 = arith.constant 38 : index
    %c0_209 = arith.constant 0 : index
    %c0_210 = arith.constant 0 : index
    %391 = vector.load %arg8[%c38_208, %c0_209, %c0_210] : memref<49x8x256xf32, #tpu.memory_space<vmem>>, vector<1x8x256xf32>
    %392 = vector.shape_cast %391 : vector<1x8x256xf32> to vector<8x256xf32>
    %393 = arith.mulf %386, %392 : vector<8x256xf32>
    %394 = arith.addf %385, %393 : vector<8x256xf32>
    %395 = vector.extract_strided_slice %38 {offsets = [0, 33], sizes = [8, 256], strides = [1, 1]} : vector<8x512xf32> to vector<8x256xf32>
    %c39 = arith.constant 39 : index
    %c0_211 = arith.constant 0 : index
    %c0_212 = arith.constant 0 : index
    %396 = vector.load %arg7[%c39, %c0_211, %c0_212] : memref<49x8x256xf32, #tpu.memory_space<vmem>>, vector<1x8x256xf32>
    %397 = vector.shape_cast %396 : vector<1x8x256xf32> to vector<8x256xf32>
    %398 = arith.mulf %395, %397 : vector<8x256xf32>
    %399 = arith.addf %390, %398 : vector<8x256xf32>
    %c39_213 = arith.constant 39 : index
    %c0_214 = arith.constant 0 : index
    %c0_215 = arith.constant 0 : index
    %400 = vector.load %arg8[%c39_213, %c0_214, %c0_215] : memref<49x8x256xf32, #tpu.memory_space<vmem>>, vector<1x8x256xf32>
    %401 = vector.shape_cast %400 : vector<1x8x256xf32> to vector<8x256xf32>
    %402 = arith.mulf %395, %401 : vector<8x256xf32>
    %403 = arith.addf %394, %402 : vector<8x256xf32>
    %404 = vector.extract_strided_slice %38 {offsets = [0, 34], sizes = [8, 256], strides = [1, 1]} : vector<8x512xf32> to vector<8x256xf32>
    %c40 = arith.constant 40 : index
    %c0_216 = arith.constant 0 : index
    %c0_217 = arith.constant 0 : index
    %405 = vector.load %arg7[%c40, %c0_216, %c0_217] : memref<49x8x256xf32, #tpu.memory_space<vmem>>, vector<1x8x256xf32>
    %406 = vector.shape_cast %405 : vector<1x8x256xf32> to vector<8x256xf32>
    %407 = arith.mulf %404, %406 : vector<8x256xf32>
    %408 = arith.addf %399, %407 : vector<8x256xf32>
    %c40_218 = arith.constant 40 : index
    %c0_219 = arith.constant 0 : index
    %c0_220 = arith.constant 0 : index
    %409 = vector.load %arg8[%c40_218, %c0_219, %c0_220] : memref<49x8x256xf32, #tpu.memory_space<vmem>>, vector<1x8x256xf32>
    %410 = vector.shape_cast %409 : vector<1x8x256xf32> to vector<8x256xf32>
    %411 = arith.mulf %404, %410 : vector<8x256xf32>
    %412 = arith.addf %403, %411 : vector<8x256xf32>
    %413 = vector.extract_strided_slice %38 {offsets = [0, 35], sizes = [8, 256], strides = [1, 1]} : vector<8x512xf32> to vector<8x256xf32>
    %c41 = arith.constant 41 : index
    %c0_221 = arith.constant 0 : index
    %c0_222 = arith.constant 0 : index
    %414 = vector.load %arg7[%c41, %c0_221, %c0_222] : memref<49x8x256xf32, #tpu.memory_space<vmem>>, vector<1x8x256xf32>
    %415 = vector.shape_cast %414 : vector<1x8x256xf32> to vector<8x256xf32>
    %416 = arith.mulf %413, %415 : vector<8x256xf32>
    %417 = arith.addf %408, %416 : vector<8x256xf32>
    %c41_223 = arith.constant 41 : index
    %c0_224 = arith.constant 0 : index
    %c0_225 = arith.constant 0 : index
    %418 = vector.load %arg8[%c41_223, %c0_224, %c0_225] : memref<49x8x256xf32, #tpu.memory_space<vmem>>, vector<1x8x256xf32>
    %419 = vector.shape_cast %418 : vector<1x8x256xf32> to vector<8x256xf32>
    %420 = arith.mulf %413, %419 : vector<8x256xf32>
    %421 = arith.addf %412, %420 : vector<8x256xf32>
    %422 = vector.extract_strided_slice %38 {offsets = [0, 45], sizes = [8, 256], strides = [1, 1]} : vector<8x512xf32> to vector<8x256xf32>
    %c42 = arith.constant 42 : index
    %c0_226 = arith.constant 0 : index
    %c0_227 = arith.constant 0 : index
    %423 = vector.load %arg7[%c42, %c0_226, %c0_227] : memref<49x8x256xf32, #tpu.memory_space<vmem>>, vector<1x8x256xf32>
    %424 = vector.shape_cast %423 : vector<1x8x256xf32> to vector<8x256xf32>
    %425 = arith.mulf %422, %424 : vector<8x256xf32>
    %426 = arith.addf %417, %425 : vector<8x256xf32>
    %c42_228 = arith.constant 42 : index
    %c0_229 = arith.constant 0 : index
    %c0_230 = arith.constant 0 : index
    %427 = vector.load %arg8[%c42_228, %c0_229, %c0_230] : memref<49x8x256xf32, #tpu.memory_space<vmem>>, vector<1x8x256xf32>
    %428 = vector.shape_cast %427 : vector<1x8x256xf32> to vector<8x256xf32>
    %429 = arith.mulf %422, %428 : vector<8x256xf32>
    %430 = arith.addf %421, %429 : vector<8x256xf32>
    %431 = vector.extract_strided_slice %38 {offsets = [0, 46], sizes = [8, 256], strides = [1, 1]} : vector<8x512xf32> to vector<8x256xf32>
    %c43 = arith.constant 43 : index
    %c0_231 = arith.constant 0 : index
    %c0_232 = arith.constant 0 : index
    %432 = vector.load %arg7[%c43, %c0_231, %c0_232] : memref<49x8x256xf32, #tpu.memory_space<vmem>>, vector<1x8x256xf32>
    %433 = vector.shape_cast %432 : vector<1x8x256xf32> to vector<8x256xf32>
    %434 = arith.mulf %431, %433 : vector<8x256xf32>
    %435 = arith.addf %426, %434 : vector<8x256xf32>
    %c43_233 = arith.constant 43 : index
    %c0_234 = arith.constant 0 : index
    %c0_235 = arith.constant 0 : index
    %436 = vector.load %arg8[%c43_233, %c0_234, %c0_235] : memref<49x8x256xf32, #tpu.memory_space<vmem>>, vector<1x8x256xf32>
    %437 = vector.shape_cast %436 : vector<1x8x256xf32> to vector<8x256xf32>
    %438 = arith.mulf %431, %437 : vector<8x256xf32>
    %439 = arith.addf %430, %438 : vector<8x256xf32>
    %440 = vector.extract_strided_slice %38 {offsets = [0, 47], sizes = [8, 256], strides = [1, 1]} : vector<8x512xf32> to vector<8x256xf32>
    %c44 = arith.constant 44 : index
    %c0_236 = arith.constant 0 : index
    %c0_237 = arith.constant 0 : index
    %441 = vector.load %arg7[%c44, %c0_236, %c0_237] : memref<49x8x256xf32, #tpu.memory_space<vmem>>, vector<1x8x256xf32>
    %442 = vector.shape_cast %441 : vector<1x8x256xf32> to vector<8x256xf32>
    %443 = arith.mulf %440, %442 : vector<8x256xf32>
    %444 = arith.addf %435, %443 : vector<8x256xf32>
    %c44_238 = arith.constant 44 : index
    %c0_239 = arith.constant 0 : index
    %c0_240 = arith.constant 0 : index
    %445 = vector.load %arg8[%c44_238, %c0_239, %c0_240] : memref<49x8x256xf32, #tpu.memory_space<vmem>>, vector<1x8x256xf32>
    %446 = vector.shape_cast %445 : vector<1x8x256xf32> to vector<8x256xf32>
    %447 = arith.mulf %440, %446 : vector<8x256xf32>
    %448 = arith.addf %439, %447 : vector<8x256xf32>
    %449 = vector.extract_strided_slice %38 {offsets = [0, 48], sizes = [8, 256], strides = [1, 1]} : vector<8x512xf32> to vector<8x256xf32>
    %c45 = arith.constant 45 : index
    %c0_241 = arith.constant 0 : index
    %c0_242 = arith.constant 0 : index
    %450 = vector.load %arg7[%c45, %c0_241, %c0_242] : memref<49x8x256xf32, #tpu.memory_space<vmem>>, vector<1x8x256xf32>
    %451 = vector.shape_cast %450 : vector<1x8x256xf32> to vector<8x256xf32>
    %452 = arith.mulf %449, %451 : vector<8x256xf32>
    %453 = arith.addf %444, %452 : vector<8x256xf32>
    %c45_243 = arith.constant 45 : index
    %c0_244 = arith.constant 0 : index
    %c0_245 = arith.constant 0 : index
    %454 = vector.load %arg8[%c45_243, %c0_244, %c0_245] : memref<49x8x256xf32, #tpu.memory_space<vmem>>, vector<1x8x256xf32>
    %455 = vector.shape_cast %454 : vector<1x8x256xf32> to vector<8x256xf32>
    %456 = arith.mulf %449, %455 : vector<8x256xf32>
    %457 = arith.addf %448, %456 : vector<8x256xf32>
    %458 = vector.extract_strided_slice %38 {offsets = [0, 49], sizes = [8, 256], strides = [1, 1]} : vector<8x512xf32> to vector<8x256xf32>
    %c46 = arith.constant 46 : index
    %c0_246 = arith.constant 0 : index
    %c0_247 = arith.constant 0 : index
    %459 = vector.load %arg7[%c46, %c0_246, %c0_247] : memref<49x8x256xf32, #tpu.memory_space<vmem>>, vector<1x8x256xf32>
    %460 = vector.shape_cast %459 : vector<1x8x256xf32> to vector<8x256xf32>
    %461 = arith.mulf %458, %460 : vector<8x256xf32>
    %462 = arith.addf %453, %461 : vector<8x256xf32>
    %c46_248 = arith.constant 46 : index
    %c0_249 = arith.constant 0 : index
    %c0_250 = arith.constant 0 : index
    %463 = vector.load %arg8[%c46_248, %c0_249, %c0_250] : memref<49x8x256xf32, #tpu.memory_space<vmem>>, vector<1x8x256xf32>
    %464 = vector.shape_cast %463 : vector<1x8x256xf32> to vector<8x256xf32>
    %465 = arith.mulf %458, %464 : vector<8x256xf32>
    %466 = arith.addf %457, %465 : vector<8x256xf32>
    %467 = vector.extract_strided_slice %38 {offsets = [0, 50], sizes = [8, 256], strides = [1, 1]} : vector<8x512xf32> to vector<8x256xf32>
    %c47 = arith.constant 47 : index
    %c0_251 = arith.constant 0 : index
    %c0_252 = arith.constant 0 : index
    %468 = vector.load %arg7[%c47, %c0_251, %c0_252] : memref<49x8x256xf32, #tpu.memory_space<vmem>>, vector<1x8x256xf32>
    %469 = vector.shape_cast %468 : vector<1x8x256xf32> to vector<8x256xf32>
    %470 = arith.mulf %467, %469 : vector<8x256xf32>
    %471 = arith.addf %462, %470 : vector<8x256xf32>
    %c47_253 = arith.constant 47 : index
    %c0_254 = arith.constant 0 : index
    %c0_255 = arith.constant 0 : index
    %472 = vector.load %arg8[%c47_253, %c0_254, %c0_255] : memref<49x8x256xf32, #tpu.memory_space<vmem>>, vector<1x8x256xf32>
    %473 = vector.shape_cast %472 : vector<1x8x256xf32> to vector<8x256xf32>
    %474 = arith.mulf %467, %473 : vector<8x256xf32>
    %475 = arith.addf %466, %474 : vector<8x256xf32>
    %476 = vector.extract_strided_slice %38 {offsets = [0, 51], sizes = [8, 256], strides = [1, 1]} : vector<8x512xf32> to vector<8x256xf32>
    %c48 = arith.constant 48 : index
    %c0_256 = arith.constant 0 : index
    %c0_257 = arith.constant 0 : index
    %477 = vector.load %arg7[%c48, %c0_256, %c0_257] : memref<49x8x256xf32, #tpu.memory_space<vmem>>, vector<1x8x256xf32>
    %478 = vector.shape_cast %477 : vector<1x8x256xf32> to vector<8x256xf32>
    %479 = arith.mulf %476, %478 : vector<8x256xf32>
    %480 = arith.addf %471, %479 : vector<8x256xf32>
    %c48_258 = arith.constant 48 : index
    %c0_259 = arith.constant 0 : index
    %c0_260 = arith.constant 0 : index
    %481 = vector.load %arg8[%c48_258, %c0_259, %c0_260] : memref<49x8x256xf32, #tpu.memory_space<vmem>>, vector<1x8x256xf32>
    %482 = vector.shape_cast %481 : vector<1x8x256xf32> to vector<8x256xf32>
    %483 = arith.mulf %476, %482 : vector<8x256xf32>
    %484 = arith.addf %475, %483 : vector<8x256xf32>
    %485 = tpu.concatenate %480, %480 in 1 : vector<8x256xf32>, vector<8x256xf32> -> vector<8x512xf32>
    %cst_261 = arith.constant 0.000000e+00 : f32
    %486 = vector.broadcast %cst_261 : f32 to vector<8x256xf32>
    %487 = vector.broadcast %7 : vector<8x1xf32> to vector<8x256xf32>
    %488 = arith.addf %486, %487 : vector<8x256xf32>
    %489 = vector.extract_strided_slice %485 {offsets = [0, 52], sizes = [8, 256], strides = [1, 1]} : vector<8x512xf32> to vector<8x256xf32>
    %c0_262 = arith.constant 0 : index
    %c0_263 = arith.constant 0 : index
    %c0_264 = arith.constant 0 : index
    %490 = vector.load %arg9[%c0_262, %c0_263, %c0_264] : memref<113x8x256xf32, #tpu.memory_space<vmem>>, vector<1x8x256xf32>
    %491 = vector.shape_cast %490 : vector<1x8x256xf32> to vector<8x256xf32>
    %492 = arith.mulf %489, %491 : vector<8x256xf32>
    %493 = arith.addf %488, %492 : vector<8x256xf32>
    %494 = vector.extract_strided_slice %485 {offsets = [0, 56], sizes = [8, 256], strides = [1, 1]} : vector<8x512xf32> to vector<8x256xf32>
    %c1_265 = arith.constant 1 : index
    %c0_266 = arith.constant 0 : index
    %c0_267 = arith.constant 0 : index
    %495 = vector.load %arg9[%c1_265, %c0_266, %c0_267] : memref<113x8x256xf32, #tpu.memory_space<vmem>>, vector<1x8x256xf32>
    %496 = vector.shape_cast %495 : vector<1x8x256xf32> to vector<8x256xf32>
    %497 = arith.mulf %494, %496 : vector<8x256xf32>
    %498 = arith.addf %493, %497 : vector<8x256xf32>
    %499 = vector.extract_strided_slice %485 {offsets = [0, 60], sizes = [8, 256], strides = [1, 1]} : vector<8x512xf32> to vector<8x256xf32>
    %c2_268 = arith.constant 2 : index
    %c0_269 = arith.constant 0 : index
    %c0_270 = arith.constant 0 : index
    %500 = vector.load %arg9[%c2_268, %c0_269, %c0_270] : memref<113x8x256xf32, #tpu.memory_space<vmem>>, vector<1x8x256xf32>
    %501 = vector.shape_cast %500 : vector<1x8x256xf32> to vector<8x256xf32>
    %502 = arith.mulf %499, %501 : vector<8x256xf32>
    %503 = arith.addf %498, %502 : vector<8x256xf32>
    %504 = vector.extract_strided_slice %485 {offsets = [0, 64], sizes = [8, 256], strides = [1, 1]} : vector<8x512xf32> to vector<8x256xf32>
    %c3_271 = arith.constant 3 : index
    %c0_272 = arith.constant 0 : index
    %c0_273 = arith.constant 0 : index
    %505 = vector.load %arg9[%c3_271, %c0_272, %c0_273] : memref<113x8x256xf32, #tpu.memory_space<vmem>>, vector<1x8x256xf32>
    %506 = vector.shape_cast %505 : vector<1x8x256xf32> to vector<8x256xf32>
    %507 = arith.mulf %504, %506 : vector<8x256xf32>
    %508 = arith.addf %503, %507 : vector<8x256xf32>
    %509 = vector.extract_strided_slice %485 {offsets = [0, 68], sizes = [8, 256], strides = [1, 1]} : vector<8x512xf32> to vector<8x256xf32>
    %c4_274 = arith.constant 4 : index
    %c0_275 = arith.constant 0 : index
    %c0_276 = arith.constant 0 : index
    %510 = vector.load %arg9[%c4_274, %c0_275, %c0_276] : memref<113x8x256xf32, #tpu.memory_space<vmem>>, vector<1x8x256xf32>
    %511 = vector.shape_cast %510 : vector<1x8x256xf32> to vector<8x256xf32>
    %512 = arith.mulf %509, %511 : vector<8x256xf32>
    %513 = arith.addf %508, %512 : vector<8x256xf32>
    %514 = vector.extract_strided_slice %485 {offsets = [0, 72], sizes = [8, 256], strides = [1, 1]} : vector<8x512xf32> to vector<8x256xf32>
    %c5_277 = arith.constant 5 : index
    %c0_278 = arith.constant 0 : index
    %c0_279 = arith.constant 0 : index
    %515 = vector.load %arg9[%c5_277, %c0_278, %c0_279] : memref<113x8x256xf32, #tpu.memory_space<vmem>>, vector<1x8x256xf32>
    %516 = vector.shape_cast %515 : vector<1x8x256xf32> to vector<8x256xf32>
    %517 = arith.mulf %514, %516 : vector<8x256xf32>
    %518 = arith.addf %513, %517 : vector<8x256xf32>
    %519 = vector.extract_strided_slice %485 {offsets = [0, 76], sizes = [8, 256], strides = [1, 1]} : vector<8x512xf32> to vector<8x256xf32>
    %c6_280 = arith.constant 6 : index
    %c0_281 = arith.constant 0 : index
    %c0_282 = arith.constant 0 : index
    %520 = vector.load %arg9[%c6_280, %c0_281, %c0_282] : memref<113x8x256xf32, #tpu.memory_space<vmem>>, vector<1x8x256xf32>
    %521 = vector.shape_cast %520 : vector<1x8x256xf32> to vector<8x256xf32>
    %522 = arith.mulf %519, %521 : vector<8x256xf32>
    %523 = arith.addf %518, %522 : vector<8x256xf32>
    %524 = vector.extract_strided_slice %485 {offsets = [0, 103], sizes = [8, 256], strides = [1, 1]} : vector<8x512xf32> to vector<8x256xf32>
    %c7_283 = arith.constant 7 : index
    %c0_284 = arith.constant 0 : index
    %c0_285 = arith.constant 0 : index
    %525 = vector.load %arg9[%c7_283, %c0_284, %c0_285] : memref<113x8x256xf32, #tpu.memory_space<vmem>>, vector<1x8x256xf32>
    %526 = vector.shape_cast %525 : vector<1x8x256xf32> to vector<8x256xf32>
    %527 = arith.mulf %524, %526 : vector<8x256xf32>
    %528 = arith.addf %523, %527 : vector<8x256xf32>
    %529 = vector.extract_strided_slice %485 {offsets = [0, 106], sizes = [8, 256], strides = [1, 1]} : vector<8x512xf32> to vector<8x256xf32>
    %c8_286 = arith.constant 8 : index
    %c0_287 = arith.constant 0 : index
    %c0_288 = arith.constant 0 : index
    %530 = vector.load %arg9[%c8_286, %c0_287, %c0_288] : memref<113x8x256xf32, #tpu.memory_space<vmem>>, vector<1x8x256xf32>
    %531 = vector.shape_cast %530 : vector<1x8x256xf32> to vector<8x256xf32>
    %532 = arith.mulf %529, %531 : vector<8x256xf32>
    %533 = arith.addf %528, %532 : vector<8x256xf32>
    %534 = vector.extract_strided_slice %485 {offsets = [0, 109], sizes = [8, 256], strides = [1, 1]} : vector<8x512xf32> to vector<8x256xf32>
    %c9_289 = arith.constant 9 : index
    %c0_290 = arith.constant 0 : index
    %c0_291 = arith.constant 0 : index
    %535 = vector.load %arg9[%c9_289, %c0_290, %c0_291] : memref<113x8x256xf32, #tpu.memory_space<vmem>>, vector<1x8x256xf32>
    %536 = vector.shape_cast %535 : vector<1x8x256xf32> to vector<8x256xf32>
    %537 = arith.mulf %534, %536 : vector<8x256xf32>
    %538 = arith.addf %533, %537 : vector<8x256xf32>
    %539 = vector.extract_strided_slice %485 {offsets = [0, 112], sizes = [8, 256], strides = [1, 1]} : vector<8x512xf32> to vector<8x256xf32>
    %c10_292 = arith.constant 10 : index
    %c0_293 = arith.constant 0 : index
    %c0_294 = arith.constant 0 : index
    %540 = vector.load %arg9[%c10_292, %c0_293, %c0_294] : memref<113x8x256xf32, #tpu.memory_space<vmem>>, vector<1x8x256xf32>
    %541 = vector.shape_cast %540 : vector<1x8x256xf32> to vector<8x256xf32>
    %542 = arith.mulf %539, %541 : vector<8x256xf32>
    %543 = arith.addf %538, %542 : vector<8x256xf32>
    %544 = vector.extract_strided_slice %485 {offsets = [0, 115], sizes = [8, 256], strides = [1, 1]} : vector<8x512xf32> to vector<8x256xf32>
    %c11_295 = arith.constant 11 : index
    %c0_296 = arith.constant 0 : index
    %c0_297 = arith.constant 0 : index
    %545 = vector.load %arg9[%c11_295, %c0_296, %c0_297] : memref<113x8x256xf32, #tpu.memory_space<vmem>>, vector<1x8x256xf32>
    %546 = vector.shape_cast %545 : vector<1x8x256xf32> to vector<8x256xf32>
    %547 = arith.mulf %544, %546 : vector<8x256xf32>
    %548 = arith.addf %543, %547 : vector<8x256xf32>
    %549 = vector.extract_strided_slice %485 {offsets = [0, 118], sizes = [8, 256], strides = [1, 1]} : vector<8x512xf32> to vector<8x256xf32>
    %c12_298 = arith.constant 12 : index
    %c0_299 = arith.constant 0 : index
    %c0_300 = arith.constant 0 : index
    %550 = vector.load %arg9[%c12_298, %c0_299, %c0_300] : memref<113x8x256xf32, #tpu.memory_space<vmem>>, vector<1x8x256xf32>
    %551 = vector.shape_cast %550 : vector<1x8x256xf32> to vector<8x256xf32>
    %552 = arith.mulf %549, %551 : vector<8x256xf32>
    %553 = arith.addf %548, %552 : vector<8x256xf32>
    %554 = vector.extract_strided_slice %485 {offsets = [0, 121], sizes = [8, 256], strides = [1, 1]} : vector<8x512xf32> to vector<8x256xf32>
    %c13_301 = arith.constant 13 : index
    %c0_302 = arith.constant 0 : index
    %c0_303 = arith.constant 0 : index
    %555 = vector.load %arg9[%c13_301, %c0_302, %c0_303] : memref<113x8x256xf32, #tpu.memory_space<vmem>>, vector<1x8x256xf32>
    %556 = vector.shape_cast %555 : vector<1x8x256xf32> to vector<8x256xf32>
    %557 = arith.mulf %554, %556 : vector<8x256xf32>
    %558 = arith.addf %553, %557 : vector<8x256xf32>
    %559 = vector.extract_strided_slice %485 {offsets = [0, 116], sizes = [8, 256], strides = [1, 1]} : vector<8x512xf32> to vector<8x256xf32>
    %c14_304 = arith.constant 14 : index
    %c0_305 = arith.constant 0 : index
    %c0_306 = arith.constant 0 : index
    %560 = vector.load %arg9[%c14_304, %c0_305, %c0_306] : memref<113x8x256xf32, #tpu.memory_space<vmem>>, vector<1x8x256xf32>
    %561 = vector.shape_cast %560 : vector<1x8x256xf32> to vector<8x256xf32>
    %562 = arith.mulf %559, %561 : vector<8x256xf32>
    %563 = arith.addf %558, %562 : vector<8x256xf32>
    %564 = vector.extract_strided_slice %485 {offsets = [0, 120], sizes = [8, 256], strides = [1, 1]} : vector<8x512xf32> to vector<8x256xf32>
    %c15_307 = arith.constant 15 : index
    %c0_308 = arith.constant 0 : index
    %c0_309 = arith.constant 0 : index
    %565 = vector.load %arg9[%c15_307, %c0_308, %c0_309] : memref<113x8x256xf32, #tpu.memory_space<vmem>>, vector<1x8x256xf32>
    %566 = vector.shape_cast %565 : vector<1x8x256xf32> to vector<8x256xf32>
    %567 = arith.mulf %564, %566 : vector<8x256xf32>
    %568 = arith.addf %563, %567 : vector<8x256xf32>
    %569 = vector.extract_strided_slice %485 {offsets = [0, 124], sizes = [8, 256], strides = [1, 1]} : vector<8x512xf32> to vector<8x256xf32>
    %c16_310 = arith.constant 16 : index
    %c0_311 = arith.constant 0 : index
    %c0_312 = arith.constant 0 : index
    %570 = vector.load %arg9[%c16_310, %c0_311, %c0_312] : memref<113x8x256xf32, #tpu.memory_space<vmem>>, vector<1x8x256xf32>
    %571 = vector.shape_cast %570 : vector<1x8x256xf32> to vector<8x256xf32>
    %572 = arith.mulf %569, %571 : vector<8x256xf32>
    %573 = arith.addf %568, %572 : vector<8x256xf32>
    %574 = vector.extract_strided_slice %485 {offsets = [0, 128], sizes = [8, 256], strides = [1, 1]} : vector<8x512xf32> to vector<8x256xf32>
    %c17_313 = arith.constant 17 : index
    %c0_314 = arith.constant 0 : index
    %c0_315 = arith.constant 0 : index
    %575 = vector.load %arg9[%c17_313, %c0_314, %c0_315] : memref<113x8x256xf32, #tpu.memory_space<vmem>>, vector<1x8x256xf32>
    %576 = vector.shape_cast %575 : vector<1x8x256xf32> to vector<8x256xf32>
    %577 = arith.mulf %574, %576 : vector<8x256xf32>
    %578 = arith.addf %573, %577 : vector<8x256xf32>
    %579 = vector.extract_strided_slice %485 {offsets = [0, 132], sizes = [8, 256], strides = [1, 1]} : vector<8x512xf32> to vector<8x256xf32>
    %c18_316 = arith.constant 18 : index
    %c0_317 = arith.constant 0 : index
    %c0_318 = arith.constant 0 : index
    %580 = vector.load %arg9[%c18_316, %c0_317, %c0_318] : memref<113x8x256xf32, #tpu.memory_space<vmem>>, vector<1x8x256xf32>
    %581 = vector.shape_cast %580 : vector<1x8x256xf32> to vector<8x256xf32>
    %582 = arith.mulf %579, %581 : vector<8x256xf32>
    %583 = arith.addf %578, %582 : vector<8x256xf32>
    %584 = vector.extract_strided_slice %485 {offsets = [0, 136], sizes = [8, 256], strides = [1, 1]} : vector<8x512xf32> to vector<8x256xf32>
    %c19_319 = arith.constant 19 : index
    %c0_320 = arith.constant 0 : index
    %c0_321 = arith.constant 0 : index
    %585 = vector.load %arg9[%c19_319, %c0_320, %c0_321] : memref<113x8x256xf32, #tpu.memory_space<vmem>>, vector<1x8x256xf32>
    %586 = vector.shape_cast %585 : vector<1x8x256xf32> to vector<8x256xf32>
    %587 = arith.mulf %584, %586 : vector<8x256xf32>
    %588 = arith.addf %583, %587 : vector<8x256xf32>
    %589 = vector.extract_strided_slice %485 {offsets = [0, 140], sizes = [8, 256], strides = [1, 1]} : vector<8x512xf32> to vector<8x256xf32>
    %c20_322 = arith.constant 20 : index
    %c0_323 = arith.constant 0 : index
    %c0_324 = arith.constant 0 : index
    %590 = vector.load %arg9[%c20_322, %c0_323, %c0_324] : memref<113x8x256xf32, #tpu.memory_space<vmem>>, vector<1x8x256xf32>
    %591 = vector.shape_cast %590 : vector<1x8x256xf32> to vector<8x256xf32>
    %592 = arith.mulf %589, %591 : vector<8x256xf32>
    %593 = arith.addf %588, %592 : vector<8x256xf32>
    %594 = vector.extract_strided_slice %485 {offsets = [0, 151], sizes = [8, 256], strides = [1, 1]} : vector<8x512xf32> to vector<8x256xf32>
    %c21_325 = arith.constant 21 : index
    %c0_326 = arith.constant 0 : index
    %c0_327 = arith.constant 0 : index
    %595 = vector.load %arg9[%c21_325, %c0_326, %c0_327] : memref<113x8x256xf32, #tpu.memory_space<vmem>>, vector<1x8x256xf32>
    %596 = vector.shape_cast %595 : vector<1x8x256xf32> to vector<8x256xf32>
    %597 = arith.mulf %594, %596 : vector<8x256xf32>
    %598 = arith.addf %593, %597 : vector<8x256xf32>
    %599 = vector.extract_strided_slice %485 {offsets = [0, 154], sizes = [8, 256], strides = [1, 1]} : vector<8x512xf32> to vector<8x256xf32>
    %c22_328 = arith.constant 22 : index
    %c0_329 = arith.constant 0 : index
    %c0_330 = arith.constant 0 : index
    %600 = vector.load %arg9[%c22_328, %c0_329, %c0_330] : memref<113x8x256xf32, #tpu.memory_space<vmem>>, vector<1x8x256xf32>
    %601 = vector.shape_cast %600 : vector<1x8x256xf32> to vector<8x256xf32>
    %602 = arith.mulf %599, %601 : vector<8x256xf32>
    %603 = arith.addf %598, %602 : vector<8x256xf32>
    %604 = vector.extract_strided_slice %485 {offsets = [0, 157], sizes = [8, 256], strides = [1, 1]} : vector<8x512xf32> to vector<8x256xf32>
    %c23_331 = arith.constant 23 : index
    %c0_332 = arith.constant 0 : index
    %c0_333 = arith.constant 0 : index
    %605 = vector.load %arg9[%c23_331, %c0_332, %c0_333] : memref<113x8x256xf32, #tpu.memory_space<vmem>>, vector<1x8x256xf32>
    %606 = vector.shape_cast %605 : vector<1x8x256xf32> to vector<8x256xf32>
    %607 = arith.mulf %604, %606 : vector<8x256xf32>
    %608 = arith.addf %603, %607 : vector<8x256xf32>
    %609 = vector.extract_strided_slice %485 {offsets = [0, 160], sizes = [8, 256], strides = [1, 1]} : vector<8x512xf32> to vector<8x256xf32>
    %c24_334 = arith.constant 24 : index
    %c0_335 = arith.constant 0 : index
    %c0_336 = arith.constant 0 : index
    %610 = vector.load %arg9[%c24_334, %c0_335, %c0_336] : memref<113x8x256xf32, #tpu.memory_space<vmem>>, vector<1x8x256xf32>
    %611 = vector.shape_cast %610 : vector<1x8x256xf32> to vector<8x256xf32>
    %612 = arith.mulf %609, %611 : vector<8x256xf32>
    %613 = arith.addf %608, %612 : vector<8x256xf32>
    %614 = vector.extract_strided_slice %485 {offsets = [0, 163], sizes = [8, 256], strides = [1, 1]} : vector<8x512xf32> to vector<8x256xf32>
    %c25_337 = arith.constant 25 : index
    %c0_338 = arith.constant 0 : index
    %c0_339 = arith.constant 0 : index
    %615 = vector.load %arg9[%c25_337, %c0_338, %c0_339] : memref<113x8x256xf32, #tpu.memory_space<vmem>>, vector<1x8x256xf32>
    %616 = vector.shape_cast %615 : vector<1x8x256xf32> to vector<8x256xf32>
    %617 = arith.mulf %614, %616 : vector<8x256xf32>
    %618 = arith.addf %613, %617 : vector<8x256xf32>
    %619 = vector.extract_strided_slice %485 {offsets = [0, 166], sizes = [8, 256], strides = [1, 1]} : vector<8x512xf32> to vector<8x256xf32>
    %c26_340 = arith.constant 26 : index
    %c0_341 = arith.constant 0 : index
    %c0_342 = arith.constant 0 : index
    %620 = vector.load %arg9[%c26_340, %c0_341, %c0_342] : memref<113x8x256xf32, #tpu.memory_space<vmem>>, vector<1x8x256xf32>
    %621 = vector.shape_cast %620 : vector<1x8x256xf32> to vector<8x256xf32>
    %622 = arith.mulf %619, %621 : vector<8x256xf32>
    %623 = arith.addf %618, %622 : vector<8x256xf32>
    %624 = vector.extract_strided_slice %485 {offsets = [0, 169], sizes = [8, 256], strides = [1, 1]} : vector<8x512xf32> to vector<8x256xf32>
    %c27_343 = arith.constant 27 : index
    %c0_344 = arith.constant 0 : index
    %c0_345 = arith.constant 0 : index
    %625 = vector.load %arg9[%c27_343, %c0_344, %c0_345] : memref<113x8x256xf32, #tpu.memory_space<vmem>>, vector<1x8x256xf32>
    %626 = vector.shape_cast %625 : vector<1x8x256xf32> to vector<8x256xf32>
    %627 = arith.mulf %624, %626 : vector<8x256xf32>
    %628 = arith.addf %623, %627 : vector<8x256xf32>
    %629 = vector.extract_strided_slice %485 {offsets = [0, 180], sizes = [8, 256], strides = [1, 1]} : vector<8x512xf32> to vector<8x256xf32>
    %c28_346 = arith.constant 28 : index
    %c0_347 = arith.constant 0 : index
    %c0_348 = arith.constant 0 : index
    %630 = vector.load %arg9[%c28_346, %c0_347, %c0_348] : memref<113x8x256xf32, #tpu.memory_space<vmem>>, vector<1x8x256xf32>
    %631 = vector.shape_cast %630 : vector<1x8x256xf32> to vector<8x256xf32>
    %632 = arith.mulf %629, %631 : vector<8x256xf32>
    %633 = arith.addf %628, %632 : vector<8x256xf32>
    %634 = vector.extract_strided_slice %485 {offsets = [0, 184], sizes = [8, 256], strides = [1, 1]} : vector<8x512xf32> to vector<8x256xf32>
    %c29_349 = arith.constant 29 : index
    %c0_350 = arith.constant 0 : index
    %c0_351 = arith.constant 0 : index
    %635 = vector.load %arg9[%c29_349, %c0_350, %c0_351] : memref<113x8x256xf32, #tpu.memory_space<vmem>>, vector<1x8x256xf32>
    %636 = vector.shape_cast %635 : vector<1x8x256xf32> to vector<8x256xf32>
    %637 = arith.mulf %634, %636 : vector<8x256xf32>
    %638 = arith.addf %633, %637 : vector<8x256xf32>
    %639 = vector.extract_strided_slice %485 {offsets = [0, 188], sizes = [8, 256], strides = [1, 1]} : vector<8x512xf32> to vector<8x256xf32>
    %c30_352 = arith.constant 30 : index
    %c0_353 = arith.constant 0 : index
    %c0_354 = arith.constant 0 : index
    %640 = vector.load %arg9[%c30_352, %c0_353, %c0_354] : memref<113x8x256xf32, #tpu.memory_space<vmem>>, vector<1x8x256xf32>
    %641 = vector.shape_cast %640 : vector<1x8x256xf32> to vector<8x256xf32>
    %642 = arith.mulf %639, %641 : vector<8x256xf32>
    %643 = arith.addf %638, %642 : vector<8x256xf32>
    %644 = vector.extract_strided_slice %485 {offsets = [0, 190], sizes = [8, 256], strides = [1, 1]} : vector<8x512xf32> to vector<8x256xf32>
    %c31_355 = arith.constant 31 : index
    %c0_356 = arith.constant 0 : index
    %c0_357 = arith.constant 0 : index
    %645 = vector.load %arg9[%c31_355, %c0_356, %c0_357] : memref<113x8x256xf32, #tpu.memory_space<vmem>>, vector<1x8x256xf32>
    %646 = vector.shape_cast %645 : vector<1x8x256xf32> to vector<8x256xf32>
    %647 = arith.mulf %644, %646 : vector<8x256xf32>
    %648 = arith.addf %643, %647 : vector<8x256xf32>
    %649 = vector.extract_strided_slice %485 {offsets = [0, 192], sizes = [8, 256], strides = [1, 1]} : vector<8x512xf32> to vector<8x256xf32>
    %c32_358 = arith.constant 32 : index
    %c0_359 = arith.constant 0 : index
    %c0_360 = arith.constant 0 : index
    %650 = vector.load %arg9[%c32_358, %c0_359, %c0_360] : memref<113x8x256xf32, #tpu.memory_space<vmem>>, vector<1x8x256xf32>
    %651 = vector.shape_cast %650 : vector<1x8x256xf32> to vector<8x256xf32>
    %652 = arith.mulf %649, %651 : vector<8x256xf32>
    %653 = arith.addf %648, %652 : vector<8x256xf32>
    %654 = vector.extract_strided_slice %485 {offsets = [0, 194], sizes = [8, 256], strides = [1, 1]} : vector<8x512xf32> to vector<8x256xf32>
    %c33_361 = arith.constant 33 : index
    %c0_362 = arith.constant 0 : index
    %c0_363 = arith.constant 0 : index
    %655 = vector.load %arg9[%c33_361, %c0_362, %c0_363] : memref<113x8x256xf32, #tpu.memory_space<vmem>>, vector<1x8x256xf32>
    %656 = vector.shape_cast %655 : vector<1x8x256xf32> to vector<8x256xf32>
    %657 = arith.mulf %654, %656 : vector<8x256xf32>
    %658 = arith.addf %653, %657 : vector<8x256xf32>
    %659 = vector.extract_strided_slice %485 {offsets = [0, 196], sizes = [8, 256], strides = [1, 1]} : vector<8x512xf32> to vector<8x256xf32>
    %c34_364 = arith.constant 34 : index
    %c0_365 = arith.constant 0 : index
    %c0_366 = arith.constant 0 : index
    %660 = vector.load %arg9[%c34_364, %c0_365, %c0_366] : memref<113x8x256xf32, #tpu.memory_space<vmem>>, vector<1x8x256xf32>
    %661 = vector.shape_cast %660 : vector<1x8x256xf32> to vector<8x256xf32>
    %662 = arith.mulf %659, %661 : vector<8x256xf32>
    %663 = arith.addf %658, %662 : vector<8x256xf32>
    %664 = vector.extract_strided_slice %485 {offsets = [0, 200], sizes = [8, 256], strides = [1, 1]} : vector<8x512xf32> to vector<8x256xf32>
    %c35_367 = arith.constant 35 : index
    %c0_368 = arith.constant 0 : index
    %c0_369 = arith.constant 0 : index
    %665 = vector.load %arg9[%c35_367, %c0_368, %c0_369] : memref<113x8x256xf32, #tpu.memory_space<vmem>>, vector<1x8x256xf32>
    %666 = vector.shape_cast %665 : vector<1x8x256xf32> to vector<8x256xf32>
    %667 = arith.mulf %664, %666 : vector<8x256xf32>
    %668 = arith.addf %663, %667 : vector<8x256xf32>
    %669 = vector.extract_strided_slice %485 {offsets = [0, 204], sizes = [8, 256], strides = [1, 1]} : vector<8x512xf32> to vector<8x256xf32>
    %c36_370 = arith.constant 36 : index
    %c0_371 = arith.constant 0 : index
    %c0_372 = arith.constant 0 : index
    %670 = vector.load %arg9[%c36_370, %c0_371, %c0_372] : memref<113x8x256xf32, #tpu.memory_space<vmem>>, vector<1x8x256xf32>
    %671 = vector.shape_cast %670 : vector<1x8x256xf32> to vector<8x256xf32>
    %672 = arith.mulf %669, %671 : vector<8x256xf32>
    %673 = arith.addf %668, %672 : vector<8x256xf32>
    %674 = vector.extract_strided_slice %485 {offsets = [0, 199], sizes = [8, 256], strides = [1, 1]} : vector<8x512xf32> to vector<8x256xf32>
    %c37_373 = arith.constant 37 : index
    %c0_374 = arith.constant 0 : index
    %c0_375 = arith.constant 0 : index
    %675 = vector.load %arg9[%c37_373, %c0_374, %c0_375] : memref<113x8x256xf32, #tpu.memory_space<vmem>>, vector<1x8x256xf32>
    %676 = vector.shape_cast %675 : vector<1x8x256xf32> to vector<8x256xf32>
    %677 = arith.mulf %674, %676 : vector<8x256xf32>
    %678 = arith.addf %673, %677 : vector<8x256xf32>
    %679 = vector.extract_strided_slice %485 {offsets = [0, 202], sizes = [8, 256], strides = [1, 1]} : vector<8x512xf32> to vector<8x256xf32>
    %c38_376 = arith.constant 38 : index
    %c0_377 = arith.constant 0 : index
    %c0_378 = arith.constant 0 : index
    %680 = vector.load %arg9[%c38_376, %c0_377, %c0_378] : memref<113x8x256xf32, #tpu.memory_space<vmem>>, vector<1x8x256xf32>
    %681 = vector.shape_cast %680 : vector<1x8x256xf32> to vector<8x256xf32>
    %682 = arith.mulf %679, %681 : vector<8x256xf32>
    %683 = arith.addf %678, %682 : vector<8x256xf32>
    %684 = vector.extract_strided_slice %485 {offsets = [0, 205], sizes = [8, 256], strides = [1, 1]} : vector<8x512xf32> to vector<8x256xf32>
    %c39_379 = arith.constant 39 : index
    %c0_380 = arith.constant 0 : index
    %c0_381 = arith.constant 0 : index
    %685 = vector.load %arg9[%c39_379, %c0_380, %c0_381] : memref<113x8x256xf32, #tpu.memory_space<vmem>>, vector<1x8x256xf32>
    %686 = vector.shape_cast %685 : vector<1x8x256xf32> to vector<8x256xf32>
    %687 = arith.mulf %684, %686 : vector<8x256xf32>
    %688 = arith.addf %683, %687 : vector<8x256xf32>
    %689 = vector.extract_strided_slice %485 {offsets = [0, 208], sizes = [8, 256], strides = [1, 1]} : vector<8x512xf32> to vector<8x256xf32>
    %c40_382 = arith.constant 40 : index
    %c0_383 = arith.constant 0 : index
    %c0_384 = arith.constant 0 : index
    %690 = vector.load %arg9[%c40_382, %c0_383, %c0_384] : memref<113x8x256xf32, #tpu.memory_space<vmem>>, vector<1x8x256xf32>
    %691 = vector.shape_cast %690 : vector<1x8x256xf32> to vector<8x256xf32>
    %692 = arith.mulf %689, %691 : vector<8x256xf32>
    %693 = arith.addf %688, %692 : vector<8x256xf32>
    %694 = vector.extract_strided_slice %485 {offsets = [0, 211], sizes = [8, 256], strides = [1, 1]} : vector<8x512xf32> to vector<8x256xf32>
    %c41_385 = arith.constant 41 : index
    %c0_386 = arith.constant 0 : index
    %c0_387 = arith.constant 0 : index
    %695 = vector.load %arg9[%c41_385, %c0_386, %c0_387] : memref<113x8x256xf32, #tpu.memory_space<vmem>>, vector<1x8x256xf32>
    %696 = vector.shape_cast %695 : vector<1x8x256xf32> to vector<8x256xf32>
    %697 = arith.mulf %694, %696 : vector<8x256xf32>
    %698 = arith.addf %693, %697 : vector<8x256xf32>
    %699 = vector.extract_strided_slice %485 {offsets = [0, 214], sizes = [8, 256], strides = [1, 1]} : vector<8x512xf32> to vector<8x256xf32>
    %c42_388 = arith.constant 42 : index
    %c0_389 = arith.constant 0 : index
    %c0_390 = arith.constant 0 : index
    %700 = vector.load %arg9[%c42_388, %c0_389, %c0_390] : memref<113x8x256xf32, #tpu.memory_space<vmem>>, vector<1x8x256xf32>
    %701 = vector.shape_cast %700 : vector<1x8x256xf32> to vector<8x256xf32>
    %702 = arith.mulf %699, %701 : vector<8x256xf32>
    %703 = arith.addf %698, %702 : vector<8x256xf32>
    %704 = vector.extract_strided_slice %485 {offsets = [0, 217], sizes = [8, 256], strides = [1, 1]} : vector<8x512xf32> to vector<8x256xf32>
    %c43_391 = arith.constant 43 : index
    %c0_392 = arith.constant 0 : index
    %c0_393 = arith.constant 0 : index
    %705 = vector.load %arg9[%c43_391, %c0_392, %c0_393] : memref<113x8x256xf32, #tpu.memory_space<vmem>>, vector<1x8x256xf32>
    %706 = vector.shape_cast %705 : vector<1x8x256xf32> to vector<8x256xf32>
    %707 = arith.mulf %704, %706 : vector<8x256xf32>
    %708 = arith.addf %703, %707 : vector<8x256xf32>
    %709 = vector.extract_strided_slice %485 {offsets = [0, 220], sizes = [8, 256], strides = [1, 1]} : vector<8x512xf32> to vector<8x256xf32>
    %c44_394 = arith.constant 44 : index
    %c0_395 = arith.constant 0 : index
    %c0_396 = arith.constant 0 : index
    %710 = vector.load %arg9[%c44_394, %c0_395, %c0_396] : memref<113x8x256xf32, #tpu.memory_space<vmem>>, vector<1x8x256xf32>
    %711 = vector.shape_cast %710 : vector<1x8x256xf32> to vector<8x256xf32>
    %712 = arith.mulf %709, %711 : vector<8x256xf32>
    %713 = arith.addf %708, %712 : vector<8x256xf32>
    %714 = vector.extract_strided_slice %485 {offsets = [0, 222], sizes = [8, 256], strides = [1, 1]} : vector<8x512xf32> to vector<8x256xf32>
    %c45_397 = arith.constant 45 : index
    %c0_398 = arith.constant 0 : index
    %c0_399 = arith.constant 0 : index
    %715 = vector.load %arg9[%c45_397, %c0_398, %c0_399] : memref<113x8x256xf32, #tpu.memory_space<vmem>>, vector<1x8x256xf32>
    %716 = vector.shape_cast %715 : vector<1x8x256xf32> to vector<8x256xf32>
    %717 = arith.mulf %714, %716 : vector<8x256xf32>
    %718 = arith.addf %713, %717 : vector<8x256xf32>
    %719 = vector.extract_strided_slice %485 {offsets = [0, 224], sizes = [8, 256], strides = [1, 1]} : vector<8x512xf32> to vector<8x256xf32>
    %c46_400 = arith.constant 46 : index
    %c0_401 = arith.constant 0 : index
    %c0_402 = arith.constant 0 : index
    %720 = vector.load %arg9[%c46_400, %c0_401, %c0_402] : memref<113x8x256xf32, #tpu.memory_space<vmem>>, vector<1x8x256xf32>
    %721 = vector.shape_cast %720 : vector<1x8x256xf32> to vector<8x256xf32>
    %722 = arith.mulf %719, %721 : vector<8x256xf32>
    %723 = arith.addf %718, %722 : vector<8x256xf32>
    %724 = vector.extract_strided_slice %485 {offsets = [0, 226], sizes = [8, 256], strides = [1, 1]} : vector<8x512xf32> to vector<8x256xf32>
    %c47_403 = arith.constant 47 : index
    %c0_404 = arith.constant 0 : index
    %c0_405 = arith.constant 0 : index
    %725 = vector.load %arg9[%c47_403, %c0_404, %c0_405] : memref<113x8x256xf32, #tpu.memory_space<vmem>>, vector<1x8x256xf32>
    %726 = vector.shape_cast %725 : vector<1x8x256xf32> to vector<8x256xf32>
    %727 = arith.mulf %724, %726 : vector<8x256xf32>
    %728 = arith.addf %723, %727 : vector<8x256xf32>
    %729 = vector.extract_strided_slice %485 {offsets = [0, 228], sizes = [8, 256], strides = [1, 1]} : vector<8x512xf32> to vector<8x256xf32>
    %c48_406 = arith.constant 48 : index
    %c0_407 = arith.constant 0 : index
    %c0_408 = arith.constant 0 : index
    %730 = vector.load %arg9[%c48_406, %c0_407, %c0_408] : memref<113x8x256xf32, #tpu.memory_space<vmem>>, vector<1x8x256xf32>
    %731 = vector.shape_cast %730 : vector<1x8x256xf32> to vector<8x256xf32>
    %732 = arith.mulf %729, %731 : vector<8x256xf32>
    %733 = arith.addf %728, %732 : vector<8x256xf32>
    %734 = vector.extract_strided_slice %485 {offsets = [0, 244], sizes = [8, 256], strides = [1, 1]} : vector<8x512xf32> to vector<8x256xf32>
    %c49 = arith.constant 49 : index
    %c0_409 = arith.constant 0 : index
    %c0_410 = arith.constant 0 : index
    %735 = vector.load %arg9[%c49, %c0_409, %c0_410] : memref<113x8x256xf32, #tpu.memory_space<vmem>>, vector<1x8x256xf32>
    %736 = vector.shape_cast %735 : vector<1x8x256xf32> to vector<8x256xf32>
    %737 = arith.mulf %734, %736 : vector<8x256xf32>
    %738 = arith.addf %733, %737 : vector<8x256xf32>
    %739 = vector.extract_strided_slice %485 {offsets = [0, 247], sizes = [8, 256], strides = [1, 1]} : vector<8x512xf32> to vector<8x256xf32>
    %c50 = arith.constant 50 : index
    %c0_411 = arith.constant 0 : index
    %c0_412 = arith.constant 0 : index
    %740 = vector.load %arg9[%c50, %c0_411, %c0_412] : memref<113x8x256xf32, #tpu.memory_space<vmem>>, vector<1x8x256xf32>
    %741 = vector.shape_cast %740 : vector<1x8x256xf32> to vector<8x256xf32>
    %742 = arith.mulf %739, %741 : vector<8x256xf32>
    %743 = arith.addf %738, %742 : vector<8x256xf32>
    %744 = vector.extract_strided_slice %485 {offsets = [0, 248], sizes = [8, 256], strides = [1, 1]} : vector<8x512xf32> to vector<8x256xf32>
    %c51 = arith.constant 51 : index
    %c0_413 = arith.constant 0 : index
    %c0_414 = arith.constant 0 : index
    %745 = vector.load %arg9[%c51, %c0_413, %c0_414] : memref<113x8x256xf32, #tpu.memory_space<vmem>>, vector<1x8x256xf32>
    %746 = vector.shape_cast %745 : vector<1x8x256xf32> to vector<8x256xf32>
    %747 = arith.mulf %744, %746 : vector<8x256xf32>
    %748 = arith.addf %743, %747 : vector<8x256xf32>
    %749 = vector.extract_strided_slice %485 {offsets = [0, 250], sizes = [8, 256], strides = [1, 1]} : vector<8x512xf32> to vector<8x256xf32>
    %c52 = arith.constant 52 : index
    %c0_415 = arith.constant 0 : index
    %c0_416 = arith.constant 0 : index
    %750 = vector.load %arg9[%c52, %c0_415, %c0_416] : memref<113x8x256xf32, #tpu.memory_space<vmem>>, vector<1x8x256xf32>
    %751 = vector.shape_cast %750 : vector<1x8x256xf32> to vector<8x256xf32>
    %752 = arith.mulf %749, %751 : vector<8x256xf32>
    %753 = arith.addf %748, %752 : vector<8x256xf32>
    %754 = vector.extract_strided_slice %485 {offsets = [0, 252], sizes = [8, 256], strides = [1, 1]} : vector<8x512xf32> to vector<8x256xf32>
    %c53 = arith.constant 53 : index
    %c0_417 = arith.constant 0 : index
    %c0_418 = arith.constant 0 : index
    %755 = vector.load %arg9[%c53, %c0_417, %c0_418] : memref<113x8x256xf32, #tpu.memory_space<vmem>>, vector<1x8x256xf32>
    %756 = vector.shape_cast %755 : vector<1x8x256xf32> to vector<8x256xf32>
    %757 = arith.mulf %754, %756 : vector<8x256xf32>
    %758 = arith.addf %753, %757 : vector<8x256xf32>
    %759 = vector.extract_strided_slice %485 {offsets = [0, 253], sizes = [8, 256], strides = [1, 1]} : vector<8x512xf32> to vector<8x256xf32>
    %c54 = arith.constant 54 : index
    %c0_419 = arith.constant 0 : index
    %c0_420 = arith.constant 0 : index
    %760 = vector.load %arg9[%c54, %c0_419, %c0_420] : memref<113x8x256xf32, #tpu.memory_space<vmem>>, vector<1x8x256xf32>
    %761 = vector.shape_cast %760 : vector<1x8x256xf32> to vector<8x256xf32>
    %762 = arith.mulf %759, %761 : vector<8x256xf32>
    %763 = arith.addf %758, %762 : vector<8x256xf32>
    %764 = vector.extract_strided_slice %485 {offsets = [0, 254], sizes = [8, 256], strides = [1, 1]} : vector<8x512xf32> to vector<8x256xf32>
    %c55 = arith.constant 55 : index
    %c0_421 = arith.constant 0 : index
    %c0_422 = arith.constant 0 : index
    %765 = vector.load %arg9[%c55, %c0_421, %c0_422] : memref<113x8x256xf32, #tpu.memory_space<vmem>>, vector<1x8x256xf32>
    %766 = vector.shape_cast %765 : vector<1x8x256xf32> to vector<8x256xf32>
    %767 = arith.mulf %764, %766 : vector<8x256xf32>
    %768 = arith.addf %763, %767 : vector<8x256xf32>
    %c56 = arith.constant 56 : index
    %c0_423 = arith.constant 0 : index
    %c0_424 = arith.constant 0 : index
    %769 = vector.load %arg9[%c56, %c0_423, %c0_424] : memref<113x8x256xf32, #tpu.memory_space<vmem>>, vector<1x8x256xf32>
    %770 = vector.shape_cast %769 : vector<1x8x256xf32> to vector<8x256xf32>
    %771 = arith.mulf %480, %770 : vector<8x256xf32>
    %772 = arith.addf %768, %771 : vector<8x256xf32>
    %773 = vector.extract_strided_slice %485 {offsets = [0, 2], sizes = [8, 256], strides = [1, 1]} : vector<8x512xf32> to vector<8x256xf32>
    %c57 = arith.constant 57 : index
    %c0_425 = arith.constant 0 : index
    %c0_426 = arith.constant 0 : index
    %774 = vector.load %arg9[%c57, %c0_425, %c0_426] : memref<113x8x256xf32, #tpu.memory_space<vmem>>, vector<1x8x256xf32>
    %775 = vector.shape_cast %774 : vector<1x8x256xf32> to vector<8x256xf32>
    %776 = arith.mulf %773, %775 : vector<8x256xf32>
    %777 = arith.addf %772, %776 : vector<8x256xf32>
    %778 = vector.extract_strided_slice %485 {offsets = [0, 3], sizes = [8, 256], strides = [1, 1]} : vector<8x512xf32> to vector<8x256xf32>
    %c58 = arith.constant 58 : index
    %c0_427 = arith.constant 0 : index
    %c0_428 = arith.constant 0 : index
    %779 = vector.load %arg9[%c58, %c0_427, %c0_428] : memref<113x8x256xf32, #tpu.memory_space<vmem>>, vector<1x8x256xf32>
    %780 = vector.shape_cast %779 : vector<1x8x256xf32> to vector<8x256xf32>
    %781 = arith.mulf %778, %780 : vector<8x256xf32>
    %782 = arith.addf %777, %781 : vector<8x256xf32>
    %783 = vector.extract_strided_slice %485 {offsets = [0, 4], sizes = [8, 256], strides = [1, 1]} : vector<8x512xf32> to vector<8x256xf32>
    %c59 = arith.constant 59 : index
    %c0_429 = arith.constant 0 : index
    %c0_430 = arith.constant 0 : index
    %784 = vector.load %arg9[%c59, %c0_429, %c0_430] : memref<113x8x256xf32, #tpu.memory_space<vmem>>, vector<1x8x256xf32>
    %785 = vector.shape_cast %784 : vector<1x8x256xf32> to vector<8x256xf32>
    %786 = arith.mulf %783, %785 : vector<8x256xf32>
    %787 = arith.addf %782, %786 : vector<8x256xf32>
    %788 = vector.extract_strided_slice %485 {offsets = [0, 6], sizes = [8, 256], strides = [1, 1]} : vector<8x512xf32> to vector<8x256xf32>
    %c60 = arith.constant 60 : index
    %c0_431 = arith.constant 0 : index
    %c0_432 = arith.constant 0 : index
    %789 = vector.load %arg9[%c60, %c0_431, %c0_432] : memref<113x8x256xf32, #tpu.memory_space<vmem>>, vector<1x8x256xf32>
    %790 = vector.shape_cast %789 : vector<1x8x256xf32> to vector<8x256xf32>
    %791 = arith.mulf %788, %790 : vector<8x256xf32>
    %792 = arith.addf %787, %791 : vector<8x256xf32>
    %793 = vector.extract_strided_slice %485 {offsets = [0, 8], sizes = [8, 256], strides = [1, 1]} : vector<8x512xf32> to vector<8x256xf32>
    %c61 = arith.constant 61 : index
    %c0_433 = arith.constant 0 : index
    %c0_434 = arith.constant 0 : index
    %794 = vector.load %arg9[%c61, %c0_433, %c0_434] : memref<113x8x256xf32, #tpu.memory_space<vmem>>, vector<1x8x256xf32>
    %795 = vector.shape_cast %794 : vector<1x8x256xf32> to vector<8x256xf32>
    %796 = arith.mulf %793, %795 : vector<8x256xf32>
    %797 = arith.addf %792, %796 : vector<8x256xf32>
    %798 = vector.extract_strided_slice %485 {offsets = [0, 9], sizes = [8, 256], strides = [1, 1]} : vector<8x512xf32> to vector<8x256xf32>
    %c62 = arith.constant 62 : index
    %c0_435 = arith.constant 0 : index
    %c0_436 = arith.constant 0 : index
    %799 = vector.load %arg9[%c62, %c0_435, %c0_436] : memref<113x8x256xf32, #tpu.memory_space<vmem>>, vector<1x8x256xf32>
    %800 = vector.shape_cast %799 : vector<1x8x256xf32> to vector<8x256xf32>
    %801 = arith.mulf %798, %800 : vector<8x256xf32>
    %802 = arith.addf %797, %801 : vector<8x256xf32>
    %803 = vector.extract_strided_slice %485 {offsets = [0, 12], sizes = [8, 256], strides = [1, 1]} : vector<8x512xf32> to vector<8x256xf32>
    %c63 = arith.constant 63 : index
    %c0_437 = arith.constant 0 : index
    %c0_438 = arith.constant 0 : index
    %804 = vector.load %arg9[%c63, %c0_437, %c0_438] : memref<113x8x256xf32, #tpu.memory_space<vmem>>, vector<1x8x256xf32>
    %805 = vector.shape_cast %804 : vector<1x8x256xf32> to vector<8x256xf32>
    %806 = arith.mulf %803, %805 : vector<8x256xf32>
    %807 = arith.addf %802, %806 : vector<8x256xf32>
    %808 = vector.extract_strided_slice %485 {offsets = [0, 28], sizes = [8, 256], strides = [1, 1]} : vector<8x512xf32> to vector<8x256xf32>
    %c64 = arith.constant 64 : index
    %c0_439 = arith.constant 0 : index
    %c0_440 = arith.constant 0 : index
    %809 = vector.load %arg9[%c64, %c0_439, %c0_440] : memref<113x8x256xf32, #tpu.memory_space<vmem>>, vector<1x8x256xf32>
    %810 = vector.shape_cast %809 : vector<1x8x256xf32> to vector<8x256xf32>
    %811 = arith.mulf %808, %810 : vector<8x256xf32>
    %812 = arith.addf %807, %811 : vector<8x256xf32>
    %813 = vector.extract_strided_slice %485 {offsets = [0, 30], sizes = [8, 256], strides = [1, 1]} : vector<8x512xf32> to vector<8x256xf32>
    %c65 = arith.constant 65 : index
    %c0_441 = arith.constant 0 : index
    %c0_442 = arith.constant 0 : index
    %814 = vector.load %arg9[%c65, %c0_441, %c0_442] : memref<113x8x256xf32, #tpu.memory_space<vmem>>, vector<1x8x256xf32>
    %815 = vector.shape_cast %814 : vector<1x8x256xf32> to vector<8x256xf32>
    %816 = arith.mulf %813, %815 : vector<8x256xf32>
    %817 = arith.addf %812, %816 : vector<8x256xf32>
    %818 = vector.extract_strided_slice %485 {offsets = [0, 32], sizes = [8, 256], strides = [1, 1]} : vector<8x512xf32> to vector<8x256xf32>
    %c66 = arith.constant 66 : index
    %c0_443 = arith.constant 0 : index
    %c0_444 = arith.constant 0 : index
    %819 = vector.load %arg9[%c66, %c0_443, %c0_444] : memref<113x8x256xf32, #tpu.memory_space<vmem>>, vector<1x8x256xf32>
    %820 = vector.shape_cast %819 : vector<1x8x256xf32> to vector<8x256xf32>
    %821 = arith.mulf %818, %820 : vector<8x256xf32>
    %822 = arith.addf %817, %821 : vector<8x256xf32>
    %823 = vector.extract_strided_slice %485 {offsets = [0, 34], sizes = [8, 256], strides = [1, 1]} : vector<8x512xf32> to vector<8x256xf32>
    %c67 = arith.constant 67 : index
    %c0_445 = arith.constant 0 : index
    %c0_446 = arith.constant 0 : index
    %824 = vector.load %arg9[%c67, %c0_445, %c0_446] : memref<113x8x256xf32, #tpu.memory_space<vmem>>, vector<1x8x256xf32>
    %825 = vector.shape_cast %824 : vector<1x8x256xf32> to vector<8x256xf32>
    %826 = arith.mulf %823, %825 : vector<8x256xf32>
    %827 = arith.addf %822, %826 : vector<8x256xf32>
    %828 = vector.extract_strided_slice %485 {offsets = [0, 36], sizes = [8, 256], strides = [1, 1]} : vector<8x512xf32> to vector<8x256xf32>
    %c68 = arith.constant 68 : index
    %c0_447 = arith.constant 0 : index
    %c0_448 = arith.constant 0 : index
    %829 = vector.load %arg9[%c68, %c0_447, %c0_448] : memref<113x8x256xf32, #tpu.memory_space<vmem>>, vector<1x8x256xf32>
    %830 = vector.shape_cast %829 : vector<1x8x256xf32> to vector<8x256xf32>
    %831 = arith.mulf %828, %830 : vector<8x256xf32>
    %832 = arith.addf %827, %831 : vector<8x256xf32>
    %833 = vector.extract_strided_slice %485 {offsets = [0, 39], sizes = [8, 256], strides = [1, 1]} : vector<8x512xf32> to vector<8x256xf32>
    %c69 = arith.constant 69 : index
    %c0_449 = arith.constant 0 : index
    %c0_450 = arith.constant 0 : index
    %834 = vector.load %arg9[%c69, %c0_449, %c0_450] : memref<113x8x256xf32, #tpu.memory_space<vmem>>, vector<1x8x256xf32>
    %835 = vector.shape_cast %834 : vector<1x8x256xf32> to vector<8x256xf32>
    %836 = arith.mulf %833, %835 : vector<8x256xf32>
    %837 = arith.addf %832, %836 : vector<8x256xf32>
    %838 = vector.extract_strided_slice %485 {offsets = [0, 42], sizes = [8, 256], strides = [1, 1]} : vector<8x512xf32> to vector<8x256xf32>
    %c70 = arith.constant 70 : index
    %c0_451 = arith.constant 0 : index
    %c0_452 = arith.constant 0 : index
    %839 = vector.load %arg9[%c70, %c0_451, %c0_452] : memref<113x8x256xf32, #tpu.memory_space<vmem>>, vector<1x8x256xf32>
    %840 = vector.shape_cast %839 : vector<1x8x256xf32> to vector<8x256xf32>
    %841 = arith.mulf %838, %840 : vector<8x256xf32>
    %842 = arith.addf %837, %841 : vector<8x256xf32>
    %843 = vector.extract_strided_slice %485 {offsets = [0, 45], sizes = [8, 256], strides = [1, 1]} : vector<8x512xf32> to vector<8x256xf32>
    %c71 = arith.constant 71 : index
    %c0_453 = arith.constant 0 : index
    %c0_454 = arith.constant 0 : index
    %844 = vector.load %arg9[%c71, %c0_453, %c0_454] : memref<113x8x256xf32, #tpu.memory_space<vmem>>, vector<1x8x256xf32>
    %845 = vector.shape_cast %844 : vector<1x8x256xf32> to vector<8x256xf32>
    %846 = arith.mulf %843, %845 : vector<8x256xf32>
    %847 = arith.addf %842, %846 : vector<8x256xf32>
    %848 = vector.extract_strided_slice %485 {offsets = [0, 48], sizes = [8, 256], strides = [1, 1]} : vector<8x512xf32> to vector<8x256xf32>
    %c72 = arith.constant 72 : index
    %c0_455 = arith.constant 0 : index
    %c0_456 = arith.constant 0 : index
    %849 = vector.load %arg9[%c72, %c0_455, %c0_456] : memref<113x8x256xf32, #tpu.memory_space<vmem>>, vector<1x8x256xf32>
    %850 = vector.shape_cast %849 : vector<1x8x256xf32> to vector<8x256xf32>
    %851 = arith.mulf %848, %850 : vector<8x256xf32>
    %852 = arith.addf %847, %851 : vector<8x256xf32>
    %853 = vector.extract_strided_slice %485 {offsets = [0, 51], sizes = [8, 256], strides = [1, 1]} : vector<8x512xf32> to vector<8x256xf32>
    %c73 = arith.constant 73 : index
    %c0_457 = arith.constant 0 : index
    %c0_458 = arith.constant 0 : index
    %854 = vector.load %arg9[%c73, %c0_457, %c0_458] : memref<113x8x256xf32, #tpu.memory_space<vmem>>, vector<1x8x256xf32>
    %855 = vector.shape_cast %854 : vector<1x8x256xf32> to vector<8x256xf32>
    %856 = arith.mulf %853, %855 : vector<8x256xf32>
    %857 = arith.addf %852, %856 : vector<8x256xf32>
    %858 = vector.extract_strided_slice %485 {offsets = [0, 54], sizes = [8, 256], strides = [1, 1]} : vector<8x512xf32> to vector<8x256xf32>
    %c74 = arith.constant 74 : index
    %c0_459 = arith.constant 0 : index
    %c0_460 = arith.constant 0 : index
    %859 = vector.load %arg9[%c74, %c0_459, %c0_460] : memref<113x8x256xf32, #tpu.memory_space<vmem>>, vector<1x8x256xf32>
    %860 = vector.shape_cast %859 : vector<1x8x256xf32> to vector<8x256xf32>
    %861 = arith.mulf %858, %860 : vector<8x256xf32>
    %862 = arith.addf %857, %861 : vector<8x256xf32>
    %863 = vector.extract_strided_slice %485 {offsets = [0, 57], sizes = [8, 256], strides = [1, 1]} : vector<8x512xf32> to vector<8x256xf32>
    %c75 = arith.constant 75 : index
    %c0_461 = arith.constant 0 : index
    %c0_462 = arith.constant 0 : index
    %864 = vector.load %arg9[%c75, %c0_461, %c0_462] : memref<113x8x256xf32, #tpu.memory_space<vmem>>, vector<1x8x256xf32>
    %865 = vector.shape_cast %864 : vector<1x8x256xf32> to vector<8x256xf32>
    %866 = arith.mulf %863, %865 : vector<8x256xf32>
    %867 = arith.addf %862, %866 : vector<8x256xf32>
    %868 = vector.extract_strided_slice %485 {offsets = [0, 52], sizes = [8, 256], strides = [1, 1]} : vector<8x512xf32> to vector<8x256xf32>
    %c76 = arith.constant 76 : index
    %c0_463 = arith.constant 0 : index
    %c0_464 = arith.constant 0 : index
    %869 = vector.load %arg9[%c76, %c0_463, %c0_464] : memref<113x8x256xf32, #tpu.memory_space<vmem>>, vector<1x8x256xf32>
    %870 = vector.shape_cast %869 : vector<1x8x256xf32> to vector<8x256xf32>
    %871 = arith.mulf %868, %870 : vector<8x256xf32>
    %872 = arith.addf %867, %871 : vector<8x256xf32>
    %873 = vector.extract_strided_slice %485 {offsets = [0, 56], sizes = [8, 256], strides = [1, 1]} : vector<8x512xf32> to vector<8x256xf32>
    %c77 = arith.constant 77 : index
    %c0_465 = arith.constant 0 : index
    %c0_466 = arith.constant 0 : index
    %874 = vector.load %arg9[%c77, %c0_465, %c0_466] : memref<113x8x256xf32, #tpu.memory_space<vmem>>, vector<1x8x256xf32>
    %875 = vector.shape_cast %874 : vector<1x8x256xf32> to vector<8x256xf32>
    %876 = arith.mulf %873, %875 : vector<8x256xf32>
    %877 = arith.addf %872, %876 : vector<8x256xf32>
    %878 = vector.extract_strided_slice %485 {offsets = [0, 60], sizes = [8, 256], strides = [1, 1]} : vector<8x512xf32> to vector<8x256xf32>
    %c78 = arith.constant 78 : index
    %c0_467 = arith.constant 0 : index
    %c0_468 = arith.constant 0 : index
    %879 = vector.load %arg9[%c78, %c0_467, %c0_468] : memref<113x8x256xf32, #tpu.memory_space<vmem>>, vector<1x8x256xf32>
    %880 = vector.shape_cast %879 : vector<1x8x256xf32> to vector<8x256xf32>
    %881 = arith.mulf %878, %880 : vector<8x256xf32>
    %882 = arith.addf %877, %881 : vector<8x256xf32>
    %883 = vector.extract_strided_slice %485 {offsets = [0, 62], sizes = [8, 256], strides = [1, 1]} : vector<8x512xf32> to vector<8x256xf32>
    %c79 = arith.constant 79 : index
    %c0_469 = arith.constant 0 : index
    %c0_470 = arith.constant 0 : index
    %884 = vector.load %arg9[%c79, %c0_469, %c0_470] : memref<113x8x256xf32, #tpu.memory_space<vmem>>, vector<1x8x256xf32>
    %885 = vector.shape_cast %884 : vector<1x8x256xf32> to vector<8x256xf32>
    %886 = arith.mulf %883, %885 : vector<8x256xf32>
    %887 = arith.addf %882, %886 : vector<8x256xf32>
    %888 = vector.extract_strided_slice %485 {offsets = [0, 64], sizes = [8, 256], strides = [1, 1]} : vector<8x512xf32> to vector<8x256xf32>
    %c80 = arith.constant 80 : index
    %c0_471 = arith.constant 0 : index
    %c0_472 = arith.constant 0 : index
    %889 = vector.load %arg9[%c80, %c0_471, %c0_472] : memref<113x8x256xf32, #tpu.memory_space<vmem>>, vector<1x8x256xf32>
    %890 = vector.shape_cast %889 : vector<1x8x256xf32> to vector<8x256xf32>
    %891 = arith.mulf %888, %890 : vector<8x256xf32>
    %892 = arith.addf %887, %891 : vector<8x256xf32>
    %893 = vector.extract_strided_slice %485 {offsets = [0, 66], sizes = [8, 256], strides = [1, 1]} : vector<8x512xf32> to vector<8x256xf32>
    %c81 = arith.constant 81 : index
    %c0_473 = arith.constant 0 : index
    %c0_474 = arith.constant 0 : index
    %894 = vector.load %arg9[%c81, %c0_473, %c0_474] : memref<113x8x256xf32, #tpu.memory_space<vmem>>, vector<1x8x256xf32>
    %895 = vector.shape_cast %894 : vector<1x8x256xf32> to vector<8x256xf32>
    %896 = arith.mulf %893, %895 : vector<8x256xf32>
    %897 = arith.addf %892, %896 : vector<8x256xf32>
    %898 = vector.extract_strided_slice %485 {offsets = [0, 68], sizes = [8, 256], strides = [1, 1]} : vector<8x512xf32> to vector<8x256xf32>
    %c82 = arith.constant 82 : index
    %c0_475 = arith.constant 0 : index
    %c0_476 = arith.constant 0 : index
    %899 = vector.load %arg9[%c82, %c0_475, %c0_476] : memref<113x8x256xf32, #tpu.memory_space<vmem>>, vector<1x8x256xf32>
    %900 = vector.shape_cast %899 : vector<1x8x256xf32> to vector<8x256xf32>
    %901 = arith.mulf %898, %900 : vector<8x256xf32>
    %902 = arith.addf %897, %901 : vector<8x256xf32>
    %903 = vector.extract_strided_slice %485 {offsets = [0, 72], sizes = [8, 256], strides = [1, 1]} : vector<8x512xf32> to vector<8x256xf32>
    %c83 = arith.constant 83 : index
    %c0_477 = arith.constant 0 : index
    %c0_478 = arith.constant 0 : index
    %904 = vector.load %arg9[%c83, %c0_477, %c0_478] : memref<113x8x256xf32, #tpu.memory_space<vmem>>, vector<1x8x256xf32>
    %905 = vector.shape_cast %904 : vector<1x8x256xf32> to vector<8x256xf32>
    %906 = arith.mulf %903, %905 : vector<8x256xf32>
    %907 = arith.addf %902, %906 : vector<8x256xf32>
    %908 = vector.extract_strided_slice %485 {offsets = [0, 76], sizes = [8, 256], strides = [1, 1]} : vector<8x512xf32> to vector<8x256xf32>
    %c84 = arith.constant 84 : index
    %c0_479 = arith.constant 0 : index
    %c0_480 = arith.constant 0 : index
    %909 = vector.load %arg9[%c84, %c0_479, %c0_480] : memref<113x8x256xf32, #tpu.memory_space<vmem>>, vector<1x8x256xf32>
    %910 = vector.shape_cast %909 : vector<1x8x256xf32> to vector<8x256xf32>
    %911 = arith.mulf %908, %910 : vector<8x256xf32>
    %912 = arith.addf %907, %911 : vector<8x256xf32>
    %913 = vector.extract_strided_slice %485 {offsets = [0, 87], sizes = [8, 256], strides = [1, 1]} : vector<8x512xf32> to vector<8x256xf32>
    %c85 = arith.constant 85 : index
    %c0_481 = arith.constant 0 : index
    %c0_482 = arith.constant 0 : index
    %914 = vector.load %arg9[%c85, %c0_481, %c0_482] : memref<113x8x256xf32, #tpu.memory_space<vmem>>, vector<1x8x256xf32>
    %915 = vector.shape_cast %914 : vector<1x8x256xf32> to vector<8x256xf32>
    %916 = arith.mulf %913, %915 : vector<8x256xf32>
    %917 = arith.addf %912, %916 : vector<8x256xf32>
    %918 = vector.extract_strided_slice %485 {offsets = [0, 90], sizes = [8, 256], strides = [1, 1]} : vector<8x512xf32> to vector<8x256xf32>
    %c86 = arith.constant 86 : index
    %c0_483 = arith.constant 0 : index
    %c0_484 = arith.constant 0 : index
    %919 = vector.load %arg9[%c86, %c0_483, %c0_484] : memref<113x8x256xf32, #tpu.memory_space<vmem>>, vector<1x8x256xf32>
    %920 = vector.shape_cast %919 : vector<1x8x256xf32> to vector<8x256xf32>
    %921 = arith.mulf %918, %920 : vector<8x256xf32>
    %922 = arith.addf %917, %921 : vector<8x256xf32>
    %923 = vector.extract_strided_slice %485 {offsets = [0, 93], sizes = [8, 256], strides = [1, 1]} : vector<8x512xf32> to vector<8x256xf32>
    %c87 = arith.constant 87 : index
    %c0_485 = arith.constant 0 : index
    %c0_486 = arith.constant 0 : index
    %924 = vector.load %arg9[%c87, %c0_485, %c0_486] : memref<113x8x256xf32, #tpu.memory_space<vmem>>, vector<1x8x256xf32>
    %925 = vector.shape_cast %924 : vector<1x8x256xf32> to vector<8x256xf32>
    %926 = arith.mulf %923, %925 : vector<8x256xf32>
    %927 = arith.addf %922, %926 : vector<8x256xf32>
    %928 = vector.extract_strided_slice %485 {offsets = [0, 96], sizes = [8, 256], strides = [1, 1]} : vector<8x512xf32> to vector<8x256xf32>
    %c88 = arith.constant 88 : index
    %c0_487 = arith.constant 0 : index
    %c0_488 = arith.constant 0 : index
    %929 = vector.load %arg9[%c88, %c0_487, %c0_488] : memref<113x8x256xf32, #tpu.memory_space<vmem>>, vector<1x8x256xf32>
    %930 = vector.shape_cast %929 : vector<1x8x256xf32> to vector<8x256xf32>
    %931 = arith.mulf %928, %930 : vector<8x256xf32>
    %932 = arith.addf %927, %931 : vector<8x256xf32>
    %933 = vector.extract_strided_slice %485 {offsets = [0, 99], sizes = [8, 256], strides = [1, 1]} : vector<8x512xf32> to vector<8x256xf32>
    %c89 = arith.constant 89 : index
    %c0_489 = arith.constant 0 : index
    %c0_490 = arith.constant 0 : index
    %934 = vector.load %arg9[%c89, %c0_489, %c0_490] : memref<113x8x256xf32, #tpu.memory_space<vmem>>, vector<1x8x256xf32>
    %935 = vector.shape_cast %934 : vector<1x8x256xf32> to vector<8x256xf32>
    %936 = arith.mulf %933, %935 : vector<8x256xf32>
    %937 = arith.addf %932, %936 : vector<8x256xf32>
    %938 = vector.extract_strided_slice %485 {offsets = [0, 102], sizes = [8, 256], strides = [1, 1]} : vector<8x512xf32> to vector<8x256xf32>
    %c90 = arith.constant 90 : index
    %c0_491 = arith.constant 0 : index
    %c0_492 = arith.constant 0 : index
    %939 = vector.load %arg9[%c90, %c0_491, %c0_492] : memref<113x8x256xf32, #tpu.memory_space<vmem>>, vector<1x8x256xf32>
    %940 = vector.shape_cast %939 : vector<1x8x256xf32> to vector<8x256xf32>
    %941 = arith.mulf %938, %940 : vector<8x256xf32>
    %942 = arith.addf %937, %941 : vector<8x256xf32>
    %943 = vector.extract_strided_slice %485 {offsets = [0, 105], sizes = [8, 256], strides = [1, 1]} : vector<8x512xf32> to vector<8x256xf32>
    %c91 = arith.constant 91 : index
    %c0_493 = arith.constant 0 : index
    %c0_494 = arith.constant 0 : index
    %944 = vector.load %arg9[%c91, %c0_493, %c0_494] : memref<113x8x256xf32, #tpu.memory_space<vmem>>, vector<1x8x256xf32>
    %945 = vector.shape_cast %944 : vector<1x8x256xf32> to vector<8x256xf32>
    %946 = arith.mulf %943, %945 : vector<8x256xf32>
    %947 = arith.addf %942, %946 : vector<8x256xf32>
    %948 = vector.extract_strided_slice %485 {offsets = [0, 116], sizes = [8, 256], strides = [1, 1]} : vector<8x512xf32> to vector<8x256xf32>
    %c92 = arith.constant 92 : index
    %c0_495 = arith.constant 0 : index
    %c0_496 = arith.constant 0 : index
    %949 = vector.load %arg9[%c92, %c0_495, %c0_496] : memref<113x8x256xf32, #tpu.memory_space<vmem>>, vector<1x8x256xf32>
    %950 = vector.shape_cast %949 : vector<1x8x256xf32> to vector<8x256xf32>
    %951 = arith.mulf %948, %950 : vector<8x256xf32>
    %952 = arith.addf %947, %951 : vector<8x256xf32>
    %953 = vector.extract_strided_slice %485 {offsets = [0, 120], sizes = [8, 256], strides = [1, 1]} : vector<8x512xf32> to vector<8x256xf32>
    %c93 = arith.constant 93 : index
    %c0_497 = arith.constant 0 : index
    %c0_498 = arith.constant 0 : index
    %954 = vector.load %arg9[%c93, %c0_497, %c0_498] : memref<113x8x256xf32, #tpu.memory_space<vmem>>, vector<1x8x256xf32>
    %955 = vector.shape_cast %954 : vector<1x8x256xf32> to vector<8x256xf32>
    %956 = arith.mulf %953, %955 : vector<8x256xf32>
    %957 = arith.addf %952, %956 : vector<8x256xf32>
    %958 = vector.extract_strided_slice %485 {offsets = [0, 124], sizes = [8, 256], strides = [1, 1]} : vector<8x512xf32> to vector<8x256xf32>
    %c94 = arith.constant 94 : index
    %c0_499 = arith.constant 0 : index
    %c0_500 = arith.constant 0 : index
    %959 = vector.load %arg9[%c94, %c0_499, %c0_500] : memref<113x8x256xf32, #tpu.memory_space<vmem>>, vector<1x8x256xf32>
    %960 = vector.shape_cast %959 : vector<1x8x256xf32> to vector<8x256xf32>
    %961 = arith.mulf %958, %960 : vector<8x256xf32>
    %962 = arith.addf %957, %961 : vector<8x256xf32>
    %963 = vector.extract_strided_slice %485 {offsets = [0, 128], sizes = [8, 256], strides = [1, 1]} : vector<8x512xf32> to vector<8x256xf32>
    %c95 = arith.constant 95 : index
    %c0_501 = arith.constant 0 : index
    %c0_502 = arith.constant 0 : index
    %964 = vector.load %arg9[%c95, %c0_501, %c0_502] : memref<113x8x256xf32, #tpu.memory_space<vmem>>, vector<1x8x256xf32>
    %965 = vector.shape_cast %964 : vector<1x8x256xf32> to vector<8x256xf32>
    %966 = arith.mulf %963, %965 : vector<8x256xf32>
    %967 = arith.addf %962, %966 : vector<8x256xf32>
    %968 = vector.extract_strided_slice %485 {offsets = [0, 132], sizes = [8, 256], strides = [1, 1]} : vector<8x512xf32> to vector<8x256xf32>
    %c96 = arith.constant 96 : index
    %c0_503 = arith.constant 0 : index
    %c0_504 = arith.constant 0 : index
    %969 = vector.load %arg9[%c96, %c0_503, %c0_504] : memref<113x8x256xf32, #tpu.memory_space<vmem>>, vector<1x8x256xf32>
    %970 = vector.shape_cast %969 : vector<1x8x256xf32> to vector<8x256xf32>
    %971 = arith.mulf %968, %970 : vector<8x256xf32>
    %972 = arith.addf %967, %971 : vector<8x256xf32>
    %973 = vector.extract_strided_slice %485 {offsets = [0, 136], sizes = [8, 256], strides = [1, 1]} : vector<8x512xf32> to vector<8x256xf32>
    %c97 = arith.constant 97 : index
    %c0_505 = arith.constant 0 : index
    %c0_506 = arith.constant 0 : index
    %974 = vector.load %arg9[%c97, %c0_505, %c0_506] : memref<113x8x256xf32, #tpu.memory_space<vmem>>, vector<1x8x256xf32>
    %975 = vector.shape_cast %974 : vector<1x8x256xf32> to vector<8x256xf32>
    %976 = arith.mulf %973, %975 : vector<8x256xf32>
    %977 = arith.addf %972, %976 : vector<8x256xf32>
    %978 = vector.extract_strided_slice %485 {offsets = [0, 140], sizes = [8, 256], strides = [1, 1]} : vector<8x512xf32> to vector<8x256xf32>
    %c98 = arith.constant 98 : index
    %c0_507 = arith.constant 0 : index
    %c0_508 = arith.constant 0 : index
    %979 = vector.load %arg9[%c98, %c0_507, %c0_508] : memref<113x8x256xf32, #tpu.memory_space<vmem>>, vector<1x8x256xf32>
    %980 = vector.shape_cast %979 : vector<1x8x256xf32> to vector<8x256xf32>
    %981 = arith.mulf %978, %980 : vector<8x256xf32>
    %982 = arith.addf %977, %981 : vector<8x256xf32>
    %983 = vector.extract_strided_slice %485 {offsets = [0, 135], sizes = [8, 256], strides = [1, 1]} : vector<8x512xf32> to vector<8x256xf32>
    %c99 = arith.constant 99 : index
    %c0_509 = arith.constant 0 : index
    %c0_510 = arith.constant 0 : index
    %984 = vector.load %arg9[%c99, %c0_509, %c0_510] : memref<113x8x256xf32, #tpu.memory_space<vmem>>, vector<1x8x256xf32>
    %985 = vector.shape_cast %984 : vector<1x8x256xf32> to vector<8x256xf32>
    %986 = arith.mulf %983, %985 : vector<8x256xf32>
    %987 = arith.addf %982, %986 : vector<8x256xf32>
    %988 = vector.extract_strided_slice %485 {offsets = [0, 138], sizes = [8, 256], strides = [1, 1]} : vector<8x512xf32> to vector<8x256xf32>
    %c100 = arith.constant 100 : index
    %c0_511 = arith.constant 0 : index
    %c0_512 = arith.constant 0 : index
    %989 = vector.load %arg9[%c100, %c0_511, %c0_512] : memref<113x8x256xf32, #tpu.memory_space<vmem>>, vector<1x8x256xf32>
    %990 = vector.shape_cast %989 : vector<1x8x256xf32> to vector<8x256xf32>
    %991 = arith.mulf %988, %990 : vector<8x256xf32>
    %992 = arith.addf %987, %991 : vector<8x256xf32>
    %993 = vector.extract_strided_slice %485 {offsets = [0, 141], sizes = [8, 256], strides = [1, 1]} : vector<8x512xf32> to vector<8x256xf32>
    %c101 = arith.constant 101 : index
    %c0_513 = arith.constant 0 : index
    %c0_514 = arith.constant 0 : index
    %994 = vector.load %arg9[%c101, %c0_513, %c0_514] : memref<113x8x256xf32, #tpu.memory_space<vmem>>, vector<1x8x256xf32>
    %995 = vector.shape_cast %994 : vector<1x8x256xf32> to vector<8x256xf32>
    %996 = arith.mulf %993, %995 : vector<8x256xf32>
    %997 = arith.addf %992, %996 : vector<8x256xf32>
    %998 = vector.extract_strided_slice %485 {offsets = [0, 144], sizes = [8, 256], strides = [1, 1]} : vector<8x512xf32> to vector<8x256xf32>
    %c102 = arith.constant 102 : index
    %c0_515 = arith.constant 0 : index
    %c0_516 = arith.constant 0 : index
    %999 = vector.load %arg9[%c102, %c0_515, %c0_516] : memref<113x8x256xf32, #tpu.memory_space<vmem>>, vector<1x8x256xf32>
    %1000 = vector.shape_cast %999 : vector<1x8x256xf32> to vector<8x256xf32>
    %1001 = arith.mulf %998, %1000 : vector<8x256xf32>
    %1002 = arith.addf %997, %1001 : vector<8x256xf32>
    %1003 = vector.extract_strided_slice %485 {offsets = [0, 147], sizes = [8, 256], strides = [1, 1]} : vector<8x512xf32> to vector<8x256xf32>
    %c103 = arith.constant 103 : index
    %c0_517 = arith.constant 0 : index
    %c0_518 = arith.constant 0 : index
    %1004 = vector.load %arg9[%c103, %c0_517, %c0_518] : memref<113x8x256xf32, #tpu.memory_space<vmem>>, vector<1x8x256xf32>
    %1005 = vector.shape_cast %1004 : vector<1x8x256xf32> to vector<8x256xf32>
    %1006 = arith.mulf %1003, %1005 : vector<8x256xf32>
    %1007 = arith.addf %1002, %1006 : vector<8x256xf32>
    %1008 = vector.extract_strided_slice %485 {offsets = [0, 150], sizes = [8, 256], strides = [1, 1]} : vector<8x512xf32> to vector<8x256xf32>
    %c104 = arith.constant 104 : index
    %c0_519 = arith.constant 0 : index
    %c0_520 = arith.constant 0 : index
    %1009 = vector.load %arg9[%c104, %c0_519, %c0_520] : memref<113x8x256xf32, #tpu.memory_space<vmem>>, vector<1x8x256xf32>
    %1010 = vector.shape_cast %1009 : vector<1x8x256xf32> to vector<8x256xf32>
    %1011 = arith.mulf %1008, %1010 : vector<8x256xf32>
    %1012 = arith.addf %1007, %1011 : vector<8x256xf32>
    %1013 = vector.extract_strided_slice %485 {offsets = [0, 153], sizes = [8, 256], strides = [1, 1]} : vector<8x512xf32> to vector<8x256xf32>
    %c105 = arith.constant 105 : index
    %c0_521 = arith.constant 0 : index
    %c0_522 = arith.constant 0 : index
    %1014 = vector.load %arg9[%c105, %c0_521, %c0_522] : memref<113x8x256xf32, #tpu.memory_space<vmem>>, vector<1x8x256xf32>
    %1015 = vector.shape_cast %1014 : vector<1x8x256xf32> to vector<8x256xf32>
    %1016 = arith.mulf %1013, %1015 : vector<8x256xf32>
    %1017 = arith.addf %1012, %1016 : vector<8x256xf32>
    %1018 = vector.extract_strided_slice %485 {offsets = [0, 180], sizes = [8, 256], strides = [1, 1]} : vector<8x512xf32> to vector<8x256xf32>
    %c106 = arith.constant 106 : index
    %c0_523 = arith.constant 0 : index
    %c0_524 = arith.constant 0 : index
    %1019 = vector.load %arg9[%c106, %c0_523, %c0_524] : memref<113x8x256xf32, #tpu.memory_space<vmem>>, vector<1x8x256xf32>
    %1020 = vector.shape_cast %1019 : vector<1x8x256xf32> to vector<8x256xf32>
    %1021 = arith.mulf %1018, %1020 : vector<8x256xf32>
    %1022 = arith.addf %1017, %1021 : vector<8x256xf32>
    %1023 = vector.extract_strided_slice %485 {offsets = [0, 184], sizes = [8, 256], strides = [1, 1]} : vector<8x512xf32> to vector<8x256xf32>
    %c107 = arith.constant 107 : index
    %c0_525 = arith.constant 0 : index
    %c0_526 = arith.constant 0 : index
    %1024 = vector.load %arg9[%c107, %c0_525, %c0_526] : memref<113x8x256xf32, #tpu.memory_space<vmem>>, vector<1x8x256xf32>
    %1025 = vector.shape_cast %1024 : vector<1x8x256xf32> to vector<8x256xf32>
    %1026 = arith.mulf %1023, %1025 : vector<8x256xf32>
    %1027 = arith.addf %1022, %1026 : vector<8x256xf32>
    %1028 = vector.extract_strided_slice %485 {offsets = [0, 188], sizes = [8, 256], strides = [1, 1]} : vector<8x512xf32> to vector<8x256xf32>
    %c108 = arith.constant 108 : index
    %c0_527 = arith.constant 0 : index
    %c0_528 = arith.constant 0 : index
    %1029 = vector.load %arg9[%c108, %c0_527, %c0_528] : memref<113x8x256xf32, #tpu.memory_space<vmem>>, vector<1x8x256xf32>
    %1030 = vector.shape_cast %1029 : vector<1x8x256xf32> to vector<8x256xf32>
    %1031 = arith.mulf %1028, %1030 : vector<8x256xf32>
    %1032 = arith.addf %1027, %1031 : vector<8x256xf32>
    %1033 = vector.extract_strided_slice %485 {offsets = [0, 192], sizes = [8, 256], strides = [1, 1]} : vector<8x512xf32> to vector<8x256xf32>
    %c109 = arith.constant 109 : index
    %c0_529 = arith.constant 0 : index
    %c0_530 = arith.constant 0 : index
    %1034 = vector.load %arg9[%c109, %c0_529, %c0_530] : memref<113x8x256xf32, #tpu.memory_space<vmem>>, vector<1x8x256xf32>
    %1035 = vector.shape_cast %1034 : vector<1x8x256xf32> to vector<8x256xf32>
    %1036 = arith.mulf %1033, %1035 : vector<8x256xf32>
    %1037 = arith.addf %1032, %1036 : vector<8x256xf32>
    %1038 = vector.extract_strided_slice %485 {offsets = [0, 196], sizes = [8, 256], strides = [1, 1]} : vector<8x512xf32> to vector<8x256xf32>
    %c110 = arith.constant 110 : index
    %c0_531 = arith.constant 0 : index
    %c0_532 = arith.constant 0 : index
    %1039 = vector.load %arg9[%c110, %c0_531, %c0_532] : memref<113x8x256xf32, #tpu.memory_space<vmem>>, vector<1x8x256xf32>
    %1040 = vector.shape_cast %1039 : vector<1x8x256xf32> to vector<8x256xf32>
    %1041 = arith.mulf %1038, %1040 : vector<8x256xf32>
    %1042 = arith.addf %1037, %1041 : vector<8x256xf32>
    %1043 = vector.extract_strided_slice %485 {offsets = [0, 200], sizes = [8, 256], strides = [1, 1]} : vector<8x512xf32> to vector<8x256xf32>
    %c111 = arith.constant 111 : index
    %c0_533 = arith.constant 0 : index
    %c0_534 = arith.constant 0 : index
    %1044 = vector.load %arg9[%c111, %c0_533, %c0_534] : memref<113x8x256xf32, #tpu.memory_space<vmem>>, vector<1x8x256xf32>
    %1045 = vector.shape_cast %1044 : vector<1x8x256xf32> to vector<8x256xf32>
    %1046 = arith.mulf %1043, %1045 : vector<8x256xf32>
    %1047 = arith.addf %1042, %1046 : vector<8x256xf32>
    %1048 = vector.extract_strided_slice %485 {offsets = [0, 204], sizes = [8, 256], strides = [1, 1]} : vector<8x512xf32> to vector<8x256xf32>
    %c112 = arith.constant 112 : index
    %c0_535 = arith.constant 0 : index
    %c0_536 = arith.constant 0 : index
    %1049 = vector.load %arg9[%c112, %c0_535, %c0_536] : memref<113x8x256xf32, #tpu.memory_space<vmem>>, vector<1x8x256xf32>
    %1050 = vector.shape_cast %1049 : vector<1x8x256xf32> to vector<8x256xf32>
    %1051 = arith.mulf %1048, %1050 : vector<8x256xf32>
    %1052 = arith.addf %1047, %1051 : vector<8x256xf32>
    %c0_537 = arith.constant 0 : index
    %c0_538 = arith.constant 0 : index
    %1053 = vector.load %arg5[%c0_537, %c0_538] : memref<8x8xf32, #tpu.memory_space<vmem>>, vector<8x8xf32>
    %cst_539 = arith.constant dense<0.000000e+00> : vector<8x256xf32>
    %1054 = tpu.matmul %1053, %1052, %cst_539 {dimension_numbers = #tpu.dot_dimension_numbers<[1], [0], [0], [1], [0, 0, 1, 1], [], []>} : vector<8x8xf32>, vector<8x256xf32>, vector<8x256xf32> -> vector<8x256xf32>
    %1055 = vector.broadcast %8 : vector<8x1xf32> to vector<8x256xf32>
    %1056 = arith.addf %1054, %1055 : vector<8x256xf32>
    %1057 = arith.mulf %1056, %484 : vector<8x256xf32>
    %1058 = arith.mulf %37, %1057 : vector<8x256xf32>
    %c0_540 = arith.constant 0 : index
    %c0_541 = arith.constant 0 : index
    %1059 = vector.load %arg6[%c0_540, %c0_541] : memref<8x8xf32, #tpu.memory_space<vmem>>, vector<8x8xf32>
    %cst_542 = arith.constant dense<0.000000e+00> : vector<8x256xf32>
    %1060 = tpu.matmul %1059, %1058, %cst_542 {dimension_numbers = #tpu.dot_dimension_numbers<[1], [0], [0], [1], [0, 0, 1, 1], [], []>} : vector<8x8xf32>, vector<8x256xf32>, vector<8x256xf32> -> vector<8x256xf32>
    %1061 = vector.broadcast %9 : vector<8x1xf32> to vector<8x256xf32>
    %1062 = arith.addf %1060, %1061 : vector<8x256xf32>
    %1063 = vector.broadcast %10 : vector<8x1xf32> to vector<8x256xf32>
    %1064 = arith.mulf %1062, %1063 : vector<8x256xf32>
    %1065 = arith.addf %1064, %1 : vector<8x256xf32>
    %c0_543 = arith.constant 0 : index
    %c0_544 = arith.constant 0 : index
    %c0_545 = arith.constant 0 : index
    %1066 = vector.load %arg10[%c0_543, %c0_544, %c0_545] : memref<1x8x256xf32, #tpu.memory_space<vmem>>, vector<1x8x256xf32>
    %1067 = vector.shape_cast %1066 : vector<1x8x256xf32> to vector<8x256xf32>
    %1068 = vector.shape_cast %1065 : vector<8x256xf32> to vector<1x8x256xf32>
    tpu.vector_store %arg10[%c0_543, %c0_544, %c0_545], %1068 {strides = array<i32>} : memref<1x8x256xf32, #tpu.memory_space<vmem>>, vector<1x8x256xf32>,
    return
  }
  func.func @transform_0(%arg0: i32) -> (i32, i32, i32) {
    %c0_i32 = arith.constant 0 : i32
    %c0_i32_0 = arith.constant 0 : i32
    %c0_i32_1 = arith.constant 0 : i32
    return %arg0, %c0_i32, %c0_i32_0 : i32, i32, i32
  }
  func.func @transform_1(%arg0: i32) -> (i32, i32) {
    %c0_i32 = arith.constant 0 : i32
    %c0_i32_0 = arith.constant 0 : i32
    %c0_i32_1 = arith.constant 0 : i32
    return %c0_i32, %c0_i32_0 : i32, i32
  }
  func.func @transform_2(%arg0: i32) -> (i32, i32) {
    %c0_i32 = arith.constant 0 : i32
    %c0_i32_0 = arith.constant 0 : i32
    %c0_i32_1 = arith.constant 0 : i32
    return %c0_i32, %c0_i32_0 : i32, i32
  }
  func.func @transform_3(%arg0: i32) -> (i32, i32) {
    %c0_i32 = arith.constant 0 : i32
    %c0_i32_0 = arith.constant 0 : i32
    %c0_i32_1 = arith.constant 0 : i32
    return %c0_i32, %c0_i32_0 : i32, i32
  }
  func.func @transform_4(%arg0: i32) -> (i32, i32) {
    %c0_i32 = arith.constant 0 : i32
    %c0_i32_0 = arith.constant 0 : i32
    %c0_i32_1 = arith.constant 0 : i32
    return %c0_i32, %c0_i32_0 : i32, i32
  }
  func.func @transform_5(%arg0: i32) -> (i32, i32) {
    %c0_i32 = arith.constant 0 : i32
    %c0_i32_0 = arith.constant 0 : i32
    %c0_i32_1 = arith.constant 0 : i32
    return %c0_i32, %c0_i32_0 : i32, i32
  }
  func.func @transform_6(%arg0: i32) -> (i32, i32, i32) {
    %c0_i32 = arith.constant 0 : i32
    %c0_i32_0 = arith.constant 0 : i32
    %c0_i32_1 = arith.constant 0 : i32
    %c0_i32_2 = arith.constant 0 : i32
    return %c0_i32, %c0_i32_0, %c0_i32_1 : i32, i32, i32
  }
  func.func @transform_7(%arg0: i32) -> (i32, i32, i32) {
    %c0_i32 = arith.constant 0 : i32
    %c0_i32_0 = arith.constant 0 : i32
    %c0_i32_1 = arith.constant 0 : i32
    %c0_i32_2 = arith.constant 0 : i32
    return %c0_i32, %c0_i32_0, %c0_i32_1 : i32, i32, i32
  }
  func.func @transform_8(%arg0: i32) -> (i32, i32, i32) {
    %c0_i32 = arith.constant 0 : i32
    %c0_i32_0 = arith.constant 0 : i32
    %c0_i32_1 = arith.constant 0 : i32
    %c0_i32_2 = arith.constant 0 : i32
    return %c0_i32, %c0_i32_0, %c0_i32_1 : i32, i32, i32
  }
  func.func @transform_9(%arg0: i32) -> (i32, i32, i32) {
    %c0_i32 = arith.constant 0 : i32
    %c0_i32_0 = arith.constant 0 : i32
    %c0_i32_1 = arith.constant 0 : i32
    return %arg0, %c0_i32, %c0_i32_0 : i32, i32, i32
  }
}

</mosaic_0001>

<llo_original>
// kernel: mlka_forward.1
$region0: #{mlka_forward.1}
  #allocation0 [shape = 'u32[]', space=smem, size = 0x4, offset = 0x4, fixed_abs, tag = 'smem constant byte address 0x4 - core index']
  #allocation1 [shape = 'u32[72,128]{1,0:T(1,128)}', space=vmem, size = 0x9000, scoped, tag = 'internal scratch']
  %s0 = inlined_call_operand.vmem [shape: f32[2,8,256], index: 0, kind: input, shape index: {}]
  %s1 = inlined_call_operand.vmem [shape: f32[8,8], index: 1, kind: input, shape index: {}]
  %s2 = inlined_call_operand.vmem [shape: f32[16,8], index: 2, kind: input, shape index: {}]
  %s3 = inlined_call_operand.vmem [shape: f32[16,1], index: 3, kind: input, shape index: {}]
  %s4 = inlined_call_operand.vmem [shape: f32[8,8], index: 4, kind: input, shape index: {}]
  %s5 = inlined_call_operand.vmem [shape: f32[8,8], index: 5, kind: input, shape index: {}]
  %s6 = inlined_call_operand.hbm [shape: f32[49,8,256], index: 6, kind: input, shape index: {}]
  %s7 = inlined_call_operand.hbm [shape: f32[49,8,256], index: 7, kind: input, shape index: {}]
  %s8 = inlined_call_operand.hbm [shape: f32[113,8,256], index: 8, kind: input, shape index: {}]
  %s9 = inlined_call_operand.vmem [shape: f32[2,8,256], index: 9, kind: output, shape index: {}]
  %s10 = sld [smem:[#allocation0]]
  $region81: #{mlka_forward.1} parent=0
    _
  %s12 = ssub.s32 1, %s10
  %s13 = scalar_select 0, %s12, %s10
  $region1: #{mlka_forward.1} parent=0
    #allocation2 [shape = 'u8[401408]{0}', space=vmem, size = 0x62000, scoped, tag = 'input window, operand 6, single buffered']
    #allocation3 [shape = 's32[2]{0}', space=sflag, size = 0x8, scoped, tag = 'scoped memory for mlka_forward.1']
    #allocation4 [shape = 'u8[401408]{0}', space=vmem, size = 0x62000, scoped, tag = 'input window, operand 7, single buffered']
    #allocation5 [shape = 's32[1]{0}', space=sflag, size = 0x4, scoped, tag = 'scoped memory for mlka_forward.1']
    #allocation6 [shape = 'u8[925696]{0}', space=vmem, size = 0xe2000, scoped, tag = 'input window, operand 8, single buffered']
    %14 = vsyncpa [#allocation3], 0
    %15 = vsyncpa [#allocation5], 0
    loop: start=0, step=1, limit=4
    $region2: #{mlka_forward.1} parent=1 // loop_pre_header
      _
    $region3: #{mlka_forward.1} parent=1 // loop_header
      %s17 = sphi 0, %s21
      %p18 = scmp.ge.s32.totalorder %s17, 4
      %s27 = sphi 0, %s29
      %s30 = sphi 0, %s27
      %s31 = sphi 0, %s30
      %s47 = sphi 0, %s31
      %s51 = sphi 0, %s51
      %s53 = sphi 0, %s51
      %s54 = sphi 0, %s53
      %s68 = sphi 0, %s54
      %s72 = sphi 0, %s72
      %s74 = sphi 0, %s72
      %s75 = sphi 0, %s74
      %s89 = sphi 0, %s75
      %s93 = sphi 0, %s93
      %s95 = sphi 0, %s93
      %s96 = sphi 0, %s95
      %s110 = sphi 0, %s96
      %s114 = sphi 0, %s114
      %s116 = sphi 0, %s114
      %s117 = sphi 0, %s116
      %s131 = sphi 0, %s117
      %s135 = sphi 0, %s135
      %s137 = sphi 0, %s135
      %s138 = sphi 0, %s137
      %s152 = sphi 0, %s138
      %s156 = sphi 0, %s156
      %s158 = sphi 0, %s156
      %s159 = sphi 0, %s158
      %s173 = sphi 0, %s159
      %s177 = sphi 0, %s177
      %s179 = sphi 0, %s177
      %s180 = sphi 0, %s179
      %s194 = sphi 0, %s180
      %s198 = sphi 0, %s198
      %s200 = sphi 0, %s198
      %s201 = sphi 0, %s200
      %s215 = sphi 0, %s201
      %s221 = sphi 0, %s223
      %s224 = sphi 0, %s221
      %s225 = sphi 0, %s224
      %s241 = sphi 0, %s225
    $region4: #{mlka_forward.1} parent=1 // loop_header_branch
      %20 = sbr.rel (%p18) target = $region8
    $region5: #{mlka_forward.1} parent=1 // loop_body
      %s22 = ssub.s32 %s17, 1
      %s23 = ssub.s32 %s17, 2
      %s24 = sadd.s32 %s17, 1
      %s25 = ssub.s32 %s17, %s24
      %p26 = scmp.eq.s32.totalorder %s25, 0
      %s28 = sadd.s32 %s27, 1
      %s29 = scalar_select %p26, %s27, %s28
      %p32 = pneg %p26
      %p33 = scmp.eq.s32.totalorder %s17, 1
      %p34 = por %p32, %p33
      %p35 = scmp.ne.s32.totalorder %s27, %s30
      %p36 = scmp.eq.s32.totalorder %s17, 0
      %p37 = por %p35, %p36
      %p38 = scmp.ne.s32.totalorder %s27, %s30
      %p39 = scmp.eq.s32.totalorder %s22, 1
      %p40 = por %p38, %p39
      %p41 = scmp.ne.s32.totalorder %s30, %s31
      %p42 = scmp.eq.s32.totalorder %s22, 0
      %p43 = por %p41, %p42
      %p44 = scmp.ne.s32.totalorder %s30, %s31
      %p45 = scmp.eq.s32.totalorder %s23, 1
      %p46 = por %p44, %p45
      %p48 = scmp.ne.s32.totalorder %s31, %s47
      %p49 = scmp.eq.s32.totalorder %s23, 0
      %p50 = por %p48, %p49
      %s52 = sadd.s32 %s51, 1
      %p55 = scmp.eq.s32.totalorder %s17, 1
      %p56 = scmp.ne.s32.totalorder %s51, %s53
      %p57 = scmp.eq.s32.totalorder %s17, 0
      %p58 = por %p56, %p57
      %p59 = scmp.ne.s32.totalorder %s51, %s53
      %p60 = scmp.eq.s32.totalorder %s22, 1
      %p61 = por %p59, %p60
      %p62 = scmp.ne.s32.totalorder %s53, %s54
      %p63 = scmp.eq.s32.totalorder %s22, 0
      %p64 = por %p62, %p63
      %p65 = scmp.ne.s32.totalorder %s53, %s54
      %p66 = scmp.eq.s32.totalorder %s23, 1
      %p67 = por %p65, %p66
      %p69 = scmp.ne.s32.totalorder %s54, %s68
      %p70 = scmp.eq.s32.totalorder %s23, 0
      %p71 = por %p69, %p70
      %s73 = sadd.s32 %s72, 1
      %p76 = scmp.eq.s32.totalorder %s17, 1
      %p77 = scmp.ne.s32.totalorder %s72, %s74
      %p78 = scmp.eq.s32.totalorder %s17, 0
      %p79 = por %p77, %p78
      %p80 = scmp.ne.s32.totalorder %s72, %s74
      %p81 = scmp.eq.s32.totalorder %s22, 1
      %p82 = por %p80, %p81
      %p83 = scmp.ne.s32.totalorder %s74, %s75
      %p84 = scmp.eq.s32.totalorder %s22, 0
      %p85 = por %p83, %p84
      %p86 = scmp.ne.s32.totalorder %s74, %s75
      %p87 = scmp.eq.s32.totalorder %s23, 1
      %p88 = por %p86, %p87
      %p90 = scmp.ne.s32.totalorder %s75, %s89
      %p91 = scmp.eq.s32.totalorder %s23, 0
      %p92 = por %p90, %p91
      %s94 = sadd.s32 %s93, 1
      %p97 = scmp.eq.s32.totalorder %s17, 1
      %p98 = scmp.ne.s32.totalorder %s93, %s95
      %p99 = scmp.eq.s32.totalorder %s17, 0
      %p100 = por %p98, %p99
      %p101 = scmp.ne.s32.totalorder %s93, %s95
      %p102 = scmp.eq.s32.totalorder %s22, 1
      %p103 = por %p101, %p102
      %p104 = scmp.ne.s32.totalorder %s95, %s96
      %p105 = scmp.eq.s32.totalorder %s22, 0
      %p106 = por %p104, %p105
      %p107 = scmp.ne.s32.totalorder %s95, %s96
      %p108 = scmp.eq.s32.totalorder %s23, 1
      %p109 = por %p107, %p108
      %p111 = scmp.ne.s32.totalorder %s96, %s110
      %p112 = scmp.eq.s32.totalorder %s23, 0
      %p113 = por %p111, %p112
      %s115 = sadd.s32 %s114, 1
      %p118 = scmp.eq.s32.totalorder %s17, 1
      %p119 = scmp.ne.s32.totalorder %s114, %s116
      %p120 = scmp.eq.s32.totalorder %s17, 0
      %p121 = por %p119, %p120
      %p122 = scmp.ne.s32.totalorder %s114, %s116
      %p123 = scmp.eq.s32.totalorder %s22, 1
      %p124 = por %p122, %p123
      %p125 = scmp.ne.s32.totalorder %s116, %s117
      %p126 = scmp.eq.s32.totalorder %s22, 0
      %p127 = por %p125, %p126
      %p128 = scmp.ne.s32.totalorder %s116, %s117
      %p129 = scmp.eq.s32.totalorder %s23, 1
      %p130 = por %p128, %p129
      %p132 = scmp.ne.s32.totalorder %s117, %s131
      %p133 = scmp.eq.s32.totalorder %s23, 0
      %p134 = por %p132, %p133
      %s136 = sadd.s32 %s135, 1
      %p139 = scmp.eq.s32.totalorder %s17, 1
      %p140 = scmp.ne.s32.totalorder %s135, %s137
      %p141 = scmp.eq.s32.totalorder %s17, 0
      %p142 = por %p140, %p141
      %p143 = scmp.ne.s32.totalorder %s135, %s137
      %p144 = scmp.eq.s32.totalorder %s22, 1
      %p145 = por %p143, %p144
      %p146 = scmp.ne.s32.totalorder %s137, %s138
      %p147 = scmp.eq.s32.totalorder %s22, 0
      %p148 = por %p146, %p147
      %p149 = scmp.ne.s32.totalorder %s137, %s138
      %p150 = scmp.eq.s32.totalorder %s23, 1
      %p151 = por %p149, %p150
      %p153 = scmp.ne.s32.totalorder %s138, %s152
      %p154 = scmp.eq.s32.totalorder %s23, 0
      %p155 = por %p153, %p154
      %s157 = sadd.s32 %s156, 1
      %p160 = scmp.eq.s32.totalorder %s17, 1
      %p161 = scmp.ne.s32.totalorder %s156, %s158
      %p162 = scmp.eq.s32.totalorder %s17, 0
      %p163 = por %p161, %p162
      %p164 = scmp.ne.s32.totalorder %s156, %s158
      %p165 = scmp.eq.s32.totalorder %s22, 1
      %p166 = por %p164, %p165
      %p167 = scmp.ne.s32.totalorder %s158, %s159
      %p168 = scmp.eq.s32.totalorder %s22, 0
      %p169 = por %p167, %p168
      %p170 = scmp.ne.s32.totalorder %s158, %s159
      %p171 = scmp.eq.s32.totalorder %s23, 1
      %p172 = por %p170, %p171
      %p174 = scmp.ne.s32.totalorder %s159, %s173
      %p175 = scmp.eq.s32.totalorder %s23, 0
      %p176 = por %p174, %p175
      %s178 = sadd.s32 %s177, 1
      %p181 = scmp.eq.s32.totalorder %s17, 1
      %p182 = scmp.ne.s32.totalorder %s177, %s179
      %p183 = scmp.eq.s32.totalorder %s17, 0
      %p184 = por %p182, %p183
      %p185 = scmp.ne.s32.totalorder %s177, %s179
      %p186 = scmp.eq.s32.totalorder %s22, 1
      %p187 = por %p185, %p186
      %p188 = scmp.ne.s32.totalorder %s179, %s180
      %p189 = scmp.eq.s32.totalorder %s22, 0
      %p190 = por %p188, %p189
      %p191 = scmp.ne.s32.totalorder %s179, %s180
      %p192 = scmp.eq.s32.totalorder %s23, 1
      %p193 = por %p191, %p192
      %p195 = scmp.ne.s32.totalorder %s180, %s194
      %p196 = scmp.eq.s32.totalorder %s23, 0
      %p197 = por %p195, %p196
      %s199 = sadd.s32 %s198, 1
      %p202 = scmp.eq.s32.totalorder %s17, 1
      %p203 = scmp.ne.s32.totalorder %s198, %s200
      %p204 = scmp.eq.s32.totalorder %s17, 0
      %p205 = por %p203, %p204
      %p206 = scmp.ne.s32.totalorder %s198, %s200
      %p207 = scmp.eq.s32.totalorder %s22, 1
      %p208 = por %p206, %p207
      %p209 = scmp.ne.s32.totalorder %s200, %s201
      %p210 = scmp.eq.s32.totalorder %s22, 0
      %p211 = por %p209, %p210
      %p212 = scmp.ne.s32.totalorder %s200, %s201
      %p213 = scmp.eq.s32.totalorder %s23, 1
      %p214 = por %p212, %p213
      %p216 = scmp.ne.s32.totalorder %s201, %s215
      %p217 = scmp.eq.s32.totalorder %s23, 0
      %p218 = por %p216, %p217
      %s219 = ssub.s32 %s17, %s24
      %p220 = scmp.eq.s32.totalorder %s219, 0
      %s222 = sadd.s32 %s221, 1
      %s223 = scalar_select %p220, %s221, %s222
      %p226 = pneg %p220
      %p227 = scmp.eq.s32.totalorder %s17, 1
      %p228 = por %p226, %p227
      %p229 = scmp.ne.s32.totalorder %s221, %s224
      %p230 = scmp.eq.s32.totalorder %s17, 0
      %p231 = por %p229, %p230
      %p232 = scmp.ne.s32.totalorder %s221, %s224
      %p233 = scmp.eq.s32.totalorder %s22, 1
      %p234 = por %p232, %p233
      %p235 = scmp.ne.s32.totalorder %s224, %s225
      %p236 = scmp.eq.s32.totalorder %s22, 0
      %p237 = por %p235, %p236
      %p238 = scmp.ne.s32.totalorder %s224, %s225
      %p239 = scmp.eq.s32.totalorder %s23, 1
      %p240 = por %p238, %p239
      %p242 = scmp.ne.s32.totalorder %s225, %s241
      %p243 = scmp.eq.s32.totalorder %s23, 0
      %p244 = por %p242, %p243
      %p245 = scmp.le.s32.totalorder 1, %s17
      %p246 = scmp.lt.s32.totalorder %s17, 3
      %p247 = pnand %p245, %p246
      %p248 = pneg %p247
      // Predicated region
      $region9: #{mlka_forward.1} parent=5 // pred_check
        _
      $region10: #{mlka_forward.1} parent=5 // pred_check_branch
        %250 = sbr.rel (%p247) target = $region12
      $region11: #{mlka_forward.1} parent=5 // pred_region
        %s251 = ssub.s32 %s17, 1
        // Predicated region
        $region13: #{mlka_forward.1} parent=11 // pred_check
          %p252 = pneg %p64
        $region14: #{mlka_forward.1} parent=11 // pred_check_branch
          %254 = sbr.rel (%p252) target = $region16
        $region15: #{mlka_forward.1} parent=11 // pred_region
          _
        $region16: #{mlka_forward.1} parent=11 // pred_fallthru
          _
        // Predicated region
        $region17: #{mlka_forward.1} parent=11 // pred_check
          %p255 = pneg %p85
        $region18: #{mlka_forward.1} parent=11 // pred_check_branch
          %257 = sbr.rel (%p255) target = $region20
        $region19: #{mlka_forward.1} parent=11 // pred_region
          _
        $region20: #{mlka_forward.1} parent=11 // pred_fallthru
          _
        // Predicated region
        $region21: #{mlka_forward.1} parent=11 // pred_check
          %p258 = pneg %p106
        $region22: #{mlka_forward.1} parent=11 // pred_check_branch
          %260 = sbr.rel (%p258) target = $region24
        $region23: #{mlka_forward.1} parent=11 // pred_region
          _
        $region24: #{mlka_forward.1} parent=11 // pred_fallthru
          _
        // Predicated region
        $region25: #{mlka_forward.1} parent=11 // pred_check
          %p261 = pneg %p127
        $region26: #{mlka_forward.1} parent=11 // pred_check_branch
          %263 = sbr.rel (%p261) target = $region28
        $region27: #{mlka_forward.1} parent=11 // pred_region
          _
        $region28: #{mlka_forward.1} parent=11 // pred_fallthru
          _
        // Predicated region
        $region29: #{mlka_forward.1} parent=11 // pred_check
          %p264 = pneg %p148
        $region30: #{mlka_forward.1} parent=11 // pred_check_branch
          %266 = sbr.rel (%p264) target = $region32
        $region31: #{mlka_forward.1} parent=11 // pred_region
          _
        $region32: #{mlka_forward.1} parent=11 // pred_fallthru
          _
        // Predicated region
        $region33: #{mlka_forward.1} parent=11 // pred_check
          %p267 = pneg %p169
        $region34: #{mlka_forward.1} parent=11 // pred_check_branch
          %269 = sbr.rel (%p267) target = $region36
        $region35: #{mlka_forward.1} parent=11 // pred_region
          %271 = vsyncadd [#allocation3], 0
          %s272 = sshll.u32 %s6, 4
          %s273 = int_to_ptr.hbm [resolvable:$true] %s272
          %s274 = sshll.u32 [#allocation2], 4
          %s275 = int_to_ptr.vmem [resolvable:$true] %s274
          %280 = dma.hbm_to_vmem [thread:$0]  %s273, 12544, %s275, [#allocation3], 256, 256, 16
        $region36: #{mlka_forward.1} parent=11 // pred_fallthru
          _
        // Predicated region
        $region37: #{mlka_forward.1} parent=11 // pred_check
          %p281 = pneg %p190
        $region38: #{mlka_forward.1} parent=11 // pred_check_branch
          %283 = sbr.rel (%p281) target = $region40
        $region39: #{mlka_forward.1} parent=11 // pred_region
          %285 = vsyncadd [#allocation5], 0
          %s286 = sshll.u32 %s7, 4
          %s287 = int_to_ptr.hbm [resolvable:$true] %s286
          %s288 = sshll.u32 [#allocation4], 4
          %s289 = int_to_ptr.vmem [resolvable:$true] %s288
          %294 = dma.hbm_to_vmem [thread:$0]  %s287, 12544, %s289, [#allocation5], 256, 256, 16
        $region40: #{mlka_forward.1} parent=11 // pred_fallthru
          _
        // Predicated region
        $region41: #{mlka_forward.1} parent=11 // pred_check
          %p295 = pneg %p211
        $region42: #{mlka_forward.1} parent=11 // pred_check_branch
          %297 = sbr.rel (%p295) target = $region44
        $region43: #{mlka_forward.1} parent=11 // pred_region
          %299 = vsyncadd [#allocation5], 0
          %s300 = sshll.u32 %s8, 4
          %s301 = int_to_ptr.hbm [resolvable:$true] %s300
          %s302 = sshll.u32 [#allocation6], 4
          %s303 = int_to_ptr.vmem [resolvable:$true] %s302
          %308 = dma.hbm_to_vmem [thread:$0]  %s301, 28928, %s303, [#allocation5], 256, 256, 16
        $region44: #{mlka_forward.1} parent=11 // pred_fallthru
          _
      $region12: #{mlka_forward.1} parent=5 // pred_fallthru
        _
      %p309 = scmp.lt.s32.totalorder %s17, 2
      // Predicated region
      $region45: #{mlka_forward.1} parent=5 // pred_check
        %p310 = pneg %p309
      $region46: #{mlka_forward.1} parent=5 // pred_check_branch
        %312 = sbr.rel (%p310) target = $region48
      $region47: #{mlka_forward.1} parent=5 // pred_region
        // Predicated region
        $region49: #{mlka_forward.1} parent=47 // pred_check
          %p313 = pneg %p37
        $region50: #{mlka_forward.1} parent=47 // pred_check_branch
          %315 = sbr.rel (%p313) target = $region52
        $region51: #{mlka_forward.1} parent=47 // pred_region
          %p316 = scmp.lt.s32.totalorder %s17, 1
          %s317 = scalar_select %p316, %s17, 1
          %s318 = smul.addr %s317, 2
          %s319 = smul.addr %s318, 8
          %s320 = scalar_lea.vmem %s0, %s319
        $region52: #{mlka_forward.1} parent=47 // pred_fallthru
          _
      $region48: #{mlka_forward.1} parent=5 // pred_fallthru
        _
      %p321 = scmp.le.s32.totalorder 1, %s17
      %p322 = scmp.lt.s32.totalorder %s17, 3
      %p323 = pnand %p321, %p322
      %p324 = pneg %p323
      // Predicated region
      $region53: #{mlka_forward.1} parent=5 // pred_check
        _
      $region54: #{mlka_forward.1} parent=5 // pred_check_branch
        %326 = sbr.rel (%p323) target = $region56
      $region55: #{mlka_forward.1} parent=5 // pred_region
        %s327 = ssub.s32 %s17, 1
        // Predicated region
        $region57: #{mlka_forward.1} parent=55 // pred_check
          %p328 = pneg %p169
        $region58: #{mlka_forward.1} parent=55 // pred_check_branch
          %330 = sbr.rel (%p328) target = $region60
        $region59: #{mlka_forward.1} parent=55 // pred_region
          %332 = dma.done [#allocation3], 12544
        $region60: #{mlka_forward.1} parent=55 // pred_fallthru
          _
        // Predicated region
        $region61: #{mlka_forward.1} parent=55 // pred_check
          %p333 = pneg %p190
        $region62: #{mlka_forward.1} parent=55 // pred_check_branch
          %335 = sbr.rel (%p333) target = $region64
        $region63: #{mlka_forward.1} parent=55 // pred_region
          %337 = dma.done [#allocation5], 12544
        $region64: #{mlka_forward.1} parent=55 // pred_fallthru
          _
        // Predicated region
        $region65: #{mlka_forward.1} parent=55 // pred_check
          %p338 = pneg %p211
        $region66: #{mlka_forward.1} parent=55 // pred_check_branch
          %340 = sbr.rel (%p338) target = $region68
        $region67: #{mlka_forward.1} parent=55 // pred_region
          %342 = dma.done [#allocation5], 28928
        $region68: #{mlka_forward.1} parent=55 // pred_fallthru
          _
        %p343 = scmp.lt.s32.totalorder %s22, 1
        %s344 = scalar_select %p343, %s22, 1
        %s345 = smul.addr %s344, 2
        %s346 = smul.addr %s345, 8
        %s347 = scalar_lea.vmem %s0, %s346
        %p348 = pneg %p43
        %p349 = pneg %p40
        %p350 = pneg %p64
        %p351 = pneg %p61
        %p352 = pneg %p85
        %p353 = pneg %p82
        %p354 = pneg %p106
        %p355 = pneg %p103
        %p356 = pneg %p127
        %p357 = pneg %p124
        %p358 = pneg %p148
        %p359 = pneg %p145
        %p360 = pneg %p169
        %p361 = pneg %p166
        %p362 = pneg %p190
        %p363 = pneg %p187
        %p364 = pneg %p211
        %p365 = pneg %p208
        %p366 = pneg %p237
        %p367 = pneg %p234
        %p368 = scmp.lt.s32.totalorder %s22, 1
        %s369 = scalar_select %p368, %s22, 1
        %s370 = smul.addr %s369, 2
        %s371 = smul.addr %s370, 8
        %s372 = scalar_lea.vmem %s9, %s371
        %p373 = scmp.lt.s32.totalorder %s22, 1
        %s374 = scalar_select %p373, %s22, 1
        %s375 = smul.addr %s374, 2
        %s376 = smul.addr %s375, 8
        %s377 = scalar_lea.vmem %s0, %s376
        %p378 = scmp.lt.s32.totalorder %s22, 1
        %s379 = scalar_select %p378, %s22, 1
        %s380 = smul.addr %s379, 2
        %s381 = smul.addr %s380, 8
        %s382 = scalar_lea.vmem %s9, %s381
        %v383 = vld [vmem:[%s377] sm:$0xff]
        %v384 = vld [vmem:[%s377 + $0x8] sm:$0xff]
        %v385 = vld [vmem:[%s1] sm:$0xff]
        %v386 = vrot.slane %v383, 4
        %v387 = vadd.f32 %v383, %v386
        %v388 = vrot.slane %v387, 2
        %v389 = vadd.f32 %v387, %v388
        %v390 = vrot.slane %v389, 1
        %v391 = vadd.f32 %v389, %v390
        %v392 = vrot.slane %v384, 4
        %v393 = vadd.f32 %v384, %v392
        %v394 = vrot.slane %v393, 2
        %v395 = vadd.f32 %v393, %v394
        %v396 = vrot.slane %v395, 1
        %v397 = vadd.f32 %v395, %v396
        %v398 = vrcp.pop 8.0
        %v399 = vmul.f32 8.0, %v398
        %v400 = vsub.f32 1.0, %v399
        %v401 = vmul.f32 %v398, %v400
        %v402 = vadd.f32 %v398, %v401
        %vm403 = vweird.f32 %v398
        %v404 = vsel %vm403, %v398, %v402
        %v405 = vmul.f32 %v391, %v404
        %v406 = vmul.f32 %v397, %v404
        %v407 = vsub.f32 %v383, %v405
        %v408 = vsub.f32 %v384, %v406
        %v409 = vmul.f32 %v407, %v407
        %v410 = vmul.f32 %v408, %v408
        %v411 = vrot.slane %v409, 4
        %v412 = vadd.f32 %v409, %v411
        %v413 = vrot.slane %v412, 2
        %v414 = vadd.f32 %v412, %v413
        %v415 = vrot.slane %v414, 1
        %v416 = vadd.f32 %v414, %v415
        %v417 = vrot.slane %v410, 4
        %v418 = vadd.f32 %v410, %v417
        %v419 = vrot.slane %v418, 2
        %v420 = vadd.f32 %v418, %v419
        %v421 = vrot.slane %v420, 1
        %v422 = vadd.f32 %v420, %v421
        %v423 = vmul.f32 %v416, %v404
        %v424 = vmul.f32 %v422, %v404
        %v425 = vadd.f32 %v423, 1e-06
        %v426 = vadd.f32 %v424, 1e-06
        %v427 = vrsqrt.pop %v425
        %v428 = vmul.f32 %v427, %v425
        %v429 = vmul.f32 %v428, %v427
        %v430 = vmul.f32 0.5, %v429
        %v431 = vsub.f32 1.5, %v430
        %v432 = vmul.f32 %v427, %v431
        %vm433 = vweird.f32 %v425
        %vm434 = vweird.f32 %v427
        %vm435 = vmor %vm433, %vm434
        %v436 = vsel %vm435, %v427, %v432
        %v437 = vrsqrt.pop %v426
        %v438 = vmul.f32 %v437, %v426
        %v439 = vmul.f32 %v438, %v437
        %v440 = vmul.f32 0.5, %v439
        %v441 = vsub.f32 1.5, %v440
        %v442 = vmul.f32 %v437, %v441
        %vm443 = vweird.f32 %v426
        %vm444 = vweird.f32 %v437
        %vm445 = vmor %vm443, %vm444
        %v446 = vsel %vm445, %v437, %v442
        %v447 = vmul.f32 %v407, %v436
        %v448 = vmul.f32 %v408, %v446
        %450 = vset.pattern.permute.xlu0 0
        %451 = vperm.xlu0 %450, %v385
        %v452 = vpop.permute.xlu0 %451
        %v454 = vmul.f32 %v447, %v452
        %v455 = vmul.f32 %v448, %v452
        %456 = vset.pattern.permute.xlu0 1
        %457 = vperm.xlu0 %456, %v385
        %v458 = vpop.permute.xlu0 %457
        %v460 = vadd.f32 %v454, %v458
        %v461 = vadd.f32 %v455, %v458
        %v462 = vld [vmem:[%s2] sm:$0xff]
        %v463 = vld [vmem:[%s2 + $0x8] sm:$0xff]
        %v464 = vld [vmem:[%s3] sm:$0xff]
        %v465 = vld [vmem:[%s3 + $0x8] sm:$0xff]
        %467 = vset.pattern.permute.xlu0 0
        %468 = vperm.xlu0 %467, %v464
        %v469 = vpop.permute.xlu0 %468
        %472 = vset.pattern.permute.xlu0 0
        %473 = vperm.xlu0 %472, %v465
        %v474 = vpop.permute.xlu0 %473
        %vm476 = vcmask 64512
        %v478 = vsel %vm476, %v462, 0
        %v481 = vsel %vm476, %v463, 0
        %483 = vmatpush.msra.mxu0 0.0
        %484 = vmatpush.msra.mxu0 0.0
        %485 = vmatpush.msra.mxu0 0.0
        %486 = vmatpush.msra.mxu0 0.0
        %487 = vmatpush.msra.mxu0 0.0
        %488 = vmatpush.msra.mxu0 0.0
        %489 = vmatpush.msra.mxu0 0.0
        %490 = vmatpush.msra.mxu0 0.0
        %491 = vmatpush.msra.mxu0 0.0
        %492 = vmatpush.msra.mxu0 0.0
        %493 = vmatpush.msra.mxu0 0.0
        %494 = vmatpush.msra.mxu0 0.0
        %495 = vmatpush.msra.mxu0 0.0
        %496 = vmatpush.msra.mxu0 0.0
        %497 = vmatpush.msra.mxu0 0.0
        %498 = vmatpush.msra.mxu0 %v460
        %499 = vmatmul.f32.gmra.mxu0 %v478
        %v500 = vpop.f32.mrf.mxu0
        %v501 = vadd.f32 %v469, %v500
        %502 = vmatmul.f32.gmra.mxu0 %v481
        %v503 = vpop.f32.mrf.mxu0
        %v504 = vadd.f32 %v474, %v503
        %505 = vdwg.mxu0
        %506 = vmatpush.msra.mxu0 0.0
        %507 = vmatpush.msra.mxu0 0.0
        %508 = vmatpush.msra.mxu0 0.0
        %509 = vmatpush.msra.mxu0 0.0
        %510 = vmatpush.msra.mxu0 0.0
        %511 = vmatpush.msra.mxu0 0.0
        %512 = vmatpush.msra.mxu0 0.0
        %513 = vmatpush.msra.mxu0 0.0
        %514 = vmatpush.msra.mxu0 0.0
        %515 = vmatpush.msra.mxu0 0.0
        %516 = vmatpush.msra.mxu0 0.0
        %517 = vmatpush.msra.mxu0 0.0
        %518 = vmatpush.msra.mxu0 0.0
        %519 = vmatpush.msra.mxu0 0.0
        %520 = vmatpush.msra.mxu0 0.0
        %521 = vmatpush.msra.mxu0 %v461
        %522 = vmatmul.f32.gmra.mxu0 %v478
        %v523 = vpop.f32.mrf.mxu0
        %v524 = vadd.f32 %v469, %v523
        %525 = vmatmul.f32.gmra.mxu0 %v481
        %v526 = vpop.f32.mrf.mxu0
        %v527 = vadd.f32 %v474, %v526
        %528 = vdwg.mxu0
        %529 = vset.pattern.permute.xlu0 2
        %530 = vperm.xlu0 %529, %v385
        %v531 = vpop.permute.xlu0 %530
        %v533 = vadd.f32 %v531, 0.0
        %534 = vset.pattern.permute.xlu0 3
        %535 = vperm.xlu0 %534, %v385
        %v536 = vpop.permute.xlu0 %535
        %v538 = vadd.f32 %v536, 0.0
        %v539 = vld [vmem:[#allocation2] sm:$0xff]
        %v540 = vld [vmem:[#allocation2 + $0x8] sm:$0xff]
        %543 = vrot.lane.b32.xlu0 %v539, 77
        %v544 = vpop.permute.xlu0 %543
        %545 = vrot.lane.b32.xlu0 %v540, 77
        %v546 = vpop.permute.xlu0 %545
        %vm547 = vcmask 629760
        %v548 = vsel %vm547, %v544, %v546
        %v552 = vmul.f32 %v524, %v544
        %v553 = vmul.f32 %v501, %v548
        %v554 = vmul.f32 %v524, %v546
        %v555 = vadd.f32 %v533, %v552
        %v556 = vadd.f32 %v533, %v553
        %v557 = vadd.f32 %v533, %v554
        %v558 = vld [vmem:[#allocation4] sm:$0xff]
        %v559 = vld [vmem:[#allocation4 + $0x8] sm:$0xff]
        %562 = vrot.lane.b32.xlu0 %v558, 77
        %v563 = vpop.permute.xlu0 %562
        %564 = vrot.lane.b32.xlu0 %v559, 77
        %v565 = vpop.permute.xlu0 %564
        %v566 = vsel %vm547, %v563, %v565
        %v570 = vmul.f32 %v524, %v563
        %v571 = vmul.f32 %v501, %v566
        %v572 = vmul.f32 %v524, %v565
        %v573 = vadd.f32 %v538, %v570
        %v574 = vadd.f32 %v538, %v571
        %v575 = vadd.f32 %v538, %v572
        %s576 = scalar_lea.vmem [#allocation2], 16
        %v577 = vld [vmem:[%s576] sm:$0xff]
        %v578 = vld [vmem:[%s576 + $0x8] sm:$0xff]
        %581 = vrot.lane.b32.xlu0 %v577, 78
        %v582 = vpop.permute.xlu0 %581
        %583 = vrot.lane.b32.xlu0 %v578, 78
        %v584 = vpop.permute.xlu0 %583
        %vm585 = vcmask 637952
        %v586 = vsel %vm585, %v582, %v584
        %v590 = vmul.f32 %v524, %v582
        %v591 = vmul.f32 %v501, %v586
        %v592 = vmul.f32 %v524, %v584
        %596 = vrot.lane.b32.xlu0 %v590, 127
        %v597 = vpop.permute.xlu0 %596
        %598 = vrot.lane.b32.xlu0 %v591, 127
        %v599 = vpop.permute.xlu0 %598
        %600 = vrot.lane.b32.xlu0 %v592, 127
        %v601 = vpop.permute.xlu0 %600
        %vm602 = vcmask 1039360
        %v603 = vsel %vm602, %v597, %v599
        %v604 = vsel %vm602, %v599, %v601
        %v608 = vadd.f32 %v555, %v603
        %v609 = vadd.f32 %v556, %v604
        %v610 = vadd.f32 %v557, %v601
        %s611 = scalar_lea.vmem [#allocation4], 16
        %v612 = vld [vmem:[%s611] sm:$0xff]
        %v613 = vld [vmem:[%s611 + $0x8] sm:$0xff]
        %616 = vrot.lane.b32.xlu0 %v612, 78
        %v617 = vpop.permute.xlu0 %616
        %618 = vrot.lane.b32.xlu0 %v613, 78
        %v619 = vpop.permute.xlu0 %618
        %v620 = vsel %vm585, %v617, %v619
        %v624 = vmul.f32 %v524, %v617
        %v625 = vmul.f32 %v501, %v620
        %v626 = vmul.f32 %v524, %v619
        %630 = vrot.lane.b32.xlu0 %v624, 127
        %v631 = vpop.permute.xlu0 %630
        %632 = vrot.lane.b32.xlu0 %v625, 127
        %v633 = vpop.permute.xlu0 %632
        %634 = vrot.lane.b32.xlu0 %v626, 127
        %v635 = vpop.permute.xlu0 %634
        %v636 = vsel %vm602, %v631, %v633
        %v637 = vsel %vm602, %v633, %v635
        %v641 = vadd.f32 %v573, %v636
        %v642 = vadd.f32 %v574, %v637
        %v643 = vadd.f32 %v575, %v635
        %s644 = scalar_lea.vmem [#allocation2], 32
        %v645 = vld [vmem:[%s644] sm:$0xff]
        %v646 = vld [vmem:[%s644 + $0x8] sm:$0xff]
        %649 = vrot.lane.b32.xlu0 %v645, 79
        %v650 = vpop.permute.xlu0 %649
        %651 = vrot.lane.b32.xlu0 %v646, 79
        %v652 = vpop.permute.xlu0 %651
        %vm653 = vcmask 646144
        %v654 = vsel %vm653, %v650, %v652
        %v658 = vmul.f32 %v524, %v650
        %v659 = vmul.f32 %v501, %v654
        %v660 = vmul.f32 %v524, %v652
        %664 = vrot.lane.b32.xlu0 %v658, 126
        %v665 = vpop.permute.xlu0 %664
        %666 = vrot.lane.b32.xlu0 %v659, 126
        %v667 = vpop.permute.xlu0 %666
        %668 = vrot.lane.b32.xlu0 %v660, 126
        %v669 = vpop.permute.xlu0 %668
        %vm670 = vcmask 1031168
        %v671 = vsel %vm670, %v665, %v667
        %v672 = vsel %vm670, %v667, %v669
        %v676 = vadd.f32 %v608, %v671
        %v677 = vadd.f32 %v609, %v672
        %v678 = vadd.f32 %v610, %v669
        %s679 = scalar_lea.vmem [#allocation4], 32
        %v680 = vld [vmem:[%s679] sm:$0xff]
        %v681 = vld [vmem:[%s679 + $0x8] sm:$0xff]
        %684 = vrot.lane.b32.xlu0 %v680, 79
        %v685 = vpop.permute.xlu0 %684
        %686 = vrot.lane.b32.xlu0 %v681, 79
        %v687 = vpop.permute.xlu0 %686
        %v688 = vsel %vm653, %v685, %v687
        %v692 = vmul.f32 %v524, %v685
        %v693 = vmul.f32 %v501, %v688
        %v694 = vmul.f32 %v524, %v687
        %698 = vrot.lane.b32.xlu0 %v692, 126
        %v699 = vpop.permute.xlu0 %698
        %700 = vrot.lane.b32.xlu0 %v693, 126
        %v701 = vpop.permute.xlu0 %700
        %702 = vrot.lane.b32.xlu0 %v694, 126
        %v703 = vpop.permute.xlu0 %702
        %v704 = vsel %vm670, %v699, %v701
        %v705 = vsel %vm670, %v701, %v703
        %v709 = vadd.f32 %v641, %v704
        %v710 = vadd.f32 %v642, %v705
        %v711 = vadd.f32 %v643, %v703
        %s712 = scalar_lea.vmem [#allocation2], 48
        %v713 = vld [vmem:[%s712] sm:$0xff]
        %v714 = vld [vmem:[%s712 + $0x8] sm:$0xff]
        %717 = vrot.lane.b32.xlu0 %v713, 80
        %v718 = vpop.permute.xlu0 %717
        %719 = vrot.lane.b32.xlu0 %v714, 80
        %v720 = vpop.permute.xlu0 %719
        %vm721 = vcmask 654336
        %v722 = vsel %vm721, %v718, %v720
        %v726 = vmul.f32 %v524, %v718
        %v727 = vmul.f32 %v501, %v722
        %v728 = vmul.f32 %v524, %v720
        %732 = vrot.lane.b32.xlu0 %v726, 125
        %v733 = vpop.permute.xlu0 %732
        %734 = vrot.lane.b32.xlu0 %v727, 125
        %v735 = vpop.permute.xlu0 %734
        %736 = vrot.lane.b32.xlu0 %v728, 125
        %v737 = vpop.permute.xlu0 %736
        %vm738 = vcmask 1022976
        %v739 = vsel %vm738, %v733, %v735
        %v740 = vsel %vm738, %v735, %v737
        %v744 = vadd.f32 %v676, %v739
        %v745 = vadd.f32 %v677, %v740
        %v746 = vadd.f32 %v678, %v737
        %s747 = scalar_lea.vmem [#allocation4], 48
        %v748 = vld [vmem:[%s747] sm:$0xff]
        %v749 = vld [vmem:[%s747 + $0x8] sm:$0xff]
        %752 = vrot.lane.b32.xlu0 %v748, 80
        %v753 = vpop.permute.xlu0 %752
        %754 = vrot.lane.b32.xlu0 %v749, 80
        %v755 = vpop.permute.xlu0 %754
        %v756 = vsel %vm721, %v753, %v755
        %v760 = vmul.f32 %v524, %v753
        %v761 = vmul.f32 %v501, %v756
        %v762 = vmul.f32 %v524, %v755
        %766 = vrot.lane.b32.xlu0 %v760, 125
        %v767 = vpop.permute.xlu0 %766
        %768 = vrot.lane.b32.xlu0 %v761, 125
        %v769 = vpop.permute.xlu0 %768
        %770 = vrot.lane.b32.xlu0 %v762, 125
        %v771 = vpop.permute.xlu0 %770
        %v772 = vsel %vm738, %v767, %v769
        %v773 = vsel %vm738, %v769, %v771
        %v777 = vadd.f32 %v709, %v772
        %v778 = vadd.f32 %v710, %v773
        %v779 = vadd.f32 %v711, %v771
        %s780 = scalar_lea.vmem [#allocation2], 64
        %v781 = vld [vmem:[%s780] sm:$0xff]
        %v782 = vld [vmem:[%s780 + $0x8] sm:$0xff]
        %785 = vrot.lane.b32.xlu0 %v781, 81
        %v786 = vpop.permute.xlu0 %785
        %787 = vrot.lane.b32.xlu0 %v782, 81
        %v788 = vpop.permute.xlu0 %787
        %vm789 = vcmask 662528
        %v790 = vsel %vm789, %v786, %v788
        %v794 = vmul.f32 %v524, %v786
        %v795 = vmul.f32 %v501, %v790
        %v796 = vmul.f32 %v524, %v788
        %800 = vrot.lane.b32.xlu0 %v794, 124
        %v801 = vpop.permute.xlu0 %800
        %802 = vrot.lane.b32.xlu0 %v795, 124
        %v803 = vpop.permute.xlu0 %802
        %804 = vrot.lane.b32.xlu0 %v796, 124
        %v805 = vpop.permute.xlu0 %804
        %vm806 = vcmask 1014784
        %v807 = vsel %vm806, %v801, %v803
        %v808 = vsel %vm806, %v803, %v805
        %v812 = vadd.f32 %v744, %v807
        %v813 = vadd.f32 %v745, %v808
        %v814 = vadd.f32 %v746, %v805
        %s815 = scalar_lea.vmem [#allocation4], 64
        %v816 = vld [vmem:[%s815] sm:$0xff]
        %v817 = vld [vmem:[%s815 + $0x8] sm:$0xff]
        %820 = vrot.lane.b32.xlu0 %v816, 81
        %v821 = vpop.permute.xlu0 %820
        %822 = vrot.lane.b32.xlu0 %v817, 81
        %v823 = vpop.permute.xlu0 %822
        %v824 = vsel %vm789, %v821, %v823
        %v828 = vmul.f32 %v524, %v821
        %v829 = vmul.f32 %v501, %v824
        %v830 = vmul.f32 %v524, %v823
        %834 = vrot.lane.b32.xlu0 %v828, 124
        %v835 = vpop.permute.xlu0 %834
        %836 = vrot.lane.b32.xlu0 %v829, 124
        %v837 = vpop.permute.xlu0 %836
        %838 = vrot.lane.b32.xlu0 %v830, 124
        %v839 = vpop.permute.xlu0 %838
        %v840 = vsel %vm806, %v835, %v837
        %v841 = vsel %vm806, %v837, %v839
        %v845 = vadd.f32 %v777, %v840
        %v846 = vadd.f32 %v778, %v841
        %v847 = vadd.f32 %v779, %v839
        %s848 = scalar_lea.vmem [#allocation2], 80
        %v849 = vld [vmem:[%s848] sm:$0xff]
        %v850 = vld [vmem:[%s848 + $0x8] sm:$0xff]
        %853 = vrot.lane.b32.xlu0 %v849, 82
        %v854 = vpop.permute.xlu0 %853
        %855 = vrot.lane.b32.xlu0 %v850, 82
        %v856 = vpop.permute.xlu0 %855
        %vm857 = vcmask 670720
        %v858 = vsel %vm857, %v854, %v856
        %v862 = vmul.f32 %v524, %v854
        %v863 = vmul.f32 %v501, %v858
        %v864 = vmul.f32 %v524, %v856
        %868 = vrot.lane.b32.xlu0 %v862, 123
        %v869 = vpop.permute.xlu0 %868
        %870 = vrot.lane.b32.xlu0 %v863, 123
        %v871 = vpop.permute.xlu0 %870
        %872 = vrot.lane.b32.xlu0 %v864, 123
        %v873 = vpop.permute.xlu0 %872
        %vm874 = vcmask 1006592
        %v875 = vsel %vm874, %v869, %v871
        %v876 = vsel %vm874, %v871, %v873
        %v880 = vadd.f32 %v812, %v875
        %v881 = vadd.f32 %v813, %v876
        %v882 = vadd.f32 %v814, %v873
        %s883 = scalar_lea.vmem [#allocation4], 80
        %v884 = vld [vmem:[%s883] sm:$0xff]
        %v885 = vld [vmem:[%s883 + $0x8] sm:$0xff]
        %888 = vrot.lane.b32.xlu0 %v884, 82
        %v889 = vpop.permute.xlu0 %888
        %890 = vrot.lane.b32.xlu0 %v885, 82
        %v891 = vpop.permute.xlu0 %890
        %v892 = vsel %vm857, %v889, %v891
        %v896 = vmul.f32 %v524, %v889
        %v897 = vmul.f32 %v501, %v892
        %v898 = vmul.f32 %v524, %v891
        %902 = vrot.lane.b32.xlu0 %v896, 123
        %v903 = vpop.permute.xlu0 %902
        %904 = vrot.lane.b32.xlu0 %v897, 123
        %v905 = vpop.permute.xlu0 %904
        %906 = vrot.lane.b32.xlu0 %v898, 123
        %v907 = vpop.permute.xlu0 %906
        %v908 = vsel %vm874, %v903, %v905
        %v909 = vsel %vm874, %v905, %v907
        %v913 = vadd.f32 %v845, %v908
        %v914 = vadd.f32 %v846, %v909
        %v915 = vadd.f32 %v847, %v907
        %s916 = scalar_lea.vmem [#allocation2], 96
        %v917 = vld [vmem:[%s916] sm:$0xff]
        %v918 = vld [vmem:[%s916 + $0x8] sm:$0xff]
        %921 = vrot.lane.b32.xlu0 %v917, 83
        %v922 = vpop.permute.xlu0 %921
        %923 = vrot.lane.b32.xlu0 %v918, 83
        %v924 = vpop.permute.xlu0 %923
        %vm925 = vcmask 678912
        %v926 = vsel %vm925, %v922, %v924
        %v930 = vmul.f32 %v524, %v922
        %v931 = vmul.f32 %v501, %v926
        %v932 = vmul.f32 %v524, %v924
        %936 = vrot.lane.b32.xlu0 %v930, 122
        %v937 = vpop.permute.xlu0 %936
        %938 = vrot.lane.b32.xlu0 %v931, 122
        %v939 = vpop.permute.xlu0 %938
        %940 = vrot.lane.b32.xlu0 %v932, 122
        %v941 = vpop.permute.xlu0 %940
        %vm942 = vcmask 998400
        %v943 = vsel %vm942, %v937, %v939
        %v944 = vsel %vm942, %v939, %v941
        %v948 = vadd.f32 %v880, %v943
        %v949 = vadd.f32 %v881, %v944
        %v950 = vadd.f32 %v882, %v941
        %s951 = scalar_lea.vmem [#allocation4], 96
        %v952 = vld [vmem:[%s951] sm:$0xff]
        %v953 = vld [vmem:[%s951 + $0x8] sm:$0xff]
        %956 = vrot.lane.b32.xlu0 %v952, 83
        %v957 = vpop.permute.xlu0 %956
        %958 = vrot.lane.b32.xlu0 %v953, 83
        %v959 = vpop.permute.xlu0 %958
        %v960 = vsel %vm925, %v957, %v959
        %v964 = vmul.f32 %v524, %v957
        %v965 = vmul.f32 %v501, %v960
        %v966 = vmul.f32 %v524, %v959
        %970 = vrot.lane.b32.xlu0 %v964, 122
        %v971 = vpop.permute.xlu0 %970
        %972 = vrot.lane.b32.xlu0 %v965, 122
        %v973 = vpop.permute.xlu0 %972
        %974 = vrot.lane.b32.xlu0 %v966, 122
        %v975 = vpop.permute.xlu0 %974
        %v976 = vsel %vm942, %v971, %v973
        %v977 = vsel %vm942, %v973, %v975
        %v981 = vadd.f32 %v913, %v976
        %v982 = vadd.f32 %v914, %v977
        %v983 = vadd.f32 %v915, %v975
        %s984 = scalar_lea.vmem [#allocation2], 112
        %v985 = vld [vmem:[%s984] sm:$0xff]
        %v986 = vld [vmem:[%s984 + $0x8] sm:$0xff]
        %989 = vrot.lane.b32.xlu0 %v985, 93
        %v990 = vpop.permute.xlu0 %989
        %991 = vrot.lane.b32.xlu0 %v986, 93
        %v992 = vpop.permute.xlu0 %991
        %vm993 = vcmask 760832
        %v994 = vsel %vm993, %v990, %v992
        %v998 = vmul.f32 %v524, %v990
        %v999 = vmul.f32 %v501, %v994
        %v1000 = vmul.f32 %v524, %v992
        %1004 = vrot.lane.b32.xlu0 %v998, 112
        %v1005 = vpop.permute.xlu0 %1004
        %1006 = vrot.lane.b32.xlu0 %v999, 112
        %v1007 = vpop.permute.xlu0 %1006
        %1008 = vrot.lane.b32.xlu0 %v1000, 112
        %v1009 = vpop.permute.xlu0 %1008
        %vm1010 = vcmask 916480
        %v1011 = vsel %vm1010, %v1005, %v1007
        %v1012 = vsel %vm1010, %v1007, %v1009
        %v1016 = vadd.f32 %v948, %v1011
        %v1017 = vadd.f32 %v949, %v1012
        %v1018 = vadd.f32 %v950, %v1009
        %s1019 = scalar_lea.vmem [#allocation4], 112
        %v1020 = vld [vmem:[%s1019] sm:$0xff]
        %v1021 = vld [vmem:[%s1019 + $0x8] sm:$0xff]
        %1024 = vrot.lane.b32.xlu0 %v1020, 93
        %v1025 = vpop.permute.xlu0 %1024
        %1026 = vrot.lane.b32.xlu0 %v1021, 93
        %v1027 = vpop.permute.xlu0 %1026
        %v1028 = vsel %vm993, %v1025, %v1027
        %v1032 = vmul.f32 %v524, %v1025
        %v1033 = vmul.f32 %v501, %v1028
        %v1034 = vmul.f32 %v524, %v1027
        %1038 = vrot.lane.b32.xlu0 %v1032, 112
        %v1039 = vpop.permute.xlu0 %1038
        %1040 = vrot.lane.b32.xlu0 %v1033, 112
        %v1041 = vpop.permute.xlu0 %1040
        %1042 = vrot.lane.b32.xlu0 %v1034, 112
        %v1043 = vpop.permute.xlu0 %1042
        %v1044 = vsel %vm1010, %v1039, %v1041
        %v1045 = vsel %vm1010, %v1041, %v1043
        %v1049 = vadd.f32 %v981, %v1044
        %v1050 = vadd.f32 %v982, %v1045
        %v1051 = vadd.f32 %v983, %v1043
        %s1052 = scalar_lea.vmem [#allocation2], 128
        %v1053 = vld [vmem:[%s1052] sm:$0xff]
        %v1054 = vld [vmem:[%s1052 + $0x8] sm:$0xff]
        %1057 = vrot.lane.b32.xlu0 %v1053, 94
        %v1058 = vpop.permute.xlu0 %1057
        %1059 = vrot.lane.b32.xlu0 %v1054, 94
        %v1060 = vpop.permute.xlu0 %1059
        %vm1061 = vcmask 769024
        %v1062 = vsel %vm1061, %v1058, %v1060
        %v1066 = vmul.f32 %v524, %v1058
        %v1067 = vmul.f32 %v501, %v1062
        %v1068 = vmul.f32 %v524, %v1060
        %1072 = vrot.lane.b32.xlu0 %v1066, 111
        %v1073 = vpop.permute.xlu0 %1072
        %1074 = vrot.lane.b32.xlu0 %v1067, 111
        %v1075 = vpop.permute.xlu0 %1074
        %1076 = vrot.lane.b32.xlu0 %v1068, 111
        %v1077 = vpop.permute.xlu0 %1076
        %vm1078 = vcmask 908288
        %v1079 = vsel %vm1078, %v1073, %v1075
        %v1080 = vsel %vm1078, %v1075, %v1077
        %v1084 = vadd.f32 %v1016, %v1079
        %v1085 = vadd.f32 %v1017, %v1080
        %v1086 = vadd.f32 %v1018, %v1077
        %s1087 = scalar_lea.vmem [#allocation4], 128
        %v1088 = vld [vmem:[%s1087] sm:$0xff]
        %v1089 = vld [vmem:[%s1087 + $0x8] sm:$0xff]
        %1092 = vrot.lane.b32.xlu0 %v1088, 94
        %v1093 = vpop.permute.xlu0 %1092
        %1094 = vrot.lane.b32.xlu0 %v1089, 94
        %v1095 = vpop.permute.xlu0 %1094
        %v1096 = vsel %vm1061, %v1093, %v1095
        %v1100 = vmul.f32 %v524, %v1093
        %v1101 = vmul.f32 %v501, %v1096
        %v1102 = vmul.f32 %v524, %v1095
        %1106 = vrot.lane.b32.xlu0 %v1100, 111
        %v1107 = vpop.permute.xlu0 %1106
        %1108 = vrot.lane.b32.xlu0 %v1101, 111
        %v1109 = vpop.permute.xlu0 %1108
        %1110 = vrot.lane.b32.xlu0 %v1102, 111
        %v1111 = vpop.permute.xlu0 %1110
        %v1112 = vsel %vm1078, %v1107, %v1109
        %v1113 = vsel %vm1078, %v1109, %v1111
        %v1117 = vadd.f32 %v1049, %v1112
        %v1118 = vadd.f32 %v1050, %v1113
        %v1119 = vadd.f32 %v1051, %v1111
        %s1120 = scalar_lea.vmem [#allocation2], 144
        %v1121 = vld [vmem:[%s1120] sm:$0xff]
        %v1122 = vld [vmem:[%s1120 + $0x8] sm:$0xff]
        %1125 = vrot.lane.b32.xlu0 %v1121, 95
        %v1126 = vpop.permute.xlu0 %1125
        %1127 = vrot.lane.b32.xlu0 %v1122, 95
        %v1128 = vpop.permute.xlu0 %1127
        %vm1129 = vcmask 777216
        %v1130 = vsel %vm1129, %v1126, %v1128
        %v1134 = vmul.f32 %v524, %v1126
        %v1135 = vmul.f32 %v501, %v1130
        %v1136 = vmul.f32 %v524, %v1128
        %1140 = vrot.lane.b32.xlu0 %v1134, 110
        %v1141 = vpop.permute.xlu0 %1140
        %1142 = vrot.lane.b32.xlu0 %v1135, 110
        %v1143 = vpop.permute.xlu0 %1142
        %1144 = vrot.lane.b32.xlu0 %v1136, 110
        %v1145 = vpop.permute.xlu0 %1144
        %vm1146 = vcmask 900096
        %v1147 = vsel %vm1146, %v1141, %v1143
        %v1148 = vsel %vm1146, %v1143, %v1145
        %v1152 = vadd.f32 %v1084, %v1147
        %v1153 = vadd.f32 %v1085, %v1148
        %v1154 = vadd.f32 %v1086, %v1145
        %s1155 = scalar_lea.vmem [#allocation4], 144
        %v1156 = vld [vmem:[%s1155] sm:$0xff]
        %v1157 = vld [vmem:[%s1155 + $0x8] sm:$0xff]
        %1160 = vrot.lane.b32.xlu0 %v1156, 95
        %v1161 = vpop.permute.xlu0 %1160
        %1162 = vrot.lane.b32.xlu0 %v1157, 95
        %v1163 = vpop.permute.xlu0 %1162
        %v1164 = vsel %vm1129, %v1161, %v1163
        %v1168 = vmul.f32 %v524, %v1161
        %v1169 = vmul.f32 %v501, %v1164
        %v1170 = vmul.f32 %v524, %v1163
        %1174 = vrot.lane.b32.xlu0 %v1168, 110
        %v1175 = vpop.permute.xlu0 %1174
        %1176 = vrot.lane.b32.xlu0 %v1169, 110
        %v1177 = vpop.permute.xlu0 %1176
        %1178 = vrot.lane.b32.xlu0 %v1170, 110
        %v1179 = vpop.permute.xlu0 %1178
        %v1180 = vsel %vm1146, %v1175, %v1177
        %v1181 = vsel %vm1146, %v1177, %v1179
        %v1185 = vadd.f32 %v1117, %v1180
        %v1186 = vadd.f32 %v1118, %v1181
        %v1187 = vadd.f32 %v1119, %v1179
        %s1188 = scalar_lea.vmem [#allocation2], 160
        %v1189 = vld [vmem:[%s1188] sm:$0xff]
        %v1190 = vld [vmem:[%s1188 + $0x8] sm:$0xff]
        %1193 = vrot.lane.b32.xlu0 %v1189, 96
        %v1194 = vpop.permute.xlu0 %1193
        %1195 = vrot.lane.b32.xlu0 %v1190, 96
        %v1196 = vpop.permute.xlu0 %1195
        %vm1197 = vcmask 785408
        %v1198 = vsel %vm1197, %v1194, %v1196
        %v1202 = vmul.f32 %v524, %v1194
        %v1203 = vmul.f32 %v501, %v1198
        %v1204 = vmul.f32 %v524, %v1196
        %1208 = vrot.lane.b32.xlu0 %v1202, 109
        %v1209 = vpop.permute.xlu0 %1208
        %1210 = vrot.lane.b32.xlu0 %v1203, 109
        %v1211 = vpop.permute.xlu0 %1210
        %1212 = vrot.lane.b32.xlu0 %v1204, 109
        %v1213 = vpop.permute.xlu0 %1212
        %vm1214 = vcmask 891904
        %v1215 = vsel %vm1214, %v1209, %v1211
        %v1216 = vsel %vm1214, %v1211, %v1213
        %v1220 = vadd.f32 %v1152, %v1215
        %v1221 = vadd.f32 %v1153, %v1216
        %v1222 = vadd.f32 %v1154, %v1213
        %s1223 = scalar_lea.vmem [#allocation4], 160
        %v1224 = vld [vmem:[%s1223] sm:$0xff]
        %v1225 = vld [vmem:[%s1223 + $0x8] sm:$0xff]
        %1228 = vrot.lane.b32.xlu0 %v1224, 96
        %v1229 = vpop.permute.xlu0 %1228
        %1230 = vrot.lane.b32.xlu0 %v1225, 96
        %v1231 = vpop.permute.xlu0 %1230
        %v1232 = vsel %vm1197, %v1229, %v1231
        %v1236 = vmul.f32 %v524, %v1229
        %v1237 = vmul.f32 %v501, %v1232
        %v1238 = vmul.f32 %v524, %v1231
        %1242 = vrot.lane.b32.xlu0 %v1236, 109
        %v1243 = vpop.permute.xlu0 %1242
        %1244 = vrot.lane.b32.xlu0 %v1237, 109
        %v1245 = vpop.permute.xlu0 %1244
        %1246 = vrot.lane.b32.xlu0 %v1238, 109
        %v1247 = vpop.permute.xlu0 %1246
        %v1248 = vsel %vm1214, %v1243, %v1245
        %v1249 = vsel %vm1214, %v1245, %v1247
        %v1253 = vadd.f32 %v1185, %v1248
        %v1254 = vadd.f32 %v1186, %v1249
        %v1255 = vadd.f32 %v1187, %v1247
        %s1256 = scalar_lea.vmem [#allocation2], 176
        %v1257 = vld [vmem:[%s1256] sm:$0xff]
        %v1258 = vld [vmem:[%s1256 + $0x8] sm:$0xff]
        %1261 = vrot.lane.b32.xlu0 %v1257, 97
        %v1262 = vpop.permute.xlu0 %1261
        %1263 = vrot.lane.b32.xlu0 %v1258, 97
        %v1264 = vpop.permute.xlu0 %1263
        %vm1265 = vcmask 793600
        %v1266 = vsel %vm1265, %v1262, %v1264
        %v1270 = vmul.f32 %v524, %v1262
        %v1271 = vmul.f32 %v501, %v1266
        %v1272 = vmul.f32 %v524, %v1264
        %1276 = vrot.lane.b32.xlu0 %v1270, 108
        %v1277 = vpop.permute.xlu0 %1276
        %1278 = vrot.lane.b32.xlu0 %v1271, 108
        %v1279 = vpop.permute.xlu0 %1278
        %1280 = vrot.lane.b32.xlu0 %v1272, 108
        %v1281 = vpop.permute.xlu0 %1280
        %vm1282 = vcmask 883712
        %v1283 = vsel %vm1282, %v1277, %v1279
        %v1284 = vsel %vm1282, %v1279, %v1281
        %v1288 = vadd.f32 %v1220, %v1283
        %v1289 = vadd.f32 %v1221, %v1284
        %v1290 = vadd.f32 %v1222, %v1281
        %s1291 = scalar_lea.vmem [#allocation4], 176
        %v1292 = vld [vmem:[%s1291] sm:$0xff]
        %v1293 = vld [vmem:[%s1291 + $0x8] sm:$0xff]
        %1296 = vrot.lane.b32.xlu0 %v1292, 97
        %v1297 = vpop.permute.xlu0 %1296
        %1298 = vrot.lane.b32.xlu0 %v1293, 97
        %v1299 = vpop.permute.xlu0 %1298
        %v1300 = vsel %vm1265, %v1297, %v1299
        %v1304 = vmul.f32 %v524, %v1297
        %v1305 = vmul.f32 %v501, %v1300
        %v1306 = vmul.f32 %v524, %v1299
        %1310 = vrot.lane.b32.xlu0 %v1304, 108
        %v1311 = vpop.permute.xlu0 %1310
        %1312 = vrot.lane.b32.xlu0 %v1305, 108
        %v1313 = vpop.permute.xlu0 %1312
        %1314 = vrot.lane.b32.xlu0 %v1306, 108
        %v1315 = vpop.permute.xlu0 %1314
        %v1316 = vsel %vm1282, %v1311, %v1313
        %v1317 = vsel %vm1282, %v1313, %v1315
        %v1321 = vadd.f32 %v1253, %v1316
        %v1322 = vadd.f32 %v1254, %v1317
        %v1323 = vadd.f32 %v1255, %v1315
        %s1324 = scalar_lea.vmem [#allocation2], 192
        %v1325 = vld [vmem:[%s1324] sm:$0xff]
        %v1326 = vld [vmem:[%s1324 + $0x8] sm:$0xff]
        %1329 = vrot.lane.b32.xlu0 %v1325, 98
        %v1330 = vpop.permute.xlu0 %1329
        %1331 = vrot.lane.b32.xlu0 %v1326, 98
        %v1332 = vpop.permute.xlu0 %1331
        %vm1333 = vcmask 801792
        %v1334 = vsel %vm1333, %v1330, %v1332
        %v1338 = vmul.f32 %v524, %v1330
        %v1339 = vmul.f32 %v501, %v1334
        %v1340 = vmul.f32 %v524, %v1332
        %1344 = vrot.lane.b32.xlu0 %v1338, 107
        %v1345 = vpop.permute.xlu0 %1344
        %1346 = vrot.lane.b32.xlu0 %v1339, 107
        %v1347 = vpop.permute.xlu0 %1346
        %1348 = vrot.lane.b32.xlu0 %v1340, 107
        %v1349 = vpop.permute.xlu0 %1348
        %vm1350 = vcmask 875520
        %v1351 = vsel %vm1350, %v1345, %v1347
        %v1352 = vsel %vm1350, %v1347, %v1349
        %v1356 = vadd.f32 %v1288, %v1351
        %v1357 = vadd.f32 %v1289, %v1352
        %v1358 = vadd.f32 %v1290, %v1349
        %s1359 = scalar_lea.vmem [#allocation4], 192
        %v1360 = vld [vmem:[%s1359] sm:$0xff]
        %v1361 = vld [vmem:[%s1359 + $0x8] sm:$0xff]
        %1364 = vrot.lane.b32.xlu0 %v1360, 98
        %v1365 = vpop.permute.xlu0 %1364
        %1366 = vrot.lane.b32.xlu0 %v1361, 98
        %v1367 = vpop.permute.xlu0 %1366
        %v1368 = vsel %vm1333, %v1365, %v1367
        %v1372 = vmul.f32 %v524, %v1365
        %v1373 = vmul.f32 %v501, %v1368
        %v1374 = vmul.f32 %v524, %v1367
        %1378 = vrot.lane.b32.xlu0 %v1372, 107
        %v1379 = vpop.permute.xlu0 %1378
        %1380 = vrot.lane.b32.xlu0 %v1373, 107
        %v1381 = vpop.permute.xlu0 %1380
        %1382 = vrot.lane.b32.xlu0 %v1374, 107
        %v1383 = vpop.permute.xlu0 %1382
        %v1384 = vsel %vm1350, %v1379, %v1381
        %v1385 = vsel %vm1350, %v1381, %v1383
        %v1389 = vadd.f32 %v1321, %v1384
        %v1390 = vadd.f32 %v1322, %v1385
        %v1391 = vadd.f32 %v1323, %v1383
        %s1392 = scalar_lea.vmem [#allocation2], 208
        %v1393 = vld [vmem:[%s1392] sm:$0xff]
        %v1394 = vld [vmem:[%s1392 + $0x8] sm:$0xff]
        %1397 = vrot.lane.b32.xlu0 %v1393, 99
        %v1398 = vpop.permute.xlu0 %1397
        %1399 = vrot.lane.b32.xlu0 %v1394, 99
        %v1400 = vpop.permute.xlu0 %1399
        %vm1401 = vcmask 809984
        %v1402 = vsel %vm1401, %v1398, %v1400
        %v1406 = vmul.f32 %v524, %v1398
        %v1407 = vmul.f32 %v501, %v1402
        %v1408 = vmul.f32 %v524, %v1400
        %1412 = vrot.lane.b32.xlu0 %v1406, 106
        %v1413 = vpop.permute.xlu0 %1412
        %1414 = vrot.lane.b32.xlu0 %v1407, 106
        %v1415 = vpop.permute.xlu0 %1414
        %1416 = vrot.lane.b32.xlu0 %v1408, 106
        %v1417 = vpop.permute.xlu0 %1416
        %vm1418 = vcmask 867328
        %v1419 = vsel %vm1418, %v1413, %v1415
        %v1420 = vsel %vm1418, %v1415, %v1417
        %v1424 = vadd.f32 %v1356, %v1419
        %v1425 = vadd.f32 %v1357, %v1420
        %v1426 = vadd.f32 %v1358, %v1417
        %s1427 = scalar_lea.vmem [#allocation4], 208
        %v1428 = vld [vmem:[%s1427] sm:$0xff]
        %v1429 = vld [vmem:[%s1427 + $0x8] sm:$0xff]
        %1432 = vrot.lane.b32.xlu0 %v1428, 99
        %v1433 = vpop.permute.xlu0 %1432
        %1434 = vrot.lane.b32.xlu0 %v1429, 99
        %v1435 = vpop.permute.xlu0 %1434
        %v1436 = vsel %vm1401, %v1433, %v1435
        %v1440 = vmul.f32 %v524, %v1433
        %v1441 = vmul.f32 %v501, %v1436
        %v1442 = vmul.f32 %v524, %v1435
        %1446 = vrot.lane.b32.xlu0 %v1440, 106
        %v1447 = vpop.permute.xlu0 %1446
        %1448 = vrot.lane.b32.xlu0 %v1441, 106
        %v1449 = vpop.permute.xlu0 %1448
        %1450 = vrot.lane.b32.xlu0 %v1442, 106
        %v1451 = vpop.permute.xlu0 %1450
        %v1452 = vsel %vm1418, %v1447, %v1449
        %v1453 = vsel %vm1418, %v1449, %v1451
        %v1457 = vadd.f32 %v1389, %v1452
        %v1458 = vadd.f32 %v1390, %v1453
        %v1459 = vadd.f32 %v1391, %v1451
        %s1460 = scalar_lea.vmem [#allocation2], 224
        %v1461 = vld [vmem:[%s1460] sm:$0xff]
        %v1462 = vld [vmem:[%s1460 + $0x8] sm:$0xff]
        %1465 = vrot.lane.b32.xlu0 %v1461, 109
        %v1466 = vpop.permute.xlu0 %1465
        %1467 = vrot.lane.b32.xlu0 %v1462, 109
        %v1468 = vpop.permute.xlu0 %1467
        %v1469 = vsel %vm1214, %v1466, %v1468
        %v1473 = vmul.f32 %v524, %v1466
        %v1474 = vmul.f32 %v501, %v1469
        %v1475 = vmul.f32 %v524, %v1468
        %1479 = vrot.lane.b32.xlu0 %v1473, 96
        %v1480 = vpop.permute.xlu0 %1479
        %1481 = vrot.lane.b32.xlu0 %v1474, 96
        %v1482 = vpop.permute.xlu0 %1481
        %1483 = vrot.lane.b32.xlu0 %v1475, 96
        %v1484 = vpop.permute.xlu0 %1483
        %v1485 = vsel %vm1197, %v1480, %v1482
        %v1486 = vsel %vm1197, %v1482, %v1484
        %v1490 = vadd.f32 %v1424, %v1485
        %v1491 = vadd.f32 %v1425, %v1486
        %v1492 = vadd.f32 %v1426, %v1484
        %s1493 = scalar_lea.vmem [#allocation4], 224
        %v1494 = vld [vmem:[%s1493] sm:$0xff]
        %v1495 = vld [vmem:[%s1493 + $0x8] sm:$0xff]
        %1498 = vrot.lane.b32.xlu0 %v1494, 109
        %v1499 = vpop.permute.xlu0 %1498
        %1500 = vrot.lane.b32.xlu0 %v1495, 109
        %v1501 = vpop.permute.xlu0 %1500
        %v1502 = vsel %vm1214, %v1499, %v1501
        %v1506 = vmul.f32 %v524, %v1499
        %v1507 = vmul.f32 %v501, %v1502
        %v1508 = vmul.f32 %v524, %v1501
        %1512 = vrot.lane.b32.xlu0 %v1506, 96
        %v1513 = vpop.permute.xlu0 %1512
        %1514 = vrot.lane.b32.xlu0 %v1507, 96
        %v1515 = vpop.permute.xlu0 %1514
        %1516 = vrot.lane.b32.xlu0 %v1508, 96
        %v1517 = vpop.permute.xlu0 %1516
        %v1518 = vsel %vm1197, %v1513, %v1515
        %v1519 = vsel %vm1197, %v1515, %v1517
        %v1523 = vadd.f32 %v1457, %v1518
        %v1524 = vadd.f32 %v1458, %v1519
        %v1525 = vadd.f32 %v1459, %v1517
        %s1526 = scalar_lea.vmem [#allocation2], 240
        %v1527 = vld [vmem:[%s1526] sm:$0xff]
        %v1528 = vld [vmem:[%s1526 + $0x8] sm:$0xff]
        %1531 = vrot.lane.b32.xlu0 %v1527, 110
        %v1532 = vpop.permute.xlu0 %1531
        %1533 = vrot.lane.b32.xlu0 %v1528, 110
        %v1534 = vpop.permute.xlu0 %1533
        %v1535 = vsel %vm1146, %v1532, %v1534
        %v1539 = vmul.f32 %v524, %v1532
        %v1540 = vmul.f32 %v501, %v1535
        %v1541 = vmul.f32 %v524, %v1534
        %1545 = vrot.lane.b32.xlu0 %v1539, 95
        %v1546 = vpop.permute.xlu0 %1545
        %1547 = vrot.lane.b32.xlu0 %v1540, 95
        %v1548 = vpop.permute.xlu0 %1547
        %1549 = vrot.lane.b32.xlu0 %v1541, 95
        %v1550 = vpop.permute.xlu0 %1549
        %v1551 = vsel %vm1129, %v1546, %v1548
        %v1552 = vsel %vm1129, %v1548, %v1550
        %v1556 = vadd.f32 %v1490, %v1551
        %v1557 = vadd.f32 %v1491, %v1552
        %v1558 = vadd.f32 %v1492, %v1550
        %s1559 = scalar_lea.vmem [#allocation4], 240
        %v1560 = vld [vmem:[%s1559] sm:$0xff]
        %v1561 = vld [vmem:[%s1559 + $0x8] sm:$0xff]
        %1564 = vrot.lane.b32.xlu0 %v1560, 110
        %v1565 = vpop.permute.xlu0 %1564
        %1566 = vrot.lane.b32.xlu0 %v1561, 110
        %v1567 = vpop.permute.xlu0 %1566
        %v1568 = vsel %vm1146, %v1565, %v1567
        %v1572 = vmul.f32 %v524, %v1565
        %v1573 = vmul.f32 %v501, %v1568
        %v1574 = vmul.f32 %v524, %v1567
        %1578 = vrot.lane.b32.xlu0 %v1572, 95
        %v1579 = vpop.permute.xlu0 %1578
        %1580 = vrot.lane.b32.xlu0 %v1573, 95
        %v1581 = vpop.permute.xlu0 %1580
        %1582 = vrot.lane.b32.xlu0 %v1574, 95
        %v1583 = vpop.permute.xlu0 %1582
        %v1584 = vsel %vm1129, %v1579, %v1581
        %v1585 = vsel %vm1129, %v1581, %v1583
        %v1589 = vadd.f32 %v1523, %v1584
        %v1590 = vadd.f32 %v1524, %v1585
        %v1591 = vadd.f32 %v1525, %v1583
        %s1592 = scalar_lea.vmem [#allocation2], 256
        %v1593 = vld [vmem:[%s1592] sm:$0xff]
        %v1594 = vld [vmem:[%s1592 + $0x8] sm:$0xff]
        %1597 = vrot.lane.b32.xlu0 %v1593, 111
        %v1598 = vpop.permute.xlu0 %1597
        %1599 = vrot.lane.b32.xlu0 %v1594, 111
        %v1600 = vpop.permute.xlu0 %1599
        %v1601 = vsel %vm1078, %v1598, %v1600
        %v1605 = vmul.f32 %v524, %v1598
        %v1606 = vmul.f32 %v501, %v1601
        %v1607 = vmul.f32 %v524, %v1600
        %1611 = vrot.lane.b32.xlu0 %v1605, 94
        %v1612 = vpop.permute.xlu0 %1611
        %1613 = vrot.lane.b32.xlu0 %v1606, 94
        %v1614 = vpop.permute.xlu0 %1613
        %1615 = vrot.lane.b32.xlu0 %v1607, 94
        %v1616 = vpop.permute.xlu0 %1615
        %v1617 = vsel %vm1061, %v1612, %v1614
        %v1618 = vsel %vm1061, %v1614, %v1616
        %v1622 = vadd.f32 %v1556, %v1617
        %v1623 = vadd.f32 %v1557, %v1618
        %v1624 = vadd.f32 %v1558, %v1616
        %s1625 = scalar_lea.vmem [#allocation4], 256
        %v1626 = vld [vmem:[%s1625] sm:$0xff]
        %v1627 = vld [vmem:[%s1625 + $0x8] sm:$0xff]
        %1630 = vrot.lane.b32.xlu0 %v1626, 111
        %v1631 = vpop.permute.xlu0 %1630
        %1632 = vrot.lane.b32.xlu0 %v1627, 111
        %v1633 = vpop.permute.xlu0 %1632
        %v1634 = vsel %vm1078, %v1631, %v1633
        %v1638 = vmul.f32 %v524, %v1631
        %v1639 = vmul.f32 %v501, %v1634
        %v1640 = vmul.f32 %v524, %v1633
        %1644 = vrot.lane.b32.xlu0 %v1638, 94
        %v1645 = vpop.permute.xlu0 %1644
        %1646 = vrot.lane.b32.xlu0 %v1639, 94
        %v1647 = vpop.permute.xlu0 %1646
        %1648 = vrot.lane.b32.xlu0 %v1640, 94
        %v1649 = vpop.permute.xlu0 %1648
        %v1650 = vsel %vm1061, %v1645, %v1647
        %v1651 = vsel %vm1061, %v1647, %v1649
        %v1655 = vadd.f32 %v1589, %v1650
        %v1656 = vadd.f32 %v1590, %v1651
        %v1657 = vadd.f32 %v1591, %v1649
        %s1658 = scalar_lea.vmem [#allocation2], 272
        %v1659 = vld [vmem:[%s1658] sm:$0xff]
        %v1660 = vld [vmem:[%s1658 + $0x8] sm:$0xff]
        %1663 = vrot.lane.b32.xlu0 %v1659, 112
        %v1664 = vpop.permute.xlu0 %1663
        %1665 = vrot.lane.b32.xlu0 %v1660, 112
        %v1666 = vpop.permute.xlu0 %1665
        %v1667 = vsel %vm1010, %v1664, %v1666
        %v1671 = vmul.f32 %v524, %v1664
        %v1672 = vmul.f32 %v501, %v1667
        %v1673 = vmul.f32 %v524, %v1666
        %1677 = vrot.lane.b32.xlu0 %v1671, 93
        %v1678 = vpop.permute.xlu0 %1677
        %1679 = vrot.lane.b32.xlu0 %v1672, 93
        %v1680 = vpop.permute.xlu0 %1679
        %1681 = vrot.lane.b32.xlu0 %v1673, 93
        %v1682 = vpop.permute.xlu0 %1681
        %v1683 = vsel %vm993, %v1678, %v1680
        %v1684 = vsel %vm993, %v1680, %v1682
        %v1688 = vadd.f32 %v1622, %v1683
        %v1689 = vadd.f32 %v1623, %v1684
        %v1690 = vadd.f32 %v1624, %v1682
        %s1691 = scalar_lea.vmem [#allocation4], 272
        %v1692 = vld [vmem:[%s1691] sm:$0xff]
        %v1693 = vld [vmem:[%s1691 + $0x8] sm:$0xff]
        %1696 = vrot.lane.b32.xlu0 %v1692, 112
        %v1697 = vpop.permute.xlu0 %1696
        %1698 = vrot.lane.b32.xlu0 %v1693, 112
        %v1699 = vpop.permute.xlu0 %1698
        %v1700 = vsel %vm1010, %v1697, %v1699
        %v1704 = vmul.f32 %v524, %v1697
        %v1705 = vmul.f32 %v501, %v1700
        %v1706 = vmul.f32 %v524, %v1699
        %1710 = vrot.lane.b32.xlu0 %v1704, 93
        %v1711 = vpop.permute.xlu0 %1710
        %1712 = vrot.lane.b32.xlu0 %v1705, 93
        %v1713 = vpop.permute.xlu0 %1712
        %1714 = vrot.lane.b32.xlu0 %v1706, 93
        %v1715 = vpop.permute.xlu0 %1714
        %v1716 = vsel %vm993, %v1711, %v1713
        %v1717 = vsel %vm993, %v1713, %v1715
        %v1721 = vadd.f32 %v1655, %v1716
        %v1722 = vadd.f32 %v1656, %v1717
        %v1723 = vadd.f32 %v1657, %v1715
        %s1724 = scalar_lea.vmem [#allocation2], 288
        %v1725 = vld [vmem:[%s1724] sm:$0xff]
        %v1726 = vld [vmem:[%s1724 + $0x8] sm:$0xff]
        %1729 = vrot.lane.b32.xlu0 %v1725, 113
        %v1730 = vpop.permute.xlu0 %1729
        %1731 = vrot.lane.b32.xlu0 %v1726, 113
        %v1732 = vpop.permute.xlu0 %1731
        %vm1733 = vcmask 924672
        %v1734 = vsel %vm1733, %v1730, %v1732
        %v1738 = vmul.f32 %v524, %v1730
        %v1739 = vmul.f32 %v501, %v1734
        %v1740 = vmul.f32 %v524, %v1732
        %1744 = vrot.lane.b32.xlu0 %v1738, 92
        %v1745 = vpop.permute.xlu0 %1744
        %1746 = vrot.lane.b32.xlu0 %v1739, 92
        %v1747 = vpop.permute.xlu0 %1746
        %1748 = vrot.lane.b32.xlu0 %v1740, 92
        %v1749 = vpop.permute.xlu0 %1748
        %vm1750 = vcmask 752640
        %v1751 = vsel %vm1750, %v1745, %v1747
        %v1752 = vsel %vm1750, %v1747, %v1749
        %v1756 = vadd.f32 %v1688, %v1751
        %v1757 = vadd.f32 %v1689, %v1752
        %v1758 = vadd.f32 %v1690, %v1749
        %s1759 = scalar_lea.vmem [#allocation4], 288
        %v1760 = vld [vmem:[%s1759] sm:$0xff]
        %v1761 = vld [vmem:[%s1759 + $0x8] sm:$0xff]
        %1764 = vrot.lane.b32.xlu0 %v1760, 113
        %v1765 = vpop.permute.xlu0 %1764
        %1766 = vrot.lane.b32.xlu0 %v1761, 113
        %v1767 = vpop.permute.xlu0 %1766
        %v1768 = vsel %vm1733, %v1765, %v1767
        %v1772 = vmul.f32 %v524, %v1765
        %v1773 = vmul.f32 %v501, %v1768
        %v1774 = vmul.f32 %v524, %v1767
        %1778 = vrot.lane.b32.xlu0 %v1772, 92
        %v1779 = vpop.permute.xlu0 %1778
        %1780 = vrot.lane.b32.xlu0 %v1773, 92
        %v1781 = vpop.permute.xlu0 %1780
        %1782 = vrot.lane.b32.xlu0 %v1774, 92
        %v1783 = vpop.permute.xlu0 %1782
        %v1784 = vsel %vm1750, %v1779, %v1781
        %v1785 = vsel %vm1750, %v1781, %v1783
        %v1789 = vadd.f32 %v1721, %v1784
        %v1790 = vadd.f32 %v1722, %v1785
        %v1791 = vadd.f32 %v1723, %v1783
        %s1792 = scalar_lea.vmem [#allocation2], 304
        %v1793 = vld [vmem:[%s1792] sm:$0xff]
        %v1794 = vld [vmem:[%s1792 + $0x8] sm:$0xff]
        %1797 = vrot.lane.b32.xlu0 %v1793, 114
        %v1798 = vpop.permute.xlu0 %1797
        %1799 = vrot.lane.b32.xlu0 %v1794, 114
        %v1800 = vpop.permute.xlu0 %1799
        %vm1801 = vcmask 932864
        %v1802 = vsel %vm1801, %v1798, %v1800
        %v1806 = vmul.f32 %v524, %v1798
        %v1807 = vmul.f32 %v501, %v1802
        %v1808 = vmul.f32 %v524, %v1800
        %1812 = vrot.lane.b32.xlu0 %v1806, 91
        %v1813 = vpop.permute.xlu0 %1812
        %1814 = vrot.lane.b32.xlu0 %v1807, 91
        %v1815 = vpop.permute.xlu0 %1814
        %1816 = vrot.lane.b32.xlu0 %v1808, 91
        %v1817 = vpop.permute.xlu0 %1816
        %vm1818 = vcmask 744448
        %v1819 = vsel %vm1818, %v1813, %v1815
        %v1820 = vsel %vm1818, %v1815, %v1817
        %v1824 = vadd.f32 %v1756, %v1819
        %v1825 = vadd.f32 %v1757, %v1820
        %v1826 = vadd.f32 %v1758, %v1817
        %s1827 = scalar_lea.vmem [#allocation4], 304
        %v1828 = vld [vmem:[%s1827] sm:$0xff]
        %v1829 = vld [vmem:[%s1827 + $0x8] sm:$0xff]
        %1832 = vrot.lane.b32.xlu0 %v1828, 114
        %v1833 = vpop.permute.xlu0 %1832
        %1834 = vrot.lane.b32.xlu0 %v1829, 114
        %v1835 = vpop.permute.xlu0 %1834
        %v1836 = vsel %vm1801, %v1833, %v1835
        %v1840 = vmul.f32 %v524, %v1833
        %v1841 = vmul.f32 %v501, %v1836
        %v1842 = vmul.f32 %v524, %v1835
        %1846 = vrot.lane.b32.xlu0 %v1840, 91
        %v1847 = vpop.permute.xlu0 %1846
        %1848 = vrot.lane.b32.xlu0 %v1841, 91
        %v1849 = vpop.permute.xlu0 %1848
        %1850 = vrot.lane.b32.xlu0 %v1842, 91
        %v1851 = vpop.permute.xlu0 %1850
        %v1852 = vsel %vm1818, %v1847, %v1849
        %v1853 = vsel %vm1818, %v1849, %v1851
        %v1857 = vadd.f32 %v1789, %v1852
        %v1858 = vadd.f32 %v1790, %v1853
        %v1859 = vadd.f32 %v1791, %v1851
        %s1860 = scalar_lea.vmem [#allocation2], 320
        %v1861 = vld [vmem:[%s1860] sm:$0xff]
        %v1862 = vld [vmem:[%s1860 + $0x8] sm:$0xff]
        %1865 = vrot.lane.b32.xlu0 %v1861, 115
        %v1866 = vpop.permute.xlu0 %1865
        %1867 = vrot.lane.b32.xlu0 %v1862, 115
        %v1868 = vpop.permute.xlu0 %1867
        %vm1869 = vcmask 941056
        %v1870 = vsel %vm1869, %v1866, %v1868
        %v1874 = vmul.f32 %v524, %v1866
        %v1875 = vmul.f32 %v501, %v1870
        %v1876 = vmul.f32 %v524, %v1868
        %1880 = vrot.lane.b32.xlu0 %v1874, 90
        %v1881 = vpop.permute.xlu0 %1880
        %1882 = vrot.lane.b32.xlu0 %v1875, 90
        %v1883 = vpop.permute.xlu0 %1882
        %1884 = vrot.lane.b32.xlu0 %v1876, 90
        %v1885 = vpop.permute.xlu0 %1884
        %vm1886 = vcmask 736256
        %v1887 = vsel %vm1886, %v1881, %v1883
        %v1888 = vsel %vm1886, %v1883, %v1885
        %v1892 = vadd.f32 %v1824, %v1887
        %v1893 = vadd.f32 %v1825, %v1888
        %v1894 = vadd.f32 %v1826, %v1885
        %s1895 = scalar_lea.vmem [#allocation4], 320
        %v1896 = vld [vmem:[%s1895] sm:$0xff]
        %v1897 = vld [vmem:[%s1895 + $0x8] sm:$0xff]
        %1900 = vrot.lane.b32.xlu0 %v1896, 115
        %v1901 = vpop.permute.xlu0 %1900
        %1902 = vrot.lane.b32.xlu0 %v1897, 115
        %v1903 = vpop.permute.xlu0 %1902
        %v1904 = vsel %vm1869, %v1901, %v1903
        %v1908 = vmul.f32 %v524, %v1901
        %v1909 = vmul.f32 %v501, %v1904
        %v1910 = vmul.f32 %v524, %v1903
        %1914 = vrot.lane.b32.xlu0 %v1908, 90
        %v1915 = vpop.permute.xlu0 %1914
        %1916 = vrot.lane.b32.xlu0 %v1909, 90
        %v1917 = vpop.permute.xlu0 %1916
        %1918 = vrot.lane.b32.xlu0 %v1910, 90
        %v1919 = vpop.permute.xlu0 %1918
        %v1920 = vsel %vm1886, %v1915, %v1917
        %v1921 = vsel %vm1886, %v1917, %v1919
        %v1925 = vadd.f32 %v1857, %v1920
        %v1926 = vadd.f32 %v1858, %v1921
        %v1927 = vadd.f32 %v1859, %v1919
        %s1928 = scalar_lea.vmem [#allocation2], 336
        %v1929 = vld [vmem:[%s1928] sm:$0xff]
        %v1930 = vld [vmem:[%s1928 + $0x8] sm:$0xff]
        %1933 = vrot.lane.b32.xlu0 %v1929, 125
        %v1934 = vpop.permute.xlu0 %1933
        %1935 = vrot.lane.b32.xlu0 %v1930, 125
        %v1936 = vpop.permute.xlu0 %1935
        %v1937 = vsel %vm738, %v1934, %v1936
        %v1941 = vmul.f32 %v524, %v1934
        %v1942 = vmul.f32 %v501, %v1937
        %v1943 = vmul.f32 %v524, %v1936
        %1947 = vrot.lane.b32.xlu0 %v1941, 80
        %v1948 = vpop.permute.xlu0 %1947
        %1949 = vrot.lane.b32.xlu0 %v1942, 80
        %v1950 = vpop.permute.xlu0 %1949
        %1951 = vrot.lane.b32.xlu0 %v1943, 80
        %v1952 = vpop.permute.xlu0 %1951
        %v1953 = vsel %vm721, %v1948, %v1950
        %v1954 = vsel %vm721, %v1950, %v1952
        %v1958 = vadd.f32 %v1892, %v1953
        %v1959 = vadd.f32 %v1893, %v1954
        %v1960 = vadd.f32 %v1894, %v1952
        %s1961 = scalar_lea.vmem [#allocation4], 336
        %v1962 = vld [vmem:[%s1961] sm:$0xff]
        %v1963 = vld [vmem:[%s1961 + $0x8] sm:$0xff]
        %1966 = vrot.lane.b32.xlu0 %v1962, 125
        %v1967 = vpop.permute.xlu0 %1966
        %1968 = vrot.lane.b32.xlu0 %v1963, 125
        %v1969 = vpop.permute.xlu0 %1968
        %v1970 = vsel %vm738, %v1967, %v1969
        %v1974 = vmul.f32 %v524, %v1967
        %v1975 = vmul.f32 %v501, %v1970
        %v1976 = vmul.f32 %v524, %v1969
        %1980 = vrot.lane.b32.xlu0 %v1974, 80
        %v1981 = vpop.permute.xlu0 %1980
        %1982 = vrot.lane.b32.xlu0 %v1975, 80
        %v1983 = vpop.permute.xlu0 %1982
        %1984 = vrot.lane.b32.xlu0 %v1976, 80
        %v1985 = vpop.permute.xlu0 %1984
        %v1986 = vsel %vm721, %v1981, %v1983
        %v1987 = vsel %vm721, %v1983, %v1985
        %v1991 = vadd.f32 %v1925, %v1986
        %v1992 = vadd.f32 %v1926, %v1987
        %v1993 = vadd.f32 %v1927, %v1985
        %s1994 = scalar_lea.vmem [#allocation2], 352
        %v1995 = vld [vmem:[%s1994] sm:$0xff]
        %v1996 = vld [vmem:[%s1994 + $0x8] sm:$0xff]
        %1999 = vrot.lane.b32.xlu0 %v1995, 126
        %v2000 = vpop.permute.xlu0 %1999
        %2001 = vrot.lane.b32.xlu0 %v1996, 126
        %v2002 = vpop.permute.xlu0 %2001
        %v2003 = vsel %vm670, %v2000, %v2002
        %v2007 = vmul.f32 %v524, %v2000
        %v2008 = vmul.f32 %v501, %v2003
        %v2009 = vmul.f32 %v524, %v2002
        %2013 = vrot.lane.b32.xlu0 %v2007, 79
        %v2014 = vpop.permute.xlu0 %2013
        %2015 = vrot.lane.b32.xlu0 %v2008, 79
        %v2016 = vpop.permute.xlu0 %2015
        %2017 = vrot.lane.b32.xlu0 %v2009, 79
        %v2018 = vpop.permute.xlu0 %2017
        %v2019 = vsel %vm653, %v2014, %v2016
        %v2020 = vsel %vm653, %v2016, %v2018
        %v2024 = vadd.f32 %v1958, %v2019
        %v2025 = vadd.f32 %v1959, %v2020
        %v2026 = vadd.f32 %v1960, %v2018
        %s2027 = scalar_lea.vmem [#allocation4], 352
        %v2028 = vld [vmem:[%s2027] sm:$0xff]
        %v2029 = vld [vmem:[%s2027 + $0x8] sm:$0xff]
        %2032 = vrot.lane.b32.xlu0 %v2028, 126
        %v2033 = vpop.permute.xlu0 %2032
        %2034 = vrot.lane.b32.xlu0 %v2029, 126
        %v2035 = vpop.permute.xlu0 %2034
        %v2036 = vsel %vm670, %v2033, %v2035
        %v2040 = vmul.f32 %v524, %v2033
        %v2041 = vmul.f32 %v501, %v2036
        %v2042 = vmul.f32 %v524, %v2035
        %2046 = vrot.lane.b32.xlu0 %v2040, 79
        %v2047 = vpop.permute.xlu0 %2046
        %2048 = vrot.lane.b32.xlu0 %v2041, 79
        %v2049 = vpop.permute.xlu0 %2048
        %2050 = vrot.lane.b32.xlu0 %v2042, 79
        %v2051 = vpop.permute.xlu0 %2050
        %v2052 = vsel %vm653, %v2047, %v2049
        %v2053 = vsel %vm653, %v2049, %v2051
        %v2057 = vadd.f32 %v1991, %v2052
        %v2058 = vadd.f32 %v1992, %v2053
        %v2059 = vadd.f32 %v1993, %v2051
        %s2060 = scalar_lea.vmem [#allocation2], 368
        %v2061 = vld [vmem:[%s2060] sm:$0xff]
        %v2062 = vld [vmem:[%s2060 + $0x8] sm:$0xff]
        %2065 = vrot.lane.b32.xlu0 %v2061, 127
        %v2066 = vpop.permute.xlu0 %2065
        %2067 = vrot.lane.b32.xlu0 %v2062, 127
        %v2068 = vpop.permute.xlu0 %2067
        %v2069 = vsel %vm602, %v2066, %v2068
        %v2073 = vmul.f32 %v524, %v2066
        %v2074 = vmul.f32 %v501, %v2069
        %v2075 = vmul.f32 %v524, %v2068
        %2079 = vrot.lane.b32.xlu0 %v2073, 78
        %v2080 = vpop.permute.xlu0 %2079
        %2081 = vrot.lane.b32.xlu0 %v2074, 78
        %v2082 = vpop.permute.xlu0 %2081
        %2083 = vrot.lane.b32.xlu0 %v2075, 78
        %v2084 = vpop.permute.xlu0 %2083
        %v2085 = vsel %vm585, %v2080, %v2082
        %v2086 = vsel %vm585, %v2082, %v2084
        %v2090 = vadd.f32 %v2024, %v2085
        %v2091 = vadd.f32 %v2025, %v2086
        %v2092 = vadd.f32 %v2026, %v2084
        %s2093 = scalar_lea.vmem [#allocation4], 368
        %v2094 = vld [vmem:[%s2093] sm:$0xff]
        %v2095 = vld [vmem:[%s2093 + $0x8] sm:$0xff]
        %2098 = vrot.lane.b32.xlu0 %v2094, 127
        %v2099 = vpop.permute.xlu0 %2098
        %2100 = vrot.lane.b32.xlu0 %v2095, 127
        %v2101 = vpop.permute.xlu0 %2100
        %v2102 = vsel %vm602, %v2099, %v2101
        %v2106 = vmul.f32 %v524, %v2099
        %v2107 = vmul.f32 %v501, %v2102
        %v2108 = vmul.f32 %v524, %v2101
        %2112 = vrot.lane.b32.xlu0 %v2106, 78
        %v2113 = vpop.permute.xlu0 %2112
        %2114 = vrot.lane.b32.xlu0 %v2107, 78
        %v2115 = vpop.permute.xlu0 %2114
        %2116 = vrot.lane.b32.xlu0 %v2108, 78
        %v2117 = vpop.permute.xlu0 %2116
        %v2118 = vsel %vm585, %v2113, %v2115
        %v2119 = vsel %vm585, %v2115, %v2117
        %v2123 = vadd.f32 %v2057, %v2118
        %v2124 = vadd.f32 %v2058, %v2119
        %v2125 = vadd.f32 %v2059, %v2117
        %s2126 = scalar_lea.vmem [#allocation2], 384
        %v2127 = vld [vmem:[%s2126] sm:$0xff]
        %v2128 = vld [vmem:[%s2126 + $0x8] sm:$0xff]
        %v2129 = vmul.f32 %v501, %v2127
        %v2130 = vmul.f32 %v524, %v2128
        %2133 = vrot.lane.b32.xlu0 %v2129, 77
        %v2134 = vpop.permute.xlu0 %2133
        %2135 = vrot.lane.b32.xlu0 %v2130, 77
        %v2136 = vpop.permute.xlu0 %2135
        %v2137 = vsel %vm547, %v2134, %v2136
        %v2141 = vadd.f32 %v2090, %v2134
        %v2142 = vadd.f32 %v2091, %v2137
        %v2143 = vadd.f32 %v2092, %v2136
        %s2144 = scalar_lea.vmem [#allocation4], 384
        %v2145 = vld [vmem:[%s2144] sm:$0xff]
        %v2146 = vld [vmem:[%s2144 + $0x8] sm:$0xff]
        %v2147 = vmul.f32 %v501, %v2145
        %v2148 = vmul.f32 %v524, %v2146
        %2151 = vrot.lane.b32.xlu0 %v2147, 77
        %v2152 = vpop.permute.xlu0 %2151
        %2153 = vrot.lane.b32.xlu0 %v2148, 77
        %v2154 = vpop.permute.xlu0 %2153
        %v2155 = vsel %vm547, %v2152, %v2154
        %v2159 = vadd.f32 %v2123, %v2152
        %v2160 = vadd.f32 %v2124, %v2155
        %v2161 = vadd.f32 %v2125, %v2154
        %s2162 = scalar_lea.vmem [#allocation2], 400
        %v2163 = vld [vmem:[%s2162] sm:$0xff]
        %v2164 = vld [vmem:[%s2162 + $0x8] sm:$0xff]
        %2167 = vrot.lane.b32.xlu0 %v2163, 1
        %v2168 = vpop.permute.xlu0 %2167
        %2169 = vrot.lane.b32.xlu0 %v2164, 1
        %v2170 = vpop.permute.xlu0 %2169
        %vm2171 = vcmask 7168
        %v2172 = vsel %vm2171, %v2168, %v2170
        %v2176 = vmul.f32 %v501, %v2168
        %v2177 = vmul.f32 %v524, %v2172
        %v2178 = vmul.f32 %v501, %v2170
        %2182 = vrot.lane.b32.xlu0 %v2176, 76
        %v2183 = vpop.permute.xlu0 %2182
        %2184 = vrot.lane.b32.xlu0 %v2177, 76
        %v2185 = vpop.permute.xlu0 %2184
        %2186 = vrot.lane.b32.xlu0 %v2178, 76
        %v2187 = vpop.permute.xlu0 %2186
        %vm2188 = vcmask 621568
        %v2189 = vsel %vm2188, %v2183, %v2185
        %v2190 = vsel %vm2188, %v2185, %v2187
        %v2194 = vadd.f32 %v2141, %v2183
        %v2195 = vadd.f32 %v2142, %v2189
        %v2196 = vadd.f32 %v2143, %v2190
        %s2197 = scalar_lea.vmem [#allocation4], 400
        %v2198 = vld [vmem:[%s2197] sm:$0xff]
        %v2199 = vld [vmem:[%s2197 + $0x8] sm:$0xff]
        %2202 = vrot.lane.b32.xlu0 %v2198, 1
        %v2203 = vpop.permute.xlu0 %2202
        %2204 = vrot.lane.b32.xlu0 %v2199, 1
        %v2205 = vpop.permute.xlu0 %2204
        %v2206 = vsel %vm2171, %v2203, %v2205
        %v2210 = vmul.f32 %v501, %v2203
        %v2211 = vmul.f32 %v524, %v2206
        %v2212 = vmul.f32 %v501, %v2205
        %2216 = vrot.lane.b32.xlu0 %v2210, 76
        %v2217 = vpop.permute.xlu0 %2216
        %2218 = vrot.lane.b32.xlu0 %v2211, 76
        %v2219 = vpop.permute.xlu0 %2218
        %2220 = vrot.lane.b32.xlu0 %v2212, 76
        %v2221 = vpop.permute.xlu0 %2220
        %v2222 = vsel %vm2188, %v2217, %v2219
        %v2223 = vsel %vm2188, %v2219, %v2221
        %v2227 = vadd.f32 %v2159, %v2217
        %v2228 = vadd.f32 %v2160, %v2222
        %v2229 = vadd.f32 %v2161, %v2223
        %s2230 = scalar_lea.vmem [#allocation2], 416
        %v2231 = vld [vmem:[%s2230] sm:$0xff]
        %v2232 = vld [vmem:[%s2230 + $0x8] sm:$0xff]
        %2235 = vrot.lane.b32.xlu0 %v2231, 2
        %v2236 = vpop.permute.xlu0 %2235
        %2237 = vrot.lane.b32.xlu0 %v2232, 2
        %v2238 = vpop.permute.xlu0 %2237
        %vm2239 = vcmask 15360
        %v2240 = vsel %vm2239, %v2236, %v2238
        %v2244 = vmul.f32 %v501, %v2236
        %v2245 = vmul.f32 %v524, %v2240
        %v2246 = vmul.f32 %v501, %v2238
        %2250 = vrot.lane.b32.xlu0 %v2244, 75
        %v2251 = vpop.permute.xlu0 %2250
        %2252 = vrot.lane.b32.xlu0 %v2245, 75
        %v2253 = vpop.permute.xlu0 %2252
        %2254 = vrot.lane.b32.xlu0 %v2246, 75
        %v2255 = vpop.permute.xlu0 %2254
        %vm2256 = vcmask 613376
        %v2257 = vsel %vm2256, %v2251, %v2253
        %v2258 = vsel %vm2256, %v2253, %v2255
        %v2262 = vadd.f32 %v2194, %v2251
        %v2263 = vadd.f32 %v2195, %v2257
        %v2264 = vadd.f32 %v2196, %v2258
        %s2265 = scalar_lea.vmem [#allocation4], 416
        %v2266 = vld [vmem:[%s2265] sm:$0xff]
        %v2267 = vld [vmem:[%s2265 + $0x8] sm:$0xff]
        %2270 = vrot.lane.b32.xlu0 %v2266, 2
        %v2271 = vpop.permute.xlu0 %2270
        %2272 = vrot.lane.b32.xlu0 %v2267, 2
        %v2273 = vpop.permute.xlu0 %2272
        %v2274 = vsel %vm2239, %v2271, %v2273
        %v2278 = vmul.f32 %v501, %v2271
        %v2279 = vmul.f32 %v524, %v2274
        %v2280 = vmul.f32 %v501, %v2273
        %2284 = vrot.lane.b32.xlu0 %v2278, 75
        %v2285 = vpop.permute.xlu0 %2284
        %2286 = vrot.lane.b32.xlu0 %v2279, 75
        %v2287 = vpop.permute.xlu0 %2286
        %2288 = vrot.lane.b32.xlu0 %v2280, 75
        %v2289 = vpop.permute.xlu0 %2288
        %v2290 = vsel %vm2256, %v2285, %v2287
        %v2291 = vsel %vm2256, %v2287, %v2289
        %v2295 = vadd.f32 %v2227, %v2285
        %v2296 = vadd.f32 %v2228, %v2290
        %v2297 = vadd.f32 %v2229, %v2291
        %s2298 = scalar_lea.vmem [#allocation2], 432
        %v2299 = vld [vmem:[%s2298] sm:$0xff]
        %v2300 = vld [vmem:[%s2298 + $0x8] sm:$0xff]
        %2303 = vrot.lane.b32.xlu0 %v2299, 3
        %v2304 = vpop.permute.xlu0 %2303
        %2305 = vrot.lane.b32.xlu0 %v2300, 3
        %v2306 = vpop.permute.xlu0 %2305
        %vm2307 = vcmask 23552
        %v2308 = vsel %vm2307, %v2304, %v2306
        %v2312 = vmul.f32 %v501, %v2304
        %v2313 = vmul.f32 %v524, %v2308
        %v2314 = vmul.f32 %v501, %v2306
        %2318 = vrot.lane.b32.xlu0 %v2312, 74
        %v2319 = vpop.permute.xlu0 %2318
        %2320 = vrot.lane.b32.xlu0 %v2313, 74
        %v2321 = vpop.permute.xlu0 %2320
        %2322 = vrot.lane.b32.xlu0 %v2314, 74
        %v2323 = vpop.permute.xlu0 %2322
        %vm2324 = vcmask 605184
        %v2325 = vsel %vm2324, %v2319, %v2321
        %v2326 = vsel %vm2324, %v2321, %v2323
        %v2330 = vadd.f32 %v2262, %v2319
        %v2331 = vadd.f32 %v2263, %v2325
        %v2332 = vadd.f32 %v2264, %v2326
        %s2333 = scalar_lea.vmem [#allocation4], 432
        %v2334 = vld [vmem:[%s2333] sm:$0xff]
        %v2335 = vld [vmem:[%s2333 + $0x8] sm:$0xff]
        %2338 = vrot.lane.b32.xlu0 %v2334, 3
        %v2339 = vpop.permute.xlu0 %2338
        %2340 = vrot.lane.b32.xlu0 %v2335, 3
        %v2341 = vpop.permute.xlu0 %2340
        %v2342 = vsel %vm2307, %v2339, %v2341
        %v2346 = vmul.f32 %v501, %v2339
        %v2347 = vmul.f32 %v524, %v2342
        %v2348 = vmul.f32 %v501, %v2341
        %2352 = vrot.lane.b32.xlu0 %v2346, 74
        %v2353 = vpop.permute.xlu0 %2352
        %2354 = vrot.lane.b32.xlu0 %v2347, 74
        %v2355 = vpop.permute.xlu0 %2354
        %2356 = vrot.lane.b32.xlu0 %v2348, 74
        %v2357 = vpop.permute.xlu0 %2356
        %v2358 = vsel %vm2324, %v2353, %v2355
        %v2359 = vsel %vm2324, %v2355, %v2357
        %v2363 = vadd.f32 %v2295, %v2353
        %v2364 = vadd.f32 %v2296, %v2358
        %v2365 = vadd.f32 %v2297, %v2359
        %s2366 = scalar_lea.vmem [#allocation2], 448
        %v2367 = vld [vmem:[%s2366] sm:$0xff]
        %v2368 = vld [vmem:[%s2366 + $0x8] sm:$0xff]
        %2371 = vrot.lane.b32.xlu0 %v2367, 13
        %v2372 = vpop.permute.xlu0 %2371
        %2373 = vrot.lane.b32.xlu0 %v2368, 13
        %v2374 = vpop.permute.xlu0 %2373
        %vm2375 = vcmask 105472
        %v2376 = vsel %vm2375, %v2372, %v2374
        %v2380 = vmul.f32 %v501, %v2372
        %v2381 = vmul.f32 %v524, %v2376
        %v2382 = vmul.f32 %v501, %v2374
        %2386 = vrot.lane.b32.xlu0 %v2380, 64
        %v2387 = vpop.permute.xlu0 %2386
        %2388 = vrot.lane.b32.xlu0 %v2381, 64
        %v2389 = vpop.permute.xlu0 %2388
        %2390 = vrot.lane.b32.xlu0 %v2382, 64
        %v2391 = vpop.permute.xlu0 %2390
        %vm2392 = vcmask 523264
        %v2393 = vsel %vm2392, %v2387, %v2389
        %v2394 = vsel %vm2392, %v2389, %v2391
        %v2398 = vadd.f32 %v2330, %v2387
        %v2399 = vadd.f32 %v2331, %v2393
        %v2400 = vadd.f32 %v2332, %v2394
        %s2401 = scalar_lea.vmem [#allocation4], 448
        %v2402 = vld [vmem:[%s2401] sm:$0xff]
        %v2403 = vld [vmem:[%s2401 + $0x8] sm:$0xff]
        %2406 = vrot.lane.b32.xlu0 %v2402, 13
        %v2407 = vpop.permute.xlu0 %2406
        %2408 = vrot.lane.b32.xlu0 %v2403, 13
        %v2409 = vpop.permute.xlu0 %2408
        %v2410 = vsel %vm2375, %v2407, %v2409
        %v2414 = vmul.f32 %v501, %v2407
        %v2415 = vmul.f32 %v524, %v2410
        %v2416 = vmul.f32 %v501, %v2409
        %2420 = vrot.lane.b32.xlu0 %v2414, 64
        %v2421 = vpop.permute.xlu0 %2420
        %2422 = vrot.lane.b32.xlu0 %v2415, 64
        %v2423 = vpop.permute.xlu0 %2422
        %2424 = vrot.lane.b32.xlu0 %v2416, 64
        %v2425 = vpop.permute.xlu0 %2424
        %v2426 = vsel %vm2392, %v2421, %v2423
        %v2427 = vsel %vm2392, %v2423, %v2425
        %v2431 = vadd.f32 %v2363, %v2421
        %v2432 = vadd.f32 %v2364, %v2426
        %v2433 = vadd.f32 %v2365, %v2427
        %s2434 = scalar_lea.vmem [#allocation2], 464
        %v2435 = vld [vmem:[%s2434] sm:$0xff]
        %v2436 = vld [vmem:[%s2434 + $0x8] sm:$0xff]
        %2439 = vrot.lane.b32.xlu0 %v2435, 14
        %v2440 = vpop.permute.xlu0 %2439
        %2441 = vrot.lane.b32.xlu0 %v2436, 14
        %v2442 = vpop.permute.xlu0 %2441
        %vm2443 = vcmask 113664
        %v2444 = vsel %vm2443, %v2440, %v2442
        %v2448 = vmul.f32 %v501, %v2440
        %v2449 = vmul.f32 %v524, %v2444
        %v2450 = vmul.f32 %v501, %v2442
        %2454 = vrot.lane.b32.xlu0 %v2448, 63
        %v2455 = vpop.permute.xlu0 %2454
        %2456 = vrot.lane.b32.xlu0 %v2449, 63
        %v2457 = vpop.permute.xlu0 %2456
        %2458 = vrot.lane.b32.xlu0 %v2450, 63
        %v2459 = vpop.permute.xlu0 %2458
        %vm2460 = vcmask 515072
        %v2461 = vsel %vm2460, %v2455, %v2457
        %v2462 = vsel %vm2460, %v2457, %v2459
        %v2466 = vadd.f32 %v2398, %v2455
        %v2467 = vadd.f32 %v2399, %v2461
        %v2468 = vadd.f32 %v2400, %v2462
        %s2469 = scalar_lea.vmem [#allocation4], 464
        %v2470 = vld [vmem:[%s2469] sm:$0xff]
        %v2471 = vld [vmem:[%s2469 + $0x8] sm:$0xff]
        %2474 = vrot.lane.b32.xlu0 %v2470, 14
        %v2475 = vpop.permute.xlu0 %2474
        %2476 = vrot.lane.b32.xlu0 %v2471, 14
        %v2477 = vpop.permute.xlu0 %2476
        %v2478 = vsel %vm2443, %v2475, %v2477
        %v2482 = vmul.f32 %v501, %v2475
        %v2483 = vmul.f32 %v524, %v2478
        %v2484 = vmul.f32 %v501, %v2477
        %2488 = vrot.lane.b32.xlu0 %v2482, 63
        %v2489 = vpop.permute.xlu0 %2488
        %2490 = vrot.lane.b32.xlu0 %v2483, 63
        %v2491 = vpop.permute.xlu0 %2490
        %2492 = vrot.lane.b32.xlu0 %v2484, 63
        %v2493 = vpop.permute.xlu0 %2492
        %v2494 = vsel %vm2460, %v2489, %v2491
        %v2495 = vsel %vm2460, %v2491, %v2493
        %v2499 = vadd.f32 %v2431, %v2489
        %v2500 = vadd.f32 %v2432, %v2494
        %v2501 = vadd.f32 %v2433, %v2495
        %s2502 = scalar_lea.vmem [#allocation2], 480
        %v2503 = vld [vmem:[%s2502] sm:$0xff]
        %v2504 = vld [vmem:[%s2502 + $0x8] sm:$0xff]
        %2507 = vrot.lane.b32.xlu0 %v2503, 15
        %v2508 = vpop.permute.xlu0 %2507
        %2509 = vrot.lane.b32.xlu0 %v2504, 15
        %v2510 = vpop.permute.xlu0 %2509
        %vm2511 = vcmask 121856
        %v2512 = vsel %vm2511, %v2508, %v2510
        %v2516 = vmul.f32 %v501, %v2508
        %v2517 = vmul.f32 %v524, %v2512
        %v2518 = vmul.f32 %v501, %v2510
        %2522 = vrot.lane.b32.xlu0 %v2516, 62
        %v2523 = vpop.permute.xlu0 %2522
        %2524 = vrot.lane.b32.xlu0 %v2517, 62
        %v2525 = vpop.permute.xlu0 %2524
        %2526 = vrot.lane.b32.xlu0 %v2518, 62
        %v2527 = vpop.permute.xlu0 %2526
        %vm2528 = vcmask 506880
        %v2529 = vsel %vm2528, %v2523, %v2525
        %v2530 = vsel %vm2528, %v2525, %v2527
        %v2534 = vadd.f32 %v2466, %v2523
        %v2535 = vadd.f32 %v2467, %v2529
        %v2536 = vadd.f32 %v2468, %v2530
        %s2537 = scalar_lea.vmem [#allocation4], 480
        %v2538 = vld [vmem:[%s2537] sm:$0xff]
        %v2539 = vld [vmem:[%s2537 + $0x8] sm:$0xff]
        %2542 = vrot.lane.b32.xlu0 %v2538, 15
        %v2543 = vpop.permute.xlu0 %2542
        %2544 = vrot.lane.b32.xlu0 %v2539, 15
        %v2545 = vpop.permute.xlu0 %2544
        %v2546 = vsel %vm2511, %v2543, %v2545
        %v2550 = vmul.f32 %v501, %v2543
        %v2551 = vmul.f32 %v524, %v2546
        %v2552 = vmul.f32 %v501, %v2545
        %2556 = vrot.lane.b32.xlu0 %v2550, 62
        %v2557 = vpop.permute.xlu0 %2556
        %2558 = vrot.lane.b32.xlu0 %v2551, 62
        %v2559 = vpop.permute.xlu0 %2558
        %2560 = vrot.lane.b32.xlu0 %v2552, 62
        %v2561 = vpop.permute.xlu0 %2560
        %v2562 = vsel %vm2528, %v2557, %v2559
        %v2563 = vsel %vm2528, %v2559, %v2561
        %v2567 = vadd.f32 %v2499, %v2557
        %v2568 = vadd.f32 %v2500, %v2562
        %v2569 = vadd.f32 %v2501, %v2563
        %s2570 = scalar_lea.vmem [#allocation2], 496
        %v2571 = vld [vmem:[%s2570] sm:$0xff]
        %v2572 = vld [vmem:[%s2570 + $0x8] sm:$0xff]
        %2575 = vrot.lane.b32.xlu0 %v2571, 16
        %v2576 = vpop.permute.xlu0 %2575
        %2577 = vrot.lane.b32.xlu0 %v2572, 16
        %v2578 = vpop.permute.xlu0 %2577
        %vm2579 = vcmask 130048
        %v2580 = vsel %vm2579, %v2576, %v2578
        %v2584 = vmul.f32 %v501, %v2576
        %v2585 = vmul.f32 %v524, %v2580
        %v2586 = vmul.f32 %v501, %v2578
        %2590 = vrot.lane.b32.xlu0 %v2584, 61
        %v2591 = vpop.permute.xlu0 %2590
        %2592 = vrot.lane.b32.xlu0 %v2585, 61
        %v2593 = vpop.permute.xlu0 %2592
        %2594 = vrot.lane.b32.xlu0 %v2586, 61
        %v2595 = vpop.permute.xlu0 %2594
        %vm2596 = vcmask 498688
        %v2597 = vsel %vm2596, %v2591, %v2593
        %v2598 = vsel %vm2596, %v2593, %v2595
        %v2602 = vadd.f32 %v2534, %v2591
        %v2603 = vadd.f32 %v2535, %v2597
        %v2604 = vadd.f32 %v2536, %v2598
        %s2605 = scalar_lea.vmem [#allocation4], 496
        %v2606 = vld [vmem:[%s2605] sm:$0xff]
        %v2607 = vld [vmem:[%s2605 + $0x8] sm:$0xff]
        %2610 = vrot.lane.b32.xlu0 %v2606, 16
        %v2611 = vpop.permute.xlu0 %2610
        %2612 = vrot.lane.b32.xlu0 %v2607, 16
        %v2613 = vpop.permute.xlu0 %2612
        %v2614 = vsel %vm2579, %v2611, %v2613
        %v2618 = vmul.f32 %v501, %v2611
        %v2619 = vmul.f32 %v524, %v2614
        %v2620 = vmul.f32 %v501, %v2613
        %2624 = vrot.lane.b32.xlu0 %v2618, 61
        %v2625 = vpop.permute.xlu0 %2624
        %2626 = vrot.lane.b32.xlu0 %v2619, 61
        %v2627 = vpop.permute.xlu0 %2626
        %2628 = vrot.lane.b32.xlu0 %v2620, 61
        %v2629 = vpop.permute.xlu0 %2628
        %v2630 = vsel %vm2596, %v2625, %v2627
        %v2631 = vsel %vm2596, %v2627, %v2629
        %v2635 = vadd.f32 %v2567, %v2625
        %v2636 = vadd.f32 %v2568, %v2630
        %v2637 = vadd.f32 %v2569, %v2631
        %s2638 = scalar_lea.vmem [#allocation2], 512
        %v2639 = vld [vmem:[%s2638] sm:$0xff]
        %v2640 = vld [vmem:[%s2638 + $0x8] sm:$0xff]
        %2643 = vrot.lane.b32.xlu0 %v2639, 17
        %v2644 = vpop.permute.xlu0 %2643
        %2645 = vrot.lane.b32.xlu0 %v2640, 17
        %v2646 = vpop.permute.xlu0 %2645
        %vm2647 = vcmask 138240
        %v2648 = vsel %vm2647, %v2644, %v2646
        %v2652 = vmul.f32 %v501, %v2644
        %v2653 = vmul.f32 %v524, %v2648
        %v2654 = vmul.f32 %v501, %v2646
        %2658 = vrot.lane.b32.xlu0 %v2652, 60
        %v2659 = vpop.permute.xlu0 %2658
        %2660 = vrot.lane.b32.xlu0 %v2653, 60
        %v2661 = vpop.permute.xlu0 %2660
        %2662 = vrot.lane.b32.xlu0 %v2654, 60
        %v2663 = vpop.permute.xlu0 %2662
        %vm2664 = vcmask 490496
        %v2665 = vsel %vm2664, %v2659, %v2661
        %v2666 = vsel %vm2664, %v2661, %v2663
        %v2670 = vadd.f32 %v2602, %v2659
        %v2671 = vadd.f32 %v2603, %v2665
        %v2672 = vadd.f32 %v2604, %v2666
        %s2673 = scalar_lea.vmem [#allocation4], 512
        %v2674 = vld [vmem:[%s2673] sm:$0xff]
        %v2675 = vld [vmem:[%s2673 + $0x8] sm:$0xff]
        %2678 = vrot.lane.b32.xlu0 %v2674, 17
        %v2679 = vpop.permute.xlu0 %2678
        %2680 = vrot.lane.b32.xlu0 %v2675, 17
        %v2681 = vpop.permute.xlu0 %2680
        %v2682 = vsel %vm2647, %v2679, %v2681
        %v2686 = vmul.f32 %v501, %v2679
        %v2687 = vmul.f32 %v524, %v2682
        %v2688 = vmul.f32 %v501, %v2681
        %2692 = vrot.lane.b32.xlu0 %v2686, 60
        %v2693 = vpop.permute.xlu0 %2692
        %2694 = vrot.lane.b32.xlu0 %v2687, 60
        %v2695 = vpop.permute.xlu0 %2694
        %2696 = vrot.lane.b32.xlu0 %v2688, 60
        %v2697 = vpop.permute.xlu0 %2696
        %v2698 = vsel %vm2664, %v2693, %v2695
        %v2699 = vsel %vm2664, %v2695, %v2697
        %v2703 = vadd.f32 %v2635, %v2693
        %v2704 = vadd.f32 %v2636, %v2698
        %v2705 = vadd.f32 %v2637, %v2699
        %s2706 = scalar_lea.vmem [#allocation2], 528
        %v2707 = vld [vmem:[%s2706] sm:$0xff]
        %v2708 = vld [vmem:[%s2706 + $0x8] sm:$0xff]
        %2711 = vrot.lane.b32.xlu0 %v2707, 18
        %v2712 = vpop.permute.xlu0 %2711
        %2713 = vrot.lane.b32.xlu0 %v2708, 18
        %v2714 = vpop.permute.xlu0 %2713
        %vm2715 = vcmask 146432
        %v2716 = vsel %vm2715, %v2712, %v2714
        %v2720 = vmul.f32 %v501, %v2712
        %v2721 = vmul.f32 %v524, %v2716
        %v2722 = vmul.f32 %v501, %v2714
        %2726 = vrot.lane.b32.xlu0 %v2720, 59
        %v2727 = vpop.permute.xlu0 %2726
        %2728 = vrot.lane.b32.xlu0 %v2721, 59
        %v2729 = vpop.permute.xlu0 %2728
        %2730 = vrot.lane.b32.xlu0 %v2722, 59
        %v2731 = vpop.permute.xlu0 %2730
        %vm2732 = vcmask 482304
        %v2733 = vsel %vm2732, %v2727, %v2729
        %v2734 = vsel %vm2732, %v2729, %v2731
        %v2738 = vadd.f32 %v2670, %v2727
        %v2739 = vadd.f32 %v2671, %v2733
        %v2740 = vadd.f32 %v2672, %v2734
        %s2741 = scalar_lea.vmem [#allocation4], 528
        %v2742 = vld [vmem:[%s2741] sm:$0xff]
        %v2743 = vld [vmem:[%s2741 + $0x8] sm:$0xff]
        %2746 = vrot.lane.b32.xlu0 %v2742, 18
        %v2747 = vpop.permute.xlu0 %2746
        %2748 = vrot.lane.b32.xlu0 %v2743, 18
        %v2749 = vpop.permute.xlu0 %2748
        %v2750 = vsel %vm2715, %v2747, %v2749
        %v2754 = vmul.f32 %v501, %v2747
        %v2755 = vmul.f32 %v524, %v2750
        %v2756 = vmul.f32 %v501, %v2749
        %2760 = vrot.lane.b32.xlu0 %v2754, 59
        %v2761 = vpop.permute.xlu0 %2760
        %2762 = vrot.lane.b32.xlu0 %v2755, 59
        %v2763 = vpop.permute.xlu0 %2762
        %2764 = vrot.lane.b32.xlu0 %v2756, 59
        %v2765 = vpop.permute.xlu0 %2764
        %v2766 = vsel %vm2732, %v2761, %v2763
        %v2767 = vsel %vm2732, %v2763, %v2765
        %v2771 = vadd.f32 %v2703, %v2761
        %v2772 = vadd.f32 %v2704, %v2766
        %v2773 = vadd.f32 %v2705, %v2767
        %s2774 = scalar_lea.vmem [#allocation2], 544
        %v2775 = vld [vmem:[%s2774] sm:$0xff]
        %v2776 = vld [vmem:[%s2774 + $0x8] sm:$0xff]
        %2779 = vrot.lane.b32.xlu0 %v2775, 19
        %v2780 = vpop.permute.xlu0 %2779
        %2781 = vrot.lane.b32.xlu0 %v2776, 19
        %v2782 = vpop.permute.xlu0 %2781
        %vm2783 = vcmask 154624
        %v2784 = vsel %vm2783, %v2780, %v2782
        %v2788 = vmul.f32 %v501, %v2780
        %v2789 = vmul.f32 %v524, %v2784
        %v2790 = vmul.f32 %v501, %v2782
        %2794 = vrot.lane.b32.xlu0 %v2788, 58
        %v2795 = vpop.permute.xlu0 %2794
        %2796 = vrot.lane.b32.xlu0 %v2789, 58
        %v2797 = vpop.permute.xlu0 %2796
        %2798 = vrot.lane.b32.xlu0 %v2790, 58
        %v2799 = vpop.permute.xlu0 %2798
        %vm2800 = vcmask 474112
        %v2801 = vsel %vm2800, %v2795, %v2797
        %v2802 = vsel %vm2800, %v2797, %v2799
        %v2806 = vadd.f32 %v2738, %v2795
        %v2807 = vadd.f32 %v2739, %v2801
        %v2808 = vadd.f32 %v2740, %v2802
        %s2809 = scalar_lea.vmem [#allocation4], 544
        %v2810 = vld [vmem:[%s2809] sm:$0xff]
        %v2811 = vld [vmem:[%s2809 + $0x8] sm:$0xff]
        %2814 = vrot.lane.b32.xlu0 %v2810, 19
        %v2815 = vpop.permute.xlu0 %2814
        %2816 = vrot.lane.b32.xlu0 %v2811, 19
        %v2817 = vpop.permute.xlu0 %2816
        %v2818 = vsel %vm2783, %v2815, %v2817
        %v2822 = vmul.f32 %v501, %v2815
        %v2823 = vmul.f32 %v524, %v2818
        %v2824 = vmul.f32 %v501, %v2817
        %2828 = vrot.lane.b32.xlu0 %v2822, 58
        %v2829 = vpop.permute.xlu0 %2828
        %2830 = vrot.lane.b32.xlu0 %v2823, 58
        %v2831 = vpop.permute.xlu0 %2830
        %2832 = vrot.lane.b32.xlu0 %v2824, 58
        %v2833 = vpop.permute.xlu0 %2832
        %v2834 = vsel %vm2800, %v2829, %v2831
        %v2835 = vsel %vm2800, %v2831, %v2833
        %v2839 = vadd.f32 %v2771, %v2829
        %v2840 = vadd.f32 %v2772, %v2834
        %v2841 = vadd.f32 %v2773, %v2835
        %s2842 = scalar_lea.vmem [#allocation2], 560
        %v2843 = vld [vmem:[%s2842] sm:$0xff]
        %v2844 = vld [vmem:[%s2842 + $0x8] sm:$0xff]
        %2847 = vrot.lane.b32.xlu0 %v2843, 29
        %v2848 = vpop.permute.xlu0 %2847
        %2849 = vrot.lane.b32.xlu0 %v2844, 29
        %v2850 = vpop.permute.xlu0 %2849
        %vm2851 = vcmask 236544
        %v2852 = vsel %vm2851, %v2848, %v2850
        %v2856 = vmul.f32 %v501, %v2848
        %v2857 = vmul.f32 %v524, %v2852
        %v2858 = vmul.f32 %v501, %v2850
        %2862 = vrot.lane.b32.xlu0 %v2856, 48
        %v2863 = vpop.permute.xlu0 %2862
        %2864 = vrot.lane.b32.xlu0 %v2857, 48
        %v2865 = vpop.permute.xlu0 %2864
        %2866 = vrot.lane.b32.xlu0 %v2858, 48
        %v2867 = vpop.permute.xlu0 %2866
        %vm2868 = vcmask 392192
        %v2869 = vsel %vm2868, %v2863, %v2865
        %v2870 = vsel %vm2868, %v2865, %v2867
        %v2874 = vadd.f32 %v2806, %v2863
        %v2875 = vadd.f32 %v2807, %v2869
        %v2876 = vadd.f32 %v2808, %v2870
        %s2877 = scalar_lea.vmem [#allocation4], 560
        %v2878 = vld [vmem:[%s2877] sm:$0xff]
        %v2879 = vld [vmem:[%s2877 + $0x8] sm:$0xff]
        %2882 = vrot.lane.b32.xlu0 %v2878, 29
        %v2883 = vpop.permute.xlu0 %2882
        %2884 = vrot.lane.b32.xlu0 %v2879, 29
        %v2885 = vpop.permute.xlu0 %2884
        %v2886 = vsel %vm2851, %v2883, %v2885
        %v2890 = vmul.f32 %v501, %v2883
        %v2891 = vmul.f32 %v524, %v2886
        %v2892 = vmul.f32 %v501, %v2885
        %2896 = vrot.lane.b32.xlu0 %v2890, 48
        %v2897 = vpop.permute.xlu0 %2896
        %2898 = vrot.lane.b32.xlu0 %v2891, 48
        %v2899 = vpop.permute.xlu0 %2898
        %2900 = vrot.lane.b32.xlu0 %v2892, 48
        %v2901 = vpop.permute.xlu0 %2900
        %v2902 = vsel %vm2868, %v2897, %v2899
        %v2903 = vsel %vm2868, %v2899, %v2901
        %v2907 = vadd.f32 %v2839, %v2897
        %v2908 = vadd.f32 %v2840, %v2902
        %v2909 = vadd.f32 %v2841, %v2903
        %s2910 = scalar_lea.vmem [#allocation2], 576
        %v2911 = vld [vmem:[%s2910] sm:$0xff]
        %v2912 = vld [vmem:[%s2910 + $0x8] sm:$0xff]
        %2915 = vrot.lane.b32.xlu0 %v2911, 30
        %v2916 = vpop.permute.xlu0 %2915
        %2917 = vrot.lane.b32.xlu0 %v2912, 30
        %v2918 = vpop.permute.xlu0 %2917
        %vm2919 = vcmask 244736
        %v2920 = vsel %vm2919, %v2916, %v2918
        %v2924 = vmul.f32 %v501, %v2916
        %v2925 = vmul.f32 %v524, %v2920
        %v2926 = vmul.f32 %v501, %v2918
        %2930 = vrot.lane.b32.xlu0 %v2924, 47
        %v2931 = vpop.permute.xlu0 %2930
        %2932 = vrot.lane.b32.xlu0 %v2925, 47
        %v2933 = vpop.permute.xlu0 %2932
        %2934 = vrot.lane.b32.xlu0 %v2926, 47
        %v2935 = vpop.permute.xlu0 %2934
        %vm2936 = vcmask 384000
        %v2937 = vsel %vm2936, %v2931, %v2933
        %v2938 = vsel %vm2936, %v2933, %v2935
        %v2942 = vadd.f32 %v2874, %v2931
        %v2943 = vadd.f32 %v2875, %v2937
        %v2944 = vadd.f32 %v2876, %v2938
        %s2945 = scalar_lea.vmem [#allocation4], 576
        %v2946 = vld [vmem:[%s2945] sm:$0xff]
        %v2947 = vld [vmem:[%s2945 + $0x8] sm:$0xff]
        %2950 = vrot.lane.b32.xlu0 %v2946, 30
        %v2951 = vpop.permute.xlu0 %2950
        %2952 = vrot.lane.b32.xlu0 %v2947, 30
        %v2953 = vpop.permute.xlu0 %2952
        %v2954 = vsel %vm2919, %v2951, %v2953
        %v2958 = vmul.f32 %v501, %v2951
        %v2959 = vmul.f32 %v524, %v2954
        %v2960 = vmul.f32 %v501, %v2953
        %2964 = vrot.lane.b32.xlu0 %v2958, 47
        %v2965 = vpop.permute.xlu0 %2964
        %2966 = vrot.lane.b32.xlu0 %v2959, 47
        %v2967 = vpop.permute.xlu0 %2966
        %2968 = vrot.lane.b32.xlu0 %v2960, 47
        %v2969 = vpop.permute.xlu0 %2968
        %v2970 = vsel %vm2936, %v2965, %v2967
        %v2971 = vsel %vm2936, %v2967, %v2969
        %v2975 = vadd.f32 %v2907, %v2965
        %v2976 = vadd.f32 %v2908, %v2970
        %v2977 = vadd.f32 %v2909, %v2971
        %s2978 = scalar_lea.vmem [#allocation2], 592
        %v2979 = vld [vmem:[%s2978] sm:$0xff]
        %v2980 = vld [vmem:[%s2978 + $0x8] sm:$0xff]
        %2983 = vrot.lane.b32.xlu0 %v2979, 31
        %v2984 = vpop.permute.xlu0 %2983
        %2985 = vrot.lane.b32.xlu0 %v2980, 31
        %v2986 = vpop.permute.xlu0 %2985
        %vm2987 = vcmask 252928
        %v2988 = vsel %vm2987, %v2984, %v2986
        %v2992 = vmul.f32 %v501, %v2984
        %v2993 = vmul.f32 %v524, %v2988
        %v2994 = vmul.f32 %v501, %v2986
        %2998 = vrot.lane.b32.xlu0 %v2992, 46
        %v2999 = vpop.permute.xlu0 %2998
        %3000 = vrot.lane.b32.xlu0 %v2993, 46
        %v3001 = vpop.permute.xlu0 %3000
        %3002 = vrot.lane.b32.xlu0 %v2994, 46
        %v3003 = vpop.permute.xlu0 %3002
        %vm3004 = vcmask 375808
        %v3005 = vsel %vm3004, %v2999, %v3001
        %v3006 = vsel %vm3004, %v3001, %v3003
        %v3010 = vadd.f32 %v2942, %v2999
        %v3011 = vadd.f32 %v2943, %v3005
        %v3012 = vadd.f32 %v2944, %v3006
        %s3013 = scalar_lea.vmem [#allocation4], 592
        %v3014 = vld [vmem:[%s3013] sm:$0xff]
        %v3015 = vld [vmem:[%s3013 + $0x8] sm:$0xff]
        %3018 = vrot.lane.b32.xlu0 %v3014, 31
        %v3019 = vpop.permute.xlu0 %3018
        %3020 = vrot.lane.b32.xlu0 %v3015, 31
        %v3021 = vpop.permute.xlu0 %3020
        %v3022 = vsel %vm2987, %v3019, %v3021
        %v3026 = vmul.f32 %v501, %v3019
        %v3027 = vmul.f32 %v524, %v3022
        %v3028 = vmul.f32 %v501, %v3021
        %3032 = vrot.lane.b32.xlu0 %v3026, 46
        %v3033 = vpop.permute.xlu0 %3032
        %3034 = vrot.lane.b32.xlu0 %v3027, 46
        %v3035 = vpop.permute.xlu0 %3034
        %3036 = vrot.lane.b32.xlu0 %v3028, 46
        %v3037 = vpop.permute.xlu0 %3036
        %v3038 = vsel %vm3004, %v3033, %v3035
        %v3039 = vsel %vm3004, %v3035, %v3037
        %v3043 = vadd.f32 %v2975, %v3033
        %v3044 = vadd.f32 %v2976, %v3038
        %v3045 = vadd.f32 %v2977, %v3039
        %s3046 = scalar_lea.vmem [#allocation2], 608
        %v3047 = vld [vmem:[%s3046] sm:$0xff]
        %v3048 = vld [vmem:[%s3046 + $0x8] sm:$0xff]
        %3051 = vrot.lane.b32.xlu0 %v3047, 32
        %v3052 = vpop.permute.xlu0 %3051
        %3053 = vrot.lane.b32.xlu0 %v3048, 32
        %v3054 = vpop.permute.xlu0 %3053
        %vm3055 = vcmask 261120
        %v3056 = vsel %vm3055, %v3052, %v3054
        %v3060 = vmul.f32 %v501, %v3052
        %v3061 = vmul.f32 %v524, %v3056
        %v3062 = vmul.f32 %v501, %v3054
        %3066 = vrot.lane.b32.xlu0 %v3060, 45
        %v3067 = vpop.permute.xlu0 %3066
        %3068 = vrot.lane.b32.xlu0 %v3061, 45
        %v3069 = vpop.permute.xlu0 %3068
        %3070 = vrot.lane.b32.xlu0 %v3062, 45
        %v3071 = vpop.permute.xlu0 %3070
        %vm3072 = vcmask 367616
        %v3073 = vsel %vm3072, %v3067, %v3069
        %v3074 = vsel %vm3072, %v3069, %v3071
        %v3078 = vadd.f32 %v3010, %v3067
        %v3079 = vadd.f32 %v3011, %v3073
        %v3080 = vadd.f32 %v3012, %v3074
        %s3081 = scalar_lea.vmem [#allocation4], 608
        %v3082 = vld [vmem:[%s3081] sm:$0xff]
        %v3083 = vld [vmem:[%s3081 + $0x8] sm:$0xff]
        %3086 = vrot.lane.b32.xlu0 %v3082, 32
        %v3087 = vpop.permute.xlu0 %3086
        %3088 = vrot.lane.b32.xlu0 %v3083, 32
        %v3089 = vpop.permute.xlu0 %3088
        %v3090 = vsel %vm3055, %v3087, %v3089
        %v3094 = vmul.f32 %v501, %v3087
        %v3095 = vmul.f32 %v524, %v3090
        %v3096 = vmul.f32 %v501, %v3089
        %3100 = vrot.lane.b32.xlu0 %v3094, 45
        %v3101 = vpop.permute.xlu0 %3100
        %3102 = vrot.lane.b32.xlu0 %v3095, 45
        %v3103 = vpop.permute.xlu0 %3102
        %3104 = vrot.lane.b32.xlu0 %v3096, 45
        %v3105 = vpop.permute.xlu0 %3104
        %v3106 = vsel %vm3072, %v3101, %v3103
        %v3107 = vsel %vm3072, %v3103, %v3105
        %v3111 = vadd.f32 %v3043, %v3101
        %v3112 = vadd.f32 %v3044, %v3106
        %v3113 = vadd.f32 %v3045, %v3107
        %s3114 = scalar_lea.vmem [#allocation2], 624
        %v3115 = vld [vmem:[%s3114] sm:$0xff]
        %v3116 = vld [vmem:[%s3114 + $0x8] sm:$0xff]
        %3119 = vrot.lane.b32.xlu0 %v3115, 33
        %v3120 = vpop.permute.xlu0 %3119
        %3121 = vrot.lane.b32.xlu0 %v3116, 33
        %v3122 = vpop.permute.xlu0 %3121
        %vm3123 = vcmask 269312
        %v3124 = vsel %vm3123, %v3120, %v3122
        %v3128 = vmul.f32 %v501, %v3120
        %v3129 = vmul.f32 %v524, %v3124
        %v3130 = vmul.f32 %v501, %v3122
        %3134 = vrot.lane.b32.xlu0 %v3128, 44
        %v3135 = vpop.permute.xlu0 %3134
        %3136 = vrot.lane.b32.xlu0 %v3129, 44
        %v3137 = vpop.permute.xlu0 %3136
        %3138 = vrot.lane.b32.xlu0 %v3130, 44
        %v3139 = vpop.permute.xlu0 %3138
        %vm3140 = vcmask 359424
        %v3141 = vsel %vm3140, %v3135, %v3137
        %v3142 = vsel %vm3140, %v3137, %v3139
        %v3146 = vadd.f32 %v3078, %v3135
        %v3147 = vadd.f32 %v3079, %v3141
        %v3148 = vadd.f32 %v3080, %v3142
        %s3149 = scalar_lea.vmem [#allocation4], 624
        %v3150 = vld [vmem:[%s3149] sm:$0xff]
        %v3151 = vld [vmem:[%s3149 + $0x8] sm:$0xff]
        %3154 = vrot.lane.b32.xlu0 %v3150, 33
        %v3155 = vpop.permute.xlu0 %3154
        %3156 = vrot.lane.b32.xlu0 %v3151, 33
        %v3157 = vpop.permute.xlu0 %3156
        %v3158 = vsel %vm3123, %v3155, %v3157
        %v3162 = vmul.f32 %v501, %v3155
        %v3163 = vmul.f32 %v524, %v3158
        %v3164 = vmul.f32 %v501, %v3157
        %3168 = vrot.lane.b32.xlu0 %v3162, 44
        %v3169 = vpop.permute.xlu0 %3168
        %3170 = vrot.lane.b32.xlu0 %v3163, 44
        %v3171 = vpop.permute.xlu0 %3170
        %3172 = vrot.lane.b32.xlu0 %v3164, 44
        %v3173 = vpop.permute.xlu0 %3172
        %v3174 = vsel %vm3140, %v3169, %v3171
        %v3175 = vsel %vm3140, %v3171, %v3173
        %v3179 = vadd.f32 %v3111, %v3169
        %v3180 = vadd.f32 %v3112, %v3174
        %v3181 = vadd.f32 %v3113, %v3175
        %s3182 = scalar_lea.vmem [#allocation2], 640
        %v3183 = vld [vmem:[%s3182] sm:$0xff]
        %v3184 = vld [vmem:[%s3182 + $0x8] sm:$0xff]
        %3187 = vrot.lane.b32.xlu0 %v3183, 34
        %v3188 = vpop.permute.xlu0 %3187
        %3189 = vrot.lane.b32.xlu0 %v3184, 34
        %v3190 = vpop.permute.xlu0 %3189
        %vm3191 = vcmask 277504
        %v3192 = vsel %vm3191, %v3188, %v3190
        %v3196 = vmul.f32 %v501, %v3188
        %v3197 = vmul.f32 %v524, %v3192
        %v3198 = vmul.f32 %v501, %v3190
        %3202 = vrot.lane.b32.xlu0 %v3196, 43
        %v3203 = vpop.permute.xlu0 %3202
        %3204 = vrot.lane.b32.xlu0 %v3197, 43
        %v3205 = vpop.permute.xlu0 %3204
        %3206 = vrot.lane.b32.xlu0 %v3198, 43
        %v3207 = vpop.permute.xlu0 %3206
        %vm3208 = vcmask 351232
        %v3209 = vsel %vm3208, %v3203, %v3205
        %v3210 = vsel %vm3208, %v3205, %v3207
        %v3214 = vadd.f32 %v3146, %v3203
        %v3215 = vadd.f32 %v3147, %v3209
        %v3216 = vadd.f32 %v3148, %v3210
        %s3217 = scalar_lea.vmem [#allocation4], 640
        %v3218 = vld [vmem:[%s3217] sm:$0xff]
        %v3219 = vld [vmem:[%s3217 + $0x8] sm:$0xff]
        %3222 = vrot.lane.b32.xlu0 %v3218, 34
        %v3223 = vpop.permute.xlu0 %3222
        %3224 = vrot.lane.b32.xlu0 %v3219, 34
        %v3225 = vpop.permute.xlu0 %3224
        %v3226 = vsel %vm3191, %v3223, %v3225
        %v3230 = vmul.f32 %v501, %v3223
        %v3231 = vmul.f32 %v524, %v3226
        %v3232 = vmul.f32 %v501, %v3225
        %3236 = vrot.lane.b32.xlu0 %v3230, 43
        %v3237 = vpop.permute.xlu0 %3236
        %3238 = vrot.lane.b32.xlu0 %v3231, 43
        %v3239 = vpop.permute.xlu0 %3238
        %3240 = vrot.lane.b32.xlu0 %v3232, 43
        %v3241 = vpop.permute.xlu0 %3240
        %v3242 = vsel %vm3208, %v3237, %v3239
        %v3243 = vsel %vm3208, %v3239, %v3241
        %v3247 = vadd.f32 %v3179, %v3237
        %v3248 = vadd.f32 %v3180, %v3242
        %v3249 = vadd.f32 %v3181, %v3243
        %s3250 = scalar_lea.vmem [#allocation2], 656
        %v3251 = vld [vmem:[%s3250] sm:$0xff]
        %v3252 = vld [vmem:[%s3250 + $0x8] sm:$0xff]
        %3255 = vrot.lane.b32.xlu0 %v3251, 35
        %v3256 = vpop.permute.xlu0 %3255
        %3257 = vrot.lane.b32.xlu0 %v3252, 35
        %v3258 = vpop.permute.xlu0 %3257
        %vm3259 = vcmask 285696
        %v3260 = vsel %vm3259, %v3256, %v3258
        %v3264 = vmul.f32 %v501, %v3256
        %v3265 = vmul.f32 %v524, %v3260
        %v3266 = vmul.f32 %v501, %v3258
        %3270 = vrot.lane.b32.xlu0 %v3264, 42
        %v3271 = vpop.permute.xlu0 %3270
        %3272 = vrot.lane.b32.xlu0 %v3265, 42
        %v3273 = vpop.permute.xlu0 %3272
        %3274 = vrot.lane.b32.xlu0 %v3266, 42
        %v3275 = vpop.permute.xlu0 %3274
        %vm3276 = vcmask 343040
        %v3277 = vsel %vm3276, %v3271, %v3273
        %v3278 = vsel %vm3276, %v3273, %v3275
        %v3282 = vadd.f32 %v3214, %v3271
        %v3283 = vadd.f32 %v3215, %v3277
        %v3284 = vadd.f32 %v3216, %v3278
        %s3285 = scalar_lea.vmem [#allocation4], 656
        %v3286 = vld [vmem:[%s3285] sm:$0xff]
        %v3287 = vld [vmem:[%s3285 + $0x8] sm:$0xff]
        %3290 = vrot.lane.b32.xlu0 %v3286, 35
        %v3291 = vpop.permute.xlu0 %3290
        %3292 = vrot.lane.b32.xlu0 %v3287, 35
        %v3293 = vpop.permute.xlu0 %3292
        %v3294 = vsel %vm3259, %v3291, %v3293
        %v3298 = vmul.f32 %v501, %v3291
        %v3299 = vmul.f32 %v524, %v3294
        %v3300 = vmul.f32 %v501, %v3293
        %3304 = vrot.lane.b32.xlu0 %v3298, 42
        %v3305 = vpop.permute.xlu0 %3304
        %3306 = vrot.lane.b32.xlu0 %v3299, 42
        %v3307 = vpop.permute.xlu0 %3306
        %3308 = vrot.lane.b32.xlu0 %v3300, 42
        %v3309 = vpop.permute.xlu0 %3308
        %v3310 = vsel %vm3276, %v3305, %v3307
        %v3311 = vsel %vm3276, %v3307, %v3309
        %v3315 = vadd.f32 %v3247, %v3305
        %v3316 = vadd.f32 %v3248, %v3310
        %v3317 = vadd.f32 %v3249, %v3311
        %s3318 = scalar_lea.vmem [#allocation2], 672
        %v3319 = vld [vmem:[%s3318] sm:$0xff]
        %v3320 = vld [vmem:[%s3318 + $0x8] sm:$0xff]
        %3323 = vrot.lane.b32.xlu0 %v3319, 45
        %v3324 = vpop.permute.xlu0 %3323
        %3325 = vrot.lane.b32.xlu0 %v3320, 45
        %v3326 = vpop.permute.xlu0 %3325
        %v3327 = vsel %vm3072, %v3324, %v3326
        %v3331 = vmul.f32 %v501, %v3324
        %v3332 = vmul.f32 %v524, %v3327
        %v3333 = vmul.f32 %v501, %v3326
        %3337 = vrot.lane.b32.xlu0 %v3331, 32
        %v3338 = vpop.permute.xlu0 %3337
        %3339 = vrot.lane.b32.xlu0 %v3332, 32
        %v3340 = vpop.permute.xlu0 %3339
        %3341 = vrot.lane.b32.xlu0 %v3333, 32
        %v3342 = vpop.permute.xlu0 %3341
        %v3343 = vsel %vm3055, %v3338, %v3340
        %v3344 = vsel %vm3055, %v3340, %v3342
        %v3348 = vadd.f32 %v3282, %v3338
        %v3349 = vadd.f32 %v3283, %v3343
        %v3350 = vadd.f32 %v3284, %v3344
        %s3351 = scalar_lea.vmem [#allocation4], 672
        %v3352 = vld [vmem:[%s3351] sm:$0xff]
        %v3353 = vld [vmem:[%s3351 + $0x8] sm:$0xff]
        %3356 = vrot.lane.b32.xlu0 %v3352, 45
        %v3357 = vpop.permute.xlu0 %3356
        %3358 = vrot.lane.b32.xlu0 %v3353, 45
        %v3359 = vpop.permute.xlu0 %3358
        %v3360 = vsel %vm3072, %v3357, %v3359
        %v3364 = vmul.f32 %v501, %v3357
        %v3365 = vmul.f32 %v524, %v3360
        %v3366 = vmul.f32 %v501, %v3359
        %3370 = vrot.lane.b32.xlu0 %v3364, 32
        %v3371 = vpop.permute.xlu0 %3370
        %3372 = vrot.lane.b32.xlu0 %v3365, 32
        %v3373 = vpop.permute.xlu0 %3372
        %3374 = vrot.lane.b32.xlu0 %v3366, 32
        %v3375 = vpop.permute.xlu0 %3374
        %v3376 = vsel %vm3055, %v3371, %v3373
        %v3377 = vsel %vm3055, %v3373, %v3375
        %v3381 = vadd.f32 %v3315, %v3371
        %v3382 = vadd.f32 %v3316, %v3376
        %v3383 = vadd.f32 %v3317, %v3377
        %s3384 = scalar_lea.vmem [#allocation2], 688
        %v3385 = vld [vmem:[%s3384] sm:$0xff]
        %v3386 = vld [vmem:[%s3384 + $0x8] sm:$0xff]
        %3389 = vrot.lane.b32.xlu0 %v3385, 46
        %v3390 = vpop.permute.xlu0 %3389
        %3391 = vrot.lane.b32.xlu0 %v3386, 46
        %v3392 = vpop.permute.xlu0 %3391
        %v3393 = vsel %vm3004, %v3390, %v3392
        %v3397 = vmul.f32 %v501, %v3390
        %v3398 = vmul.f32 %v524, %v3393
        %v3399 = vmul.f32 %v501, %v3392
        %3403 = vrot.lane.b32.xlu0 %v3397, 31
        %v3404 = vpop.permute.xlu0 %3403
        %3405 = vrot.lane.b32.xlu0 %v3398, 31
        %v3406 = vpop.permute.xlu0 %3405
        %3407 = vrot.lane.b32.xlu0 %v3399, 31
        %v3408 = vpop.permute.xlu0 %3407
        %v3409 = vsel %vm2987, %v3404, %v3406
        %v3410 = vsel %vm2987, %v3406, %v3408
        %v3414 = vadd.f32 %v3348, %v3404
        %v3415 = vadd.f32 %v3349, %v3409
        %v3416 = vadd.f32 %v3350, %v3410
        %s3417 = scalar_lea.vmem [#allocation4], 688
        %v3418 = vld [vmem:[%s3417] sm:$0xff]
        %v3419 = vld [vmem:[%s3417 + $0x8] sm:$0xff]
        %3422 = vrot.lane.b32.xlu0 %v3418, 46
        %v3423 = vpop.permute.xlu0 %3422
        %3424 = vrot.lane.b32.xlu0 %v3419, 46
        %v3425 = vpop.permute.xlu0 %3424
        %v3426 = vsel %vm3004, %v3423, %v3425
        %v3430 = vmul.f32 %v501, %v3423
        %v3431 = vmul.f32 %v524, %v3426
        %v3432 = vmul.f32 %v501, %v3425
        %3436 = vrot.lane.b32.xlu0 %v3430, 31
        %v3437 = vpop.permute.xlu0 %3436
        %3438 = vrot.lane.b32.xlu0 %v3431, 31
        %v3439 = vpop.permute.xlu0 %3438
        %3440 = vrot.lane.b32.xlu0 %v3432, 31
        %v3441 = vpop.permute.xlu0 %3440
        %v3442 = vsel %vm2987, %v3437, %v3439
        %v3443 = vsel %vm2987, %v3439, %v3441
        %v3447 = vadd.f32 %v3381, %v3437
        %v3448 = vadd.f32 %v3382, %v3442
        %v3449 = vadd.f32 %v3383, %v3443
        %s3450 = scalar_lea.vmem [#allocation2], 704
        %v3451 = vld [vmem:[%s3450] sm:$0xff]
        %v3452 = vld [vmem:[%s3450 + $0x8] sm:$0xff]
        %3455 = vrot.lane.b32.xlu0 %v3451, 47
        %v3456 = vpop.permute.xlu0 %3455
        %3457 = vrot.lane.b32.xlu0 %v3452, 47
        %v3458 = vpop.permute.xlu0 %3457
        %v3459 = vsel %vm2936, %v3456, %v3458
        %v3463 = vmul.f32 %v501, %v3456
        %v3464 = vmul.f32 %v524, %v3459
        %v3465 = vmul.f32 %v501, %v3458
        %3469 = vrot.lane.b32.xlu0 %v3463, 30
        %v3470 = vpop.permute.xlu0 %3469
        %3471 = vrot.lane.b32.xlu0 %v3464, 30
        %v3472 = vpop.permute.xlu0 %3471
        %3473 = vrot.lane.b32.xlu0 %v3465, 30
        %v3474 = vpop.permute.xlu0 %3473
        %v3475 = vsel %vm2919, %v3470, %v3472
        %v3476 = vsel %vm2919, %v3472, %v3474
        %v3480 = vadd.f32 %v3414, %v3470
        %v3481 = vadd.f32 %v3415, %v3475
        %v3482 = vadd.f32 %v3416, %v3476
        %s3483 = scalar_lea.vmem [#allocation4], 704
        %v3484 = vld [vmem:[%s3483] sm:$0xff]
        %v3485 = vld [vmem:[%s3483 + $0x8] sm:$0xff]
        %3488 = vrot.lane.b32.xlu0 %v3484, 47
        %v3489 = vpop.permute.xlu0 %3488
        %3490 = vrot.lane.b32.xlu0 %v3485, 47
        %v3491 = vpop.permute.xlu0 %3490
        %v3492 = vsel %vm2936, %v3489, %v3491
        %v3496 = vmul.f32 %v501, %v3489
        %v3497 = vmul.f32 %v524, %v3492
        %v3498 = vmul.f32 %v501, %v3491
        %3502 = vrot.lane.b32.xlu0 %v3496, 30
        %v3503 = vpop.permute.xlu0 %3502
        %3504 = vrot.lane.b32.xlu0 %v3497, 30
        %v3505 = vpop.permute.xlu0 %3504
        %3506 = vrot.lane.b32.xlu0 %v3498, 30
        %v3507 = vpop.permute.xlu0 %3506
        %v3508 = vsel %vm2919, %v3503, %v3505
        %v3509 = vsel %vm2919, %v3505, %v3507
        %v3513 = vadd.f32 %v3447, %v3503
        %v3514 = vadd.f32 %v3448, %v3508
        %v3515 = vadd.f32 %v3449, %v3509
        %s3516 = scalar_lea.vmem [#allocation2], 720
        %v3517 = vld [vmem:[%s3516] sm:$0xff]
        %v3518 = vld [vmem:[%s3516 + $0x8] sm:$0xff]
        %3521 = vrot.lane.b32.xlu0 %v3517, 48
        %v3522 = vpop.permute.xlu0 %3521
        %3523 = vrot.lane.b32.xlu0 %v3518, 48
        %v3524 = vpop.permute.xlu0 %3523
        %v3525 = vsel %vm2868, %v3522, %v3524
        %v3529 = vmul.f32 %v501, %v3522
        %v3530 = vmul.f32 %v524, %v3525
        %v3531 = vmul.f32 %v501, %v3524
        %3535 = vrot.lane.b32.xlu0 %v3529, 29
        %v3536 = vpop.permute.xlu0 %3535
        %3537 = vrot.lane.b32.xlu0 %v3530, 29
        %v3538 = vpop.permute.xlu0 %3537
        %3539 = vrot.lane.b32.xlu0 %v3531, 29
        %v3540 = vpop.permute.xlu0 %3539
        %v3541 = vsel %vm2851, %v3536, %v3538
        %v3542 = vsel %vm2851, %v3538, %v3540
        %v3546 = vadd.f32 %v3480, %v3536
        %v3547 = vadd.f32 %v3481, %v3541
        %v3548 = vadd.f32 %v3482, %v3542
        %s3549 = scalar_lea.vmem [#allocation4], 720
        %v3550 = vld [vmem:[%s3549] sm:$0xff]
        %v3551 = vld [vmem:[%s3549 + $0x8] sm:$0xff]
        %3554 = vrot.lane.b32.xlu0 %v3550, 48
        %v3555 = vpop.permute.xlu0 %3554
        %3556 = vrot.lane.b32.xlu0 %v3551, 48
        %v3557 = vpop.permute.xlu0 %3556
        %v3558 = vsel %vm2868, %v3555, %v3557
        %v3562 = vmul.f32 %v501, %v3555
        %v3563 = vmul.f32 %v524, %v3558
        %v3564 = vmul.f32 %v501, %v3557
        %3568 = vrot.lane.b32.xlu0 %v3562, 29
        %v3569 = vpop.permute.xlu0 %3568
        %3570 = vrot.lane.b32.xlu0 %v3563, 29
        %v3571 = vpop.permute.xlu0 %3570
        %3572 = vrot.lane.b32.xlu0 %v3564, 29
        %v3573 = vpop.permute.xlu0 %3572
        %v3574 = vsel %vm2851, %v3569, %v3571
        %v3575 = vsel %vm2851, %v3571, %v3573
        %v3579 = vadd.f32 %v3513, %v3569
        %v3580 = vadd.f32 %v3514, %v3574
        %v3581 = vadd.f32 %v3515, %v3575
        %s3582 = scalar_lea.vmem [#allocation2], 736
        %v3583 = vld [vmem:[%s3582] sm:$0xff]
        %v3584 = vld [vmem:[%s3582 + $0x8] sm:$0xff]
        %3587 = vrot.lane.b32.xlu0 %v3583, 49
        %v3588 = vpop.permute.xlu0 %3587
        %3589 = vrot.lane.b32.xlu0 %v3584, 49
        %v3590 = vpop.permute.xlu0 %3589
        %vm3591 = vcmask 400384
        %v3592 = vsel %vm3591, %v3588, %v3590
        %v3596 = vmul.f32 %v501, %v3588
        %v3597 = vmul.f32 %v524, %v3592
        %v3598 = vmul.f32 %v501, %v3590
        %3602 = vrot.lane.b32.xlu0 %v3596, 28
        %v3603 = vpop.permute.xlu0 %3602
        %3604 = vrot.lane.b32.xlu0 %v3597, 28
        %v3605 = vpop.permute.xlu0 %3604
        %3606 = vrot.lane.b32.xlu0 %v3598, 28
        %v3607 = vpop.permute.xlu0 %3606
        %vm3608 = vcmask 228352
        %v3609 = vsel %vm3608, %v3603, %v3605
        %v3610 = vsel %vm3608, %v3605, %v3607
        %v3614 = vadd.f32 %v3546, %v3603
        %v3615 = vadd.f32 %v3547, %v3609
        %v3616 = vadd.f32 %v3548, %v3610
        %s3617 = scalar_lea.vmem [#allocation4], 736
        %v3618 = vld [vmem:[%s3617] sm:$0xff]
        %v3619 = vld [vmem:[%s3617 + $0x8] sm:$0xff]
        %3622 = vrot.lane.b32.xlu0 %v3618, 49
        %v3623 = vpop.permute.xlu0 %3622
        %3624 = vrot.lane.b32.xlu0 %v3619, 49
        %v3625 = vpop.permute.xlu0 %3624
        %v3626 = vsel %vm3591, %v3623, %v3625
        %v3630 = vmul.f32 %v501, %v3623
        %v3631 = vmul.f32 %v524, %v3626
        %v3632 = vmul.f32 %v501, %v3625
        %3636 = vrot.lane.b32.xlu0 %v3630, 28
        %v3637 = vpop.permute.xlu0 %3636
        %3638 = vrot.lane.b32.xlu0 %v3631, 28
        %v3639 = vpop.permute.xlu0 %3638
        %3640 = vrot.lane.b32.xlu0 %v3632, 28
        %v3641 = vpop.permute.xlu0 %3640
        %v3642 = vsel %vm3608, %v3637, %v3639
        %v3643 = vsel %vm3608, %v3639, %v3641
        %v3647 = vadd.f32 %v3579, %v3637
        %v3648 = vadd.f32 %v3580, %v3642
        %v3649 = vadd.f32 %v3581, %v3643
        %s3650 = scalar_lea.vmem [#allocation2], 752
        %v3651 = vld [vmem:[%s3650] sm:$0xff]
        %v3652 = vld [vmem:[%s3650 + $0x8] sm:$0xff]
        %3655 = vrot.lane.b32.xlu0 %v3651, 50
        %v3656 = vpop.permute.xlu0 %3655
        %3657 = vrot.lane.b32.xlu0 %v3652, 50
        %v3658 = vpop.permute.xlu0 %3657
        %vm3659 = vcmask 408576
        %v3660 = vsel %vm3659, %v3656, %v3658
        %v3664 = vmul.f32 %v501, %v3656
        %v3665 = vmul.f32 %v524, %v3660
        %v3666 = vmul.f32 %v501, %v3658
        %3670 = vrot.lane.b32.xlu0 %v3664, 27
        %v3671 = vpop.permute.xlu0 %3670
        %3672 = vrot.lane.b32.xlu0 %v3665, 27
        %v3673 = vpop.permute.xlu0 %3672
        %3674 = vrot.lane.b32.xlu0 %v3666, 27
        %v3675 = vpop.permute.xlu0 %3674
        %vm3676 = vcmask 220160
        %v3677 = vsel %vm3676, %v3671, %v3673
        %v3678 = vsel %vm3676, %v3673, %v3675
        %v3682 = vadd.f32 %v3614, %v3671
        %v3683 = vadd.f32 %v3615, %v3677
        %v3684 = vadd.f32 %v3616, %v3678
        %s3685 = scalar_lea.vmem [#allocation4], 752
        %v3686 = vld [vmem:[%s3685] sm:$0xff]
        %v3687 = vld [vmem:[%s3685 + $0x8] sm:$0xff]
        %3690 = vrot.lane.b32.xlu0 %v3686, 50
        %v3691 = vpop.permute.xlu0 %3690
        %3692 = vrot.lane.b32.xlu0 %v3687, 50
        %v3693 = vpop.permute.xlu0 %3692
        %v3694 = vsel %vm3659, %v3691, %v3693
        %v3698 = vmul.f32 %v501, %v3691
        %v3699 = vmul.f32 %v524, %v3694
        %v3700 = vmul.f32 %v501, %v3693
        %3704 = vrot.lane.b32.xlu0 %v3698, 27
        %v3705 = vpop.permute.xlu0 %3704
        %3706 = vrot.lane.b32.xlu0 %v3699, 27
        %v3707 = vpop.permute.xlu0 %3706
        %3708 = vrot.lane.b32.xlu0 %v3700, 27
        %v3709 = vpop.permute.xlu0 %3708
        %v3710 = vsel %vm3676, %v3705, %v3707
        %v3711 = vsel %vm3676, %v3707, %v3709
        %v3715 = vadd.f32 %v3647, %v3705
        %v3716 = vadd.f32 %v3648, %v3710
        %v3717 = vadd.f32 %v3649, %v3711
        %s3718 = scalar_lea.vmem [#allocation2], 768
        %v3719 = vld [vmem:[%s3718] sm:$0xff]
        %v3720 = vld [vmem:[%s3718 + $0x8] sm:$0xff]
        %3723 = vrot.lane.b32.xlu0 %v3719, 51
        %v3724 = vpop.permute.xlu0 %3723
        %3725 = vrot.lane.b32.xlu0 %v3720, 51
        %v3726 = vpop.permute.xlu0 %3725
        %vm3727 = vcmask 416768
        %v3728 = vsel %vm3727, %v3724, %v3726
        %v3732 = vmul.f32 %v501, %v3724
        %v3733 = vmul.f32 %v524, %v3728
        %v3734 = vmul.f32 %v501, %v3726
        %3738 = vrot.lane.b32.xlu0 %v3732, 26
        %v3739 = vpop.permute.xlu0 %3738
        %3740 = vrot.lane.b32.xlu0 %v3733, 26
        %v3741 = vpop.permute.xlu0 %3740
        %3742 = vrot.lane.b32.xlu0 %v3734, 26
        %v3743 = vpop.permute.xlu0 %3742
        %vm3744 = vcmask 211968
        %v3745 = vsel %vm3744, %v3739, %v3741
        %v3746 = vsel %vm3744, %v3741, %v3743
        %v3750 = vadd.f32 %v3682, %v3739
        %v3751 = vadd.f32 %v3683, %v3745
        %v3752 = vadd.f32 %v3684, %v3746
        %s3753 = scalar_lea.vmem [#allocation4], 768
        %v3754 = vld [vmem:[%s3753] sm:$0xff]
        %v3755 = vld [vmem:[%s3753 + $0x8] sm:$0xff]
        %3758 = vrot.lane.b32.xlu0 %v3754, 51
        %v3759 = vpop.permute.xlu0 %3758
        %3760 = vrot.lane.b32.xlu0 %v3755, 51
        %v3761 = vpop.permute.xlu0 %3760
        %v3762 = vsel %vm3727, %v3759, %v3761
        %v3766 = vmul.f32 %v501, %v3759
        %v3767 = vmul.f32 %v524, %v3762
        %v3768 = vmul.f32 %v501, %v3761
        %3772 = vrot.lane.b32.xlu0 %v3766, 26
        %v3773 = vpop.permute.xlu0 %3772
        %3774 = vrot.lane.b32.xlu0 %v3767, 26
        %v3775 = vpop.permute.xlu0 %3774
        %3776 = vrot.lane.b32.xlu0 %v3768, 26
        %v3777 = vpop.permute.xlu0 %3776
        %v3778 = vsel %vm3744, %v3773, %v3775
        %v3779 = vsel %vm3744, %v3775, %v3777
        %v3783 = vadd.f32 %v3715, %v3773
        %v3784 = vadd.f32 %v3716, %v3778
        %v3785 = vadd.f32 %v3717, %v3779
        %3789 = vrot.lane.b32.xlu0 %v3750, 51
        %v3790 = vpop.permute.xlu0 %3789
        %3791 = vrot.lane.b32.xlu0 %v3751, 51
        %v3792 = vpop.permute.xlu0 %3791
        %3793 = vrot.lane.b32.xlu0 %v3752, 51
        %v3794 = vpop.permute.xlu0 %3793
        %v3795 = vsel %vm3727, %v3790, %v3792
        %v3796 = vsel %vm3727, %v3792, %v3794
        %3799 = vset.pattern.permute.xlu0 4
        %3800 = vperm.xlu0 %3799, %v385
        %v3801 = vpop.permute.xlu0 %3800
        %v3803 = vadd.f32 %v3801, 0.0
        %v3804 = vld [vmem:[#allocation6] sm:$0xff]
        %v3805 = vld [vmem:[#allocation6 + $0x8] sm:$0xff]
        %3808 = vrot.lane.b32.xlu0 %v3804, 52
        %v3809 = vpop.permute.xlu0 %3808
        %3810 = vrot.lane.b32.xlu0 %v3805, 52
        %v3811 = vpop.permute.xlu0 %3810
        %vm3812 = vcmask 424960
        %v3813 = vsel %vm3812, %v3809, %v3811
        %v3817 = vmul.f32 %v3795, %v3809
        %v3818 = vmul.f32 %v3796, %v3813
        %v3819 = vmul.f32 %v3795, %v3811
        %v3820 = vadd.f32 %v3803, %v3817
        %v3821 = vadd.f32 %v3803, %v3818
        %v3822 = vadd.f32 %v3803, %v3819
        %s3823 = scalar_lea.vmem [#allocation6], 16
        %v3824 = vld [vmem:[%s3823] sm:$0xff]
        %v3825 = vld [vmem:[%s3823 + $0x8] sm:$0xff]
        %3828 = vrot.lane.b32.xlu0 %v3824, 56
        %v3829 = vpop.permute.xlu0 %3828
        %3830 = vrot.lane.b32.xlu0 %v3825, 56
        %v3831 = vpop.permute.xlu0 %3830
        %vm3832 = vcmask 457728
        %v3833 = vsel %vm3832, %v3829, %v3831
        %v3837 = vmul.f32 %v3795, %v3829
        %v3838 = vmul.f32 %v3796, %v3833
        %v3839 = vmul.f32 %v3795, %v3831
        %3843 = vrot.lane.b32.xlu0 %v3837, 124
        %v3844 = vpop.permute.xlu0 %3843
        %3845 = vrot.lane.b32.xlu0 %v3838, 124
        %v3846 = vpop.permute.xlu0 %3845
        %3847 = vrot.lane.b32.xlu0 %v3839, 124
        %v3848 = vpop.permute.xlu0 %3847
        %v3849 = vsel %vm806, %v3844, %v3846
        %v3850 = vsel %vm806, %v3846, %v3848
        %v3854 = vadd.f32 %v3820, %v3849
        %v3855 = vadd.f32 %v3821, %v3850
        %v3856 = vadd.f32 %v3822, %v3848
        %s3857 = scalar_lea.vmem [#allocation6], 32
        %v3858 = vld [vmem:[%s3857] sm:$0xff]
        %v3859 = vld [vmem:[%s3857 + $0x8] sm:$0xff]
        %3862 = vrot.lane.b32.xlu0 %v3858, 60
        %v3863 = vpop.permute.xlu0 %3862
        %3864 = vrot.lane.b32.xlu0 %v3859, 60
        %v3865 = vpop.permute.xlu0 %3864
        %v3866 = vsel %vm2664, %v3863, %v3865
        %v3870 = vmul.f32 %v3795, %v3863
        %v3871 = vmul.f32 %v3796, %v3866
        %v3872 = vmul.f32 %v3795, %v3865
        %3876 = vrot.lane.b32.xlu0 %v3870, 120
        %v3877 = vpop.permute.xlu0 %3876
        %3878 = vrot.lane.b32.xlu0 %v3871, 120
        %v3879 = vpop.permute.xlu0 %3878
        %3880 = vrot.lane.b32.xlu0 %v3872, 120
        %v3881 = vpop.permute.xlu0 %3880
        %vm3882 = vcmask 982016
        %v3883 = vsel %vm3882, %v3877, %v3879
        %v3884 = vsel %vm3882, %v3879, %v3881
        %v3888 = vadd.f32 %v3854, %v3883
        %v3889 = vadd.f32 %v3855, %v3884
        %v3890 = vadd.f32 %v3856, %v3881
        %s3891 = scalar_lea.vmem [#allocation6], 48
        %v3892 = vld [vmem:[%s3891] sm:$0xff]
        %v3893 = vld [vmem:[%s3891 + $0x8] sm:$0xff]
        %3896 = vrot.lane.b32.xlu0 %v3892, 64
        %v3897 = vpop.permute.xlu0 %3896
        %3898 = vrot.lane.b32.xlu0 %v3893, 64
        %v3899 = vpop.permute.xlu0 %3898
        %v3900 = vsel %vm2392, %v3897, %v3899
        %v3904 = vmul.f32 %v3795, %v3897
        %v3905 = vmul.f32 %v3796, %v3900
        %v3906 = vmul.f32 %v3795, %v3899
        %3910 = vrot.lane.b32.xlu0 %v3904, 116
        %v3911 = vpop.permute.xlu0 %3910
        %3912 = vrot.lane.b32.xlu0 %v3905, 116
        %v3913 = vpop.permute.xlu0 %3912
        %3914 = vrot.lane.b32.xlu0 %v3906, 116
        %v3915 = vpop.permute.xlu0 %3914
        %vm3916 = vcmask 949248
        %v3917 = vsel %vm3916, %v3911, %v3913
        %v3918 = vsel %vm3916, %v3913, %v3915
        %v3922 = vadd.f32 %v3888, %v3917
        %v3923 = vadd.f32 %v3889, %v3918
        %v3924 = vadd.f32 %v3890, %v3915
        %s3925 = scalar_lea.vmem [#allocation6], 64
        %v3926 = vld [vmem:[%s3925] sm:$0xff]
        %v3927 = vld [vmem:[%s3925 + $0x8] sm:$0xff]
        %3930 = vrot.lane.b32.xlu0 %v3926, 68
        %v3931 = vpop.permute.xlu0 %3930
        %3932 = vrot.lane.b32.xlu0 %v3927, 68
        %v3933 = vpop.permute.xlu0 %3932
        %vm3934 = vcmask 556032
        %v3935 = vsel %vm3934, %v3931, %v3933
        %v3939 = vmul.f32 %v3795, %v3931
        %v3940 = vmul.f32 %v3796, %v3935
        %v3941 = vmul.f32 %v3795, %v3933
        %3945 = vrot.lane.b32.xlu0 %v3939, 112
        %v3946 = vpop.permute.xlu0 %3945
        %3947 = vrot.lane.b32.xlu0 %v3940, 112
        %v3948 = vpop.permute.xlu0 %3947
        %3949 = vrot.lane.b32.xlu0 %v3941, 112
        %v3950 = vpop.permute.xlu0 %3949
        %v3951 = vsel %vm1010, %v3946, %v3948
        %v3952 = vsel %vm1010, %v3948, %v3950
        %v3956 = vadd.f32 %v3922, %v3951
        %v3957 = vadd.f32 %v3923, %v3952
        %v3958 = vadd.f32 %v3924, %v3950
        %s3959 = scalar_lea.vmem [#allocation6], 80
        %v3960 = vld [vmem:[%s3959] sm:$0xff]
        %v3961 = vld [vmem:[%s3959 + $0x8] sm:$0xff]
        %3964 = vrot.lane.b32.xlu0 %v3960, 72
        %v3965 = vpop.permute.xlu0 %3964
        %3966 = vrot.lane.b32.xlu0 %v3961, 72
        %v3967 = vpop.permute.xlu0 %3966
        %vm3968 = vcmask 588800
        %v3969 = vsel %vm3968, %v3965, %v3967
        %v3973 = vmul.f32 %v3795, %v3965
        %v3974 = vmul.f32 %v3796, %v3969
        %v3975 = vmul.f32 %v3795, %v3967
        %3979 = vrot.lane.b32.xlu0 %v3973, 108
        %v3980 = vpop.permute.xlu0 %3979
        %3981 = vrot.lane.b32.xlu0 %v3974, 108
        %v3982 = vpop.permute.xlu0 %3981
        %3983 = vrot.lane.b32.xlu0 %v3975, 108
        %v3984 = vpop.permute.xlu0 %3983
        %v3985 = vsel %vm1282, %v3980, %v3982
        %v3986 = vsel %vm1282, %v3982, %v3984
        %v3990 = vadd.f32 %v3956, %v3985
        %v3991 = vadd.f32 %v3957, %v3986
        %v3992 = vadd.f32 %v3958, %v3984
        %s3993 = scalar_lea.vmem [#allocation6], 96
        %v3994 = vld [vmem:[%s3993] sm:$0xff]
        %v3995 = vld [vmem:[%s3993 + $0x8] sm:$0xff]
        %3998 = vrot.lane.b32.xlu0 %v3994, 76
        %v3999 = vpop.permute.xlu0 %3998
        %4000 = vrot.lane.b32.xlu0 %v3995, 76
        %v4001 = vpop.permute.xlu0 %4000
        %v4002 = vsel %vm2188, %v3999, %v4001
        %v4006 = vmul.f32 %v3795, %v3999
        %v4007 = vmul.f32 %v3796, %v4002
        %v4008 = vmul.f32 %v3795, %v4001
        %4012 = vrot.lane.b32.xlu0 %v4006, 104
        %v4013 = vpop.permute.xlu0 %4012
        %4014 = vrot.lane.b32.xlu0 %v4007, 104
        %v4015 = vpop.permute.xlu0 %4014
        %4016 = vrot.lane.b32.xlu0 %v4008, 104
        %v4017 = vpop.permute.xlu0 %4016
        %vm4018 = vcmask 850944
        %v4019 = vsel %vm4018, %v4013, %v4015
        %v4020 = vsel %vm4018, %v4015, %v4017
        %v4024 = vadd.f32 %v3990, %v4019
        %v4025 = vadd.f32 %v3991, %v4020
        %v4026 = vadd.f32 %v3992, %v4017
        %s4027 = scalar_lea.vmem [#allocation6], 112
        %v4028 = vld [vmem:[%s4027] sm:$0xff]
        %v4029 = vld [vmem:[%s4027 + $0x8] sm:$0xff]
        %4032 = vrot.lane.b32.xlu0 %v4028, 103
        %v4033 = vpop.permute.xlu0 %4032
        %4034 = vrot.lane.b32.xlu0 %v4029, 103
        %v4035 = vpop.permute.xlu0 %4034
        %vm4036 = vcmask 842752
        %v4037 = vsel %vm4036, %v4033, %v4035
        %v4041 = vmul.f32 %v3795, %v4033
        %v4042 = vmul.f32 %v3796, %v4037
        %v4043 = vmul.f32 %v3795, %v4035
        %4047 = vrot.lane.b32.xlu0 %v4041, 77
        %v4048 = vpop.permute.xlu0 %4047
        %4049 = vrot.lane.b32.xlu0 %v4042, 77
        %v4050 = vpop.permute.xlu0 %4049
        %4051 = vrot.lane.b32.xlu0 %v4043, 77
        %v4052 = vpop.permute.xlu0 %4051
        %v4053 = vsel %vm547, %v4048, %v4050
        %v4054 = vsel %vm547, %v4050, %v4052
        %v4058 = vadd.f32 %v4024, %v4053
        %v4059 = vadd.f32 %v4025, %v4054
        %v4060 = vadd.f32 %v4026, %v4052
        %s4061 = scalar_lea.vmem [#allocation6], 128
        %v4062 = vld [vmem:[%s4061] sm:$0xff]
        %v4063 = vld [vmem:[%s4061 + $0x8] sm:$0xff]
        %4066 = vrot.lane.b32.xlu0 %v4062, 106
        %v4067 = vpop.permute.xlu0 %4066
        %4068 = vrot.lane.b32.xlu0 %v4063, 106
        %v4069 = vpop.permute.xlu0 %4068
        %v4070 = vsel %vm1418, %v4067, %v4069
        %v4074 = vmul.f32 %v3795, %v4067
        %v4075 = vmul.f32 %v3796, %v4070
        %v4076 = vmul.f32 %v3795, %v4069
        %4080 = vrot.lane.b32.xlu0 %v4074, 74
        %v4081 = vpop.permute.xlu0 %4080
        %4082 = vrot.lane.b32.xlu0 %v4075, 74
        %v4083 = vpop.permute.xlu0 %4082
        %4084 = vrot.lane.b32.xlu0 %v4076, 74
        %v4085 = vpop.permute.xlu0 %4084
        %v4086 = vsel %vm2324, %v4081, %v4083
        %v4087 = vsel %vm2324, %v4083, %v4085
        %v4091 = vadd.f32 %v4058, %v4086
        %v4092 = vadd.f32 %v4059, %v4087
        %v4093 = vadd.f32 %v4060, %v4085
        %s4094 = scalar_lea.vmem [#allocation6], 144
        %v4095 = vld [vmem:[%s4094] sm:$0xff]
        %v4096 = vld [vmem:[%s4094 + $0x8] sm:$0xff]
        %4099 = vrot.lane.b32.xlu0 %v4095, 109
        %v4100 = vpop.permute.xlu0 %4099
        %4101 = vrot.lane.b32.xlu0 %v4096, 109
        %v4102 = vpop.permute.xlu0 %4101
        %v4103 = vsel %vm1214, %v4100, %v4102
        %v4107 = vmul.f32 %v3795, %v4100
        %v4108 = vmul.f32 %v3796, %v4103
        %v4109 = vmul.f32 %v3795, %v4102
        %4113 = vrot.lane.b32.xlu0 %v4107, 71
        %v4114 = vpop.permute.xlu0 %4113
        %4115 = vrot.lane.b32.xlu0 %v4108, 71
        %v4116 = vpop.permute.xlu0 %4115
        %4117 = vrot.lane.b32.xlu0 %v4109, 71
        %v4118 = vpop.permute.xlu0 %4117
        %vm4119 = vcmask 580608
        %v4120 = vsel %vm4119, %v4114, %v4116
        %v4121 = vsel %vm4119, %v4116, %v4118
        %v4125 = vadd.f32 %v4091, %v4120
        %v4126 = vadd.f32 %v4092, %v4121
        %v4127 = vadd.f32 %v4093, %v4118
        %s4128 = scalar_lea.vmem [#allocation6], 160
        %v4129 = vld [vmem:[%s4128] sm:$0xff]
        %v4130 = vld [vmem:[%s4128 + $0x8] sm:$0xff]
        %4133 = vrot.lane.b32.xlu0 %v4129, 112
        %v4134 = vpop.permute.xlu0 %4133
        %4135 = vrot.lane.b32.xlu0 %v4130, 112
        %v4136 = vpop.permute.xlu0 %4135
        %v4137 = vsel %vm1010, %v4134, %v4136
        %v4141 = vmul.f32 %v3795, %v4134
        %v4142 = vmul.f32 %v3796, %v4137
        %v4143 = vmul.f32 %v3795, %v4136
        %4147 = vrot.lane.b32.xlu0 %v4141, 68
        %v4148 = vpop.permute.xlu0 %4147
        %4149 = vrot.lane.b32.xlu0 %v4142, 68
        %v4150 = vpop.permute.xlu0 %4149
        %4151 = vrot.lane.b32.xlu0 %v4143, 68
        %v4152 = vpop.permute.xlu0 %4151
        %v4153 = vsel %vm3934, %v4148, %v4150
        %v4154 = vsel %vm3934, %v4150, %v4152
        %v4158 = vadd.f32 %v4125, %v4153
        %v4159 = vadd.f32 %v4126, %v4154
        %v4160 = vadd.f32 %v4127, %v4152
        %s4161 = scalar_lea.vmem [#allocation6], 176
        %v4162 = vld [vmem:[%s4161] sm:$0xff]
        %v4163 = vld [vmem:[%s4161 + $0x8] sm:$0xff]
        %4166 = vrot.lane.b32.xlu0 %v4162, 115
        %v4167 = vpop.permute.xlu0 %4166
        %4168 = vrot.lane.b32.xlu0 %v4163, 115
        %v4169 = vpop.permute.xlu0 %4168
        %v4170 = vsel %vm1869, %v4167, %v4169
        %v4174 = vmul.f32 %v3795, %v4167
        %v4175 = vmul.f32 %v3796, %v4170
        %v4176 = vmul.f32 %v3795, %v4169
        %4180 = vrot.lane.b32.xlu0 %v4174, 65
        %v4181 = vpop.permute.xlu0 %4180
        %4182 = vrot.lane.b32.xlu0 %v4175, 65
        %v4183 = vpop.permute.xlu0 %4182
        %4184 = vrot.lane.b32.xlu0 %v4176, 65
        %v4185 = vpop.permute.xlu0 %4184
        %vm4186 = vcmask 531456
        %v4187 = vsel %vm4186, %v4181, %v4183
        %v4188 = vsel %vm4186, %v4183, %v4185
        %v4192 = vadd.f32 %v4158, %v4187
        %v4193 = vadd.f32 %v4159, %v4188
        %v4194 = vadd.f32 %v4160, %v4185
        %s4195 = scalar_lea.vmem [#allocation6], 192
        %v4196 = vld [vmem:[%s4195] sm:$0xff]
        %v4197 = vld [vmem:[%s4195 + $0x8] sm:$0xff]
        %4200 = vrot.lane.b32.xlu0 %v4196, 118
        %v4201 = vpop.permute.xlu0 %4200
        %4202 = vrot.lane.b32.xlu0 %v4197, 118
        %v4203 = vpop.permute.xlu0 %4202
        %vm4204 = vcmask 965632
        %v4205 = vsel %vm4204, %v4201, %v4203
        %v4209 = vmul.f32 %v3795, %v4201
        %v4210 = vmul.f32 %v3796, %v4205
        %v4211 = vmul.f32 %v3795, %v4203
        %4215 = vrot.lane.b32.xlu0 %v4209, 62
        %v4216 = vpop.permute.xlu0 %4215
        %4217 = vrot.lane.b32.xlu0 %v4210, 62
        %v4218 = vpop.permute.xlu0 %4217
        %4219 = vrot.lane.b32.xlu0 %v4211, 62
        %v4220 = vpop.permute.xlu0 %4219
        %v4221 = vsel %vm2528, %v4216, %v4218
        %v4222 = vsel %vm2528, %v4218, %v4220
        %v4226 = vadd.f32 %v4192, %v4221
        %v4227 = vadd.f32 %v4193, %v4222
        %v4228 = vadd.f32 %v4194, %v4220
        %s4229 = scalar_lea.vmem [#allocation6], 208
        %v4230 = vld [vmem:[%s4229] sm:$0xff]
        %v4231 = vld [vmem:[%s4229 + $0x8] sm:$0xff]
        %4234 = vrot.lane.b32.xlu0 %v4230, 121
        %v4235 = vpop.permute.xlu0 %4234
        %4236 = vrot.lane.b32.xlu0 %v4231, 121
        %v4237 = vpop.permute.xlu0 %4236
        %vm4238 = vcmask 990208
        %v4239 = vsel %vm4238, %v4235, %v4237
        %v4243 = vmul.f32 %v3795, %v4235
        %v4244 = vmul.f32 %v3796, %v4239
        %v4245 = vmul.f32 %v3795, %v4237
        %4249 = vrot.lane.b32.xlu0 %v4243, 59
        %v4250 = vpop.permute.xlu0 %4249
        %4251 = vrot.lane.b32.xlu0 %v4244, 59
        %v4252 = vpop.permute.xlu0 %4251
        %4253 = vrot.lane.b32.xlu0 %v4245, 59
        %v4254 = vpop.permute.xlu0 %4253
        %v4255 = vsel %vm2732, %v4250, %v4252
        %v4256 = vsel %vm2732, %v4252, %v4254
        %v4260 = vadd.f32 %v4226, %v4255
        %v4261 = vadd.f32 %v4227, %v4256
        %v4262 = vadd.f32 %v4228, %v4254
        %s4263 = scalar_lea.vmem [#allocation6], 224
        %v4264 = vld [vmem:[%s4263] sm:$0xff]
        %v4265 = vld [vmem:[%s4263 + $0x8] sm:$0xff]
        %4268 = vrot.lane.b32.xlu0 %v4264, 116
        %v4269 = vpop.permute.xlu0 %4268
        %4270 = vrot.lane.b32.xlu0 %v4265, 116
        %v4271 = vpop.permute.xlu0 %4270
        %v4272 = vsel %vm3916, %v4269, %v4271
        %v4276 = vmul.f32 %v3795, %v4269
        %v4277 = vmul.f32 %v3796, %v4272
        %v4278 = vmul.f32 %v3795, %v4271
        %4282 = vrot.lane.b32.xlu0 %v4276, 64
        %v4283 = vpop.permute.xlu0 %4282
        %4284 = vrot.lane.b32.xlu0 %v4277, 64
        %v4285 = vpop.permute.xlu0 %4284
        %4286 = vrot.lane.b32.xlu0 %v4278, 64
        %v4287 = vpop.permute.xlu0 %4286
        %v4288 = vsel %vm2392, %v4283, %v4285
        %v4289 = vsel %vm2392, %v4285, %v4287
        %v4293 = vadd.f32 %v4260, %v4288
        %v4294 = vadd.f32 %v4261, %v4289
        %v4295 = vadd.f32 %v4262, %v4287
        %s4296 = scalar_lea.vmem [#allocation6], 240
        %v4297 = vld [vmem:[%s4296] sm:$0xff]
        %v4298 = vld [vmem:[%s4296 + $0x8] sm:$0xff]
        %4301 = vrot.lane.b32.xlu0 %v4297, 120
        %v4302 = vpop.permute.xlu0 %4301
        %4303 = vrot.lane.b32.xlu0 %v4298, 120
        %v4304 = vpop.permute.xlu0 %4303
        %v4305 = vsel %vm3882, %v4302, %v4304
        %v4309 = vmul.f32 %v3795, %v4302
        %v4310 = vmul.f32 %v3796, %v4305
        %v4311 = vmul.f32 %v3795, %v4304
        %4315 = vrot.lane.b32.xlu0 %v4309, 60
        %v4316 = vpop.permute.xlu0 %4315
        %4317 = vrot.lane.b32.xlu0 %v4310, 60
        %v4318 = vpop.permute.xlu0 %4317
        %4319 = vrot.lane.b32.xlu0 %v4311, 60
        %v4320 = vpop.permute.xlu0 %4319
        %v4321 = vsel %vm2664, %v4316, %v4318
        %v4322 = vsel %vm2664, %v4318, %v4320
        %v4326 = vadd.f32 %v4293, %v4321
        %v4327 = vadd.f32 %v4294, %v4322
        %v4328 = vadd.f32 %v4295, %v4320
        %s4329 = scalar_lea.vmem [#allocation6], 256
        %v4330 = vld [vmem:[%s4329] sm:$0xff]
        %v4331 = vld [vmem:[%s4329 + $0x8] sm:$0xff]
        %4334 = vrot.lane.b32.xlu0 %v4330, 124
        %v4335 = vpop.permute.xlu0 %4334
        %4336 = vrot.lane.b32.xlu0 %v4331, 124
        %v4337 = vpop.permute.xlu0 %4336
        %v4338 = vsel %vm806, %v4335, %v4337
        %v4342 = vmul.f32 %v3795, %v4335
        %v4343 = vmul.f32 %v3796, %v4338
        %v4344 = vmul.f32 %v3795, %v4337
        %4348 = vrot.lane.b32.xlu0 %v4342, 56
        %v4349 = vpop.permute.xlu0 %4348
        %4350 = vrot.lane.b32.xlu0 %v4343, 56
        %v4351 = vpop.permute.xlu0 %4350
        %4352 = vrot.lane.b32.xlu0 %v4344, 56
        %v4353 = vpop.permute.xlu0 %4352
        %v4354 = vsel %vm3832, %v4349, %v4351
        %v4355 = vsel %vm3832, %v4351, %v4353
        %v4359 = vadd.f32 %v4326, %v4354
        %v4360 = vadd.f32 %v4327, %v4355
        %v4361 = vadd.f32 %v4328, %v4353
        %s4362 = scalar_lea.vmem [#allocation6], 272
        %v4363 = vld [vmem:[%s4362] sm:$0xff]
        %v4364 = vld [vmem:[%s4362 + $0x8] sm:$0xff]
        %v4365 = vmul.f32 %v3796, %v4363
        %v4366 = vmul.f32 %v3795, %v4364
        %4369 = vrot.lane.b32.xlu0 %v4365, 52
        %v4370 = vpop.permute.xlu0 %4369
        %4371 = vrot.lane.b32.xlu0 %v4366, 52
        %v4372 = vpop.permute.xlu0 %4371
        %v4373 = vsel %vm3812, %v4370, %v4372
        %v4377 = vadd.f32 %v4359, %v4370
        %v4378 = vadd.f32 %v4360, %v4373
        %v4379 = vadd.f32 %v4361, %v4372
        %s4380 = scalar_lea.vmem [#allocation6], 288
        %v4381 = vld [vmem:[%s4380] sm:$0xff]
        %v4382 = vld [vmem:[%s4380 + $0x8] sm:$0xff]
        %4385 = vrot.lane.b32.xlu0 %v4381, 4
        %v4386 = vpop.permute.xlu0 %4385
        %4387 = vrot.lane.b32.xlu0 %v4382, 4
        %v4388 = vpop.permute.xlu0 %4387
        %vm4389 = vcmask 31744
        %v4390 = vsel %vm4389, %v4386, %v4388
        %v4394 = vmul.f32 %v3796, %v4386
        %v4395 = vmul.f32 %v3795, %v4390
        %v4396 = vmul.f32 %v3796, %v4388
        %4400 = vrot.lane.b32.xlu0 %v4394, 48
        %v4401 = vpop.permute.xlu0 %4400
        %4402 = vrot.lane.b32.xlu0 %v4395, 48
        %v4403 = vpop.permute.xlu0 %4402
        %4404 = vrot.lane.b32.xlu0 %v4396, 48
        %v4405 = vpop.permute.xlu0 %4404
        %v4406 = vsel %vm2868, %v4401, %v4403
        %v4407 = vsel %vm2868, %v4403, %v4405
        %v4411 = vadd.f32 %v4377, %v4401
        %v4412 = vadd.f32 %v4378, %v4406
        %v4413 = vadd.f32 %v4379, %v4407
        %s4414 = scalar_lea.vmem [#allocation6], 304
        %v4415 = vld [vmem:[%s4414] sm:$0xff]
        %v4416 = vld [vmem:[%s4414 + $0x8] sm:$0xff]
        %4419 = vrot.lane.b32.xlu0 %v4415, 8
        %v4420 = vpop.permute.xlu0 %4419
        %4421 = vrot.lane.b32.xlu0 %v4416, 8
        %v4422 = vpop.permute.xlu0 %4421
        %v4423 = vsel %vm476, %v4420, %v4422
        %v4427 = vmul.f32 %v3796, %v4420
        %v4428 = vmul.f32 %v3795, %v4423
        %v4429 = vmul.f32 %v3796, %v4422
        %4433 = vrot.lane.b32.xlu0 %v4427, 44
        %v4434 = vpop.permute.xlu0 %4433
        %4435 = vrot.lane.b32.xlu0 %v4428, 44
        %v4436 = vpop.permute.xlu0 %4435
        %4437 = vrot.lane.b32.xlu0 %v4429, 44
        %v4438 = vpop.permute.xlu0 %4437
        %v4439 = vsel %vm3140, %v4434, %v4436
        %v4440 = vsel %vm3140, %v4436, %v4438
        %v4444 = vadd.f32 %v4411, %v4434
        %v4445 = vadd.f32 %v4412, %v4439
        %v4446 = vadd.f32 %v4413, %v4440
        %s4447 = scalar_lea.vmem [#allocation6], 320
        %v4448 = vld [vmem:[%s4447] sm:$0xff]
        %v4449 = vld [vmem:[%s4447 + $0x8] sm:$0xff]
        %4452 = vrot.lane.b32.xlu0 %v4448, 12
        %v4453 = vpop.permute.xlu0 %4452
        %4454 = vrot.lane.b32.xlu0 %v4449, 12
        %v4455 = vpop.permute.xlu0 %4454
        %vm4456 = vcmask 97280
        %v4457 = vsel %vm4456, %v4453, %v4455
        %v4461 = vmul.f32 %v3796, %v4453
        %v4462 = vmul.f32 %v3795, %v4457
        %v4463 = vmul.f32 %v3796, %v4455
        %4467 = vrot.lane.b32.xlu0 %v4461, 40
        %v4468 = vpop.permute.xlu0 %4467
        %4469 = vrot.lane.b32.xlu0 %v4462, 40
        %v4470 = vpop.permute.xlu0 %4469
        %4471 = vrot.lane.b32.xlu0 %v4463, 40
        %v4472 = vpop.permute.xlu0 %4471
        %vm4473 = vcmask 326656
        %v4474 = vsel %vm4473, %v4468, %v4470
        %v4475 = vsel %vm4473, %v4470, %v4472
        %v4479 = vadd.f32 %v4444, %v4468
        %v4480 = vadd.f32 %v4445, %v4474
        %v4481 = vadd.f32 %v4446, %v4475
        %s4482 = scalar_lea.vmem [#allocation6], 336
        %v4483 = vld [vmem:[%s4482] sm:$0xff]
        %v4484 = vld [vmem:[%s4482 + $0x8] sm:$0xff]
        %4487 = vrot.lane.b32.xlu0 %v4483, 23
        %v4488 = vpop.permute.xlu0 %4487
        %4489 = vrot.lane.b32.xlu0 %v4484, 23
        %v4490 = vpop.permute.xlu0 %4489
        %vm4491 = vcmask 187392
        %v4492 = vsel %vm4491, %v4488, %v4490
        %v4496 = vmul.f32 %v3796, %v4488
        %v4497 = vmul.f32 %v3795, %v4492
        %v4498 = vmul.f32 %v3796, %v4490
        %4502 = vrot.lane.b32.xlu0 %v4496, 29
        %v4503 = vpop.permute.xlu0 %4502
        %4504 = vrot.lane.b32.xlu0 %v4497, 29
        %v4505 = vpop.permute.xlu0 %4504
        %4506 = vrot.lane.b32.xlu0 %v4498, 29
        %v4507 = vpop.permute.xlu0 %4506
        %v4508 = vsel %vm2851, %v4503, %v4505
        %v4509 = vsel %vm2851, %v4505, %v4507
        %v4513 = vadd.f32 %v4479, %v4503
        %v4514 = vadd.f32 %v4480, %v4508
        %v4515 = vadd.f32 %v4481, %v4509
        %s4516 = scalar_lea.vmem [#allocation6], 352
        %v4517 = vld [vmem:[%s4516] sm:$0xff]
        %v4518 = vld [vmem:[%s4516 + $0x8] sm:$0xff]
        %4521 = vrot.lane.b32.xlu0 %v4517, 26
        %v4522 = vpop.permute.xlu0 %4521
        %4523 = vrot.lane.b32.xlu0 %v4518, 26
        %v4524 = vpop.permute.xlu0 %4523
        %v4525 = vsel %vm3744, %v4522, %v4524
        %v4529 = vmul.f32 %v3796, %v4522
        %v4530 = vmul.f32 %v3795, %v4525
        %v4531 = vmul.f32 %v3796, %v4524
        %4535 = vrot.lane.b32.xlu0 %v4529, 26
        %v4536 = vpop.permute.xlu0 %4535
        %4537 = vrot.lane.b32.xlu0 %v4530, 26
        %v4538 = vpop.permute.xlu0 %4537
        %4539 = vrot.lane.b32.xlu0 %v4531, 26
        %v4540 = vpop.permute.xlu0 %4539
        %v4541 = vsel %vm3744, %v4536, %v4538
        %v4542 = vsel %vm3744, %v4538, %v4540
        %v4546 = vadd.f32 %v4513, %v4536
        %v4547 = vadd.f32 %v4514, %v4541
        %v4548 = vadd.f32 %v4515, %v4542
        %s4549 = scalar_lea.vmem [#allocation6], 368
        %v4550 = vld [vmem:[%s4549] sm:$0xff]
        %v4551 = vld [vmem:[%s4549 + $0x8] sm:$0xff]
        %4554 = vrot.lane.b32.xlu0 %v4550, 29
        %v4555 = vpop.permute.xlu0 %4554
        %4556 = vrot.lane.b32.xlu0 %v4551, 29
        %v4557 = vpop.permute.xlu0 %4556
        %v4558 = vsel %vm2851, %v4555, %v4557
        %v4562 = vmul.f32 %v3796, %v4555
        %v4563 = vmul.f32 %v3795, %v4558
        %v4564 = vmul.f32 %v3796, %v4557
        %4568 = vrot.lane.b32.xlu0 %v4562, 23
        %v4569 = vpop.permute.xlu0 %4568
        %4570 = vrot.lane.b32.xlu0 %v4563, 23
        %v4571 = vpop.permute.xlu0 %4570
        %4572 = vrot.lane.b32.xlu0 %v4564, 23
        %v4573 = vpop.permute.xlu0 %4572
        %v4574 = vsel %vm4491, %v4569, %v4571
        %v4575 = vsel %vm4491, %v4571, %v4573
        %v4579 = vadd.f32 %v4546, %v4569
        %v4580 = vadd.f32 %v4547, %v4574
        %v4581 = vadd.f32 %v4548, %v4575
        %s4582 = scalar_lea.vmem [#allocation6], 384
        %v4583 = vld [vmem:[%s4582] sm:$0xff]
        %v4584 = vld [vmem:[%s4582 + $0x8] sm:$0xff]
        %4587 = vrot.lane.b32.xlu0 %v4583, 32
        %v4588 = vpop.permute.xlu0 %4587
        %4589 = vrot.lane.b32.xlu0 %v4584, 32
        %v4590 = vpop.permute.xlu0 %4589
        %v4591 = vsel %vm3055, %v4588, %v4590
        %v4595 = vmul.f32 %v3796, %v4588
        %v4596 = vmul.f32 %v3795, %v4591
        %v4597 = vmul.f32 %v3796, %v4590
        %4601 = vrot.lane.b32.xlu0 %v4595, 20
        %v4602 = vpop.permute.xlu0 %4601
        %4603 = vrot.lane.b32.xlu0 %v4596, 20
        %v4604 = vpop.permute.xlu0 %4603
        %4605 = vrot.lane.b32.xlu0 %v4597, 20
        %v4606 = vpop.permute.xlu0 %4605
        %vm4607 = vcmask 162816
        %v4608 = vsel %vm4607, %v4602, %v4604
        %v4609 = vsel %vm4607, %v4604, %v4606
        %v4613 = vadd.f32 %v4579, %v4602
        %v4614 = vadd.f32 %v4580, %v4608
        %v4615 = vadd.f32 %v4581, %v4609
        %s4616 = scalar_lea.vmem [#allocation6], 400
        %v4617 = vld [vmem:[%s4616] sm:$0xff]
        %v4618 = vld [vmem:[%s4616 + $0x8] sm:$0xff]
        %4621 = vrot.lane.b32.xlu0 %v4617, 35
        %v4622 = vpop.permute.xlu0 %4621
        %4623 = vrot.lane.b32.xlu0 %v4618, 35
        %v4624 = vpop.permute.xlu0 %4623
        %v4625 = vsel %vm3259, %v4622, %v4624
        %v4629 = vmul.f32 %v3796, %v4622
        %v4630 = vmul.f32 %v3795, %v4625
        %v4631 = vmul.f32 %v3796, %v4624
        %4635 = vrot.lane.b32.xlu0 %v4629, 17
        %v4636 = vpop.permute.xlu0 %4635
        %4637 = vrot.lane.b32.xlu0 %v4630, 17
        %v4638 = vpop.permute.xlu0 %4637
        %4639 = vrot.lane.b32.xlu0 %v4631, 17
        %v4640 = vpop.permute.xlu0 %4639
        %v4641 = vsel %vm2647, %v4636, %v4638
        %v4642 = vsel %vm2647, %v4638, %v4640
        %v4646 = vadd.f32 %v4613, %v4636
        %v4647 = vadd.f32 %v4614, %v4641
        %v4648 = vadd.f32 %v4615, %v4642
        %s4649 = scalar_lea.vmem [#allocation6], 416
        %v4650 = vld [vmem:[%s4649] sm:$0xff]
        %v4651 = vld [vmem:[%s4649 + $0x8] sm:$0xff]
        %4654 = vrot.lane.b32.xlu0 %v4650, 38
        %v4655 = vpop.permute.xlu0 %4654
        %4656 = vrot.lane.b32.xlu0 %v4651, 38
        %v4657 = vpop.permute.xlu0 %4656
        %vm4658 = vcmask 310272
        %v4659 = vsel %vm4658, %v4655, %v4657
        %v4663 = vmul.f32 %v3796, %v4655
        %v4664 = vmul.f32 %v3795, %v4659
        %v4665 = vmul.f32 %v3796, %v4657
        %4669 = vrot.lane.b32.xlu0 %v4663, 14
        %v4670 = vpop.permute.xlu0 %4669
        %4671 = vrot.lane.b32.xlu0 %v4664, 14
        %v4672 = vpop.permute.xlu0 %4671
        %4673 = vrot.lane.b32.xlu0 %v4665, 14
        %v4674 = vpop.permute.xlu0 %4673
        %v4675 = vsel %vm2443, %v4670, %v4672
        %v4676 = vsel %vm2443, %v4672, %v4674
        %v4680 = vadd.f32 %v4646, %v4670
        %v4681 = vadd.f32 %v4647, %v4675
        %v4682 = vadd.f32 %v4648, %v4676
        %s4683 = scalar_lea.vmem [#allocation6], 432
        %v4684 = vld [vmem:[%s4683] sm:$0xff]
        %v4685 = vld [vmem:[%s4683 + $0x8] sm:$0xff]
        %4688 = vrot.lane.b32.xlu0 %v4684, 41
        %v4689 = vpop.permute.xlu0 %4688
        %4690 = vrot.lane.b32.xlu0 %v4685, 41
        %v4691 = vpop.permute.xlu0 %4690
        %vm4692 = vcmask 334848
        %v4693 = vsel %vm4692, %v4689, %v4691
        %v4697 = vmul.f32 %v3796, %v4689
        %v4698 = vmul.f32 %v3795, %v4693
        %v4699 = vmul.f32 %v3796, %v4691
        %4703 = vrot.lane.b32.xlu0 %v4697, 11
        %v4704 = vpop.permute.xlu0 %4703
        %4705 = vrot.lane.b32.xlu0 %v4698, 11
        %v4706 = vpop.permute.xlu0 %4705
        %4707 = vrot.lane.b32.xlu0 %v4699, 11
        %v4708 = vpop.permute.xlu0 %4707
        %vm4709 = vcmask 89088
        %v4710 = vsel %vm4709, %v4704, %v4706
        %v4711 = vsel %vm4709, %v4706, %v4708
        %v4715 = vadd.f32 %v4680, %v4704
        %v4716 = vadd.f32 %v4681, %v4710
        %v4717 = vadd.f32 %v4682, %v4711
        %s4718 = scalar_lea.vmem [#allocation6], 448
        %v4719 = vld [vmem:[%s4718] sm:$0xff]
        %v4720 = vld [vmem:[%s4718 + $0x8] sm:$0xff]
        %4723 = vrot.lane.b32.xlu0 %v4719, 52
        %v4724 = vpop.permute.xlu0 %4723
        %4725 = vrot.lane.b32.xlu0 %v4720, 52
        %v4726 = vpop.permute.xlu0 %4725
        %v4727 = vsel %vm3812, %v4724, %v4726
        %v4731 = vmul.f32 %v3796, %v4724
        %v4732 = vmul.f32 %v3795, %v4727
        %v4733 = vmul.f32 %v3796, %v4726
        %v4734 = vadd.f32 %v4715, %v4731
        %v4735 = vadd.f32 %v4716, %v4732
        %v4736 = vadd.f32 %v4717, %v4733
        %s4737 = scalar_lea.vmem [#allocation6], 464
        %v4738 = vld [vmem:[%s4737] sm:$0xff]
        %v4739 = vld [vmem:[%s4737 + $0x8] sm:$0xff]
        %4742 = vrot.lane.b32.xlu0 %v4738, 56
        %v4743 = vpop.permute.xlu0 %4742
        %4744 = vrot.lane.b32.xlu0 %v4739, 56
        %v4745 = vpop.permute.xlu0 %4744
        %v4746 = vsel %vm3832, %v4743, %v4745
        %v4750 = vmul.f32 %v3796, %v4743
        %v4751 = vmul.f32 %v3795, %v4746
        %v4752 = vmul.f32 %v3796, %v4745
        %4756 = vrot.lane.b32.xlu0 %v4750, 124
        %v4757 = vpop.permute.xlu0 %4756
        %4758 = vrot.lane.b32.xlu0 %v4751, 124
        %v4759 = vpop.permute.xlu0 %4758
        %4760 = vrot.lane.b32.xlu0 %v4752, 124
        %v4761 = vpop.permute.xlu0 %4760
        %v4762 = vsel %vm806, %v4757, %v4759
        %v4763 = vsel %vm806, %v4759, %v4761
        %v4767 = vadd.f32 %v4734, %v4762
        %v4768 = vadd.f32 %v4735, %v4763
        %v4769 = vadd.f32 %v4736, %v4761
        %s4770 = scalar_lea.vmem [#allocation6], 480
        %v4771 = vld [vmem:[%s4770] sm:$0xff]
        %v4772 = vld [vmem:[%s4770 + $0x8] sm:$0xff]
        %4775 = vrot.lane.b32.xlu0 %v4771, 60
        %v4776 = vpop.permute.xlu0 %4775
        %4777 = vrot.lane.b32.xlu0 %v4772, 60
        %v4778 = vpop.permute.xlu0 %4777
        %v4779 = vsel %vm2664, %v4776, %v4778
        %v4783 = vmul.f32 %v3796, %v4776
        %v4784 = vmul.f32 %v3795, %v4779
        %v4785 = vmul.f32 %v3796, %v4778
        %4789 = vrot.lane.b32.xlu0 %v4783, 120
        %v4790 = vpop.permute.xlu0 %4789
        %4791 = vrot.lane.b32.xlu0 %v4784, 120
        %v4792 = vpop.permute.xlu0 %4791
        %4793 = vrot.lane.b32.xlu0 %v4785, 120
        %v4794 = vpop.permute.xlu0 %4793
        %v4795 = vsel %vm3882, %v4790, %v4792
        %v4796 = vsel %vm3882, %v4792, %v4794
        %v4800 = vadd.f32 %v4767, %v4795
        %v4801 = vadd.f32 %v4768, %v4796
        %v4802 = vadd.f32 %v4769, %v4794
        %s4803 = scalar_lea.vmem [#allocation6], 496
        %v4804 = vld [vmem:[%s4803] sm:$0xff]
        %v4805 = vld [vmem:[%s4803 + $0x8] sm:$0xff]
        %4808 = vrot.lane.b32.xlu0 %v4804, 62
        %v4809 = vpop.permute.xlu0 %4808
        %4810 = vrot.lane.b32.xlu0 %v4805, 62
        %v4811 = vpop.permute.xlu0 %4810
        %v4812 = vsel %vm2528, %v4809, %v4811
        %v4816 = vmul.f32 %v3796, %v4809
        %v4817 = vmul.f32 %v3795, %v4812
        %v4818 = vmul.f32 %v3796, %v4811
        %4822 = vrot.lane.b32.xlu0 %v4816, 118
        %v4823 = vpop.permute.xlu0 %4822
        %4824 = vrot.lane.b32.xlu0 %v4817, 118
        %v4825 = vpop.permute.xlu0 %4824
        %4826 = vrot.lane.b32.xlu0 %v4818, 118
        %v4827 = vpop.permute.xlu0 %4826
        %v4828 = vsel %vm4204, %v4823, %v4825
        %v4829 = vsel %vm4204, %v4825, %v4827
        %v4833 = vadd.f32 %v4800, %v4828
        %v4834 = vadd.f32 %v4801, %v4829
        %v4835 = vadd.f32 %v4802, %v4827
        %s4836 = scalar_lea.vmem [#allocation6], 512
        %v4837 = vld [vmem:[%s4836] sm:$0xff]
        %v4838 = vld [vmem:[%s4836 + $0x8] sm:$0xff]
        %4841 = vrot.lane.b32.xlu0 %v4837, 64
        %v4842 = vpop.permute.xlu0 %4841
        %4843 = vrot.lane.b32.xlu0 %v4838, 64
        %v4844 = vpop.permute.xlu0 %4843
        %v4845 = vsel %vm2392, %v4842, %v4844
        %v4849 = vmul.f32 %v3796, %v4842
        %v4850 = vmul.f32 %v3795, %v4845
        %v4851 = vmul.f32 %v3796, %v4844
        %4855 = vrot.lane.b32.xlu0 %v4849, 116
        %v4856 = vpop.permute.xlu0 %4855
        %4857 = vrot.lane.b32.xlu0 %v4850, 116
        %v4858 = vpop.permute.xlu0 %4857
        %4859 = vrot.lane.b32.xlu0 %v4851, 116
        %v4860 = vpop.permute.xlu0 %4859
        %v4861 = vsel %vm3916, %v4856, %v4858
        %v4862 = vsel %vm3916, %v4858, %v4860
        %v4866 = vadd.f32 %v4833, %v4861
        %v4867 = vadd.f32 %v4834, %v4862
        %v4868 = vadd.f32 %v4835, %v4860
        %s4869 = scalar_lea.vmem [#allocation6], 528
        %v4870 = vld [vmem:[%s4869] sm:$0xff]
        %v4871 = vld [vmem:[%s4869 + $0x8] sm:$0xff]
        %4874 = vrot.lane.b32.xlu0 %v4870, 66
        %v4875 = vpop.permute.xlu0 %4874
        %4876 = vrot.lane.b32.xlu0 %v4871, 66
        %v4877 = vpop.permute.xlu0 %4876
        %vm4878 = vcmask 539648
        %v4879 = vsel %vm4878, %v4875, %v4877
        %v4883 = vmul.f32 %v3796, %v4875
        %v4884 = vmul.f32 %v3795, %v4879
        %v4885 = vmul.f32 %v3796, %v4877
        %4889 = vrot.lane.b32.xlu0 %v4883, 114
        %v4890 = vpop.permute.xlu0 %4889
        %4891 = vrot.lane.b32.xlu0 %v4884, 114
        %v4892 = vpop.permute.xlu0 %4891
        %4893 = vrot.lane.b32.xlu0 %v4885, 114
        %v4894 = vpop.permute.xlu0 %4893
        %v4895 = vsel %vm1801, %v4890, %v4892
        %v4896 = vsel %vm1801, %v4892, %v4894
        %v4900 = vadd.f32 %v4866, %v4895
        %v4901 = vadd.f32 %v4867, %v4896
        %v4902 = vadd.f32 %v4868, %v4894
        %s4903 = scalar_lea.vmem [#allocation6], 544
        %v4904 = vld [vmem:[%s4903] sm:$0xff]
        %v4905 = vld [vmem:[%s4903 + $0x8] sm:$0xff]
        %4908 = vrot.lane.b32.xlu0 %v4904, 68
        %v4909 = vpop.permute.xlu0 %4908
        %4910 = vrot.lane.b32.xlu0 %v4905, 68
        %v4911 = vpop.permute.xlu0 %4910
        %v4912 = vsel %vm3934, %v4909, %v4911
        %v4916 = vmul.f32 %v3796, %v4909
        %v4917 = vmul.f32 %v3795, %v4912
        %v4918 = vmul.f32 %v3796, %v4911
        %4922 = vrot.lane.b32.xlu0 %v4916, 112
        %v4923 = vpop.permute.xlu0 %4922
        %4924 = vrot.lane.b32.xlu0 %v4917, 112
        %v4925 = vpop.permute.xlu0 %4924
        %4926 = vrot.lane.b32.xlu0 %v4918, 112
        %v4927 = vpop.permute.xlu0 %4926
        %v4928 = vsel %vm1010, %v4923, %v4925
        %v4929 = vsel %vm1010, %v4925, %v4927
        %v4933 = vadd.f32 %v4900, %v4928
        %v4934 = vadd.f32 %v4901, %v4929
        %v4935 = vadd.f32 %v4902, %v4927
        %s4936 = scalar_lea.vmem [#allocation6], 560
        %v4937 = vld [vmem:[%s4936] sm:$0xff]
        %v4938 = vld [vmem:[%s4936 + $0x8] sm:$0xff]
        %4941 = vrot.lane.b32.xlu0 %v4937, 72
        %v4942 = vpop.permute.xlu0 %4941
        %4943 = vrot.lane.b32.xlu0 %v4938, 72
        %v4944 = vpop.permute.xlu0 %4943
        %v4945 = vsel %vm3968, %v4942, %v4944
        %v4949 = vmul.f32 %v3796, %v4942
        %v4950 = vmul.f32 %v3795, %v4945
        %v4951 = vmul.f32 %v3796, %v4944
        %4955 = vrot.lane.b32.xlu0 %v4949, 108
        %v4956 = vpop.permute.xlu0 %4955
        %4957 = vrot.lane.b32.xlu0 %v4950, 108
        %v4958 = vpop.permute.xlu0 %4957
        %4959 = vrot.lane.b32.xlu0 %v4951, 108
        %v4960 = vpop.permute.xlu0 %4959
        %v4961 = vsel %vm1282, %v4956, %v4958
        %v4962 = vsel %vm1282, %v4958, %v4960
        %v4966 = vadd.f32 %v4933, %v4961
        %v4967 = vadd.f32 %v4934, %v4962
        %v4968 = vadd.f32 %v4935, %v4960
        %s4969 = scalar_lea.vmem [#allocation6], 576
        %v4970 = vld [vmem:[%s4969] sm:$0xff]
        %v4971 = vld [vmem:[%s4969 + $0x8] sm:$0xff]
        %4974 = vrot.lane.b32.xlu0 %v4970, 76
        %v4975 = vpop.permute.xlu0 %4974
        %4976 = vrot.lane.b32.xlu0 %v4971, 76
        %v4977 = vpop.permute.xlu0 %4976
        %v4978 = vsel %vm2188, %v4975, %v4977
        %v4982 = vmul.f32 %v3796, %v4975
        %v4983 = vmul.f32 %v3795, %v4978
        %v4984 = vmul.f32 %v3796, %v4977
        %4988 = vrot.lane.b32.xlu0 %v4982, 104
        %v4989 = vpop.permute.xlu0 %4988
        %4990 = vrot.lane.b32.xlu0 %v4983, 104
        %v4991 = vpop.permute.xlu0 %4990
        %4992 = vrot.lane.b32.xlu0 %v4984, 104
        %v4993 = vpop.permute.xlu0 %4992
        %v4994 = vsel %vm4018, %v4989, %v4991
        %v4995 = vsel %vm4018, %v4991, %v4993
        %v4999 = vadd.f32 %v4966, %v4994
        %v5000 = vadd.f32 %v4967, %v4995
        %v5001 = vadd.f32 %v4968, %v4993
        %s5002 = scalar_lea.vmem [#allocation6], 592
        %v5003 = vld [vmem:[%s5002] sm:$0xff]
        %v5004 = vld [vmem:[%s5002 + $0x8] sm:$0xff]
        %5007 = vrot.lane.b32.xlu0 %v5003, 71
        %v5008 = vpop.permute.xlu0 %5007
        %5009 = vrot.lane.b32.xlu0 %v5004, 71
        %v5010 = vpop.permute.xlu0 %5009
        %v5011 = vsel %vm4119, %v5008, %v5010
        %v5015 = vmul.f32 %v3796, %v5008
        %v5016 = vmul.f32 %v3795, %v5011
        %v5017 = vmul.f32 %v3796, %v5010
        %5021 = vrot.lane.b32.xlu0 %v5015, 109
        %v5022 = vpop.permute.xlu0 %5021
        %5023 = vrot.lane.b32.xlu0 %v5016, 109
        %v5024 = vpop.permute.xlu0 %5023
        %5025 = vrot.lane.b32.xlu0 %v5017, 109
        %v5026 = vpop.permute.xlu0 %5025
        %v5027 = vsel %vm1214, %v5022, %v5024
        %v5028 = vsel %vm1214, %v5024, %v5026
        %v5032 = vadd.f32 %v4999, %v5027
        %v5033 = vadd.f32 %v5000, %v5028
        %v5034 = vadd.f32 %v5001, %v5026
        %s5035 = scalar_lea.vmem [#allocation6], 608
        %v5036 = vld [vmem:[%s5035] sm:$0xff]
        %v5037 = vld [vmem:[%s5035 + $0x8] sm:$0xff]
        %5040 = vrot.lane.b32.xlu0 %v5036, 74
        %v5041 = vpop.permute.xlu0 %5040
        %5042 = vrot.lane.b32.xlu0 %v5037, 74
        %v5043 = vpop.permute.xlu0 %5042
        %v5044 = vsel %vm2324, %v5041, %v5043
        %v5048 = vmul.f32 %v3796, %v5041
        %v5049 = vmul.f32 %v3795, %v5044
        %v5050 = vmul.f32 %v3796, %v5043
        %5054 = vrot.lane.b32.xlu0 %v5048, 106
        %v5055 = vpop.permute.xlu0 %5054
        %5056 = vrot.lane.b32.xlu0 %v5049, 106
        %v5057 = vpop.permute.xlu0 %5056
        %5058 = vrot.lane.b32.xlu0 %v5050, 106
        %v5059 = vpop.permute.xlu0 %5058
        %v5060 = vsel %vm1418, %v5055, %v5057
        %v5061 = vsel %vm1418, %v5057, %v5059
        %v5065 = vadd.f32 %v5032, %v5060
        %v5066 = vadd.f32 %v5033, %v5061
        %v5067 = vadd.f32 %v5034, %v5059
        %s5068 = scalar_lea.vmem [#allocation6], 624
        %v5069 = vld [vmem:[%s5068] sm:$0xff]
        %v5070 = vld [vmem:[%s5068 + $0x8] sm:$0xff]
        %5073 = vrot.lane.b32.xlu0 %v5069, 77
        %v5074 = vpop.permute.xlu0 %5073
        %5075 = vrot.lane.b32.xlu0 %v5070, 77
        %v5076 = vpop.permute.xlu0 %5075
        %v5077 = vsel %vm547, %v5074, %v5076
        %v5081 = vmul.f32 %v3796, %v5074
        %v5082 = vmul.f32 %v3795, %v5077
        %v5083 = vmul.f32 %v3796, %v5076
        %5087 = vrot.lane.b32.xlu0 %v5081, 103
        %v5088 = vpop.permute.xlu0 %5087
        %5089 = vrot.lane.b32.xlu0 %v5082, 103
        %v5090 = vpop.permute.xlu0 %5089
        %5091 = vrot.lane.b32.xlu0 %v5083, 103
        %v5092 = vpop.permute.xlu0 %5091
        %v5093 = vsel %vm4036, %v5088, %v5090
        %v5094 = vsel %vm4036, %v5090, %v5092
        %v5098 = vadd.f32 %v5065, %v5093
        %v5099 = vadd.f32 %v5066, %v5094
        %v5100 = vadd.f32 %v5067, %v5092
        %s5101 = scalar_lea.vmem [#allocation6], 640
        %v5102 = vld [vmem:[%s5101] sm:$0xff]
        %v5103 = vld [vmem:[%s5101 + $0x8] sm:$0xff]
        %5106 = vrot.lane.b32.xlu0 %v5102, 80
        %v5107 = vpop.permute.xlu0 %5106
        %5108 = vrot.lane.b32.xlu0 %v5103, 80
        %v5109 = vpop.permute.xlu0 %5108
        %v5110 = vsel %vm721, %v5107, %v5109
        %v5114 = vmul.f32 %v3796, %v5107
        %v5115 = vmul.f32 %v3795, %v5110
        %v5116 = vmul.f32 %v3796, %v5109
        %5120 = vrot.lane.b32.xlu0 %v5114, 100
        %v5121 = vpop.permute.xlu0 %5120
        %5122 = vrot.lane.b32.xlu0 %v5115, 100
        %v5123 = vpop.permute.xlu0 %5122
        %5124 = vrot.lane.b32.xlu0 %v5116, 100
        %v5125 = vpop.permute.xlu0 %5124
        %vm5126 = vcmask 818176
        %v5127 = vsel %vm5126, %v5121, %v5123
        %v5128 = vsel %vm5126, %v5123, %v5125
        %v5132 = vadd.f32 %v5098, %v5127
        %v5133 = vadd.f32 %v5099, %v5128
        %v5134 = vadd.f32 %v5100, %v5125
        %s5135 = scalar_lea.vmem [#allocation6], 656
        %v5136 = vld [vmem:[%s5135] sm:$0xff]
        %v5137 = vld [vmem:[%s5135 + $0x8] sm:$0xff]
        %5140 = vrot.lane.b32.xlu0 %v5136, 83
        %v5141 = vpop.permute.xlu0 %5140
        %5142 = vrot.lane.b32.xlu0 %v5137, 83
        %v5143 = vpop.permute.xlu0 %5142
        %v5144 = vsel %vm925, %v5141, %v5143
        %v5148 = vmul.f32 %v3796, %v5141
        %v5149 = vmul.f32 %v3795, %v5144
        %v5150 = vmul.f32 %v3796, %v5143
        %5154 = vrot.lane.b32.xlu0 %v5148, 97
        %v5155 = vpop.permute.xlu0 %5154
        %5156 = vrot.lane.b32.xlu0 %v5149, 97
        %v5157 = vpop.permute.xlu0 %5156
        %5158 = vrot.lane.b32.xlu0 %v5150, 97
        %v5159 = vpop.permute.xlu0 %5158
        %v5160 = vsel %vm1265, %v5155, %v5157
        %v5161 = vsel %vm1265, %v5157, %v5159
        %v5165 = vadd.f32 %v5132, %v5160
        %v5166 = vadd.f32 %v5133, %v5161
        %v5167 = vadd.f32 %v5134, %v5159
        %s5168 = scalar_lea.vmem [#allocation6], 672
        %v5169 = vld [vmem:[%s5168] sm:$0xff]
        %v5170 = vld [vmem:[%s5168 + $0x8] sm:$0xff]
        %5173 = vrot.lane.b32.xlu0 %v5169, 86
        %v5174 = vpop.permute.xlu0 %5173
        %5175 = vrot.lane.b32.xlu0 %v5170, 86
        %v5176 = vpop.permute.xlu0 %5175
        %vm5177 = vcmask 703488
        %v5178 = vsel %vm5177, %v5174, %v5176
        %v5182 = vmul.f32 %v3796, %v5174
        %v5183 = vmul.f32 %v3795, %v5178
        %v5184 = vmul.f32 %v3796, %v5176
        %5188 = vrot.lane.b32.xlu0 %v5182, 94
        %v5189 = vpop.permute.xlu0 %5188
        %5190 = vrot.lane.b32.xlu0 %v5183, 94
        %v5191 = vpop.permute.xlu0 %5190
        %5192 = vrot.lane.b32.xlu0 %v5184, 94
        %v5193 = vpop.permute.xlu0 %5192
        %v5194 = vsel %vm1061, %v5189, %v5191
        %v5195 = vsel %vm1061, %v5191, %v5193
        %v5199 = vadd.f32 %v5165, %v5194
        %v5200 = vadd.f32 %v5166, %v5195
        %v5201 = vadd.f32 %v5167, %v5193
        %s5202 = scalar_lea.vmem [#allocation6], 688
        %v5203 = vld [vmem:[%s5202] sm:$0xff]
        %v5204 = vld [vmem:[%s5202 + $0x8] sm:$0xff]
        %5207 = vrot.lane.b32.xlu0 %v5203, 89
        %v5208 = vpop.permute.xlu0 %5207
        %5209 = vrot.lane.b32.xlu0 %v5204, 89
        %v5210 = vpop.permute.xlu0 %5209
        %vm5211 = vcmask 728064
        %v5212 = vsel %vm5211, %v5208, %v5210
        %v5216 = vmul.f32 %v3796, %v5208
        %v5217 = vmul.f32 %v3795, %v5212
        %v5218 = vmul.f32 %v3796, %v5210
        %5222 = vrot.lane.b32.xlu0 %v5216, 91
        %v5223 = vpop.permute.xlu0 %5222
        %5224 = vrot.lane.b32.xlu0 %v5217, 91
        %v5225 = vpop.permute.xlu0 %5224
        %5226 = vrot.lane.b32.xlu0 %v5218, 91
        %v5227 = vpop.permute.xlu0 %5226
        %v5228 = vsel %vm1818, %v5223, %v5225
        %v5229 = vsel %vm1818, %v5225, %v5227
        %v5233 = vadd.f32 %v5199, %v5228
        %v5234 = vadd.f32 %v5200, %v5229
        %v5235 = vadd.f32 %v5201, %v5227
        %s5236 = scalar_lea.vmem [#allocation6], 704
        %v5237 = vld [vmem:[%s5236] sm:$0xff]
        %v5238 = vld [vmem:[%s5236 + $0x8] sm:$0xff]
        %5241 = vrot.lane.b32.xlu0 %v5237, 92
        %v5242 = vpop.permute.xlu0 %5241
        %5243 = vrot.lane.b32.xlu0 %v5238, 92
        %v5244 = vpop.permute.xlu0 %5243
        %v5245 = vsel %vm1750, %v5242, %v5244
        %v5249 = vmul.f32 %v3796, %v5242
        %v5250 = vmul.f32 %v3795, %v5245
        %v5251 = vmul.f32 %v3796, %v5244
        %5255 = vrot.lane.b32.xlu0 %v5249, 88
        %v5256 = vpop.permute.xlu0 %5255
        %5257 = vrot.lane.b32.xlu0 %v5250, 88
        %v5258 = vpop.permute.xlu0 %5257
        %5259 = vrot.lane.b32.xlu0 %v5251, 88
        %v5260 = vpop.permute.xlu0 %5259
        %vm5261 = vcmask 719872
        %v5262 = vsel %vm5261, %v5256, %v5258
        %v5263 = vsel %vm5261, %v5258, %v5260
        %v5267 = vadd.f32 %v5233, %v5262
        %v5268 = vadd.f32 %v5234, %v5263
        %v5269 = vadd.f32 %v5235, %v5260
        %s5270 = scalar_lea.vmem [#allocation6], 720
        %v5271 = vld [vmem:[%s5270] sm:$0xff]
        %v5272 = vld [vmem:[%s5270 + $0x8] sm:$0xff]
        %5275 = vrot.lane.b32.xlu0 %v5271, 94
        %v5276 = vpop.permute.xlu0 %5275
        %5277 = vrot.lane.b32.xlu0 %v5272, 94
        %v5278 = vpop.permute.xlu0 %5277
        %v5279 = vsel %vm1061, %v5276, %v5278
        %v5283 = vmul.f32 %v3796, %v5276
        %v5284 = vmul.f32 %v3795, %v5279
        %v5285 = vmul.f32 %v3796, %v5278
        %5289 = vrot.lane.b32.xlu0 %v5283, 86
        %v5290 = vpop.permute.xlu0 %5289
        %5291 = vrot.lane.b32.xlu0 %v5284, 86
        %v5292 = vpop.permute.xlu0 %5291
        %5293 = vrot.lane.b32.xlu0 %v5285, 86
        %v5294 = vpop.permute.xlu0 %5293
        %v5295 = vsel %vm5177, %v5290, %v5292
        %v5296 = vsel %vm5177, %v5292, %v5294
        %v5300 = vadd.f32 %v5267, %v5295
        %v5301 = vadd.f32 %v5268, %v5296
        %v5302 = vadd.f32 %v5269, %v5294
        %s5303 = scalar_lea.vmem [#allocation6], 736
        %v5304 = vld [vmem:[%s5303] sm:$0xff]
        %v5305 = vld [vmem:[%s5303 + $0x8] sm:$0xff]
        %5308 = vrot.lane.b32.xlu0 %v5304, 96
        %v5309 = vpop.permute.xlu0 %5308
        %5310 = vrot.lane.b32.xlu0 %v5305, 96
        %v5311 = vpop.permute.xlu0 %5310
        %v5312 = vsel %vm1197, %v5309, %v5311
        %v5316 = vmul.f32 %v3796, %v5309
        %v5317 = vmul.f32 %v3795, %v5312
        %v5318 = vmul.f32 %v3796, %v5311
        %5322 = vrot.lane.b32.xlu0 %v5316, 84
        %v5323 = vpop.permute.xlu0 %5322
        %5324 = vrot.lane.b32.xlu0 %v5317, 84
        %v5325 = vpop.permute.xlu0 %5324
        %5326 = vrot.lane.b32.xlu0 %v5318, 84
        %v5327 = vpop.permute.xlu0 %5326
        %vm5328 = vcmask 687104
        %v5329 = vsel %vm5328, %v5323, %v5325
        %v5330 = vsel %vm5328, %v5325, %v5327
        %v5334 = vadd.f32 %v5300, %v5329
        %v5335 = vadd.f32 %v5301, %v5330
        %v5336 = vadd.f32 %v5302, %v5327
        %s5337 = scalar_lea.vmem [#allocation6], 752
        %v5338 = vld [vmem:[%s5337] sm:$0xff]
        %v5339 = vld [vmem:[%s5337 + $0x8] sm:$0xff]
        %5342 = vrot.lane.b32.xlu0 %v5338, 98
        %v5343 = vpop.permute.xlu0 %5342
        %5344 = vrot.lane.b32.xlu0 %v5339, 98
        %v5345 = vpop.permute.xlu0 %5344
        %v5346 = vsel %vm1333, %v5343, %v5345
        %v5350 = vmul.f32 %v3796, %v5343
        %v5351 = vmul.f32 %v3795, %v5346
        %v5352 = vmul.f32 %v3796, %v5345
        %5356 = vrot.lane.b32.xlu0 %v5350, 82
        %v5357 = vpop.permute.xlu0 %5356
        %5358 = vrot.lane.b32.xlu0 %v5351, 82
        %v5359 = vpop.permute.xlu0 %5358
        %5360 = vrot.lane.b32.xlu0 %v5352, 82
        %v5361 = vpop.permute.xlu0 %5360
        %v5362 = vsel %vm857, %v5357, %v5359
        %v5363 = vsel %vm857, %v5359, %v5361
        %v5367 = vadd.f32 %v5334, %v5362
        %v5368 = vadd.f32 %v5335, %v5363
        %v5369 = vadd.f32 %v5336, %v5361
        %s5370 = scalar_lea.vmem [#allocation6], 768
        %v5371 = vld [vmem:[%s5370] sm:$0xff]
        %v5372 = vld [vmem:[%s5370 + $0x8] sm:$0xff]
        %5375 = vrot.lane.b32.xlu0 %v5371, 100
        %v5376 = vpop.permute.xlu0 %5375
        %5377 = vrot.lane.b32.xlu0 %v5372, 100
        %v5378 = vpop.permute.xlu0 %5377
        %v5379 = vsel %vm5126, %v5376, %v5378
        %v5383 = vmul.f32 %v3796, %v5376
        %v5384 = vmul.f32 %v3795, %v5379
        %v5385 = vmul.f32 %v3796, %v5378
        %5389 = vrot.lane.b32.xlu0 %v5383, 80
        %v5390 = vpop.permute.xlu0 %5389
        %5391 = vrot.lane.b32.xlu0 %v5384, 80
        %v5392 = vpop.permute.xlu0 %5391
        %5393 = vrot.lane.b32.xlu0 %v5385, 80
        %v5394 = vpop.permute.xlu0 %5393
        %v5395 = vsel %vm721, %v5390, %v5392
        %v5396 = vsel %vm721, %v5392, %v5394
        %v5400 = vadd.f32 %v5367, %v5395
        %v5401 = vadd.f32 %v5368, %v5396
        %v5402 = vadd.f32 %v5369, %v5394
        %s5403 = scalar_lea.vmem [#allocation6], 784
        %v5404 = vld [vmem:[%s5403] sm:$0xff]
        %v5405 = vld [vmem:[%s5403 + $0x8] sm:$0xff]
        %5408 = vrot.lane.b32.xlu0 %v5404, 116
        %v5409 = vpop.permute.xlu0 %5408
        %5410 = vrot.lane.b32.xlu0 %v5405, 116
        %v5411 = vpop.permute.xlu0 %5410
        %v5412 = vsel %vm3916, %v5409, %v5411
        %v5416 = vmul.f32 %v3796, %v5409
        %v5417 = vmul.f32 %v3795, %v5412
        %v5418 = vmul.f32 %v3796, %v5411
        %5422 = vrot.lane.b32.xlu0 %v5416, 64
        %v5423 = vpop.permute.xlu0 %5422
        %5424 = vrot.lane.b32.xlu0 %v5417, 64
        %v5425 = vpop.permute.xlu0 %5424
        %5426 = vrot.lane.b32.xlu0 %v5418, 64
        %v5427 = vpop.permute.xlu0 %5426
        %v5428 = vsel %vm2392, %v5423, %v5425
        %v5429 = vsel %vm2392, %v5425, %v5427
        %v5433 = vadd.f32 %v5400, %v5428
        %v5434 = vadd.f32 %v5401, %v5429
        %v5435 = vadd.f32 %v5402, %v5427
        %s5436 = scalar_lea.vmem [#allocation6], 800
        %v5437 = vld [vmem:[%s5436] sm:$0xff]
        %v5438 = vld [vmem:[%s5436 + $0x8] sm:$0xff]
        %5441 = vrot.lane.b32.xlu0 %v5437, 119
        %v5442 = vpop.permute.xlu0 %5441
        %5443 = vrot.lane.b32.xlu0 %v5438, 119
        %v5444 = vpop.permute.xlu0 %5443
        %vm5445 = vcmask 973824
        %v5446 = vsel %vm5445, %v5442, %v5444
        %v5450 = vmul.f32 %v3796, %v5442
        %v5451 = vmul.f32 %v3795, %v5446
        %v5452 = vmul.f32 %v3796, %v5444
        %5456 = vrot.lane.b32.xlu0 %v5450, 61
        %v5457 = vpop.permute.xlu0 %5456
        %5458 = vrot.lane.b32.xlu0 %v5451, 61
        %v5459 = vpop.permute.xlu0 %5458
        %5460 = vrot.lane.b32.xlu0 %v5452, 61
        %v5461 = vpop.permute.xlu0 %5460
        %v5462 = vsel %vm2596, %v5457, %v5459
        %v5463 = vsel %vm2596, %v5459, %v5461
        %v5467 = vadd.f32 %v5433, %v5462
        %v5468 = vadd.f32 %v5434, %v5463
        %v5469 = vadd.f32 %v5435, %v5461
        %s5470 = scalar_lea.vmem [#allocation6], 816
        %v5471 = vld [vmem:[%s5470] sm:$0xff]
        %v5472 = vld [vmem:[%s5470 + $0x8] sm:$0xff]
        %5475 = vrot.lane.b32.xlu0 %v5471, 120
        %v5476 = vpop.permute.xlu0 %5475
        %5477 = vrot.lane.b32.xlu0 %v5472, 120
        %v5478 = vpop.permute.xlu0 %5477
        %v5479 = vsel %vm3882, %v5476, %v5478
        %v5483 = vmul.f32 %v3796, %v5476
        %v5484 = vmul.f32 %v3795, %v5479
        %v5485 = vmul.f32 %v3796, %v5478
        %5489 = vrot.lane.b32.xlu0 %v5483, 60
        %v5490 = vpop.permute.xlu0 %5489
        %5491 = vrot.lane.b32.xlu0 %v5484, 60
        %v5492 = vpop.permute.xlu0 %5491
        %5493 = vrot.lane.b32.xlu0 %v5485, 60
        %v5494 = vpop.permute.xlu0 %5493
        %v5495 = vsel %vm2664, %v5490, %v5492
        %v5496 = vsel %vm2664, %v5492, %v5494
        %v5500 = vadd.f32 %v5467, %v5495
        %v5501 = vadd.f32 %v5468, %v5496
        %v5502 = vadd.f32 %v5469, %v5494
        %s5503 = scalar_lea.vmem [#allocation6], 832
        %v5504 = vld [vmem:[%s5503] sm:$0xff]
        %v5505 = vld [vmem:[%s5503 + $0x8] sm:$0xff]
        %5508 = vrot.lane.b32.xlu0 %v5504, 122
        %v5509 = vpop.permute.xlu0 %5508
        %5510 = vrot.lane.b32.xlu0 %v5505, 122
        %v5511 = vpop.permute.xlu0 %5510
        %v5512 = vsel %vm942, %v5509, %v5511
        %v5516 = vmul.f32 %v3796, %v5509
        %v5517 = vmul.f32 %v3795, %v5512
        %v5518 = vmul.f32 %v3796, %v5511
        %5522 = vrot.lane.b32.xlu0 %v5516, 58
        %v5523 = vpop.permute.xlu0 %5522
        %5524 = vrot.lane.b32.xlu0 %v5517, 58
        %v5525 = vpop.permute.xlu0 %5524
        %5526 = vrot.lane.b32.xlu0 %v5518, 58
        %v5527 = vpop.permute.xlu0 %5526
        %v5528 = vsel %vm2800, %v5523, %v5525
        %v5529 = vsel %vm2800, %v5525, %v5527
        %v5533 = vadd.f32 %v5500, %v5528
        %v5534 = vadd.f32 %v5501, %v5529
        %v5535 = vadd.f32 %v5502, %v5527
        %s5536 = scalar_lea.vmem [#allocation6], 848
        %v5537 = vld [vmem:[%s5536] sm:$0xff]
        %v5538 = vld [vmem:[%s5536 + $0x8] sm:$0xff]
        %5541 = vrot.lane.b32.xlu0 %v5537, 124
        %v5542 = vpop.permute.xlu0 %5541
        %5543 = vrot.lane.b32.xlu0 %v5538, 124
        %v5544 = vpop.permute.xlu0 %5543
        %v5545 = vsel %vm806, %v5542, %v5544
        %v5549 = vmul.f32 %v3796, %v5542
        %v5550 = vmul.f32 %v3795, %v5545
        %v5551 = vmul.f32 %v3796, %v5544
        %5555 = vrot.lane.b32.xlu0 %v5549, 56
        %v5556 = vpop.permute.xlu0 %5555
        %5557 = vrot.lane.b32.xlu0 %v5550, 56
        %v5558 = vpop.permute.xlu0 %5557
        %5559 = vrot.lane.b32.xlu0 %v5551, 56
        %v5560 = vpop.permute.xlu0 %5559
        %v5561 = vsel %vm3832, %v5556, %v5558
        %v5562 = vsel %vm3832, %v5558, %v5560
        %v5566 = vadd.f32 %v5533, %v5561
        %v5567 = vadd.f32 %v5534, %v5562
        %v5568 = vadd.f32 %v5535, %v5560
        %s5569 = scalar_lea.vmem [#allocation6], 864
        %v5570 = vld [vmem:[%s5569] sm:$0xff]
        %v5571 = vld [vmem:[%s5569 + $0x8] sm:$0xff]
        %5574 = vrot.lane.b32.xlu0 %v5570, 125
        %v5575 = vpop.permute.xlu0 %5574
        %5576 = vrot.lane.b32.xlu0 %v5571, 125
        %v5577 = vpop.permute.xlu0 %5576
        %v5578 = vsel %vm738, %v5575, %v5577
        %v5582 = vmul.f32 %v3796, %v5575
        %v5583 = vmul.f32 %v3795, %v5578
        %v5584 = vmul.f32 %v3796, %v5577
        %5588 = vrot.lane.b32.xlu0 %v5582, 55
        %v5589 = vpop.permute.xlu0 %5588
        %5590 = vrot.lane.b32.xlu0 %v5583, 55
        %v5591 = vpop.permute.xlu0 %5590
        %5592 = vrot.lane.b32.xlu0 %v5584, 55
        %v5593 = vpop.permute.xlu0 %5592
        %vm5594 = vcmask 449536
        %v5595 = vsel %vm5594, %v5589, %v5591
        %v5596 = vsel %vm5594, %v5591, %v5593
        %v5600 = vadd.f32 %v5566, %v5595
        %v5601 = vadd.f32 %v5567, %v5596
        %v5602 = vadd.f32 %v5568, %v5593
        %s5603 = scalar_lea.vmem [#allocation6], 880
        %v5604 = vld [vmem:[%s5603] sm:$0xff]
        %v5605 = vld [vmem:[%s5603 + $0x8] sm:$0xff]
        %5608 = vrot.lane.b32.xlu0 %v5604, 126
        %v5609 = vpop.permute.xlu0 %5608
        %5610 = vrot.lane.b32.xlu0 %v5605, 126
        %v5611 = vpop.permute.xlu0 %5610
        %v5612 = vsel %vm670, %v5609, %v5611
        %v5616 = vmul.f32 %v3796, %v5609
        %v5617 = vmul.f32 %v3795, %v5612
        %v5618 = vmul.f32 %v3796, %v5611
        %5622 = vrot.lane.b32.xlu0 %v5616, 54
        %v5623 = vpop.permute.xlu0 %5622
        %5624 = vrot.lane.b32.xlu0 %v5617, 54
        %v5625 = vpop.permute.xlu0 %5624
        %5626 = vrot.lane.b32.xlu0 %v5618, 54
        %v5627 = vpop.permute.xlu0 %5626
        %vm5628 = vcmask 441344
        %v5629 = vsel %vm5628, %v5623, %v5625
        %v5630 = vsel %vm5628, %v5625, %v5627
        %v5634 = vadd.f32 %v5600, %v5629
        %v5635 = vadd.f32 %v5601, %v5630
        %v5636 = vadd.f32 %v5602, %v5627
        %s5637 = scalar_lea.vmem [#allocation6], 896
        %v5638 = vld [vmem:[%s5637] sm:$0xff]
        %v5639 = vld [vmem:[%s5637 + $0x8] sm:$0xff]
        %5642 = vrot.lane.b32.xlu0 %v5638, 77
        %v5643 = vpop.permute.xlu0 %5642
        %5644 = vrot.lane.b32.xlu0 %v5639, 77
        %v5645 = vpop.permute.xlu0 %5644
        %v5646 = vsel %vm547, %v5643, %v5645
        %v5650 = vmul.f32 %v3750, %v5643
        %v5651 = vmul.f32 %v3751, %v5646
        %v5652 = vmul.f32 %v3752, %v5645
        %5656 = vrot.lane.b32.xlu0 %v5650, 103
        %v5657 = vpop.permute.xlu0 %5656
        %5658 = vrot.lane.b32.xlu0 %v5651, 103
        %v5659 = vpop.permute.xlu0 %5658
        %5660 = vrot.lane.b32.xlu0 %v5652, 103
        %v5661 = vpop.permute.xlu0 %5660
        %v5662 = vsel %vm4036, %v5657, %v5659
        %v5663 = vsel %vm4036, %v5659, %v5661
        %v5667 = vadd.f32 %v5634, %v5662
        %v5668 = vadd.f32 %v5635, %v5663
        %v5669 = vadd.f32 %v5636, %v5661
        %s5670 = scalar_lea.vmem [#allocation6], 912
        %v5671 = vld [vmem:[%s5670] sm:$0xff]
        %v5672 = vld [vmem:[%s5670 + $0x8] sm:$0xff]
        %5675 = vrot.lane.b32.xlu0 %v5671, 2
        %v5676 = vpop.permute.xlu0 %5675
        %5677 = vrot.lane.b32.xlu0 %v5672, 2
        %v5678 = vpop.permute.xlu0 %5677
        %v5679 = vsel %vm2239, %v5676, %v5678
        %v5683 = vmul.f32 %v3795, %v5676
        %v5684 = vmul.f32 %v3796, %v5679
        %v5685 = vmul.f32 %v3795, %v5678
        %5689 = vrot.lane.b32.xlu0 %v5683, 50
        %v5690 = vpop.permute.xlu0 %5689
        %5691 = vrot.lane.b32.xlu0 %v5684, 50
        %v5692 = vpop.permute.xlu0 %5691
        %5693 = vrot.lane.b32.xlu0 %v5685, 50
        %v5694 = vpop.permute.xlu0 %5693
        %v5695 = vsel %vm3659, %v5690, %v5692
        %v5696 = vsel %vm3659, %v5692, %v5694
        %v5700 = vadd.f32 %v5667, %v5690
        %v5701 = vadd.f32 %v5668, %v5695
        %v5702 = vadd.f32 %v5669, %v5696
        %s5703 = scalar_lea.vmem [#allocation6], 928
        %v5704 = vld [vmem:[%s5703] sm:$0xff]
        %v5705 = vld [vmem:[%s5703 + $0x8] sm:$0xff]
        %5708 = vrot.lane.b32.xlu0 %v5704, 3
        %v5709 = vpop.permute.xlu0 %5708
        %5710 = vrot.lane.b32.xlu0 %v5705, 3
        %v5711 = vpop.permute.xlu0 %5710
        %v5712 = vsel %vm2307, %v5709, %v5711
        %v5716 = vmul.f32 %v3795, %v5709
        %v5717 = vmul.f32 %v3796, %v5712
        %v5718 = vmul.f32 %v3795, %v5711
        %5722 = vrot.lane.b32.xlu0 %v5716, 49
        %v5723 = vpop.permute.xlu0 %5722
        %5724 = vrot.lane.b32.xlu0 %v5717, 49
        %v5725 = vpop.permute.xlu0 %5724
        %5726 = vrot.lane.b32.xlu0 %v5718, 49
        %v5727 = vpop.permute.xlu0 %5726
        %v5728 = vsel %vm3591, %v5723, %v5725
        %v5729 = vsel %vm3591, %v5725, %v5727
        %v5733 = vadd.f32 %v5700, %v5723
        %v5734 = vadd.f32 %v5701, %v5728
        %v5735 = vadd.f32 %v5702, %v5729
        %s5736 = scalar_lea.vmem [#allocation6], 944
        %v5737 = vld [vmem:[%s5736] sm:$0xff]
        %v5738 = vld [vmem:[%s5736 + $0x8] sm:$0xff]
        %5741 = vrot.lane.b32.xlu0 %v5737, 4
        %v5742 = vpop.permute.xlu0 %5741
        %5743 = vrot.lane.b32.xlu0 %v5738, 4
        %v5744 = vpop.permute.xlu0 %5743
        %v5745 = vsel %vm4389, %v5742, %v5744
        %v5749 = vmul.f32 %v3795, %v5742
        %v5750 = vmul.f32 %v3796, %v5745
        %v5751 = vmul.f32 %v3795, %v5744
        %5755 = vrot.lane.b32.xlu0 %v5749, 48
        %v5756 = vpop.permute.xlu0 %5755
        %5757 = vrot.lane.b32.xlu0 %v5750, 48
        %v5758 = vpop.permute.xlu0 %5757
        %5759 = vrot.lane.b32.xlu0 %v5751, 48
        %v5760 = vpop.permute.xlu0 %5759
        %v5761 = vsel %vm2868, %v5756, %v5758
        %v5762 = vsel %vm2868, %v5758, %v5760
        %v5766 = vadd.f32 %v5733, %v5756
        %v5767 = vadd.f32 %v5734, %v5761
        %v5768 = vadd.f32 %v5735, %v5762
        %s5769 = scalar_lea.vmem [#allocation6], 960
        %v5770 = vld [vmem:[%s5769] sm:$0xff]
        %v5771 = vld [vmem:[%s5769 + $0x8] sm:$0xff]
        %5774 = vrot.lane.b32.xlu0 %v5770, 6
        %v5775 = vpop.permute.xlu0 %5774
        %5776 = vrot.lane.b32.xlu0 %v5771, 6
        %v5777 = vpop.permute.xlu0 %5776
        %vm5778 = vcmask 48128
        %v5779 = vsel %vm5778, %v5775, %v5777
        %v5783 = vmul.f32 %v3795, %v5775
        %v5784 = vmul.f32 %v3796, %v5779
        %v5785 = vmul.f32 %v3795, %v5777
        %5789 = vrot.lane.b32.xlu0 %v5783, 46
        %v5790 = vpop.permute.xlu0 %5789
        %5791 = vrot.lane.b32.xlu0 %v5784, 46
        %v5792 = vpop.permute.xlu0 %5791
        %5793 = vrot.lane.b32.xlu0 %v5785, 46
        %v5794 = vpop.permute.xlu0 %5793
        %v5795 = vsel %vm3004, %v5790, %v5792
        %v5796 = vsel %vm3004, %v5792, %v5794
        %v5800 = vadd.f32 %v5766, %v5790
        %v5801 = vadd.f32 %v5767, %v5795
        %v5802 = vadd.f32 %v5768, %v5796
        %s5803 = scalar_lea.vmem [#allocation6], 976
        %v5804 = vld [vmem:[%s5803] sm:$0xff]
        %v5805 = vld [vmem:[%s5803 + $0x8] sm:$0xff]
        %5808 = vrot.lane.b32.xlu0 %v5804, 8
        %v5809 = vpop.permute.xlu0 %5808
        %5810 = vrot.lane.b32.xlu0 %v5805, 8
        %v5811 = vpop.permute.xlu0 %5810
        %v5812 = vsel %vm476, %v5809, %v5811
        %v5816 = vmul.f32 %v3795, %v5809
        %v5817 = vmul.f32 %v3796, %v5812
        %v5818 = vmul.f32 %v3795, %v5811
        %5822 = vrot.lane.b32.xlu0 %v5816, 44
        %v5823 = vpop.permute.xlu0 %5822
        %5824 = vrot.lane.b32.xlu0 %v5817, 44
        %v5825 = vpop.permute.xlu0 %5824
        %5826 = vrot.lane.b32.xlu0 %v5818, 44
        %v5827 = vpop.permute.xlu0 %5826
        %v5828 = vsel %vm3140, %v5823, %v5825
        %v5829 = vsel %vm3140, %v5825, %v5827
        %v5833 = vadd.f32 %v5800, %v5823
        %v5834 = vadd.f32 %v5801, %v5828
        %v5835 = vadd.f32 %v5802, %v5829
        %s5836 = scalar_lea.vmem [#allocation6], 992
        %v5837 = vld [vmem:[%s5836] sm:$0xff]
        %v5838 = vld [vmem:[%s5836 + $0x8] sm:$0xff]
        %5841 = vrot.lane.b32.xlu0 %v5837, 9
        %v5842 = vpop.permute.xlu0 %5841
        %5843 = vrot.lane.b32.xlu0 %v5838, 9
        %v5844 = vpop.permute.xlu0 %5843
        %vm5845 = vcmask 72704
        %v5846 = vsel %vm5845, %v5842, %v5844
        %v5850 = vmul.f32 %v3795, %v5842
        %v5851 = vmul.f32 %v3796, %v5846
        %v5852 = vmul.f32 %v3795, %v5844
        %5856 = vrot.lane.b32.xlu0 %v5850, 43
        %v5857 = vpop.permute.xlu0 %5856
        %5858 = vrot.lane.b32.xlu0 %v5851, 43
        %v5859 = vpop.permute.xlu0 %5858
        %5860 = vrot.lane.b32.xlu0 %v5852, 43
        %v5861 = vpop.permute.xlu0 %5860
        %v5862 = vsel %vm3208, %v5857, %v5859
        %v5863 = vsel %vm3208, %v5859, %v5861
        %v5867 = vadd.f32 %v5833, %v5857
        %v5868 = vadd.f32 %v5834, %v5862
        %v5869 = vadd.f32 %v5835, %v5863
        %s5870 = scalar_lea.vmem [#allocation6], 1008
        %v5871 = vld [vmem:[%s5870] sm:$0xff]
        %v5872 = vld [vmem:[%s5870 + $0x8] sm:$0xff]
        %5875 = vrot.lane.b32.xlu0 %v5871, 12
        %v5876 = vpop.permute.xlu0 %5875
        %5877 = vrot.lane.b32.xlu0 %v5872, 12
        %v5878 = vpop.permute.xlu0 %5877
        %v5879 = vsel %vm4456, %v5876, %v5878
        %v5883 = vmul.f32 %v3795, %v5876
        %v5884 = vmul.f32 %v3796, %v5879
        %v5885 = vmul.f32 %v3795, %v5878
        %5889 = vrot.lane.b32.xlu0 %v5883, 40
        %v5890 = vpop.permute.xlu0 %5889
        %5891 = vrot.lane.b32.xlu0 %v5884, 40
        %v5892 = vpop.permute.xlu0 %5891
        %5893 = vrot.lane.b32.xlu0 %v5885, 40
        %v5894 = vpop.permute.xlu0 %5893
        %v5895 = vsel %vm4473, %v5890, %v5892
        %v5896 = vsel %vm4473, %v5892, %v5894
        %v5900 = vadd.f32 %v5867, %v5890
        %v5901 = vadd.f32 %v5868, %v5895
        %v5902 = vadd.f32 %v5869, %v5896
        %s5903 = scalar_lea.vmem [#allocation6], 1024
        %v5904 = vld [vmem:[%s5903] sm:$0xff]
        %v5905 = vld [vmem:[%s5903 + $0x8] sm:$0xff]
        %5908 = vrot.lane.b32.xlu0 %v5904, 28
        %v5909 = vpop.permute.xlu0 %5908
        %5910 = vrot.lane.b32.xlu0 %v5905, 28
        %v5911 = vpop.permute.xlu0 %5910
        %v5912 = vsel %vm3608, %v5909, %v5911
        %v5916 = vmul.f32 %v3795, %v5909
        %v5917 = vmul.f32 %v3796, %v5912
        %v5918 = vmul.f32 %v3795, %v5911
        %5922 = vrot.lane.b32.xlu0 %v5916, 24
        %v5923 = vpop.permute.xlu0 %5922
        %5924 = vrot.lane.b32.xlu0 %v5917, 24
        %v5925 = vpop.permute.xlu0 %5924
        %5926 = vrot.lane.b32.xlu0 %v5918, 24
        %v5927 = vpop.permute.xlu0 %5926
        %vm5928 = vcmask 195584
        %v5929 = vsel %vm5928, %v5923, %v5925
        %v5930 = vsel %vm5928, %v5925, %v5927
        %v5934 = vadd.f32 %v5900, %v5923
        %v5935 = vadd.f32 %v5901, %v5929
        %v5936 = vadd.f32 %v5902, %v5930
        %s5937 = scalar_lea.vmem [#allocation6], 1040
        %v5938 = vld [vmem:[%s5937] sm:$0xff]
        %v5939 = vld [vmem:[%s5937 + $0x8] sm:$0xff]
        %5942 = vrot.lane.b32.xlu0 %v5938, 30
        %v5943 = vpop.permute.xlu0 %5942
        %5944 = vrot.lane.b32.xlu0 %v5939, 30
        %v5945 = vpop.permute.xlu0 %5944
        %v5946 = vsel %vm2919, %v5943, %v5945
        %v5950 = vmul.f32 %v3795, %v5943
        %v5951 = vmul.f32 %v3796, %v5946
        %v5952 = vmul.f32 %v3795, %v5945
        %5956 = vrot.lane.b32.xlu0 %v5950, 22
        %v5957 = vpop.permute.xlu0 %5956
        %5958 = vrot.lane.b32.xlu0 %v5951, 22
        %v5959 = vpop.permute.xlu0 %5958
        %5960 = vrot.lane.b32.xlu0 %v5952, 22
        %v5961 = vpop.permute.xlu0 %5960
        %vm5962 = vcmask 179200
        %v5963 = vsel %vm5962, %v5957, %v5959
        %v5964 = vsel %vm5962, %v5959, %v5961
        %v5968 = vadd.f32 %v5934, %v5957
        %v5969 = vadd.f32 %v5935, %v5963
        %v5970 = vadd.f32 %v5936, %v5964
        %s5971 = scalar_lea.vmem [#allocation6], 1056
        %v5972 = vld [vmem:[%s5971] sm:$0xff]
        %v5973 = vld [vmem:[%s5971 + $0x8] sm:$0xff]
        %5976 = vrot.lane.b32.xlu0 %v5972, 32
        %v5977 = vpop.permute.xlu0 %5976
        %5978 = vrot.lane.b32.xlu0 %v5973, 32
        %v5979 = vpop.permute.xlu0 %5978
        %v5980 = vsel %vm3055, %v5977, %v5979
        %v5984 = vmul.f32 %v3795, %v5977
        %v5985 = vmul.f32 %v3796, %v5980
        %v5986 = vmul.f32 %v3795, %v5979
        %5990 = vrot.lane.b32.xlu0 %v5984, 20
        %v5991 = vpop.permute.xlu0 %5990
        %5992 = vrot.lane.b32.xlu0 %v5985, 20
        %v5993 = vpop.permute.xlu0 %5992
        %5994 = vrot.lane.b32.xlu0 %v5986, 20
        %v5995 = vpop.permute.xlu0 %5994
        %v5996 = vsel %vm4607, %v5991, %v5993
        %v5997 = vsel %vm4607, %v5993, %v5995
        %v6001 = vadd.f32 %v5968, %v5991
        %v6002 = vadd.f32 %v5969, %v5996
        %v6003 = vadd.f32 %v5970, %v5997
        %s6004 = scalar_lea.vmem [#allocation6], 1072
        %v6005 = vld [vmem:[%s6004] sm:$0xff]
        %v6006 = vld [vmem:[%s6004 + $0x8] sm:$0xff]
        %6009 = vrot.lane.b32.xlu0 %v6005, 34
        %v6010 = vpop.permute.xlu0 %6009
        %6011 = vrot.lane.b32.xlu0 %v6006, 34
        %v6012 = vpop.permute.xlu0 %6011
        %v6013 = vsel %vm3191, %v6010, %v6012
        %v6017 = vmul.f32 %v3795, %v6010
        %v6018 = vmul.f32 %v3796, %v6013
        %v6019 = vmul.f32 %v3795, %v6012
        %6023 = vrot.lane.b32.xlu0 %v6017, 18
        %v6024 = vpop.permute.xlu0 %6023
        %6025 = vrot.lane.b32.xlu0 %v6018, 18
        %v6026 = vpop.permute.xlu0 %6025
        %6027 = vrot.lane.b32.xlu0 %v6019, 18
        %v6028 = vpop.permute.xlu0 %6027
        %v6029 = vsel %vm2715, %v6024, %v6026
        %v6030 = vsel %vm2715, %v6026, %v6028
        %v6034 = vadd.f32 %v6001, %v6024
        %v6035 = vadd.f32 %v6002, %v6029
        %v6036 = vadd.f32 %v6003, %v6030
        %s6037 = scalar_lea.vmem [#allocation6], 1088
        %v6038 = vld [vmem:[%s6037] sm:$0xff]
        %v6039 = vld [vmem:[%s6037 + $0x8] sm:$0xff]
        %6042 = vrot.lane.b32.xlu0 %v6038, 36
        %v6043 = vpop.permute.xlu0 %6042
        %6044 = vrot.lane.b32.xlu0 %v6039, 36
        %v6045 = vpop.permute.xlu0 %6044
        %vm6046 = vcmask 293888
        %v6047 = vsel %vm6046, %v6043, %v6045
        %v6051 = vmul.f32 %v3795, %v6043
        %v6052 = vmul.f32 %v3796, %v6047
        %v6053 = vmul.f32 %v3795, %v6045
        %6057 = vrot.lane.b32.xlu0 %v6051, 16
        %v6058 = vpop.permute.xlu0 %6057
        %6059 = vrot.lane.b32.xlu0 %v6052, 16
        %v6060 = vpop.permute.xlu0 %6059
        %6061 = vrot.lane.b32.xlu0 %v6053, 16
        %v6062 = vpop.permute.xlu0 %6061
        %v6063 = vsel %vm2579, %v6058, %v6060
        %v6064 = vsel %vm2579, %v6060, %v6062
        %v6068 = vadd.f32 %v6034, %v6058
        %v6069 = vadd.f32 %v6035, %v6063
        %v6070 = vadd.f32 %v6036, %v6064
        %s6071 = scalar_lea.vmem [#allocation6], 1104
        %v6072 = vld [vmem:[%s6071] sm:$0xff]
        %v6073 = vld [vmem:[%s6071 + $0x8] sm:$0xff]
        %6076 = vrot.lane.b32.xlu0 %v6072, 39
        %v6077 = vpop.permute.xlu0 %6076
        %6078 = vrot.lane.b32.xlu0 %v6073, 39
        %v6079 = vpop.permute.xlu0 %6078
        %vm6080 = vcmask 318464
        %v6081 = vsel %vm6080, %v6077, %v6079
        %v6085 = vmul.f32 %v3795, %v6077
        %v6086 = vmul.f32 %v3796, %v6081
        %v6087 = vmul.f32 %v3795, %v6079
        %6091 = vrot.lane.b32.xlu0 %v6085, 13
        %v6092 = vpop.permute.xlu0 %6091
        %6093 = vrot.lane.b32.xlu0 %v6086, 13
        %v6094 = vpop.permute.xlu0 %6093
        %6095 = vrot.lane.b32.xlu0 %v6087, 13
        %v6096 = vpop.permute.xlu0 %6095
        %v6097 = vsel %vm2375, %v6092, %v6094
        %v6098 = vsel %vm2375, %v6094, %v6096
        %v6102 = vadd.f32 %v6068, %v6092
        %v6103 = vadd.f32 %v6069, %v6097
        %v6104 = vadd.f32 %v6070, %v6098
        %s6105 = scalar_lea.vmem [#allocation6], 1120
        %v6106 = vld [vmem:[%s6105] sm:$0xff]
        %v6107 = vld [vmem:[%s6105 + $0x8] sm:$0xff]
        %6110 = vrot.lane.b32.xlu0 %v6106, 42
        %v6111 = vpop.permute.xlu0 %6110
        %6112 = vrot.lane.b32.xlu0 %v6107, 42
        %v6113 = vpop.permute.xlu0 %6112
        %v6114 = vsel %vm3276, %v6111, %v6113
        %v6118 = vmul.f32 %v3795, %v6111
        %v6119 = vmul.f32 %v3796, %v6114
        %v6120 = vmul.f32 %v3795, %v6113
        %6124 = vrot.lane.b32.xlu0 %v6118, 10
        %v6125 = vpop.permute.xlu0 %6124
        %6126 = vrot.lane.b32.xlu0 %v6119, 10
        %v6127 = vpop.permute.xlu0 %6126
        %6128 = vrot.lane.b32.xlu0 %v6120, 10
        %v6129 = vpop.permute.xlu0 %6128
        %vm6130 = vcmask 80896
        %v6131 = vsel %vm6130, %v6125, %v6127
        %v6132 = vsel %vm6130, %v6127, %v6129
        %v6136 = vadd.f32 %v6102, %v6125
        %v6137 = vadd.f32 %v6103, %v6131
        %v6138 = vadd.f32 %v6104, %v6132
        %s6139 = scalar_lea.vmem [#allocation6], 1136
        %v6140 = vld [vmem:[%s6139] sm:$0xff]
        %v6141 = vld [vmem:[%s6139 + $0x8] sm:$0xff]
        %6144 = vrot.lane.b32.xlu0 %v6140, 45
        %v6145 = vpop.permute.xlu0 %6144
        %6146 = vrot.lane.b32.xlu0 %v6141, 45
        %v6147 = vpop.permute.xlu0 %6146
        %v6148 = vsel %vm3072, %v6145, %v6147
        %v6152 = vmul.f32 %v3795, %v6145
        %v6153 = vmul.f32 %v3796, %v6148
        %v6154 = vmul.f32 %v3795, %v6147
        %6158 = vrot.lane.b32.xlu0 %v6152, 7
        %v6159 = vpop.permute.xlu0 %6158
        %6160 = vrot.lane.b32.xlu0 %v6153, 7
        %v6161 = vpop.permute.xlu0 %6160
        %6162 = vrot.lane.b32.xlu0 %v6154, 7
        %v6163 = vpop.permute.xlu0 %6162
        %vm6164 = vcmask 56320
        %v6165 = vsel %vm6164, %v6159, %v6161
        %v6166 = vsel %vm6164, %v6161, %v6163
        %v6170 = vadd.f32 %v6136, %v6159
        %v6171 = vadd.f32 %v6137, %v6165
        %v6172 = vadd.f32 %v6138, %v6166
        %s6173 = scalar_lea.vmem [#allocation6], 1152
        %v6174 = vld [vmem:[%s6173] sm:$0xff]
        %v6175 = vld [vmem:[%s6173 + $0x8] sm:$0xff]
        %6178 = vrot.lane.b32.xlu0 %v6174, 48
        %v6179 = vpop.permute.xlu0 %6178
        %6180 = vrot.lane.b32.xlu0 %v6175, 48
        %v6181 = vpop.permute.xlu0 %6180
        %v6182 = vsel %vm2868, %v6179, %v6181
        %v6186 = vmul.f32 %v3795, %v6179
        %v6187 = vmul.f32 %v3796, %v6182
        %v6188 = vmul.f32 %v3795, %v6181
        %6192 = vrot.lane.b32.xlu0 %v6186, 4
        %v6193 = vpop.permute.xlu0 %6192
        %6194 = vrot.lane.b32.xlu0 %v6187, 4
        %v6195 = vpop.permute.xlu0 %6194
        %6196 = vrot.lane.b32.xlu0 %v6188, 4
        %v6197 = vpop.permute.xlu0 %6196
        %v6198 = vsel %vm4389, %v6193, %v6195
        %v6199 = vsel %vm4389, %v6195, %v6197
        %v6203 = vadd.f32 %v6170, %v6193
        %v6204 = vadd.f32 %v6171, %v6198
        %v6205 = vadd.f32 %v6172, %v6199
        %s6206 = scalar_lea.vmem [#allocation6], 1168
        %v6207 = vld [vmem:[%s6206] sm:$0xff]
        %v6208 = vld [vmem:[%s6206 + $0x8] sm:$0xff]
        %6211 = vrot.lane.b32.xlu0 %v6207, 51
        %v6212 = vpop.permute.xlu0 %6211
        %6213 = vrot.lane.b32.xlu0 %v6208, 51
        %v6214 = vpop.permute.xlu0 %6213
        %v6215 = vsel %vm3727, %v6212, %v6214
        %v6219 = vmul.f32 %v3795, %v6212
        %v6220 = vmul.f32 %v3796, %v6215
        %v6221 = vmul.f32 %v3795, %v6214
        %6225 = vrot.lane.b32.xlu0 %v6219, 1
        %v6226 = vpop.permute.xlu0 %6225
        %6227 = vrot.lane.b32.xlu0 %v6220, 1
        %v6228 = vpop.permute.xlu0 %6227
        %6229 = vrot.lane.b32.xlu0 %v6221, 1
        %v6230 = vpop.permute.xlu0 %6229
        %v6231 = vsel %vm2171, %v6226, %v6228
        %v6232 = vsel %vm2171, %v6228, %v6230
        %v6236 = vadd.f32 %v6203, %v6226
        %v6237 = vadd.f32 %v6204, %v6231
        %v6238 = vadd.f32 %v6205, %v6232
        %s6239 = scalar_lea.vmem [#allocation6], 1184
        %v6240 = vld [vmem:[%s6239] sm:$0xff]
        %v6241 = vld [vmem:[%s6239 + $0x8] sm:$0xff]
        %6244 = vrot.lane.b32.xlu0 %v6240, 54
        %v6245 = vpop.permute.xlu0 %6244
        %6246 = vrot.lane.b32.xlu0 %v6241, 54
        %v6247 = vpop.permute.xlu0 %6246
        %v6248 = vsel %vm5628, %v6245, %v6247
        %v6252 = vmul.f32 %v3795, %v6245
        %v6253 = vmul.f32 %v3796, %v6248
        %v6254 = vmul.f32 %v3795, %v6247
        %6258 = vrot.lane.b32.xlu0 %v6252, 126
        %v6259 = vpop.permute.xlu0 %6258
        %6260 = vrot.lane.b32.xlu0 %v6253, 126
        %v6261 = vpop.permute.xlu0 %6260
        %6262 = vrot.lane.b32.xlu0 %v6254, 126
        %v6263 = vpop.permute.xlu0 %6262
        %v6264 = vsel %vm670, %v6259, %v6261
        %v6265 = vsel %vm670, %v6261, %v6263
        %v6269 = vadd.f32 %v6236, %v6264
        %v6270 = vadd.f32 %v6237, %v6265
        %v6271 = vadd.f32 %v6238, %v6263
        %s6272 = scalar_lea.vmem [#allocation6], 1200
        %v6273 = vld [vmem:[%s6272] sm:$0xff]
        %v6274 = vld [vmem:[%s6272 + $0x8] sm:$0xff]
        %6277 = vrot.lane.b32.xlu0 %v6273, 57
        %v6278 = vpop.permute.xlu0 %6277
        %6279 = vrot.lane.b32.xlu0 %v6274, 57
        %v6280 = vpop.permute.xlu0 %6279
        %vm6281 = vcmask 465920
        %v6282 = vsel %vm6281, %v6278, %v6280
        %v6286 = vmul.f32 %v3795, %v6278
        %v6287 = vmul.f32 %v3796, %v6282
        %v6288 = vmul.f32 %v3795, %v6280
        %6292 = vrot.lane.b32.xlu0 %v6286, 123
        %v6293 = vpop.permute.xlu0 %6292
        %6294 = vrot.lane.b32.xlu0 %v6287, 123
        %v6295 = vpop.permute.xlu0 %6294
        %6296 = vrot.lane.b32.xlu0 %v6288, 123
        %v6297 = vpop.permute.xlu0 %6296
        %v6298 = vsel %vm874, %v6293, %v6295
        %v6299 = vsel %vm874, %v6295, %v6297
        %v6303 = vadd.f32 %v6269, %v6298
        %v6304 = vadd.f32 %v6270, %v6299
        %v6305 = vadd.f32 %v6271, %v6297
        %s6306 = scalar_lea.vmem [#allocation6], 1216
        %v6307 = vld [vmem:[%s6306] sm:$0xff]
        %v6308 = vld [vmem:[%s6306 + $0x8] sm:$0xff]
        %6311 = vrot.lane.b32.xlu0 %v6307, 52
        %v6312 = vpop.permute.xlu0 %6311
        %6313 = vrot.lane.b32.xlu0 %v6308, 52
        %v6314 = vpop.permute.xlu0 %6313
        %v6315 = vsel %vm3812, %v6312, %v6314
        %v6319 = vmul.f32 %v3795, %v6312
        %v6320 = vmul.f32 %v3796, %v6315
        %v6321 = vmul.f32 %v3795, %v6314
        %v6322 = vadd.f32 %v6303, %v6319
        %v6323 = vadd.f32 %v6304, %v6320
        %v6324 = vadd.f32 %v6305, %v6321
        %s6325 = scalar_lea.vmem [#allocation6], 1232
        %v6326 = vld [vmem:[%s6325] sm:$0xff]
        %v6327 = vld [vmem:[%s6325 + $0x8] sm:$0xff]
        %6330 = vrot.lane.b32.xlu0 %v6326, 56
        %v6331 = vpop.permute.xlu0 %6330
        %6332 = vrot.lane.b32.xlu0 %v6327, 56
        %v6333 = vpop.permute.xlu0 %6332
        %v6334 = vsel %vm3832, %v6331, %v6333
        %v6338 = vmul.f32 %v3795, %v6331
        %v6339 = vmul.f32 %v3796, %v6334
        %v6340 = vmul.f32 %v3795, %v6333
        %6344 = vrot.lane.b32.xlu0 %v6338, 124
        %v6345 = vpop.permute.xlu0 %6344
        %6346 = vrot.lane.b32.xlu0 %v6339, 124
        %v6347 = vpop.permute.xlu0 %6346
        %6348 = vrot.lane.b32.xlu0 %v6340, 124
        %v6349 = vpop.permute.xlu0 %6348
        %v6350 = vsel %vm806, %v6345, %v6347
        %v6351 = vsel %vm806, %v6347, %v6349
        %v6355 = vadd.f32 %v6322, %v6350
        %v6356 = vadd.f32 %v6323, %v6351
        %v6357 = vadd.f32 %v6324, %v6349
        %s6358 = scalar_lea.vmem [#allocation6], 1248
        %v6359 = vld [vmem:[%s6358] sm:$0xff]
        %v6360 = vld [vmem:[%s6358 + $0x8] sm:$0xff]
        %6363 = vrot.lane.b32.xlu0 %v6359, 60
        %v6364 = vpop.permute.xlu0 %6363
        %6365 = vrot.lane.b32.xlu0 %v6360, 60
        %v6366 = vpop.permute.xlu0 %6365
        %v6367 = vsel %vm2664, %v6364, %v6366
        %v6371 = vmul.f32 %v3795, %v6364
        %v6372 = vmul.f32 %v3796, %v6367
        %v6373 = vmul.f32 %v3795, %v6366
        %6377 = vrot.lane.b32.xlu0 %v6371, 120
        %v6378 = vpop.permute.xlu0 %6377
        %6379 = vrot.lane.b32.xlu0 %v6372, 120
        %v6380 = vpop.permute.xlu0 %6379
        %6381 = vrot.lane.b32.xlu0 %v6373, 120
        %v6382 = vpop.permute.xlu0 %6381
        %v6383 = vsel %vm3882, %v6378, %v6380
        %v6384 = vsel %vm3882, %v6380, %v6382
        %v6388 = vadd.f32 %v6355, %v6383
        %v6389 = vadd.f32 %v6356, %v6384
        %v6390 = vadd.f32 %v6357, %v6382
        %s6391 = scalar_lea.vmem [#allocation6], 1264
        %v6392 = vld [vmem:[%s6391] sm:$0xff]
        %v6393 = vld [vmem:[%s6391 + $0x8] sm:$0xff]
        %6396 = vrot.lane.b32.xlu0 %v6392, 62
        %v6397 = vpop.permute.xlu0 %6396
        %6398 = vrot.lane.b32.xlu0 %v6393, 62
        %v6399 = vpop.permute.xlu0 %6398
        %v6400 = vsel %vm2528, %v6397, %v6399
        %v6404 = vmul.f32 %v3795, %v6397
        %v6405 = vmul.f32 %v3796, %v6400
        %v6406 = vmul.f32 %v3795, %v6399
        %6410 = vrot.lane.b32.xlu0 %v6404, 118
        %v6411 = vpop.permute.xlu0 %6410
        %6412 = vrot.lane.b32.xlu0 %v6405, 118
        %v6413 = vpop.permute.xlu0 %6412
        %6414 = vrot.lane.b32.xlu0 %v6406, 118
        %v6415 = vpop.permute.xlu0 %6414
        %v6416 = vsel %vm4204, %v6411, %v6413
        %v6417 = vsel %vm4204, %v6413, %v6415
        %v6421 = vadd.f32 %v6388, %v6416
        %v6422 = vadd.f32 %v6389, %v6417
        %v6423 = vadd.f32 %v6390, %v6415
        %s6424 = scalar_lea.vmem [#allocation6], 1280
        %v6425 = vld [vmem:[%s6424] sm:$0xff]
        %v6426 = vld [vmem:[%s6424 + $0x8] sm:$0xff]
        %6429 = vrot.lane.b32.xlu0 %v6425, 64
        %v6430 = vpop.permute.xlu0 %6429
        %6431 = vrot.lane.b32.xlu0 %v6426, 64
        %v6432 = vpop.permute.xlu0 %6431
        %v6433 = vsel %vm2392, %v6430, %v6432
        %v6437 = vmul.f32 %v3795, %v6430
        %v6438 = vmul.f32 %v3796, %v6433
        %v6439 = vmul.f32 %v3795, %v6432
        %6443 = vrot.lane.b32.xlu0 %v6437, 116
        %v6444 = vpop.permute.xlu0 %6443
        %6445 = vrot.lane.b32.xlu0 %v6438, 116
        %v6446 = vpop.permute.xlu0 %6445
        %6447 = vrot.lane.b32.xlu0 %v6439, 116
        %v6448 = vpop.permute.xlu0 %6447
        %v6449 = vsel %vm3916, %v6444, %v6446
        %v6450 = vsel %vm3916, %v6446, %v6448
        %v6454 = vadd.f32 %v6421, %v6449
        %v6455 = vadd.f32 %v6422, %v6450
        %v6456 = vadd.f32 %v6423, %v6448
        %s6457 = scalar_lea.vmem [#allocation6], 1296
        %v6458 = vld [vmem:[%s6457] sm:$0xff]
        %v6459 = vld [vmem:[%s6457 + $0x8] sm:$0xff]
        %6462 = vrot.lane.b32.xlu0 %v6458, 66
        %v6463 = vpop.permute.xlu0 %6462
        %6464 = vrot.lane.b32.xlu0 %v6459, 66
        %v6465 = vpop.permute.xlu0 %6464
        %v6466 = vsel %vm4878, %v6463, %v6465
        %v6470 = vmul.f32 %v3795, %v6463
        %v6471 = vmul.f32 %v3796, %v6466
        %v6472 = vmul.f32 %v3795, %v6465
        %6476 = vrot.lane.b32.xlu0 %v6470, 114
        %v6477 = vpop.permute.xlu0 %6476
        %6478 = vrot.lane.b32.xlu0 %v6471, 114
        %v6479 = vpop.permute.xlu0 %6478
        %6480 = vrot.lane.b32.xlu0 %v6472, 114
        %v6481 = vpop.permute.xlu0 %6480
        %v6482 = vsel %vm1801, %v6477, %v6479
        %v6483 = vsel %vm1801, %v6479, %v6481
        %v6487 = vadd.f32 %v6454, %v6482
        %v6488 = vadd.f32 %v6455, %v6483
        %v6489 = vadd.f32 %v6456, %v6481
        %s6490 = scalar_lea.vmem [#allocation6], 1312
        %v6491 = vld [vmem:[%s6490] sm:$0xff]
        %v6492 = vld [vmem:[%s6490 + $0x8] sm:$0xff]
        %6495 = vrot.lane.b32.xlu0 %v6491, 68
        %v6496 = vpop.permute.xlu0 %6495
        %6497 = vrot.lane.b32.xlu0 %v6492, 68
        %v6498 = vpop.permute.xlu0 %6497
        %v6499 = vsel %vm3934, %v6496, %v6498
        %v6503 = vmul.f32 %v3795, %v6496
        %v6504 = vmul.f32 %v3796, %v6499
        %v6505 = vmul.f32 %v3795, %v6498
        %6509 = vrot.lane.b32.xlu0 %v6503, 112
        %v6510 = vpop.permute.xlu0 %6509
        %6511 = vrot.lane.b32.xlu0 %v6504, 112
        %v6512 = vpop.permute.xlu0 %6511
        %6513 = vrot.lane.b32.xlu0 %v6505, 112
        %v6514 = vpop.permute.xlu0 %6513
        %v6515 = vsel %vm1010, %v6510, %v6512
        %v6516 = vsel %vm1010, %v6512, %v6514
        %v6520 = vadd.f32 %v6487, %v6515
        %v6521 = vadd.f32 %v6488, %v6516
        %v6522 = vadd.f32 %v6489, %v6514
        %s6523 = scalar_lea.vmem [#allocation6], 1328
        %v6524 = vld [vmem:[%s6523] sm:$0xff]
        %v6525 = vld [vmem:[%s6523 + $0x8] sm:$0xff]
        %6528 = vrot.lane.b32.xlu0 %v6524, 72
        %v6529 = vpop.permute.xlu0 %6528
        %6530 = vrot.lane.b32.xlu0 %v6525, 72
        %v6531 = vpop.permute.xlu0 %6530
        %v6532 = vsel %vm3968, %v6529, %v6531
        %v6536 = vmul.f32 %v3795, %v6529
        %v6537 = vmul.f32 %v3796, %v6532
        %v6538 = vmul.f32 %v3795, %v6531
        %6542 = vrot.lane.b32.xlu0 %v6536, 108
        %v6543 = vpop.permute.xlu0 %6542
        %6544 = vrot.lane.b32.xlu0 %v6537, 108
        %v6545 = vpop.permute.xlu0 %6544
        %6546 = vrot.lane.b32.xlu0 %v6538, 108
        %v6547 = vpop.permute.xlu0 %6546
        %v6548 = vsel %vm1282, %v6543, %v6545
        %v6549 = vsel %vm1282, %v6545, %v6547
        %v6553 = vadd.f32 %v6520, %v6548
        %v6554 = vadd.f32 %v6521, %v6549
        %v6555 = vadd.f32 %v6522, %v6547
        %s6556 = scalar_lea.vmem [#allocation6], 1344
        %v6557 = vld [vmem:[%s6556] sm:$0xff]
        %v6558 = vld [vmem:[%s6556 + $0x8] sm:$0xff]
        %6561 = vrot.lane.b32.xlu0 %v6557, 76
        %v6562 = vpop.permute.xlu0 %6561
        %6563 = vrot.lane.b32.xlu0 %v6558, 76
        %v6564 = vpop.permute.xlu0 %6563
        %v6565 = vsel %vm2188, %v6562, %v6564
        %v6569 = vmul.f32 %v3795, %v6562
        %v6570 = vmul.f32 %v3796, %v6565
        %v6571 = vmul.f32 %v3795, %v6564
        %6575 = vrot.lane.b32.xlu0 %v6569, 104
        %v6576 = vpop.permute.xlu0 %6575
        %6577 = vrot.lane.b32.xlu0 %v6570, 104
        %v6578 = vpop.permute.xlu0 %6577
        %6579 = vrot.lane.b32.xlu0 %v6571, 104
        %v6580 = vpop.permute.xlu0 %6579
        %v6581 = vsel %vm4018, %v6576, %v6578
        %v6582 = vsel %vm4018, %v6578, %v6580
        %v6586 = vadd.f32 %v6553, %v6581
        %v6587 = vadd.f32 %v6554, %v6582
        %v6588 = vadd.f32 %v6555, %v6580
        %s6589 = scalar_lea.vmem [#allocation6], 1360
        %v6590 = vld [vmem:[%s6589] sm:$0xff]
        %v6591 = vld [vmem:[%s6589 + $0x8] sm:$0xff]
        %6594 = vrot.lane.b32.xlu0 %v6590, 87
        %v6595 = vpop.permute.xlu0 %6594
        %6596 = vrot.lane.b32.xlu0 %v6591, 87
        %v6597 = vpop.permute.xlu0 %6596
        %vm6598 = vcmask 711680
        %v6599 = vsel %vm6598, %v6595, %v6597
        %v6603 = vmul.f32 %v3795, %v6595
        %v6604 = vmul.f32 %v3796, %v6599
        %v6605 = vmul.f32 %v3795, %v6597
        %6609 = vrot.lane.b32.xlu0 %v6603, 93
        %v6610 = vpop.permute.xlu0 %6609
        %6611 = vrot.lane.b32.xlu0 %v6604, 93
        %v6612 = vpop.permute.xlu0 %6611
        %6613 = vrot.lane.b32.xlu0 %v6605, 93
        %v6614 = vpop.permute.xlu0 %6613
        %v6615 = vsel %vm993, %v6610, %v6612
        %v6616 = vsel %vm993, %v6612, %v6614
        %v6620 = vadd.f32 %v6586, %v6615
        %v6621 = vadd.f32 %v6587, %v6616
        %v6622 = vadd.f32 %v6588, %v6614
        %s6623 = scalar_lea.vmem [#allocation6], 1376
        %v6624 = vld [vmem:[%s6623] sm:$0xff]
        %v6625 = vld [vmem:[%s6623 + $0x8] sm:$0xff]
        %6628 = vrot.lane.b32.xlu0 %v6624, 90
        %v6629 = vpop.permute.xlu0 %6628
        %6630 = vrot.lane.b32.xlu0 %v6625, 90
        %v6631 = vpop.permute.xlu0 %6630
        %v6632 = vsel %vm1886, %v6629, %v6631
        %v6636 = vmul.f32 %v3795, %v6629
        %v6637 = vmul.f32 %v3796, %v6632
        %v6638 = vmul.f32 %v3795, %v6631
        %6642 = vrot.lane.b32.xlu0 %v6636, 90
        %v6643 = vpop.permute.xlu0 %6642
        %6644 = vrot.lane.b32.xlu0 %v6637, 90
        %v6645 = vpop.permute.xlu0 %6644
        %6646 = vrot.lane.b32.xlu0 %v6638, 90
        %v6647 = vpop.permute.xlu0 %6646
        %v6648 = vsel %vm1886, %v6643, %v6645
        %v6649 = vsel %vm1886, %v6645, %v6647
        %v6653 = vadd.f32 %v6620, %v6648
        %v6654 = vadd.f32 %v6621, %v6649
        %v6655 = vadd.f32 %v6622, %v6647
        %s6656 = scalar_lea.vmem [#allocation6], 1392
        %v6657 = vld [vmem:[%s6656] sm:$0xff]
        %v6658 = vld [vmem:[%s6656 + $0x8] sm:$0xff]
        %6661 = vrot.lane.b32.xlu0 %v6657, 93
        %v6662 = vpop.permute.xlu0 %6661
        %6663 = vrot.lane.b32.xlu0 %v6658, 93
        %v6664 = vpop.permute.xlu0 %6663
        %v6665 = vsel %vm993, %v6662, %v6664
        %v6669 = vmul.f32 %v3795, %v6662
        %v6670 = vmul.f32 %v3796, %v6665
        %v6671 = vmul.f32 %v3795, %v6664
        %6675 = vrot.lane.b32.xlu0 %v6669, 87
        %v6676 = vpop.permute.xlu0 %6675
        %6677 = vrot.lane.b32.xlu0 %v6670, 87
        %v6678 = vpop.permute.xlu0 %6677
        %6679 = vrot.lane.b32.xlu0 %v6671, 87
        %v6680 = vpop.permute.xlu0 %6679
        %v6681 = vsel %vm6598, %v6676, %v6678
        %v6682 = vsel %vm6598, %v6678, %v6680
        %v6686 = vadd.f32 %v6653, %v6681
        %v6687 = vadd.f32 %v6654, %v6682
        %v6688 = vadd.f32 %v6655, %v6680
        %s6689 = scalar_lea.vmem [#allocation6], 1408
        %v6690 = vld [vmem:[%s6689] sm:$0xff]
        %v6691 = vld [vmem:[%s6689 + $0x8] sm:$0xff]
        %6694 = vrot.lane.b32.xlu0 %v6690, 96
        %v6695 = vpop.permute.xlu0 %6694
        %6696 = vrot.lane.b32.xlu0 %v6691, 96
        %v6697 = vpop.permute.xlu0 %6696
        %v6698 = vsel %vm1197, %v6695, %v6697
        %v6702 = vmul.f32 %v3795, %v6695
        %v6703 = vmul.f32 %v3796, %v6698
        %v6704 = vmul.f32 %v3795, %v6697
        %6708 = vrot.lane.b32.xlu0 %v6702, 84
        %v6709 = vpop.permute.xlu0 %6708
        %6710 = vrot.lane.b32.xlu0 %v6703, 84
        %v6711 = vpop.permute.xlu0 %6710
        %6712 = vrot.lane.b32.xlu0 %v6704, 84
        %v6713 = vpop.permute.xlu0 %6712
        %v6714 = vsel %vm5328, %v6709, %v6711
        %v6715 = vsel %vm5328, %v6711, %v6713
        %v6719 = vadd.f32 %v6686, %v6714
        %v6720 = vadd.f32 %v6687, %v6715
        %v6721 = vadd.f32 %v6688, %v6713
        %s6722 = scalar_lea.vmem [#allocation6], 1424
        %v6723 = vld [vmem:[%s6722] sm:$0xff]
        %v6724 = vld [vmem:[%s6722 + $0x8] sm:$0xff]
        %6727 = vrot.lane.b32.xlu0 %v6723, 99
        %v6728 = vpop.permute.xlu0 %6727
        %6729 = vrot.lane.b32.xlu0 %v6724, 99
        %v6730 = vpop.permute.xlu0 %6729
        %v6731 = vsel %vm1401, %v6728, %v6730
        %v6735 = vmul.f32 %v3795, %v6728
        %v6736 = vmul.f32 %v3796, %v6731
        %v6737 = vmul.f32 %v3795, %v6730
        %6741 = vrot.lane.b32.xlu0 %v6735, 81
        %v6742 = vpop.permute.xlu0 %6741
        %6743 = vrot.lane.b32.xlu0 %v6736, 81
        %v6744 = vpop.permute.xlu0 %6743
        %6745 = vrot.lane.b32.xlu0 %v6737, 81
        %v6746 = vpop.permute.xlu0 %6745
        %v6747 = vsel %vm789, %v6742, %v6744
        %v6748 = vsel %vm789, %v6744, %v6746
        %v6752 = vadd.f32 %v6719, %v6747
        %v6753 = vadd.f32 %v6720, %v6748
        %v6754 = vadd.f32 %v6721, %v6746
        %s6755 = scalar_lea.vmem [#allocation6], 1440
        %v6756 = vld [vmem:[%s6755] sm:$0xff]
        %v6757 = vld [vmem:[%s6755 + $0x8] sm:$0xff]
        %6760 = vrot.lane.b32.xlu0 %v6756, 102
        %v6761 = vpop.permute.xlu0 %6760
        %6762 = vrot.lane.b32.xlu0 %v6757, 102
        %v6763 = vpop.permute.xlu0 %6762
        %vm6764 = vcmask 834560
        %v6765 = vsel %vm6764, %v6761, %v6763
        %v6769 = vmul.f32 %v3795, %v6761
        %v6770 = vmul.f32 %v3796, %v6765
        %v6771 = vmul.f32 %v3795, %v6763
        %6775 = vrot.lane.b32.xlu0 %v6769, 78
        %v6776 = vpop.permute.xlu0 %6775
        %6777 = vrot.lane.b32.xlu0 %v6770, 78
        %v6778 = vpop.permute.xlu0 %6777
        %6779 = vrot.lane.b32.xlu0 %v6771, 78
        %v6780 = vpop.permute.xlu0 %6779
        %v6781 = vsel %vm585, %v6776, %v6778
        %v6782 = vsel %vm585, %v6778, %v6780
        %v6786 = vadd.f32 %v6752, %v6781
        %v6787 = vadd.f32 %v6753, %v6782
        %v6788 = vadd.f32 %v6754, %v6780
        %s6789 = scalar_lea.vmem [#allocation6], 1456
        %v6790 = vld [vmem:[%s6789] sm:$0xff]
        %v6791 = vld [vmem:[%s6789 + $0x8] sm:$0xff]
        %6794 = vrot.lane.b32.xlu0 %v6790, 105
        %v6795 = vpop.permute.xlu0 %6794
        %6796 = vrot.lane.b32.xlu0 %v6791, 105
        %v6797 = vpop.permute.xlu0 %6796
        %vm6798 = vcmask 859136
        %v6799 = vsel %vm6798, %v6795, %v6797
        %v6803 = vmul.f32 %v3795, %v6795
        %v6804 = vmul.f32 %v3796, %v6799
        %v6805 = vmul.f32 %v3795, %v6797
        %6809 = vrot.lane.b32.xlu0 %v6803, 75
        %v6810 = vpop.permute.xlu0 %6809
        %6811 = vrot.lane.b32.xlu0 %v6804, 75
        %v6812 = vpop.permute.xlu0 %6811
        %6813 = vrot.lane.b32.xlu0 %v6805, 75
        %v6814 = vpop.permute.xlu0 %6813
        %v6815 = vsel %vm2256, %v6810, %v6812
        %v6816 = vsel %vm2256, %v6812, %v6814
        %v6820 = vadd.f32 %v6786, %v6815
        %v6821 = vadd.f32 %v6787, %v6816
        %v6822 = vadd.f32 %v6788, %v6814
        %s6823 = scalar_lea.vmem [#allocation6], 1472
        %v6824 = vld [vmem:[%s6823] sm:$0xff]
        %v6825 = vld [vmem:[%s6823 + $0x8] sm:$0xff]
        %6828 = vrot.lane.b32.xlu0 %v6824, 116
        %v6829 = vpop.permute.xlu0 %6828
        %6830 = vrot.lane.b32.xlu0 %v6825, 116
        %v6831 = vpop.permute.xlu0 %6830
        %v6832 = vsel %vm3916, %v6829, %v6831
        %v6836 = vmul.f32 %v3795, %v6829
        %v6837 = vmul.f32 %v3796, %v6832
        %v6838 = vmul.f32 %v3795, %v6831
        %6842 = vrot.lane.b32.xlu0 %v6836, 64
        %v6843 = vpop.permute.xlu0 %6842
        %6844 = vrot.lane.b32.xlu0 %v6837, 64
        %v6845 = vpop.permute.xlu0 %6844
        %6846 = vrot.lane.b32.xlu0 %v6838, 64
        %v6847 = vpop.permute.xlu0 %6846
        %v6848 = vsel %vm2392, %v6843, %v6845
        %v6849 = vsel %vm2392, %v6845, %v6847
        %v6853 = vadd.f32 %v6820, %v6848
        %v6854 = vadd.f32 %v6821, %v6849
        %v6855 = vadd.f32 %v6822, %v6847
        %s6856 = scalar_lea.vmem [#allocation6], 1488
        %v6857 = vld [vmem:[%s6856] sm:$0xff]
        %v6858 = vld [vmem:[%s6856 + $0x8] sm:$0xff]
        %6861 = vrot.lane.b32.xlu0 %v6857, 120
        %v6862 = vpop.permute.xlu0 %6861
        %6863 = vrot.lane.b32.xlu0 %v6858, 120
        %v6864 = vpop.permute.xlu0 %6863
        %v6865 = vsel %vm3882, %v6862, %v6864
        %v6869 = vmul.f32 %v3795, %v6862
        %v6870 = vmul.f32 %v3796, %v6865
        %v6871 = vmul.f32 %v3795, %v6864
        %6875 = vrot.lane.b32.xlu0 %v6869, 60
        %v6876 = vpop.permute.xlu0 %6875
        %6877 = vrot.lane.b32.xlu0 %v6870, 60
        %v6878 = vpop.permute.xlu0 %6877
        %6879 = vrot.lane.b32.xlu0 %v6871, 60
        %v6880 = vpop.permute.xlu0 %6879
        %v6881 = vsel %vm2664, %v6876, %v6878
        %v6882 = vsel %vm2664, %v6878, %v6880
        %v6886 = vadd.f32 %v6853, %v6881
        %v6887 = vadd.f32 %v6854, %v6882
        %v6888 = vadd.f32 %v6855, %v6880
        %s6889 = scalar_lea.vmem [#allocation6], 1504
        %v6890 = vld [vmem:[%s6889] sm:$0xff]
        %v6891 = vld [vmem:[%s6889 + $0x8] sm:$0xff]
        %6894 = vrot.lane.b32.xlu0 %v6890, 124
        %v6895 = vpop.permute.xlu0 %6894
        %6896 = vrot.lane.b32.xlu0 %v6891, 124
        %v6897 = vpop.permute.xlu0 %6896
        %v6898 = vsel %vm806, %v6895, %v6897
        %v6902 = vmul.f32 %v3795, %v6895
        %v6903 = vmul.f32 %v3796, %v6898
        %v6904 = vmul.f32 %v3795, %v6897
        %6908 = vrot.lane.b32.xlu0 %v6902, 56
        %v6909 = vpop.permute.xlu0 %6908
        %6910 = vrot.lane.b32.xlu0 %v6903, 56
        %v6911 = vpop.permute.xlu0 %6910
        %6912 = vrot.lane.b32.xlu0 %v6904, 56
        %v6913 = vpop.permute.xlu0 %6912
        %v6914 = vsel %vm3832, %v6909, %v6911
        %v6915 = vsel %vm3832, %v6911, %v6913
        %v6919 = vadd.f32 %v6886, %v6914
        %v6920 = vadd.f32 %v6887, %v6915
        %v6921 = vadd.f32 %v6888, %v6913
        %s6922 = scalar_lea.vmem [#allocation6], 1520
        %v6923 = vld [vmem:[%s6922] sm:$0xff]
        %v6924 = vld [vmem:[%s6922 + $0x8] sm:$0xff]
        %v6925 = vmul.f32 %v3796, %v6923
        %v6926 = vmul.f32 %v3795, %v6924
        %6929 = vrot.lane.b32.xlu0 %v6925, 52
        %v6930 = vpop.permute.xlu0 %6929
        %6931 = vrot.lane.b32.xlu0 %v6926, 52
        %v6932 = vpop.permute.xlu0 %6931
        %v6933 = vsel %vm3812, %v6930, %v6932
        %v6937 = vadd.f32 %v6919, %v6930
        %v6938 = vadd.f32 %v6920, %v6933
        %v6939 = vadd.f32 %v6921, %v6932
        %s6940 = scalar_lea.vmem [#allocation6], 1536
        %v6941 = vld [vmem:[%s6940] sm:$0xff]
        %v6942 = vld [vmem:[%s6940 + $0x8] sm:$0xff]
        %6945 = vrot.lane.b32.xlu0 %v6941, 4
        %v6946 = vpop.permute.xlu0 %6945
        %6947 = vrot.lane.b32.xlu0 %v6942, 4
        %v6948 = vpop.permute.xlu0 %6947
        %v6949 = vsel %vm4389, %v6946, %v6948
        %v6953 = vmul.f32 %v3796, %v6946
        %v6954 = vmul.f32 %v3795, %v6949
        %v6955 = vmul.f32 %v3796, %v6948
        %6959 = vrot.lane.b32.xlu0 %v6953, 48
        %v6960 = vpop.permute.xlu0 %6959
        %6961 = vrot.lane.b32.xlu0 %v6954, 48
        %v6962 = vpop.permute.xlu0 %6961
        %6963 = vrot.lane.b32.xlu0 %v6955, 48
        %v6964 = vpop.permute.xlu0 %6963
        %v6965 = vsel %vm2868, %v6960, %v6962
        %v6966 = vsel %vm2868, %v6962, %v6964
        %v6970 = vadd.f32 %v6937, %v6960
        %v6971 = vadd.f32 %v6938, %v6965
        %v6972 = vadd.f32 %v6939, %v6966
        %s6973 = scalar_lea.vmem [#allocation6], 1552
        %v6974 = vld [vmem:[%s6973] sm:$0xff]
        %v6975 = vld [vmem:[%s6973 + $0x8] sm:$0xff]
        %6978 = vrot.lane.b32.xlu0 %v6974, 8
        %v6979 = vpop.permute.xlu0 %6978
        %6980 = vrot.lane.b32.xlu0 %v6975, 8
        %v6981 = vpop.permute.xlu0 %6980
        %v6982 = vsel %vm476, %v6979, %v6981
        %v6986 = vmul.f32 %v3796, %v6979
        %v6987 = vmul.f32 %v3795, %v6982
        %v6988 = vmul.f32 %v3796, %v6981
        %6992 = vrot.lane.b32.xlu0 %v6986, 44
        %v6993 = vpop.permute.xlu0 %6992
        %6994 = vrot.lane.b32.xlu0 %v6987, 44
        %v6995 = vpop.permute.xlu0 %6994
        %6996 = vrot.lane.b32.xlu0 %v6988, 44
        %v6997 = vpop.permute.xlu0 %6996
        %v6998 = vsel %vm3140, %v6993, %v6995
        %v6999 = vsel %vm3140, %v6995, %v6997
        %v7003 = vadd.f32 %v6970, %v6993
        %v7004 = vadd.f32 %v6971, %v6998
        %v7005 = vadd.f32 %v6972, %v6999
        %s7006 = scalar_lea.vmem [#allocation6], 1568
        %v7007 = vld [vmem:[%s7006] sm:$0xff]
        %v7008 = vld [vmem:[%s7006 + $0x8] sm:$0xff]
        %7011 = vrot.lane.b32.xlu0 %v7007, 12
        %v7012 = vpop.permute.xlu0 %7011
        %7013 = vrot.lane.b32.xlu0 %v7008, 12
        %v7014 = vpop.permute.xlu0 %7013
        %v7015 = vsel %vm4456, %v7012, %v7014
        %v7019 = vmul.f32 %v3796, %v7012
        %v7020 = vmul.f32 %v3795, %v7015
        %v7021 = vmul.f32 %v3796, %v7014
        %7025 = vrot.lane.b32.xlu0 %v7019, 40
        %v7026 = vpop.permute.xlu0 %7025
        %7027 = vrot.lane.b32.xlu0 %v7020, 40
        %v7028 = vpop.permute.xlu0 %7027
        %7029 = vrot.lane.b32.xlu0 %v7021, 40
        %v7030 = vpop.permute.xlu0 %7029
        %v7031 = vsel %vm4473, %v7026, %v7028
        %v7032 = vsel %vm4473, %v7028, %v7030
        %v7036 = vadd.f32 %v7003, %v7026
        %v7037 = vadd.f32 %v7004, %v7031
        %v7038 = vadd.f32 %v7005, %v7032
        %s7039 = scalar_lea.vmem [#allocation6], 1584
        %v7040 = vld [vmem:[%s7039] sm:$0xff]
        %v7041 = vld [vmem:[%s7039 + $0x8] sm:$0xff]
        %7044 = vrot.lane.b32.xlu0 %v7040, 7
        %v7045 = vpop.permute.xlu0 %7044
        %7046 = vrot.lane.b32.xlu0 %v7041, 7
        %v7047 = vpop.permute.xlu0 %7046
        %v7048 = vsel %vm6164, %v7045, %v7047
        %v7052 = vmul.f32 %v3796, %v7045
        %v7053 = vmul.f32 %v3795, %v7048
        %v7054 = vmul.f32 %v3796, %v7047
        %7058 = vrot.lane.b32.xlu0 %v7052, 45
        %v7059 = vpop.permute.xlu0 %7058
        %7060 = vrot.lane.b32.xlu0 %v7053, 45
        %v7061 = vpop.permute.xlu0 %7060
        %7062 = vrot.lane.b32.xlu0 %v7054, 45
        %v7063 = vpop.permute.xlu0 %7062
        %v7064 = vsel %vm3072, %v7059, %v7061
        %v7065 = vsel %vm3072, %v7061, %v7063
        %v7069 = vadd.f32 %v7036, %v7059
        %v7070 = vadd.f32 %v7037, %v7064
        %v7071 = vadd.f32 %v7038, %v7065
        %s7072 = scalar_lea.vmem [#allocation6], 1600
        %v7073 = vld [vmem:[%s7072] sm:$0xff]
        %v7074 = vld [vmem:[%s7072 + $0x8] sm:$0xff]
        %7077 = vrot.lane.b32.xlu0 %v7073, 10
        %v7078 = vpop.permute.xlu0 %7077
        %7079 = vrot.lane.b32.xlu0 %v7074, 10
        %v7080 = vpop.permute.xlu0 %7079
        %v7081 = vsel %vm6130, %v7078, %v7080
        %v7085 = vmul.f32 %v3796, %v7078
        %v7086 = vmul.f32 %v3795, %v7081
        %v7087 = vmul.f32 %v3796, %v7080
        %7091 = vrot.lane.b32.xlu0 %v7085, 42
        %v7092 = vpop.permute.xlu0 %7091
        %7093 = vrot.lane.b32.xlu0 %v7086, 42
        %v7094 = vpop.permute.xlu0 %7093
        %7095 = vrot.lane.b32.xlu0 %v7087, 42
        %v7096 = vpop.permute.xlu0 %7095
        %v7097 = vsel %vm3276, %v7092, %v7094
        %v7098 = vsel %vm3276, %v7094, %v7096
        %v7102 = vadd.f32 %v7069, %v7092
        %v7103 = vadd.f32 %v7070, %v7097
        %v7104 = vadd.f32 %v7071, %v7098
        %s7105 = scalar_lea.vmem [#allocation6], 1616
        %v7106 = vld [vmem:[%s7105] sm:$0xff]
        %v7107 = vld [vmem:[%s7105 + $0x8] sm:$0xff]
        %7110 = vrot.lane.b32.xlu0 %v7106, 13
        %v7111 = vpop.permute.xlu0 %7110
        %7112 = vrot.lane.b32.xlu0 %v7107, 13
        %v7113 = vpop.permute.xlu0 %7112
        %v7114 = vsel %vm2375, %v7111, %v7113
        %v7118 = vmul.f32 %v3796, %v7111
        %v7119 = vmul.f32 %v3795, %v7114
        %v7120 = vmul.f32 %v3796, %v7113
        %7124 = vrot.lane.b32.xlu0 %v7118, 39
        %v7125 = vpop.permute.xlu0 %7124
        %7126 = vrot.lane.b32.xlu0 %v7119, 39
        %v7127 = vpop.permute.xlu0 %7126
        %7128 = vrot.lane.b32.xlu0 %v7120, 39
        %v7129 = vpop.permute.xlu0 %7128
        %v7130 = vsel %vm6080, %v7125, %v7127
        %v7131 = vsel %vm6080, %v7127, %v7129
        %v7135 = vadd.f32 %v7102, %v7125
        %v7136 = vadd.f32 %v7103, %v7130
        %v7137 = vadd.f32 %v7104, %v7131
        %s7138 = scalar_lea.vmem [#allocation6], 1632
        %v7139 = vld [vmem:[%s7138] sm:$0xff]
        %v7140 = vld [vmem:[%s7138 + $0x8] sm:$0xff]
        %7143 = vrot.lane.b32.xlu0 %v7139, 16
        %v7144 = vpop.permute.xlu0 %7143
        %7145 = vrot.lane.b32.xlu0 %v7140, 16
        %v7146 = vpop.permute.xlu0 %7145
        %v7147 = vsel %vm2579, %v7144, %v7146
        %v7151 = vmul.f32 %v3796, %v7144
        %v7152 = vmul.f32 %v3795, %v7147
        %v7153 = vmul.f32 %v3796, %v7146
        %7157 = vrot.lane.b32.xlu0 %v7151, 36
        %v7158 = vpop.permute.xlu0 %7157
        %7159 = vrot.lane.b32.xlu0 %v7152, 36
        %v7160 = vpop.permute.xlu0 %7159
        %7161 = vrot.lane.b32.xlu0 %v7153, 36
        %v7162 = vpop.permute.xlu0 %7161
        %v7163 = vsel %vm6046, %v7158, %v7160
        %v7164 = vsel %vm6046, %v7160, %v7162
        %v7168 = vadd.f32 %v7135, %v7158
        %v7169 = vadd.f32 %v7136, %v7163
        %v7170 = vadd.f32 %v7137, %v7164
        %s7171 = scalar_lea.vmem [#allocation6], 1648
        %v7172 = vld [vmem:[%s7171] sm:$0xff]
        %v7173 = vld [vmem:[%s7171 + $0x8] sm:$0xff]
        %7176 = vrot.lane.b32.xlu0 %v7172, 19
        %v7177 = vpop.permute.xlu0 %7176
        %7178 = vrot.lane.b32.xlu0 %v7173, 19
        %v7179 = vpop.permute.xlu0 %7178
        %v7180 = vsel %vm2783, %v7177, %v7179
        %v7184 = vmul.f32 %v3796, %v7177
        %v7185 = vmul.f32 %v3795, %v7180
        %v7186 = vmul.f32 %v3796, %v7179
        %7190 = vrot.lane.b32.xlu0 %v7184, 33
        %v7191 = vpop.permute.xlu0 %7190
        %7192 = vrot.lane.b32.xlu0 %v7185, 33
        %v7193 = vpop.permute.xlu0 %7192
        %7194 = vrot.lane.b32.xlu0 %v7186, 33
        %v7195 = vpop.permute.xlu0 %7194
        %v7196 = vsel %vm3123, %v7191, %v7193
        %v7197 = vsel %vm3123, %v7193, %v7195
        %v7201 = vadd.f32 %v7168, %v7191
        %v7202 = vadd.f32 %v7169, %v7196
        %v7203 = vadd.f32 %v7170, %v7197
        %s7204 = scalar_lea.vmem [#allocation6], 1664
        %v7205 = vld [vmem:[%s7204] sm:$0xff]
        %v7206 = vld [vmem:[%s7204 + $0x8] sm:$0xff]
        %7209 = vrot.lane.b32.xlu0 %v7205, 22
        %v7210 = vpop.permute.xlu0 %7209
        %7211 = vrot.lane.b32.xlu0 %v7206, 22
        %v7212 = vpop.permute.xlu0 %7211
        %v7213 = vsel %vm5962, %v7210, %v7212
        %v7217 = vmul.f32 %v3796, %v7210
        %v7218 = vmul.f32 %v3795, %v7213
        %v7219 = vmul.f32 %v3796, %v7212
        %7223 = vrot.lane.b32.xlu0 %v7217, 30
        %v7224 = vpop.permute.xlu0 %7223
        %7225 = vrot.lane.b32.xlu0 %v7218, 30
        %v7226 = vpop.permute.xlu0 %7225
        %7227 = vrot.lane.b32.xlu0 %v7219, 30
        %v7228 = vpop.permute.xlu0 %7227
        %v7229 = vsel %vm2919, %v7224, %v7226
        %v7230 = vsel %vm2919, %v7226, %v7228
        %v7234 = vadd.f32 %v7201, %v7224
        %v7235 = vadd.f32 %v7202, %v7229
        %v7236 = vadd.f32 %v7203, %v7230
        %s7237 = scalar_lea.vmem [#allocation6], 1680
        %v7238 = vld [vmem:[%s7237] sm:$0xff]
        %v7239 = vld [vmem:[%s7237 + $0x8] sm:$0xff]
        %7242 = vrot.lane.b32.xlu0 %v7238, 25
        %v7243 = vpop.permute.xlu0 %7242
        %7244 = vrot.lane.b32.xlu0 %v7239, 25
        %v7245 = vpop.permute.xlu0 %7244
        %vm7246 = vcmask 203776
        %v7247 = vsel %vm7246, %v7243, %v7245
        %v7251 = vmul.f32 %v3796, %v7243
        %v7252 = vmul.f32 %v3795, %v7247
        %v7253 = vmul.f32 %v3796, %v7245
        %7257 = vrot.lane.b32.xlu0 %v7251, 27
        %v7258 = vpop.permute.xlu0 %7257
        %7259 = vrot.lane.b32.xlu0 %v7252, 27
        %v7260 = vpop.permute.xlu0 %7259
        %7261 = vrot.lane.b32.xlu0 %v7253, 27
        %v7262 = vpop.permute.xlu0 %7261
        %v7263 = vsel %vm3676, %v7258, %v7260
        %v7264 = vsel %vm3676, %v7260, %v7262
        %v7268 = vadd.f32 %v7234, %v7258
        %v7269 = vadd.f32 %v7235, %v7263
        %v7270 = vadd.f32 %v7236, %v7264
        %s7271 = scalar_lea.vmem [#allocation6], 1696
        %v7272 = vld [vmem:[%s7271] sm:$0xff]
        %v7273 = vld [vmem:[%s7271 + $0x8] sm:$0xff]
        %7276 = vrot.lane.b32.xlu0 %v7272, 52
        %v7277 = vpop.permute.xlu0 %7276
        %7278 = vrot.lane.b32.xlu0 %v7273, 52
        %v7279 = vpop.permute.xlu0 %7278
        %v7280 = vsel %vm3812, %v7277, %v7279
        %v7284 = vmul.f32 %v3796, %v7277
        %v7285 = vmul.f32 %v3795, %v7280
        %v7286 = vmul.f32 %v3796, %v7279
        %v7287 = vadd.f32 %v7268, %v7284
        %v7288 = vadd.f32 %v7269, %v7285
        %v7289 = vadd.f32 %v7270, %v7286
        %s7290 = scalar_lea.vmem [#allocation6], 1712
        %v7291 = vld [vmem:[%s7290] sm:$0xff]
        %v7292 = vld [vmem:[%s7290 + $0x8] sm:$0xff]
        %7295 = vrot.lane.b32.xlu0 %v7291, 56
        %v7296 = vpop.permute.xlu0 %7295
        %7297 = vrot.lane.b32.xlu0 %v7292, 56
        %v7298 = vpop.permute.xlu0 %7297
        %v7299 = vsel %vm3832, %v7296, %v7298
        %v7303 = vmul.f32 %v3796, %v7296
        %v7304 = vmul.f32 %v3795, %v7299
        %v7305 = vmul.f32 %v3796, %v7298
        %7309 = vrot.lane.b32.xlu0 %v7303, 124
        %v7310 = vpop.permute.xlu0 %7309
        %7311 = vrot.lane.b32.xlu0 %v7304, 124
        %v7312 = vpop.permute.xlu0 %7311
        %7313 = vrot.lane.b32.xlu0 %v7305, 124
        %v7314 = vpop.permute.xlu0 %7313
        %v7315 = vsel %vm806, %v7310, %v7312
        %v7316 = vsel %vm806, %v7312, %v7314
        %v7320 = vadd.f32 %v7287, %v7315
        %v7321 = vadd.f32 %v7288, %v7316
        %v7322 = vadd.f32 %v7289, %v7314
        %s7323 = scalar_lea.vmem [#allocation6], 1728
        %v7324 = vld [vmem:[%s7323] sm:$0xff]
        %v7325 = vld [vmem:[%s7323 + $0x8] sm:$0xff]
        %7328 = vrot.lane.b32.xlu0 %v7324, 60
        %v7329 = vpop.permute.xlu0 %7328
        %7330 = vrot.lane.b32.xlu0 %v7325, 60
        %v7331 = vpop.permute.xlu0 %7330
        %v7332 = vsel %vm2664, %v7329, %v7331
        %v7336 = vmul.f32 %v3796, %v7329
        %v7337 = vmul.f32 %v3795, %v7332
        %v7338 = vmul.f32 %v3796, %v7331
        %7342 = vrot.lane.b32.xlu0 %v7336, 120
        %v7343 = vpop.permute.xlu0 %7342
        %7344 = vrot.lane.b32.xlu0 %v7337, 120
        %v7345 = vpop.permute.xlu0 %7344
        %7346 = vrot.lane.b32.xlu0 %v7338, 120
        %v7347 = vpop.permute.xlu0 %7346
        %v7348 = vsel %vm3882, %v7343, %v7345
        %v7349 = vsel %vm3882, %v7345, %v7347
        %v7353 = vadd.f32 %v7320, %v7348
        %v7354 = vadd.f32 %v7321, %v7349
        %v7355 = vadd.f32 %v7322, %v7347
        %s7356 = scalar_lea.vmem [#allocation6], 1744
        %v7357 = vld [vmem:[%s7356] sm:$0xff]
        %v7358 = vld [vmem:[%s7356 + $0x8] sm:$0xff]
        %7361 = vrot.lane.b32.xlu0 %v7357, 64
        %v7362 = vpop.permute.xlu0 %7361
        %7363 = vrot.lane.b32.xlu0 %v7358, 64
        %v7364 = vpop.permute.xlu0 %7363
        %v7365 = vsel %vm2392, %v7362, %v7364
        %v7369 = vmul.f32 %v3796, %v7362
        %v7370 = vmul.f32 %v3795, %v7365
        %v7371 = vmul.f32 %v3796, %v7364
        %7375 = vrot.lane.b32.xlu0 %v7369, 116
        %v7376 = vpop.permute.xlu0 %7375
        %7377 = vrot.lane.b32.xlu0 %v7370, 116
        %v7378 = vpop.permute.xlu0 %7377
        %7379 = vrot.lane.b32.xlu0 %v7371, 116
        %v7380 = vpop.permute.xlu0 %7379
        %v7381 = vsel %vm3916, %v7376, %v7378
        %v7382 = vsel %vm3916, %v7378, %v7380
        %v7386 = vadd.f32 %v7353, %v7381
        %v7387 = vadd.f32 %v7354, %v7382
        %v7388 = vadd.f32 %v7355, %v7380
        %s7389 = scalar_lea.vmem [#allocation6], 1760
        %v7390 = vld [vmem:[%s7389] sm:$0xff]
        %v7391 = vld [vmem:[%s7389 + $0x8] sm:$0xff]
        %7394 = vrot.lane.b32.xlu0 %v7390, 68
        %v7395 = vpop.permute.xlu0 %7394
        %7396 = vrot.lane.b32.xlu0 %v7391, 68
        %v7397 = vpop.permute.xlu0 %7396
        %v7398 = vsel %vm3934, %v7395, %v7397
        %v7402 = vmul.f32 %v3796, %v7395
        %v7403 = vmul.f32 %v3795, %v7398
        %v7404 = vmul.f32 %v3796, %v7397
        %7408 = vrot.lane.b32.xlu0 %v7402, 112
        %v7409 = vpop.permute.xlu0 %7408
        %7410 = vrot.lane.b32.xlu0 %v7403, 112
        %v7411 = vpop.permute.xlu0 %7410
        %7412 = vrot.lane.b32.xlu0 %v7404, 112
        %v7413 = vpop.permute.xlu0 %7412
        %v7414 = vsel %vm1010, %v7409, %v7411
        %v7415 = vsel %vm1010, %v7411, %v7413
        %v7419 = vadd.f32 %v7386, %v7414
        %v7420 = vadd.f32 %v7387, %v7415
        %v7421 = vadd.f32 %v7388, %v7413
        %s7422 = scalar_lea.vmem [#allocation6], 1776
        %v7423 = vld [vmem:[%s7422] sm:$0xff]
        %v7424 = vld [vmem:[%s7422 + $0x8] sm:$0xff]
        %7427 = vrot.lane.b32.xlu0 %v7423, 72
        %v7428 = vpop.permute.xlu0 %7427
        %7429 = vrot.lane.b32.xlu0 %v7424, 72
        %v7430 = vpop.permute.xlu0 %7429
        %v7431 = vsel %vm3968, %v7428, %v7430
        %v7435 = vmul.f32 %v3796, %v7428
        %v7436 = vmul.f32 %v3795, %v7431
        %v7437 = vmul.f32 %v3796, %v7430
        %7441 = vrot.lane.b32.xlu0 %v7435, 108
        %v7442 = vpop.permute.xlu0 %7441
        %7443 = vrot.lane.b32.xlu0 %v7436, 108
        %v7444 = vpop.permute.xlu0 %7443
        %7445 = vrot.lane.b32.xlu0 %v7437, 108
        %v7446 = vpop.permute.xlu0 %7445
        %v7447 = vsel %vm1282, %v7442, %v7444
        %v7448 = vsel %vm1282, %v7444, %v7446
        %v7452 = vadd.f32 %v7419, %v7447
        %v7453 = vadd.f32 %v7420, %v7448
        %v7454 = vadd.f32 %v7421, %v7446
        %s7455 = scalar_lea.vmem [#allocation6], 1792
        %v7456 = vld [vmem:[%s7455] sm:$0xff]
        %v7457 = vld [vmem:[%s7455 + $0x8] sm:$0xff]
        %7460 = vrot.lane.b32.xlu0 %v7456, 76
        %v7461 = vpop.permute.xlu0 %7460
        %7462 = vrot.lane.b32.xlu0 %v7457, 76
        %v7463 = vpop.permute.xlu0 %7462
        %v7464 = vsel %vm2188, %v7461, %v7463
        %v7468 = vmul.f32 %v3796, %v7461
        %v7469 = vmul.f32 %v3795, %v7464
        %v7470 = vmul.f32 %v3796, %v7463
        %7474 = vrot.lane.b32.xlu0 %v7468, 104
        %v7475 = vpop.permute.xlu0 %7474
        %7476 = vrot.lane.b32.xlu0 %v7469, 104
        %v7477 = vpop.permute.xlu0 %7476
        %7478 = vrot.lane.b32.xlu0 %v7470, 104
        %v7479 = vpop.permute.xlu0 %7478
        %v7480 = vsel %vm4018, %v7475, %v7477
        %v7481 = vsel %vm4018, %v7477, %v7479
        %v7485 = vadd.f32 %v7452, %v7480
        %v7486 = vadd.f32 %v7453, %v7481
        %v7487 = vadd.f32 %v7454, %v7479
        %v7488 = vld [vmem:[%s4] sm:$0xff]
        %7489 = vset.pattern.permute.xlu0 5
        %7490 = vperm.xlu0 %7489, %v385
        %v7491 = vpop.permute.xlu0 %7490
        %7496 = vrot.lane.b32.xlu0 %v7485, 76
        %v7497 = vpop.permute.xlu0 %7496
        %7498 = vrot.lane.b32.xlu0 %v7486, 76
        %v7499 = vpop.permute.xlu0 %7498
        %7500 = vrot.lane.b32.xlu0 %v7487, 76
        %v7501 = vpop.permute.xlu0 %7500
        %v7502 = vsel %vm2188, %v7497, %v7499
        %v7503 = vsel %vm2188, %v7499, %v7501
        %v7507 = vsel %vm476, %v7488, 0
        %7509 = vmatpush.msra.mxu0 0.0
        %7510 = vmatpush.msra.mxu0 0.0
        %7511 = vmatpush.msra.mxu0 0.0
        %7512 = vmatpush.msra.mxu0 0.0
        %7513 = vmatpush.msra.mxu0 0.0
        %7514 = vmatpush.msra.mxu0 0.0
        %7515 = vmatpush.msra.mxu0 0.0
        %7516 = vmatpush.msra.mxu0 0.0
        %7517 = vmatpush.msra.mxu0 0.0
        %7518 = vmatpush.msra.mxu0 0.0
        %7519 = vmatpush.msra.mxu0 0.0
        %7520 = vmatpush.msra.mxu0 0.0
        %7521 = vmatpush.msra.mxu0 0.0
        %7522 = vmatpush.msra.mxu0 0.0
        %7523 = vmatpush.msra.mxu0 0.0
        %7524 = vmatpush.msra.mxu0 %v7502
        %7525 = vmatmul.f32.gmra.mxu0 %v7507
        %v7526 = vpop.f32.mrf.mxu0
        %v7527 = vadd.f32 %v7491, %v7526
        %7528 = vdwg.mxu0
        %7529 = vmatpush.msra.mxu0 0.0
        %7530 = vmatpush.msra.mxu0 0.0
        %7531 = vmatpush.msra.mxu0 0.0
        %7532 = vmatpush.msra.mxu0 0.0
        %7533 = vmatpush.msra.mxu0 0.0
        %7534 = vmatpush.msra.mxu0 0.0
        %7535 = vmatpush.msra.mxu0 0.0
        %7536 = vmatpush.msra.mxu0 0.0
        %7537 = vmatpush.msra.mxu0 0.0
        %7538 = vmatpush.msra.mxu0 0.0
        %7539 = vmatpush.msra.mxu0 0.0
        %7540 = vmatpush.msra.mxu0 0.0
        %7541 = vmatpush.msra.mxu0 0.0
        %7542 = vmatpush.msra.mxu0 0.0
        %7543 = vmatpush.msra.mxu0 0.0
        %7544 = vmatpush.msra.mxu0 %v7503
        %7545 = vmatmul.f32.gmra.mxu0 %v7507
        %v7546 = vpop.f32.mrf.mxu0
        %v7547 = vadd.f32 %v7491, %v7546
        %7548 = vdwg.mxu0
        %7552 = vrot.lane.b32.xlu0 %v3783, 51
        %v7553 = vpop.permute.xlu0 %7552
        %7554 = vrot.lane.b32.xlu0 %v3784, 51
        %v7555 = vpop.permute.xlu0 %7554
        %7556 = vrot.lane.b32.xlu0 %v3785, 51
        %v7557 = vpop.permute.xlu0 %7556
        %v7558 = vsel %vm3727, %v7553, %v7555
        %v7559 = vsel %vm3727, %v7555, %v7557
        %v7562 = vmul.f32 %v7527, %v7558
        %v7563 = vmul.f32 %v7547, %v7559
        %v7564 = vmul.f32 %v504, %v7562
        %v7565 = vmul.f32 %v527, %v7563
        %v7566 = vld [vmem:[%s5] sm:$0xff]
        %7567 = vset.pattern.permute.xlu0 6
        %7568 = vperm.xlu0 %7567, %v385
        %v7569 = vpop.permute.xlu0 %7568
        %v7572 = vsel %vm476, %v7566, 0
        %7574 = vmatpush.msra.mxu0 0.0
        %7575 = vmatpush.msra.mxu0 0.0
        %7576 = vmatpush.msra.mxu0 0.0
        %7577 = vmatpush.msra.mxu0 0.0
        %7578 = vmatpush.msra.mxu0 0.0
        %7579 = vmatpush.msra.mxu0 0.0
        %7580 = vmatpush.msra.mxu0 0.0
        %7581 = vmatpush.msra.mxu0 0.0
        %7582 = vmatpush.msra.mxu0 0.0
        %7583 = vmatpush.msra.mxu0 0.0
        %7584 = vmatpush.msra.mxu0 0.0
        %7585 = vmatpush.msra.mxu0 0.0
        %7586 = vmatpush.msra.mxu0 0.0
        %7587 = vmatpush.msra.mxu0 0.0
        %7588 = vmatpush.msra.mxu0 0.0
        %7589 = vmatpush.msra.mxu0 %v7564
        %7590 = vmatmul.f32.gmra.mxu0 %v7572
        %v7591 = vpop.f32.mrf.mxu0
        %v7592 = vadd.f32 %v7569, %v7591
        %7593 = vdwg.mxu0
        %7594 = vmatpush.msra.mxu0 0.0
        %7595 = vmatpush.msra.mxu0 0.0
        %7596 = vmatpush.msra.mxu0 0.0
        %7597 = vmatpush.msra.mxu0 0.0
        %7598 = vmatpush.msra.mxu0 0.0
        %7599 = vmatpush.msra.mxu0 0.0
        %7600 = vmatpush.msra.mxu0 0.0
        %7601 = vmatpush.msra.mxu0 0.0
        %7602 = vmatpush.msra.mxu0 0.0
        %7603 = vmatpush.msra.mxu0 0.0
        %7604 = vmatpush.msra.mxu0 0.0
        %7605 = vmatpush.msra.mxu0 0.0
        %7606 = vmatpush.msra.mxu0 0.0
        %7607 = vmatpush.msra.mxu0 0.0
        %7608 = vmatpush.msra.mxu0 0.0
        %7609 = vmatpush.msra.mxu0 %v7565
        %7610 = vmatmul.f32.gmra.mxu0 %v7572
        %v7611 = vpop.f32.mrf.mxu0
        %v7612 = vadd.f32 %v7569, %v7611
        %7613 = vdwg.mxu0
        %7614 = vset.pattern.permute.xlu0 7
        %7615 = vperm.xlu0 %7614, %v385
        %v7616 = vpop.permute.xlu0 %7615
        %v7618 = vmul.f32 %v7592, %v7616
        %v7619 = vmul.f32 %v7612, %v7616
        %v7620 = vadd.f32 %v7618, %v383
        %v7621 = vadd.f32 %v7619, %v384
        %7622 = vst [vmem:[%s382] sm:$0xff] %v7620
        %7623 = vst [vmem:[%s382 + $0x8] sm:$0xff] %v7621
        %p7624 = scmp.lt.s32.totalorder %s22, 1
        %s7625 = scalar_select %p7624, %s22, 1
        %s7626 = smul.addr %s7625, 2
        %s7627 = smul.addr %s7626, 8
        %s7628 = scalar_lea.vmem %s9, %s7627
        // Predicated region
        $region69: #{mlka_forward.1} parent=55 // pred_check
          %p7629 = pneg %p234
        $region70: #{mlka_forward.1} parent=55 // pred_check_branch
          %7631 = sbr.rel (%p7629) target = $region72
        $region71: #{mlka_forward.1} parent=55 // pred_region
          _
        $region72: #{mlka_forward.1} parent=55 // pred_fallthru
          _
      $region56: #{mlka_forward.1} parent=5 // pred_fallthru
        _
      %p7632 = scmp.le.s32.totalorder 2, %s17
      // Predicated region
      $region73: #{mlka_forward.1} parent=5 // pred_check
        %p7633 = pneg %p7632
      $region74: #{mlka_forward.1} parent=5 // pred_check_branch
        %7635 = sbr.rel (%p7633) target = $region76
      $region75: #{mlka_forward.1} parent=5 // pred_region
        %s7636 = ssub.s32 %s17, 2
        // Predicated region
        $region77: #{mlka_forward.1} parent=75 // pred_check
          %p7637 = pneg %p240
        $region78: #{mlka_forward.1} parent=75 // pred_check_branch
          %7639 = sbr.rel (%p7637) target = $region80
        $region79: #{mlka_forward.1} parent=75 // pred_region
          %p7640 = scmp.lt.s32.totalorder %s23, 1
          %s7641 = scalar_select %p7640, %s23, 1
          %s7642 = smul.addr %s7641, 2
          %s7643 = smul.addr %s7642, 8
          %s7644 = scalar_lea.vmem %s9, %s7643
        $region80: #{mlka_forward.1} parent=75 // pred_fallthru
          _
      $region76: #{mlka_forward.1} parent=5 // pred_fallthru
        _
    $region6: #{mlka_forward.1} parent=1 // loop_footer
      %s21 = sadd.s32 1, %s17
    $region7: #{mlka_forward.1} parent=1 // loop_footer_branch
      %16 = sbr.rel target = $region3
    $region8: #{mlka_forward.1} parent=1 // loop_exit
      _
    %7645 = vsyncpa [#allocation3], 1
    %s7646 = scalar_lea.sflag [#allocation3], 1
    %7647 = vsyncpa %s7646, 1
    %7648 = vsyncpa [#allocation5], 1

</llo_original>
